<compile_context>
chip_gen: v5e
topology: v5e:2x2
jax: 0.10.0
libtpu: 0.0.40
codegen_flags: <defaults>
</compile_context>

<pallas_src>
import jax
import jax.numpy as jnp
from jax import lax
from jax.experimental import pallas as pl
from jax.experimental.pallas import tpu as pltpu


def mlp_difs_softmax_kernel(src_ref, dst_ref, h_ref, hw1_ref, b1_ref, w2_ref, b2_ref,
                            out_ref, att_ref, denom_ref, hs_ref):
    p = pl.program_id(0)          # 0: attention + per-source denominators, 1: scatter
    t = pl.program_id(1)          # edge-tile index
    TE = src_ref.shape[0]
    N = h_ref.shape[0]

    # One-hot incidence rows for this edge tile (padded edges carry index -1 -> all-zero
    # rows, so they contribute nothing to denominators or outputs).
    node_ids = lax.broadcasted_iota(jnp.int32, (TE, N), 1)
    oh_src = (src_ref[...] == node_ids).astype(jnp.float32)          # (TE, N)
    oh_dst = (dst_ref[...] == node_ids).astype(jnp.float32)          # (TE, N)

    @pl.when((p == 0) & (t == 0))
    def _init_denom():
        denom_ref[...] = jnp.zeros_like(denom_ref)

    @pl.when(p == 0)
    def _phase_attention():
        # relu((h[src]-h[dst])@W1 + b1) == relu(hW1[src]-hW1[dst] + b1): fuse both gathers
        # into a single MXU pass with the +/-1 one-hot difference (exact in f32).
        oh_dif = oh_src - oh_dst                                                     # (TE, N)
        g = jnp.dot(oh_dif, hw1_ref[...], preferred_element_type=jnp.float32)        # (TE, H)
        z1 = jnp.maximum(g + b1_ref[...], 0.0)                                       # (TE, H)
        # Linear(H, 1) as VPU multiply + lane reduction; b2 scalar lives in SMEM.
        z2 = jnp.sum(z1 * w2_ref[...], axis=-1, keepdims=True) + b2_ref[0, 0]        # (TE, 1)
        att_col = 1.0 / (1.0 + jnp.exp(-jnp.maximum(z2, 0.0)))                       # (TE, 1)
        # Store lane-dense (one tiny XLU transpose per tile) and accumulate the
        # per-source-node denominator with a lane-dense (1,TE)x(TE,N) matmul.
        att_row = jnp.transpose(att_col, (1, 0))                                     # (1, TE)
        att_ref[pl.ds(t, 1), :] = att_row
        denom_ref[...] += jnp.dot(att_row, oh_src, preferred_element_type=jnp.float32)  # (1,N)

    @pl.when((p == 1) & (t == 0))
    def _prescale():
        # Pre-scale h by the per-source denominator once (exact divide, not approx recip).
        # Nodes that never appear as a source have denom == 0 -> scaled row forced to 0
        # (those rows are never gathered anyway).
        denom_col = jnp.transpose(denom_ref[...], (1, 0))                            # (N, 1)
        has_out_edges = denom_col > 0.0
        hs_ref[...] = jnp.where(has_out_edges,
                                h_ref[...] / jnp.where(has_out_edges, denom_col, 1.0),
                                0.0)
        out_ref[...] = jnp.zeros_like(out_ref)

    @pl.when(p == 1)
    def _phase_messages():
        att_col = jnp.transpose(att_ref[pl.ds(t, 1), :], (1, 0))                     # (TE, 1)
        h_src = jnp.dot(oh_src, hs_ref[...], preferred_element_type=jnp.float32)     # (TE, D)
        weighted = att_col * h_src                                                   # (TE, D)
        # Scatter-add to destination nodes: contract over the edge axis of the one-hot
        # (transposed-LHS dot_general, handled natively by the MXU).
        out_ref[...] += lax.dot_general(
            oh_dst, weighted, (((0,), (0,)), ((), ())),
            preferred_element_type=jnp.float32)                                      # (N, D)


def mlp_difs_softmax(src, dst, h, w1, b1, w2, b2, *, edge_tile=None):
    """src, dst: int (E,), h: f32 (N, D), w1: (D, H), b1: (H,), w2: (H, 1), b2: (1,).
    Returns (N, D) f32 node features after the normalized edge-weighted aggregation."""
    E = src.shape[0]
    N, D = h.shape
    H = w1.shape[1]

    # Generation-aware VMEM capacity (v5e/v6e: 128 MiB, v7x: 64 MiB).
    try:
        vmem_cap = int(pltpu.get_tpu_info().vmem_capacity_bytes)
    except Exception:  # pragma: no cover - conservative fallback
        vmem_cap = 64 * 2**20

    n_lanes = max(((N + 127) // 128) * 128, 128)   # lane-padded node count

    # Edge tile: as large as possible (amortizes the ~0.35us/step floor, fills the 256-wide
    # MXU on v6e/v7x) while keeping the ~3 f32 (TE,N) one-hots within ~1/4 of VMEM, and not
    # grossly over-padding tiny edge sets.
    if edge_tile is None:
        edge_tile = 2048
        while edge_tile > 256 and 3 * 4 * edge_tile * n_lanes > vmem_cap // 4:
            edge_tile //= 2
        edge_tile = min(edge_tile, max(256, ((E + 255) // 256) * 256))
    TE = max(8, ((int(edge_tile) + 7) // 8) * 8)

    E_pad = ((E + TE - 1) // TE) * TE
    num_tiles = E_pad // TE
    pad = E_pad - E

    src_col = src.astype(jnp.int32).reshape(E, 1)
    dst_col = dst.astype(jnp.int32).reshape(E, 1)
    if pad:
        fill = jnp.full((pad, 1), -1, dtype=jnp.int32)   # -1 never matches a node id
        src_col = jnp.concatenate([src_col, fill], axis=0)
        dst_col = jnp.concatenate([dst_col, fill], axis=0)

    h = h.astype(jnp.float32)
    # Node-side matmul hoisted out of the kernel (depends on nodes only, not edges).
    hw1 = jnp.dot(h, w1.astype(jnp.float32), precision=lax.Precision.HIGHEST)   # (N, H)
    b1_row = b1.reshape(1, H).astype(jnp.float32)
    w2_row = w2.reshape(1, H).astype(jnp.float32)        # (H,1) -> (1,H) row for lane reduce
    b2_s = b2.reshape(1, 1).astype(jnp.float32)          # scalar, kept in SMEM

    # VMEM budget: resident tensors + per-tile working set, 2x headroom, capped per chip.
    f32 = 4
    resident = f32 * (2 * N * D          # h (double-buffer headroom)
                      + 2 * N * H        # hW1
                      + N * D            # h_scaled scratch
                      + 2 * N * D        # output accumulator (+writeback)
                      + num_tiles * TE   # lane-dense att scratch
                      + 8 * n_lanes      # denom row (sublane padding)
                      + 4 * H)
    per_tile = f32 * TE * (3 * n_lanes + 2 * H + 2 * D) + 2 * 2 * 4 * 128 * TE
    vmem_limit = int(min(max(2 * (resident + per_tile), 16 * 2**20),
                         int(0.85 * vmem_cap)))

    grid_spec = pltpu.PrefetchScalarGridSpec(
        num_scalar_prefetch=0,
        grid=(2, num_tiles),
        in_specs=[
            pl.BlockSpec((TE, 1), lambda p, t: (t, 0)),             # src tile (streamed)
            pl.BlockSpec((TE, 1), lambda p, t: (t, 0)),             # dst tile (streamed)
            pl.BlockSpec((N, D), lambda p, t: (0, 0)),              # h (VMEM resident)
            pl.BlockSpec((N, H), lambda p, t: (0, 0)),              # hW1 (VMEM resident)
            pl.BlockSpec((1, H), lambda p, t: (0, 0)),              # b1
            pl.BlockSpec((1, H), lambda p, t: (0, 0)),              # W2 as a row
            pl.BlockSpec(memory_space=pltpu.MemorySpace.SMEM),      # b2 scalar
        ],
        out_specs=pl.BlockSpec((N, D), lambda p, t: (0, 0)),        # resident accumulator
        scratch_shapes=[
            pltpu.VMEM((num_tiles, TE), jnp.float32),   # per-edge attention (lane-dense)
            pltpu.VMEM((1, N), jnp.float32),            # per-source denominator (lane-dense)
            pltpu.VMEM((N, D), jnp.float32),            # h / denom (phase-1 resident)
        ],
    )

    return pl.pallas_call(
        mlp_difs_softmax_kernel,
        out_shape=jax.ShapeDtypeStruct((N, D), jnp.float32),
        grid_spec=grid_spec,
        compiler_params=pltpu.CompilerParams(
            # Both axes are a sequential reduction into the resident accumulators.
            dimension_semantics=("arbitrary", "arbitrary"),
            vmem_limit_bytes=vmem_limit,
        ),
    )(src_col, dst_col, h, hw1, b1_row, w2_row, b2_s)


def reference(src, dst, h, w1, b1, w2, b2):
    """Pure-JAX reference of the same forward pass."""
    N = h.shape[0]
    dif = h[src] - h[dst]
    z1 = jnp.maximum(dif @ w1 + b1, 0.0)
    z2 = jnp.maximum(z1 @ w2 + b2, 0.0)
    att = jax.nn.sigmoid(z2)[:, 0]
    denom = jax.ops.segment_sum(att, src, num_segments=N)
    norm_w = att / denom[src]
    out = jax.ops.segment_sum(norm_w[:, None] * h[src], dst, num_segments=N)
    return out


if __name__ == "__main__":
    # Small synthetic kNN-style graph: every node has K incoming edges from random sources.
    # E = 700 exercises the padding path (not a multiple of the edge tile).
    N, D_IN, HID, K = 100, 16, 32, 7     # in_dim=16, edge-MLP hidden (out_dim)=32
    E = N * K

    key = jax.random.PRNGKey(0)
    k_h, k_src, k_w1, k_b1, k_w2, k_b2 = jax.random.split(key, 6)

    h = jax.random.normal(k_h, (N, D_IN), dtype=jnp.float32)
    dst = jnp.repeat(jnp.arange(N, dtype=jnp.int32), K)                 # (E,)
    src = jax.random.randint(k_src, (E,), 0, N, dtype=jnp.int32)        # (E,)

    # PyTorch Linear weights stored here as (in, out).
    w1 = 0.1 * jax.random.normal(k_w1, (D_IN, HID), dtype=jnp.float32)
    b1 = 0.1 * jax.random.normal(k_b1, (HID,), dtype=jnp.float32)
    w2 = 0.1 * jax.random.normal(k_w2, (HID, 1), dtype=jnp.float32)
    b2 = 0.1 * jax.random.normal(k_b2, (1,), dtype=jnp.float32)

    out = jax.block_until_ready(mlp_difs_softmax(src, dst, h, w1, b1, w2, b2))
    ref = reference(src, dst, h, w1, b1, w2, b2)

    assert out.shape == (N, D_IN) and out.dtype == jnp.float32
    # Tile-wise MXU accumulation / pre-scaled normalization reorder f32 rounding slightly.
    assert jnp.allclose(out, ref, rtol=1e-4, atol=1e-5), (out, ref)
    print("KERNEL_OK")
</pallas_src>

<mosaic_0001>
module attributes {stable_mosaic.version = 11 : i64} {
  func.func @mlp_difs_softmax_kernel(%arg0: i32, %arg1: i32, %arg2: memref<768x1xi32, #tpu.memory_space<vmem>>, %arg3: memref<768x1xi32, #tpu.memory_space<vmem>>, %arg4: memref<100x16xf32, #tpu.memory_space<vmem>>, %arg5: memref<100x32xf32, #tpu.memory_space<vmem>>, %arg6: memref<1x32xf32, #tpu.memory_space<vmem>>, %arg7: memref<1x32xf32, #tpu.memory_space<vmem>>, %arg8: memref<1x1xf32, #tpu.memory_space<smem>>, %arg9: memref<100x16xf32, #tpu.memory_space<vmem>>, %arg10: memref<1x768xf32, #tpu.memory_space<vmem>>, %arg11: memref<1x100xf32, #tpu.memory_space<vmem>>, %arg12: memref<100x16xf32, #tpu.memory_space<vmem>>) attributes {dimension_semantics = [#tpu.dimension_semantics<arbitrary>, #tpu.dimension_semantics<arbitrary>], iteration_bounds = array<i64: 2, 1>, scalar_prefetch = 0 : i64, scratch_operands = 3 : i64, tpu.core_type = #tpu.core_type<tc>, window_params = [{transform_indices = @transform_0, window_bounds = array<i64: 768, 1>}, {transform_indices = @transform_1, window_bounds = array<i64: 768, 1>}, {pipeline_mode = #tpu.pipeline_mode<synchronous>, transform_indices = @transform_2, window_bounds = array<i64: 100, 16>}, {pipeline_mode = #tpu.pipeline_mode<synchronous>, transform_indices = @transform_3, window_bounds = array<i64: 100, 32>}, {pipeline_mode = #tpu.pipeline_mode<synchronous>, transform_indices = @transform_4, window_bounds = array<i64: 1, 32>}, {pipeline_mode = #tpu.pipeline_mode<synchronous>, transform_indices = @transform_5, window_bounds = array<i64: 1, 32>}, {transform_indices = @transform_6, window_bounds = array<i64: 1, 1>}, {pipeline_mode = #tpu.pipeline_mode<synchronous>, transform_indices = @transform_7, window_bounds = array<i64: 100, 16>}]} {
    %0 = tpu.iota {dimensions = array<i32: 1>} : vector<768x100xi32>
    %c0 = arith.constant 0 : index
    %c0_0 = arith.constant 0 : index
    %1 = vector.load %arg2[%c0, %c0_0] : memref<768x1xi32, #tpu.memory_space<vmem>>, vector<768x1xi32>
    %2 = vector.broadcast %1 : vector<768x1xi32> to vector<768x100xi32>
    %3 = arith.cmpi eq, %2, %0 : vector<768x100xi32>
    %4 = arith.extui %3 : vector<768x100xi1> to vector<768x100xi32>
    %5 = arith.sitofp %4 : vector<768x100xi32> to vector<768x100xf32>
    %c0_1 = arith.constant 0 : index
    %c0_2 = arith.constant 0 : index
    %6 = vector.load %arg3[%c0_1, %c0_2] : memref<768x1xi32, #tpu.memory_space<vmem>>, vector<768x1xi32>
    %7 = vector.broadcast %6 : vector<768x1xi32> to vector<768x100xi32>
    %8 = arith.cmpi eq, %7, %0 : vector<768x100xi32>
    %9 = arith.extui %8 : vector<768x100xi1> to vector<768x100xi32>
    %10 = arith.sitofp %9 : vector<768x100xi32> to vector<768x100xf32>
    %c0_i32 = arith.constant 0 : i32
    %11 = arith.cmpi eq, %arg0, %c0_i32 : i32
    %c0_i32_3 = arith.constant 0 : i32
    %12 = arith.cmpi eq, %arg1, %c0_i32_3 : i32
    %13 = arith.andi %11, %12 : i1
    %14 = arith.extui %13 : i1 to i32
    %c0_i32_4 = arith.constant 0 : i32
    %15 = arith.cmpi ne, %14, %c0_i32_4 : i32
    scf.if %15 {
      %cst = arith.constant 0.000000e+00 : f32
      %27 = vector.broadcast %cst : f32 to vector<1x100xf32>
      %c0_11 = arith.constant 0 : index
      %c0_12 = arith.constant 0 : index
      %28 = vector.load %arg11[%c0_11, %c0_12] : memref<1x100xf32, #tpu.memory_space<vmem>>, vector<1x100xf32>
      tpu.vector_store %arg11[%c0_11, %c0_12], %27 {strides = array<i32>} : memref<1x100xf32, #tpu.memory_space<vmem>>, vector<1x100xf32>,
    } else {
    }
    %c0_i32_5 = arith.constant 0 : i32
    %16 = arith.cmpi eq, %arg0, %c0_i32_5 : i32
    %17 = arith.extui %16 : i1 to i32
    %c0_i32_6 = arith.constant 0 : i32
    %18 = arith.cmpi ne, %17, %c0_i32_6 : i32
    scf.if %18 {
      %27 = arith.subf %5, %10 : vector<768x100xf32>
      %c0_11 = arith.constant 0 : index
      %c0_12 = arith.constant 0 : index
      %28 = vector.load %arg5[%c0_11, %c0_12] : memref<100x32xf32, #tpu.memory_space<vmem>>, vector<100x32xf32>
      %cst = arith.constant dense<0.000000e+00> : vector<768x32xf32>
      %29 = tpu.matmul %27, %28, %cst {dimension_numbers = #tpu.dot_dimension_numbers<[1], [0], [0], [1], [0, 0, 1, 1], [], []>} : vector<768x100xf32>, vector<100x32xf32>, vector<768x32xf32> -> vector<768x32xf32>
      %c0_13 = arith.constant 0 : index
      %c0_14 = arith.constant 0 : index
      %30 = vector.load %arg6[%c0_13, %c0_14] : memref<1x32xf32, #tpu.memory_space<vmem>>, vector<1x32xf32>
      %31 = vector.broadcast %30 : vector<1x32xf32> to vector<768x32xf32>
      %32 = arith.addf %29, %31 : vector<768x32xf32>
      %cst_15 = arith.constant 0.000000e+00 : f32
      %33 = vector.broadcast %cst_15 : f32 to vector<768x32xf32>
      %34 = arith.maximumf %32, %33 : vector<768x32xf32>
      %c0_16 = arith.constant 0 : index
      %c0_17 = arith.constant 0 : index
      %35 = vector.load %arg7[%c0_16, %c0_17] : memref<1x32xf32, #tpu.memory_space<vmem>>, vector<1x32xf32>
      %36 = vector.broadcast %35 : vector<1x32xf32> to vector<768x32xf32>
      %37 = arith.mulf %34, %36 : vector<768x32xf32>
      %cst_18 = arith.constant dense<0.000000e+00> : vector<768xf32>
      %38 = vector.multi_reduction <add>, %37, %cst_18 [1] : vector<768x32xf32> to vector<768xf32>
      %39 = vector.shape_cast %38 : vector<768xf32> to vector<768x1xf32>
      %c0_19 = arith.constant 0 : index
      %c0_20 = arith.constant 0 : index
      %40 = memref.load %arg8[%c0_19, %c0_20] : memref<1x1xf32, #tpu.memory_space<smem>>
      %41 = vector.broadcast %40 : f32 to vector<768x1xf32>
      %42 = arith.addf %39, %41 : vector<768x1xf32>
      %cst_21 = arith.constant 0.000000e+00 : f32
      %43 = vector.broadcast %cst_21 : f32 to vector<768x1xf32>
      %44 = arith.maximumf %42, %43 : vector<768x1xf32>
      %cst_22 = arith.constant 0.000000e+00 : f32
      %45 = vector.broadcast %cst_22 : f32 to vector<768x1xf32>
      %46 = arith.subf %45, %44 : vector<768x1xf32>
      %47 = math.exp %46 : vector<768x1xf32>
      %cst_23 = arith.constant 1.000000e+00 : f32
      %48 = vector.broadcast %cst_23 : f32 to vector<768x1xf32>
      %49 = arith.addf %48, %47 : vector<768x1xf32>
      %cst_24 = arith.constant 1.000000e+00 : f32
      %50 = vector.broadcast %cst_24 : f32 to vector<768x1xf32>
      %51 = arith.divf %50, %49 : vector<768x1xf32>
      %52 = tpu.transpose %51, [1, 0] : vector<768x1xf32> -> vector<1x768xf32>
      %53 = arith.index_cast %arg1 : i32 to index
      %c0_25 = arith.constant 0 : index
      %54 = vector.load %arg10[%53, %c0_25] : memref<1x768xf32, #tpu.memory_space<vmem>>, vector<1x768xf32>
      tpu.vector_store %arg10[%53, %c0_25], %52 {strides = array<i32>} : memref<1x768xf32, #tpu.memory_space<vmem>>, vector<1x768xf32>,
      %c0_26 = arith.constant 0 : index
      %c0_27 = arith.constant 0 : index
      %55 = vector.load %arg11[%c0_26, %c0_27] : memref<1x100xf32, #tpu.memory_space<vmem>>, vector<1x100xf32>
      %cst_28 = arith.constant dense<0.000000e+00> : vector<1x100xf32>
      %56 = tpu.matmul %52, %5, %cst_28 {dimension_numbers = #tpu.dot_dimension_numbers<[1], [0], [0], [1], [0, 0, 1, 1], [], []>} : vector<1x768xf32>, vector<768x100xf32>, vector<1x100xf32> -> vector<1x100xf32>
      %57 = arith.addf %55, %56 : vector<1x100xf32>
      %c0_29 = arith.constant 0 : index
      %c0_30 = arith.constant 0 : index
      %58 = vector.load %arg11[%c0_29, %c0_30] : memref<1x100xf32, #tpu.memory_space<vmem>>, vector<1x100xf32>
      tpu.vector_store %arg11[%c0_29, %c0_30], %57 {strides = array<i32>} : memref<1x100xf32, #tpu.memory_space<vmem>>, vector<1x100xf32>,
    } else {
    }
    %c1_i32 = arith.constant 1 : i32
    %19 = arith.cmpi eq, %arg0, %c1_i32 : i32
    %c0_i32_7 = arith.constant 0 : i32
    %20 = arith.cmpi eq, %arg1, %c0_i32_7 : i32
    %21 = arith.andi %19, %20 : i1
    %22 = arith.extui %21 : i1 to i32
    %c0_i32_8 = arith.constant 0 : i32
    %23 = arith.cmpi ne, %22, %c0_i32_8 : i32
    scf.if %23 {
      %c0_11 = arith.constant 0 : index
      %c0_12 = arith.constant 0 : index
      %27 = vector.load %arg11[%c0_11, %c0_12] : memref<1x100xf32, #tpu.memory_space<vmem>>, vector<1x100xf32>
      %28 = tpu.transpose %27, [1, 0] : vector<1x100xf32> -> vector<100x1xf32>
      %cst = arith.constant 0.000000e+00 : f32
      %29 = vector.broadcast %cst : f32 to vector<100x1xf32>
      %30 = arith.cmpf ogt, %28, %29 : vector<100x1xf32>
      %c0_13 = arith.constant 0 : index
      %c0_14 = arith.constant 0 : index
      %31 = vector.load %arg4[%c0_13, %c0_14] : memref<100x16xf32, #tpu.memory_space<vmem>>, vector<100x16xf32>
      %cst_15 = arith.constant 1.000000e+00 : f32
      %32 = vector.broadcast %cst_15 : f32 to vector<100x1xf32>
      %33 = arith.select %30, %28, %32 : vector<100x1xi1>, vector<100x1xf32>
      %34 = vector.broadcast %33 : vector<100x1xf32> to vector<100x16xf32>
      %35 = arith.divf %31, %34 : vector<100x16xf32>
      %cst_16 = arith.constant 0.000000e+00 : f32
      %36 = vector.shape_cast %30 : vector<100x1xi1> to vector<100x1xi1>
      %37 = vector.broadcast %36 : vector<100x1xi1> to vector<100x16xi1>
      %38 = vector.broadcast %cst_16 : f32 to vector<100x16xf32>
      %39 = arith.select %37, %35, %38 : vector<100x16xi1>, vector<100x16xf32>
      %c0_17 = arith.constant 0 : index
      %c0_18 = arith.constant 0 : index
      %40 = vector.load %arg12[%c0_17, %c0_18] : memref<100x16xf32, #tpu.memory_space<vmem>>, vector<100x16xf32>
      tpu.vector_store %arg12[%c0_17, %c0_18], %39 {strides = array<i32>} : memref<100x16xf32, #tpu.memory_space<vmem>>, vector<100x16xf32>,
      %cst_19 = arith.constant 0.000000e+00 : f32
      %41 = vector.broadcast %cst_19 : f32 to vector<100x16xf32>
      %c0_20 = arith.constant 0 : index
      %c0_21 = arith.constant 0 : index
      %42 = vector.load %arg9[%c0_20, %c0_21] : memref<100x16xf32, #tpu.memory_space<vmem>>, vector<100x16xf32>
      tpu.vector_store %arg9[%c0_20, %c0_21], %41 {strides = array<i32>} : memref<100x16xf32, #tpu.memory_space<vmem>>, vector<100x16xf32>,
    } else {
    }
    %c1_i32_9 = arith.constant 1 : i32
    %24 = arith.cmpi eq, %arg0, %c1_i32_9 : i32
    %25 = arith.extui %24 : i1 to i32
    %c0_i32_10 = arith.constant 0 : i32
    %26 = arith.cmpi ne, %25, %c0_i32_10 : i32
    scf.if %26 {
      %27 = arith.index_cast %arg1 : i32 to index
      %c0_11 = arith.constant 0 : index
      %28 = vector.load %arg10[%27, %c0_11] : memref<1x768xf32, #tpu.memory_space<vmem>>, vector<1x768xf32>
      %29 = tpu.transpose %28, [1, 0] : vector<1x768xf32> -> vector<768x1xf32>
      %c0_12 = arith.constant 0 : index
      %c0_13 = arith.constant 0 : index
      %30 = vector.load %arg12[%c0_12, %c0_13] : memref<100x16xf32, #tpu.memory_space<vmem>>, vector<100x16xf32>
      %cst = arith.constant dense<0.000000e+00> : vector<768x16xf32>
      %31 = tpu.matmul %5, %30, %cst {dimension_numbers = #tpu.dot_dimension_numbers<[1], [0], [0], [1], [0, 0, 1, 1], [], []>} : vector<768x100xf32>, vector<100x16xf32>, vector<768x16xf32> -> vector<768x16xf32>
      %32 = vector.broadcast %29 : vector<768x1xf32> to vector<768x16xf32>
      %33 = arith.mulf %32, %31 : vector<768x16xf32>
      %c0_14 = arith.constant 0 : index
      %c0_15 = arith.constant 0 : index
      %34 = vector.load %arg9[%c0_14, %c0_15] : memref<100x16xf32, #tpu.memory_space<vmem>>, vector<100x16xf32>
      %cst_16 = arith.constant dense<0.000000e+00> : vector<100x16xf32>
      %35 = tpu.matmul %10, %33, %cst_16 {dimension_numbers = #tpu.dot_dimension_numbers<[0], [0], [1], [1], [0, 1, 1, 1], [], []>} : vector<768x100xf32>, vector<768x16xf32>, vector<100x16xf32> -> vector<100x16xf32>
      %36 = arith.addf %34, %35 : vector<100x16xf32>
      %c0_17 = arith.constant 0 : index
      %c0_18 = arith.constant 0 : index
      %37 = vector.load %arg9[%c0_17, %c0_18] : memref<100x16xf32, #tpu.memory_space<vmem>>, vector<100x16xf32>
      tpu.vector_store %arg9[%c0_17, %c0_18], %36 {strides = array<i32>} : memref<100x16xf32, #tpu.memory_space<vmem>>, vector<100x16xf32>,
    } else {
    }
    return
  }
  func.func @transform_0(%arg0: i32, %arg1: i32) -> (i32, i32) {
    %c0_i32 = arith.constant 0 : i32
    %c0_i32_0 = arith.constant 0 : i32
    return %arg1, %c0_i32 : i32, i32
  }
  func.func @transform_1(%arg0: i32, %arg1: i32) -> (i32, i32) {
    %c0_i32 = arith.constant 0 : i32
    %c0_i32_0 = arith.constant 0 : i32
    return %arg1, %c0_i32 : i32, i32
  }
  func.func @transform_2(%arg0: i32, %arg1: i32) -> (i32, i32) {
    %c0_i32 = arith.constant 0 : i32
    %c0_i32_0 = arith.constant 0 : i32
    %c0_i32_1 = arith.constant 0 : i32
    return %c0_i32, %c0_i32_0 : i32, i32
  }
  func.func @transform_3(%arg0: i32, %arg1: i32) -> (i32, i32) {
    %c0_i32 = arith.constant 0 : i32
    %c0_i32_0 = arith.constant 0 : i32
    %c0_i32_1 = arith.constant 0 : i32
    return %c0_i32, %c0_i32_0 : i32, i32
  }
  func.func @transform_4(%arg0: i32, %arg1: i32) -> (i32, i32) {
    %c0_i32 = arith.constant 0 : i32
    %c0_i32_0 = arith.constant 0 : i32
    %c0_i32_1 = arith.constant 0 : i32
    return %c0_i32, %c0_i32_0 : i32, i32
  }
  func.func @transform_5(%arg0: i32, %arg1: i32) -> (i32, i32) {
    %c0_i32 = arith.constant 0 : i32
    %c0_i32_0 = arith.constant 0 : i32
    %c0_i32_1 = arith.constant 0 : i32
    return %c0_i32, %c0_i32_0 : i32, i32
  }
  func.func @transform_6(%arg0: i32, %arg1: i32) -> (i32, i32) {
    %c0_i32 = arith.constant 0 : i32
    %c0_i32_0 = arith.constant 0 : i32
    %c0_i32_1 = arith.constant 0 : i32
    return %c0_i32, %c0_i32_0 : i32, i32
  }
  func.func @transform_7(%arg0: i32, %arg1: i32) -> (i32, i32) {
    %c0_i32 = arith.constant 0 : i32
    %c0_i32_0 = arith.constant 0 : i32
    %c0_i32_1 = arith.constant 0 : i32
    return %c0_i32, %c0_i32_0 : i32, i32
  }
}

</mosaic_0001>

<llo_original>
// kernel: tpu_custom_call.1
$region0: #{tpu_custom_call.1}
  #allocation0 [shape = 'u32[]', space=smem, size = 0x4, offset = 0x4, fixed_abs, tag = 'smem constant byte address 0x4 - core index']
  #allocation1 [shape = 'u32[72,128]{1,0:T(1,128)}', space=vmem, size = 0x9000, scoped, tag = 'internal scratch']
  #allocation2 [shape = 'f32[1,768]{1,0:T(1,128)}', space=vmem, size = 0xc00, scoped, tag = 'scratch operand']
  #allocation3 [shape = 'f32[1,100]{1,0:T(1,128)}', space=vmem, size = 0x200, scoped, tag = 'scratch operand']
  #allocation4 [shape = 'f32[100,16]{1,0:T(8,128)}', space=vmem, size = 0xd000, scoped, tag = 'scratch operand']
  #allocation5 [shape = 'f32[1,1]{1,0:T(1,128)S(6)}', space=smem, size = 0x200, scoped, tag = 'scoped memory for tpu_custom_call.1']
  %s0 = inlined_call_operand.vmem [shape: s32[768,1], index: 0, kind: input, shape index: {}]
  %s1 = inlined_call_operand.vmem [shape: s32[768,1], index: 1, kind: input, shape index: {}]
  %s2 = inlined_call_operand.vmem [shape: f32[100,16], index: 2, kind: input, shape index: {}]
  %s3 = inlined_call_operand.vmem [shape: f32[100,32], index: 3, kind: input, shape index: {}]
  %s4 = inlined_call_operand.vmem [shape: f32[1,32], index: 4, kind: input, shape index: {}]
  %s5 = inlined_call_operand.vmem [shape: f32[1,32], index: 5, kind: input, shape index: {}]
  %s6 = inlined_call_operand.<no memory space> [shape: f32[1,1], index: 6, kind: input, shape index: {}]
  %s7 = inlined_call_operand.vmem [shape: f32[100,16], index: 7, kind: output, shape index: {}]
  %s8 = sld [smem:[#allocation0]]
  $region77: #{tpu_custom_call.1} parent=0
    _
  %s10 = ssub.s32 1, %s8
  %s11 = scalar_select 0, %s10, %s8
  %12 = sst [smem:[#allocation5]] %s6
  loop: start=0, step=1, limit=4
  $region2: #{tpu_custom_call.1} parent=0 // loop_pre_header
    _
  $region3: #{tpu_custom_call.1} parent=0 // loop_header
    %s14 = sphi 0, %s18
    %p15 = scmp.ge.s32.totalorder %s14, 4
    %s21 = sphi 0, %s33
    %s22 = sphi 0, %s29
    %s23 = sphi 0, %s21
    %s24 = sphi 0, %s22
    %s25 = sphi 0, %s23
    %s26 = sphi 0, %s24
    %s36 = sphi 0, %s38
    %s39 = sphi 0, %s36
    %s40 = sphi 0, %s39
    %s56 = sphi 0, %s40
    %s62 = sphi 0, %s64
    %s65 = sphi 0, %s62
    %s66 = sphi 0, %s65
    %s82 = sphi 0, %s66
    %s86 = sphi 0, %s86
    %s88 = sphi 0, %s86
    %s89 = sphi 0, %s88
    %s103 = sphi 0, %s89
    %s107 = sphi 0, %s107
    %s109 = sphi 0, %s107
    %s110 = sphi 0, %s109
    %s124 = sphi 0, %s110
    %s128 = sphi 0, %s128
    %s130 = sphi 0, %s128
    %s131 = sphi 0, %s130
    %s145 = sphi 0, %s131
    %s149 = sphi 0, %s149
    %s151 = sphi 0, %s149
    %s152 = sphi 0, %s151
    %s166 = sphi 0, %s152
    %s170 = sphi 0, %s170
    %s172 = sphi 0, %s170
    %s173 = sphi 0, %s172
    %s187 = sphi 0, %s173
    %s191 = sphi 0, %s191
    %s193 = sphi 0, %s191
    %s194 = sphi 0, %s193
    %s208 = sphi 0, %s194
  $region4: #{tpu_custom_call.1} parent=0 // loop_header_branch
    %17 = sbr.rel (%p15) target = $region8
  $region5: #{tpu_custom_call.1} parent=0 // loop_body
    %s19 = ssub.s32 %s14, 1
    %s20 = ssub.s32 %s14, 2
    %s27 = sadd.s32 1, %s22
    %p28 = scmp.ge.s32.totalorder %s27, 1
    %s29 = scalar_select %p28, 0, %s27
    %s30 = sadd.s32 1, %s21
    %s31 = scalar_select %p28, %s30, %s21
    %p32 = scmp.ge.s32.totalorder %s31, 2
    %s33 = scalar_select %p32, 0, %s31
    %s34 = ssub.s32 %s22, %s29
    %p35 = scmp.eq.s32.totalorder %s34, 0
    %s37 = sadd.s32 %s36, 1
    %s38 = scalar_select %p35, %s36, %s37
    %p41 = pneg %p35
    %p42 = scmp.eq.s32.totalorder %s14, 1
    %p43 = por %p41, %p42
    %p44 = scmp.ne.s32.totalorder %s36, %s39
    %p45 = scmp.eq.s32.totalorder %s14, 0
    %p46 = por %p44, %p45
    %p47 = scmp.ne.s32.totalorder %s36, %s39
    %p48 = scmp.eq.s32.totalorder %s19, 1
    %p49 = por %p47, %p48
    %p50 = scmp.ne.s32.totalorder %s39, %s40
    %p51 = scmp.eq.s32.totalorder %s19, 0
    %p52 = por %p50, %p51
    %p53 = scmp.ne.s32.totalorder %s39, %s40
    %p54 = scmp.eq.s32.totalorder %s20, 1
    %p55 = por %p53, %p54
    %p57 = scmp.ne.s32.totalorder %s40, %s56
    %p58 = scmp.eq.s32.totalorder %s20, 0
    %p59 = por %p57, %p58
    %s60 = ssub.s32 %s22, %s29
    %p61 = scmp.eq.s32.totalorder %s60, 0
    %s63 = sadd.s32 %s62, 1
    %s64 = scalar_select %p61, %s62, %s63
    %p67 = pneg %p61
    %p68 = scmp.eq.s32.totalorder %s14, 1
    %p69 = por %p67, %p68
    %p70 = scmp.ne.s32.totalorder %s62, %s65
    %p71 = scmp.eq.s32.totalorder %s14, 0
    %p72 = por %p70, %p71
    %p73 = scmp.ne.s32.totalorder %s62, %s65
    %p74 = scmp.eq.s32.totalorder %s19, 1
    %p75 = por %p73, %p74
    %p76 = scmp.ne.s32.totalorder %s65, %s66
    %p77 = scmp.eq.s32.totalorder %s19, 0
    %p78 = por %p76, %p77
    %p79 = scmp.ne.s32.totalorder %s65, %s66
    %p80 = scmp.eq.s32.totalorder %s20, 1
    %p81 = por %p79, %p80
    %p83 = scmp.ne.s32.totalorder %s66, %s82
    %p84 = scmp.eq.s32.totalorder %s20, 0
    %p85 = por %p83, %p84
    %s87 = sadd.s32 %s86, 1
    %p90 = scmp.eq.s32.totalorder %s14, 1
    %p91 = scmp.ne.s32.totalorder %s86, %s88
    %p92 = scmp.eq.s32.totalorder %s14, 0
    %p93 = por %p91, %p92
    %p94 = scmp.ne.s32.totalorder %s86, %s88
    %p95 = scmp.eq.s32.totalorder %s19, 1
    %p96 = por %p94, %p95
    %p97 = scmp.ne.s32.totalorder %s88, %s89
    %p98 = scmp.eq.s32.totalorder %s19, 0
    %p99 = por %p97, %p98
    %p100 = scmp.ne.s32.totalorder %s88, %s89
    %p101 = scmp.eq.s32.totalorder %s20, 1
    %p102 = por %p100, %p101
    %p104 = scmp.ne.s32.totalorder %s89, %s103
    %p105 = scmp.eq.s32.totalorder %s20, 0
    %p106 = por %p104, %p105
    %s108 = sadd.s32 %s107, 1
    %p111 = scmp.eq.s32.totalorder %s14, 1
    %p112 = scmp.ne.s32.totalorder %s107, %s109
    %p113 = scmp.eq.s32.totalorder %s14, 0
    %p114 = por %p112, %p113
    %p115 = scmp.ne.s32.totalorder %s107, %s109
    %p116 = scmp.eq.s32.totalorder %s19, 1
    %p117 = por %p115, %p116
    %p118 = scmp.ne.s32.totalorder %s109, %s110
    %p119 = scmp.eq.s32.totalorder %s19, 0
    %p120 = por %p118, %p119
    %p121 = scmp.ne.s32.totalorder %s109, %s110
    %p122 = scmp.eq.s32.totalorder %s20, 1
    %p123 = por %p121, %p122
    %p125 = scmp.ne.s32.totalorder %s110, %s124
    %p126 = scmp.eq.s32.totalorder %s20, 0
    %p127 = por %p125, %p126
    %s129 = sadd.s32 %s128, 1
    %p132 = scmp.eq.s32.totalorder %s14, 1
    %p133 = scmp.ne.s32.totalorder %s128, %s130
    %p134 = scmp.eq.s32.totalorder %s14, 0
    %p135 = por %p133, %p134
    %p136 = scmp.ne.s32.totalorder %s128, %s130
    %p137 = scmp.eq.s32.totalorder %s19, 1
    %p138 = por %p136, %p137
    %p139 = scmp.ne.s32.totalorder %s130, %s131
    %p140 = scmp.eq.s32.totalorder %s19, 0
    %p141 = por %p139, %p140
    %p142 = scmp.ne.s32.totalorder %s130, %s131
    %p143 = scmp.eq.s32.totalorder %s20, 1
    %p144 = por %p142, %p143
    %p146 = scmp.ne.s32.totalorder %s131, %s145
    %p147 = scmp.eq.s32.totalorder %s20, 0
    %p148 = por %p146, %p147
    %s150 = sadd.s32 %s149, 1
    %p153 = scmp.eq.s32.totalorder %s14, 1
    %p154 = scmp.ne.s32.totalorder %s149, %s151
    %p155 = scmp.eq.s32.totalorder %s14, 0
    %p156 = por %p154, %p155
    %p157 = scmp.ne.s32.totalorder %s149, %s151
    %p158 = scmp.eq.s32.totalorder %s19, 1
    %p159 = por %p157, %p158
    %p160 = scmp.ne.s32.totalorder %s151, %s152
    %p161 = scmp.eq.s32.totalorder %s19, 0
    %p162 = por %p160, %p161
    %p163 = scmp.ne.s32.totalorder %s151, %s152
    %p164 = scmp.eq.s32.totalorder %s20, 1
    %p165 = por %p163, %p164
    %p167 = scmp.ne.s32.totalorder %s152, %s166
    %p168 = scmp.eq.s32.totalorder %s20, 0
    %p169 = por %p167, %p168
    %s171 = sadd.s32 %s170, 1
    %p174 = scmp.eq.s32.totalorder %s14, 1
    %p175 = scmp.ne.s32.totalorder %s170, %s172
    %p176 = scmp.eq.s32.totalorder %s14, 0
    %p177 = por %p175, %p176
    %p178 = scmp.ne.s32.totalorder %s170, %s172
    %p179 = scmp.eq.s32.totalorder %s19, 1
    %p180 = por %p178, %p179
    %p181 = scmp.ne.s32.totalorder %s172, %s173
    %p182 = scmp.eq.s32.totalorder %s19, 0
    %p183 = por %p181, %p182
    %p184 = scmp.ne.s32.totalorder %s172, %s173
    %p185 = scmp.eq.s32.totalorder %s20, 1
    %p186 = por %p184, %p185
    %p188 = scmp.ne.s32.totalorder %s173, %s187
    %p189 = scmp.eq.s32.totalorder %s20, 0
    %p190 = por %p188, %p189
    %s192 = sadd.s32 %s191, 1
    %p195 = scmp.eq.s32.totalorder %s14, 1
    %p196 = scmp.ne.s32.totalorder %s191, %s193
    %p197 = scmp.eq.s32.totalorder %s14, 0
    %p198 = por %p196, %p197
    %p199 = scmp.ne.s32.totalorder %s191, %s193
    %p200 = scmp.eq.s32.totalorder %s19, 1
    %p201 = por %p199, %p200
    %p202 = scmp.ne.s32.totalorder %s193, %s194
    %p203 = scmp.eq.s32.totalorder %s19, 0
    %p204 = por %p202, %p203
    %p205 = scmp.ne.s32.totalorder %s193, %s194
    %p206 = scmp.eq.s32.totalorder %s20, 1
    %p207 = por %p205, %p206
    %p209 = scmp.ne.s32.totalorder %s194, %s208
    %p210 = scmp.eq.s32.totalorder %s20, 0
    %p211 = por %p209, %p210
    %p212 = scmp.le.s32.totalorder 1, %s14
    %p213 = scmp.lt.s32.totalorder %s14, 3
    %p214 = pnand %p212, %p213
    %p215 = pneg %p214
    // Predicated region
    $region9: #{tpu_custom_call.1} parent=5 // pred_check
      _
    $region10: #{tpu_custom_call.1} parent=5 // pred_check_branch
      %217 = sbr.rel (%p214) target = $region12
    $region11: #{tpu_custom_call.1} parent=5 // pred_region
      %s218 = ssub.s32 %s14, 1
      // Predicated region
      $region13: #{tpu_custom_call.1} parent=11 // pred_check
        %p219 = pneg %p52
      $region14: #{tpu_custom_call.1} parent=11 // pred_check_branch
        %221 = sbr.rel (%p219) target = $region16
      $region15: #{tpu_custom_call.1} parent=11 // pred_region
        %s222 = smul.u32 96, %s24
        %p223 = scmp.lt.s32.totalorder %s222, 95
        %s224 = scalar_select %p223, %s222, 95
        %s225 = smul.addr %s224, 8
        %s226 = scalar_lea.vmem %s0, %s225
        %s227 = smul.u32 96, %s24
      $region16: #{tpu_custom_call.1} parent=11 // pred_fallthru
        _
      // Predicated region
      $region17: #{tpu_custom_call.1} parent=11 // pred_check
        %p228 = pneg %p78
      $region18: #{tpu_custom_call.1} parent=11 // pred_check_branch
        %230 = sbr.rel (%p228) target = $region20
      $region19: #{tpu_custom_call.1} parent=11 // pred_region
        %s231 = smul.u32 96, %s24
        %p232 = scmp.lt.s32.totalorder %s231, 95
        %s233 = scalar_select %p232, %s231, 95
        %s234 = smul.addr %s233, 8
        %s235 = scalar_lea.vmem %s1, %s234
        %s236 = smul.u32 96, %s24
      $region20: #{tpu_custom_call.1} parent=11 // pred_fallthru
        _
      // Predicated region
      $region21: #{tpu_custom_call.1} parent=11 // pred_check
        %p237 = pneg %p99
      $region22: #{tpu_custom_call.1} parent=11 // pred_check_branch
        %239 = sbr.rel (%p237) target = $region24
      $region23: #{tpu_custom_call.1} parent=11 // pred_region
        _
      $region24: #{tpu_custom_call.1} parent=11 // pred_fallthru
        _
      // Predicated region
      $region25: #{tpu_custom_call.1} parent=11 // pred_check
        %p240 = pneg %p120
      $region26: #{tpu_custom_call.1} parent=11 // pred_check_branch
        %242 = sbr.rel (%p240) target = $region28
      $region27: #{tpu_custom_call.1} parent=11 // pred_region
        _
      $region28: #{tpu_custom_call.1} parent=11 // pred_fallthru
        _
      // Predicated region
      $region29: #{tpu_custom_call.1} parent=11 // pred_check
        %p243 = pneg %p141
      $region30: #{tpu_custom_call.1} parent=11 // pred_check_branch
        %245 = sbr.rel (%p243) target = $region32
      $region31: #{tpu_custom_call.1} parent=11 // pred_region
        _
      $region32: #{tpu_custom_call.1} parent=11 // pred_fallthru
        _
      // Predicated region
      $region33: #{tpu_custom_call.1} parent=11 // pred_check
        %p246 = pneg %p162
      $region34: #{tpu_custom_call.1} parent=11 // pred_check_branch
        %248 = sbr.rel (%p246) target = $region36
      $region35: #{tpu_custom_call.1} parent=11 // pred_region
        _
      $region36: #{tpu_custom_call.1} parent=11 // pred_fallthru
        _
      // Predicated region
      $region37: #{tpu_custom_call.1} parent=11 // pred_check
        %p249 = pneg %p183
      $region38: #{tpu_custom_call.1} parent=11 // pred_check_branch
        %251 = sbr.rel (%p249) target = $region40
      $region39: #{tpu_custom_call.1} parent=11 // pred_region
        _
      $region40: #{tpu_custom_call.1} parent=11 // pred_fallthru
        _
    $region12: #{tpu_custom_call.1} parent=5 // pred_fallthru
      _
    %p252 = scmp.lt.s32.totalorder %s14, 2
    // Predicated region
    $region41: #{tpu_custom_call.1} parent=5 // pred_check
      %p253 = pneg %p252
    $region42: #{tpu_custom_call.1} parent=5 // pred_check_branch
      %255 = sbr.rel (%p253) target = $region44
    $region43: #{tpu_custom_call.1} parent=5 // pred_region
      _
    $region44: #{tpu_custom_call.1} parent=5 // pred_fallthru
      _
    %p256 = scmp.le.s32.totalorder 1, %s14
    %p257 = scmp.lt.s32.totalorder %s14, 3
    %p258 = pnand %p256, %p257
    %p259 = pneg %p258
    // Predicated region
    $region45: #{tpu_custom_call.1} parent=5 // pred_check
      _
    $region46: #{tpu_custom_call.1} parent=5 // pred_check_branch
      %261 = sbr.rel (%p258) target = $region48
    $region47: #{tpu_custom_call.1} parent=5 // pred_region
      %s262 = ssub.s32 %s14, 1
      %s263 = smul.u32 96, %s24
      %p264 = scmp.lt.s32.totalorder %s263, 95
      %s265 = scalar_select %p264, %s263, 95
      %s266 = smul.addr %s265, 8
      %s267 = scalar_lea.vmem %s0, %s266
      %p268 = pneg %p52
      %p269 = pneg %p49
      %s270 = smul.u32 96, %s24
      %p271 = scmp.lt.s32.totalorder %s270, 95
      %s272 = scalar_select %p271, %s270, 95
      %s273 = smul.addr %s272, 8
      %s274 = scalar_lea.vmem %s1, %s273
      %p275 = pneg %p78
      %p276 = pneg %p75
      %p277 = pneg %p99
      %p278 = pneg %p96
      %p279 = pneg %p120
      %p280 = pneg %p117
      %p281 = pneg %p141
      %p282 = pneg %p138
      %p283 = pneg %p162
      %p284 = pneg %p159
      %p285 = pneg %p183
      %p286 = pneg %p180
      %p287 = pneg %p204
      %p288 = pneg %p201
      %s289 = smul.u32 96, %s24
      %p290 = scmp.lt.s32.totalorder %s289, 95
      %s291 = scalar_select %p290, %s289, 95
      %s292 = smul.addr %s291, 8
      %s293 = scalar_lea.vmem %s0, %s292
      %s294 = smul.u32 96, %s24
      %s295 = smul.u32 96, %s24
      %p296 = scmp.lt.s32.totalorder %s295, 95
      %s297 = scalar_select %p296, %s295, 95
      %s298 = smul.addr %s297, 8
      %s299 = scalar_lea.vmem %s1, %s298
      %s300 = smul.u32 96, %s24
      %v301 = vlaneseq
      %v302 = vand.u32 %v301, 127
      %v303 = vld [vmem:[%s293] sm:$0xff]
      %v304 = vld [vmem:[%s293 + $0x8] sm:$0xff]
      %v305 = vld [vmem:[%s293 + $0x10] sm:$0xff]
      %v306 = vld [vmem:[%s293 + $0x18] sm:$0xff]
      %v307 = vld [vmem:[%s293 + $0x20] sm:$0xff]
      %v308 = vld [vmem:[%s293 + $0x28] sm:$0xff]
      %v309 = vld [vmem:[%s293 + $0x30] sm:$0xff]
      %v310 = vld [vmem:[%s293 + $0x38] sm:$0xff]
      %v311 = vld [vmem:[%s293 + $0x40] sm:$0xff]
      %v312 = vld [vmem:[%s293 + $0x48] sm:$0xff]
      %v313 = vld [vmem:[%s293 + $0x50] sm:$0xff]
      %v314 = vld [vmem:[%s293 + $0x58] sm:$0xff]
      %v315 = vld [vmem:[%s293 + $0x60] sm:$0xff]
      %v316 = vld [vmem:[%s293 + $0x68] sm:$0xff]
      %v317 = vld [vmem:[%s293 + $0x70] sm:$0xff]
      %v318 = vld [vmem:[%s293 + $0x78] sm:$0xff]
      %v319 = vld [vmem:[%s293 + $0x80] sm:$0xff]
      %v320 = vld [vmem:[%s293 + $0x88] sm:$0xff]
      %v321 = vld [vmem:[%s293 + $0x90] sm:$0xff]
      %v322 = vld [vmem:[%s293 + $0x98] sm:$0xff]
      %v323 = vld [vmem:[%s293 + $0xa0] sm:$0xff]
      %v324 = vld [vmem:[%s293 + $0xa8] sm:$0xff]
      %v325 = vld [vmem:[%s293 + $0xb0] sm:$0xff]
      %v326 = vld [vmem:[%s293 + $0xb8] sm:$0xff]
      %v327 = vld [vmem:[%s293 + $0xc0] sm:$0xff]
      %v328 = vld [vmem:[%s293 + $0xc8] sm:$0xff]
      %v329 = vld [vmem:[%s293 + $0xd0] sm:$0xff]
      %v330 = vld [vmem:[%s293 + $0xd8] sm:$0xff]
      %v331 = vld [vmem:[%s293 + $0xe0] sm:$0xff]
      %v332 = vld [vmem:[%s293 + $0xe8] sm:$0xff]
      %v333 = vld [vmem:[%s293 + $0xf0] sm:$0xff]
      %v334 = vld [vmem:[%s293 + $0xf8] sm:$0xff]
      %v335 = vld [vmem:[%s293 + $0x100] sm:$0xff]
      %v336 = vld [vmem:[%s293 + $0x108] sm:$0xff]
      %v337 = vld [vmem:[%s293 + $0x110] sm:$0xff]
      %v338 = vld [vmem:[%s293 + $0x118] sm:$0xff]
      %v339 = vld [vmem:[%s293 + $0x120] sm:$0xff]
      %v340 = vld [vmem:[%s293 + $0x128] sm:$0xff]
      %v341 = vld [vmem:[%s293 + $0x130] sm:$0xff]
      %v342 = vld [vmem:[%s293 + $0x138] sm:$0xff]
      %v343 = vld [vmem:[%s293 + $0x140] sm:$0xff]
      %v344 = vld [vmem:[%s293 + $0x148] sm:$0xff]
      %v345 = vld [vmem:[%s293 + $0x150] sm:$0xff]
      %v346 = vld [vmem:[%s293 + $0x158] sm:$0xff]
      %v347 = vld [vmem:[%s293 + $0x160] sm:$0xff]
      %v348 = vld [vmem:[%s293 + $0x168] sm:$0xff]
      %v349 = vld [vmem:[%s293 + $0x170] sm:$0xff]
      %v350 = vld [vmem:[%s293 + $0x178] sm:$0xff]
      %v351 = vld [vmem:[%s293 + $0x180] sm:$0xff]
      %v352 = vld [vmem:[%s293 + $0x188] sm:$0xff]
      %v353 = vld [vmem:[%s293 + $0x190] sm:$0xff]
      %v354 = vld [vmem:[%s293 + $0x198] sm:$0xff]
      %v355 = vld [vmem:[%s293 + $0x1a0] sm:$0xff]
      %v356 = vld [vmem:[%s293 + $0x1a8] sm:$0xff]
      %v357 = vld [vmem:[%s293 + $0x1b0] sm:$0xff]
      %v358 = vld [vmem:[%s293 + $0x1b8] sm:$0xff]
      %v359 = vld [vmem:[%s293 + $0x1c0] sm:$0xff]
      %v360 = vld [vmem:[%s293 + $0x1c8] sm:$0xff]
      %v361 = vld [vmem:[%s293 + $0x1d0] sm:$0xff]
      %v362 = vld [vmem:[%s293 + $0x1d8] sm:$0xff]
      %v363 = vld [vmem:[%s293 + $0x1e0] sm:$0xff]
      %v364 = vld [vmem:[%s293 + $0x1e8] sm:$0xff]
      %v365 = vld [vmem:[%s293 + $0x1f0] sm:$0xff]
      %v366 = vld [vmem:[%s293 + $0x1f8] sm:$0xff]
      %v367 = vld [vmem:[%s293 + $0x200] sm:$0xff]
      %v368 = vld [vmem:[%s293 + $0x208] sm:$0xff]
      %v369 = vld [vmem:[%s293 + $0x210] sm:$0xff]
      %v370 = vld [vmem:[%s293 + $0x218] sm:$0xff]
      %v371 = vld [vmem:[%s293 + $0x220] sm:$0xff]
      %v372 = vld [vmem:[%s293 + $0x228] sm:$0xff]
      %v373 = vld [vmem:[%s293 + $0x230] sm:$0xff]
      %v374 = vld [vmem:[%s293 + $0x238] sm:$0xff]
      %v375 = vld [vmem:[%s293 + $0x240] sm:$0xff]
      %v376 = vld [vmem:[%s293 + $0x248] sm:$0xff]
      %v377 = vld [vmem:[%s293 + $0x250] sm:$0xff]
      %v378 = vld [vmem:[%s293 + $0x258] sm:$0xff]
      %v379 = vld [vmem:[%s293 + $0x260] sm:$0xff]
      %v380 = vld [vmem:[%s293 + $0x268] sm:$0xff]
      %v381 = vld [vmem:[%s293 + $0x270] sm:$0xff]
      %v382 = vld [vmem:[%s293 + $0x278] sm:$0xff]
      %v383 = vld [vmem:[%s293 + $0x280] sm:$0xff]
      %v384 = vld [vmem:[%s293 + $0x288] sm:$0xff]
      %v385 = vld [vmem:[%s293 + $0x290] sm:$0xff]
      %v386 = vld [vmem:[%s293 + $0x298] sm:$0xff]
      %v387 = vld [vmem:[%s293 + $0x2a0] sm:$0xff]
      %v388 = vld [vmem:[%s293 + $0x2a8] sm:$0xff]
      %v389 = vld [vmem:[%s293 + $0x2b0] sm:$0xff]
      %v390 = vld [vmem:[%s293 + $0x2b8] sm:$0xff]
      %v391 = vld [vmem:[%s293 + $0x2c0] sm:$0xff]
      %v392 = vld [vmem:[%s293 + $0x2c8] sm:$0xff]
      %v393 = vld [vmem:[%s293 + $0x2d0] sm:$0xff]
      %v394 = vld [vmem:[%s293 + $0x2d8] sm:$0xff]
      %v395 = vld [vmem:[%s293 + $0x2e0] sm:$0xff]
      %v396 = vld [vmem:[%s293 + $0x2e8] sm:$0xff]
      %v397 = vld [vmem:[%s293 + $0x2f0] sm:$0xff]
      %v398 = vld [vmem:[%s293 + $0x2f8] sm:$0xff]
      %399 = vset.pattern.permute.xlu0 0
      %400 = vperm.xlu0 %399, %v303
      %v401 = vpop.permute.xlu0 %400
      %402 = vset.pattern.permute.xlu0 0
      %403 = vperm.xlu0 %402, %v304
      %v404 = vpop.permute.xlu0 %403
      %405 = vset.pattern.permute.xlu0 0
      %406 = vperm.xlu0 %405, %v305
      %v407 = vpop.permute.xlu0 %406
      %408 = vset.pattern.permute.xlu0 0
      %409 = vperm.xlu0 %408, %v306
      %v410 = vpop.permute.xlu0 %409
      %411 = vset.pattern.permute.xlu0 0
      %412 = vperm.xlu0 %411, %v307
      %v413 = vpop.permute.xlu0 %412
      %414 = vset.pattern.permute.xlu0 0
      %415 = vperm.xlu0 %414, %v308
      %v416 = vpop.permute.xlu0 %415
      %417 = vset.pattern.permute.xlu0 0
      %418 = vperm.xlu0 %417, %v309
      %v419 = vpop.permute.xlu0 %418
      %420 = vset.pattern.permute.xlu0 0
      %421 = vperm.xlu0 %420, %v310
      %v422 = vpop.permute.xlu0 %421
      %423 = vset.pattern.permute.xlu0 0
      %424 = vperm.xlu0 %423, %v311
      %v425 = vpop.permute.xlu0 %424
      %426 = vset.pattern.permute.xlu0 0
      %427 = vperm.xlu0 %426, %v312
      %v428 = vpop.permute.xlu0 %427
      %429 = vset.pattern.permute.xlu0 0
      %430 = vperm.xlu0 %429, %v313
      %v431 = vpop.permute.xlu0 %430
      %432 = vset.pattern.permute.xlu0 0
      %433 = vperm.xlu0 %432, %v314
      %v434 = vpop.permute.xlu0 %433
      %435 = vset.pattern.permute.xlu0 0
      %436 = vperm.xlu0 %435, %v315
      %v437 = vpop.permute.xlu0 %436
      %438 = vset.pattern.permute.xlu0 0
      %439 = vperm.xlu0 %438, %v316
      %v440 = vpop.permute.xlu0 %439
      %441 = vset.pattern.permute.xlu0 0
      %442 = vperm.xlu0 %441, %v317
      %v443 = vpop.permute.xlu0 %442
      %444 = vset.pattern.permute.xlu0 0
      %445 = vperm.xlu0 %444, %v318
      %v446 = vpop.permute.xlu0 %445
      %447 = vset.pattern.permute.xlu0 0
      %448 = vperm.xlu0 %447, %v319
      %v449 = vpop.permute.xlu0 %448
      %450 = vset.pattern.permute.xlu0 0
      %451 = vperm.xlu0 %450, %v320
      %v452 = vpop.permute.xlu0 %451
      %453 = vset.pattern.permute.xlu0 0
      %454 = vperm.xlu0 %453, %v321
      %v455 = vpop.permute.xlu0 %454
      %456 = vset.pattern.permute.xlu0 0
      %457 = vperm.xlu0 %456, %v322
      %v458 = vpop.permute.xlu0 %457
      %459 = vset.pattern.permute.xlu0 0
      %460 = vperm.xlu0 %459, %v323
      %v461 = vpop.permute.xlu0 %460
      %462 = vset.pattern.permute.xlu0 0
      %463 = vperm.xlu0 %462, %v324
      %v464 = vpop.permute.xlu0 %463
      %465 = vset.pattern.permute.xlu0 0
      %466 = vperm.xlu0 %465, %v325
      %v467 = vpop.permute.xlu0 %466
      %468 = vset.pattern.permute.xlu0 0
      %469 = vperm.xlu0 %468, %v326
      %v470 = vpop.permute.xlu0 %469
      %471 = vset.pattern.permute.xlu0 0
      %472 = vperm.xlu0 %471, %v327
      %v473 = vpop.permute.xlu0 %472
      %474 = vset.pattern.permute.xlu0 0
      %475 = vperm.xlu0 %474, %v328
      %v476 = vpop.permute.xlu0 %475
      %477 = vset.pattern.permute.xlu0 0
      %478 = vperm.xlu0 %477, %v329
      %v479 = vpop.permute.xlu0 %478
      %480 = vset.pattern.permute.xlu0 0
      %481 = vperm.xlu0 %480, %v330
      %v482 = vpop.permute.xlu0 %481
      %483 = vset.pattern.permute.xlu0 0
      %484 = vperm.xlu0 %483, %v331
      %v485 = vpop.permute.xlu0 %484
      %486 = vset.pattern.permute.xlu0 0
      %487 = vperm.xlu0 %486, %v332
      %v488 = vpop.permute.xlu0 %487
      %489 = vset.pattern.permute.xlu0 0
      %490 = vperm.xlu0 %489, %v333
      %v491 = vpop.permute.xlu0 %490
      %492 = vset.pattern.permute.xlu0 0
      %493 = vperm.xlu0 %492, %v334
      %v494 = vpop.permute.xlu0 %493
      %495 = vset.pattern.permute.xlu0 0
      %496 = vperm.xlu0 %495, %v335
      %v497 = vpop.permute.xlu0 %496
      %498 = vset.pattern.permute.xlu0 0
      %499 = vperm.xlu0 %498, %v336
      %v500 = vpop.permute.xlu0 %499
      %501 = vset.pattern.permute.xlu0 0
      %502 = vperm.xlu0 %501, %v337
      %v503 = vpop.permute.xlu0 %502
      %504 = vset.pattern.permute.xlu0 0
      %505 = vperm.xlu0 %504, %v338
      %v506 = vpop.permute.xlu0 %505
      %507 = vset.pattern.permute.xlu0 0
      %508 = vperm.xlu0 %507, %v339
      %v509 = vpop.permute.xlu0 %508
      %510 = vset.pattern.permute.xlu0 0
      %511 = vperm.xlu0 %510, %v340
      %v512 = vpop.permute.xlu0 %511
      %513 = vset.pattern.permute.xlu0 0
      %514 = vperm.xlu0 %513, %v341
      %v515 = vpop.permute.xlu0 %514
      %516 = vset.pattern.permute.xlu0 0
      %517 = vperm.xlu0 %516, %v342
      %v518 = vpop.permute.xlu0 %517
      %519 = vset.pattern.permute.xlu0 0
      %520 = vperm.xlu0 %519, %v343
      %v521 = vpop.permute.xlu0 %520
      %522 = vset.pattern.permute.xlu0 0
      %523 = vperm.xlu0 %522, %v344
      %v524 = vpop.permute.xlu0 %523
      %525 = vset.pattern.permute.xlu0 0
      %526 = vperm.xlu0 %525, %v345
      %v527 = vpop.permute.xlu0 %526
      %528 = vset.pattern.permute.xlu0 0
      %529 = vperm.xlu0 %528, %v346
      %v530 = vpop.permute.xlu0 %529
      %531 = vset.pattern.permute.xlu0 0
      %532 = vperm.xlu0 %531, %v347
      %v533 = vpop.permute.xlu0 %532
      %534 = vset.pattern.permute.xlu0 0
      %535 = vperm.xlu0 %534, %v348
      %v536 = vpop.permute.xlu0 %535
      %537 = vset.pattern.permute.xlu0 0
      %538 = vperm.xlu0 %537, %v349
      %v539 = vpop.permute.xlu0 %538
      %540 = vset.pattern.permute.xlu0 0
      %541 = vperm.xlu0 %540, %v350
      %v542 = vpop.permute.xlu0 %541
      %543 = vset.pattern.permute.xlu0 0
      %544 = vperm.xlu0 %543, %v351
      %v545 = vpop.permute.xlu0 %544
      %546 = vset.pattern.permute.xlu0 0
      %547 = vperm.xlu0 %546, %v352
      %v548 = vpop.permute.xlu0 %547
      %549 = vset.pattern.permute.xlu0 0
      %550 = vperm.xlu0 %549, %v353
      %v551 = vpop.permute.xlu0 %550
      %552 = vset.pattern.permute.xlu0 0
      %553 = vperm.xlu0 %552, %v354
      %v554 = vpop.permute.xlu0 %553
      %555 = vset.pattern.permute.xlu0 0
      %556 = vperm.xlu0 %555, %v355
      %v557 = vpop.permute.xlu0 %556
      %558 = vset.pattern.permute.xlu0 0
      %559 = vperm.xlu0 %558, %v356
      %v560 = vpop.permute.xlu0 %559
      %561 = vset.pattern.permute.xlu0 0
      %562 = vperm.xlu0 %561, %v357
      %v563 = vpop.permute.xlu0 %562
      %564 = vset.pattern.permute.xlu0 0
      %565 = vperm.xlu0 %564, %v358
      %v566 = vpop.permute.xlu0 %565
      %567 = vset.pattern.permute.xlu0 0
      %568 = vperm.xlu0 %567, %v359
      %v569 = vpop.permute.xlu0 %568
      %570 = vset.pattern.permute.xlu0 0
      %571 = vperm.xlu0 %570, %v360
      %v572 = vpop.permute.xlu0 %571
      %573 = vset.pattern.permute.xlu0 0
      %574 = vperm.xlu0 %573, %v361
      %v575 = vpop.permute.xlu0 %574
      %576 = vset.pattern.permute.xlu0 0
      %577 = vperm.xlu0 %576, %v362
      %v578 = vpop.permute.xlu0 %577
      %579 = vset.pattern.permute.xlu0 0
      %580 = vperm.xlu0 %579, %v363
      %v581 = vpop.permute.xlu0 %580
      %582 = vset.pattern.permute.xlu0 0
      %583 = vperm.xlu0 %582, %v364
      %v584 = vpop.permute.xlu0 %583
      %585 = vset.pattern.permute.xlu0 0
      %586 = vperm.xlu0 %585, %v365
      %v587 = vpop.permute.xlu0 %586
      %588 = vset.pattern.permute.xlu0 0
      %589 = vperm.xlu0 %588, %v366
      %v590 = vpop.permute.xlu0 %589
      %591 = vset.pattern.permute.xlu0 0
      %592 = vperm.xlu0 %591, %v367
      %v593 = vpop.permute.xlu0 %592
      %594 = vset.pattern.permute.xlu0 0
      %595 = vperm.xlu0 %594, %v368
      %v596 = vpop.permute.xlu0 %595
      %597 = vset.pattern.permute.xlu0 0
      %598 = vperm.xlu0 %597, %v369
      %v599 = vpop.permute.xlu0 %598
      %600 = vset.pattern.permute.xlu0 0
      %601 = vperm.xlu0 %600, %v370
      %v602 = vpop.permute.xlu0 %601
      %603 = vset.pattern.permute.xlu0 0
      %604 = vperm.xlu0 %603, %v371
      %v605 = vpop.permute.xlu0 %604
      %606 = vset.pattern.permute.xlu0 0
      %607 = vperm.xlu0 %606, %v372
      %v608 = vpop.permute.xlu0 %607
      %609 = vset.pattern.permute.xlu0 0
      %610 = vperm.xlu0 %609, %v373
      %v611 = vpop.permute.xlu0 %610
      %612 = vset.pattern.permute.xlu0 0
      %613 = vperm.xlu0 %612, %v374
      %v614 = vpop.permute.xlu0 %613
      %615 = vset.pattern.permute.xlu0 0
      %616 = vperm.xlu0 %615, %v375
      %v617 = vpop.permute.xlu0 %616
      %618 = vset.pattern.permute.xlu0 0
      %619 = vperm.xlu0 %618, %v376
      %v620 = vpop.permute.xlu0 %619
      %621 = vset.pattern.permute.xlu0 0
      %622 = vperm.xlu0 %621, %v377
      %v623 = vpop.permute.xlu0 %622
      %624 = vset.pattern.permute.xlu0 0
      %625 = vperm.xlu0 %624, %v378
      %v626 = vpop.permute.xlu0 %625
      %627 = vset.pattern.permute.xlu0 0
      %628 = vperm.xlu0 %627, %v379
      %v629 = vpop.permute.xlu0 %628
      %630 = vset.pattern.permute.xlu0 0
      %631 = vperm.xlu0 %630, %v380
      %v632 = vpop.permute.xlu0 %631
      %633 = vset.pattern.permute.xlu0 0
      %634 = vperm.xlu0 %633, %v381
      %v635 = vpop.permute.xlu0 %634
      %636 = vset.pattern.permute.xlu0 0
      %637 = vperm.xlu0 %636, %v382
      %v638 = vpop.permute.xlu0 %637
      %639 = vset.pattern.permute.xlu0 0
      %640 = vperm.xlu0 %639, %v383
      %v641 = vpop.permute.xlu0 %640
      %642 = vset.pattern.permute.xlu0 0
      %643 = vperm.xlu0 %642, %v384
      %v644 = vpop.permute.xlu0 %643
      %645 = vset.pattern.permute.xlu0 0
      %646 = vperm.xlu0 %645, %v385
      %v647 = vpop.permute.xlu0 %646
      %648 = vset.pattern.permute.xlu0 0
      %649 = vperm.xlu0 %648, %v386
      %v650 = vpop.permute.xlu0 %649
      %651 = vset.pattern.permute.xlu0 0
      %652 = vperm.xlu0 %651, %v387
      %v653 = vpop.permute.xlu0 %652
      %654 = vset.pattern.permute.xlu0 0
      %655 = vperm.xlu0 %654, %v388
      %v656 = vpop.permute.xlu0 %655
      %657 = vset.pattern.permute.xlu0 0
      %658 = vperm.xlu0 %657, %v389
      %v659 = vpop.permute.xlu0 %658
      %660 = vset.pattern.permute.xlu0 0
      %661 = vperm.xlu0 %660, %v390
      %v662 = vpop.permute.xlu0 %661
      %663 = vset.pattern.permute.xlu0 0
      %664 = vperm.xlu0 %663, %v391
      %v665 = vpop.permute.xlu0 %664
      %666 = vset.pattern.permute.xlu0 0
      %667 = vperm.xlu0 %666, %v392
      %v668 = vpop.permute.xlu0 %667
      %669 = vset.pattern.permute.xlu0 0
      %670 = vperm.xlu0 %669, %v393
      %v671 = vpop.permute.xlu0 %670
      %672 = vset.pattern.permute.xlu0 0
      %673 = vperm.xlu0 %672, %v394
      %v674 = vpop.permute.xlu0 %673
      %675 = vset.pattern.permute.xlu0 0
      %676 = vperm.xlu0 %675, %v395
      %v677 = vpop.permute.xlu0 %676
      %678 = vset.pattern.permute.xlu0 0
      %679 = vperm.xlu0 %678, %v396
      %v680 = vpop.permute.xlu0 %679
      %681 = vset.pattern.permute.xlu0 0
      %682 = vperm.xlu0 %681, %v397
      %v683 = vpop.permute.xlu0 %682
      %684 = vset.pattern.permute.xlu0 0
      %685 = vperm.xlu0 %684, %v398
      %v686 = vpop.permute.xlu0 %685
      %vm687 = vcmp.eq.s32.totalorder %v401, %v302
      %vm688 = vcmp.eq.s32.totalorder %v404, %v302
      %vm689 = vcmp.eq.s32.totalorder %v407, %v302
      %vm690 = vcmp.eq.s32.totalorder %v410, %v302
      %vm691 = vcmp.eq.s32.totalorder %v413, %v302
      %vm692 = vcmp.eq.s32.totalorder %v416, %v302
      %vm693 = vcmp.eq.s32.totalorder %v419, %v302
      %vm694 = vcmp.eq.s32.totalorder %v422, %v302
      %vm695 = vcmp.eq.s32.totalorder %v425, %v302
      %vm696 = vcmp.eq.s32.totalorder %v428, %v302
      %vm697 = vcmp.eq.s32.totalorder %v431, %v302
      %vm698 = vcmp.eq.s32.totalorder %v434, %v302
      %vm699 = vcmp.eq.s32.totalorder %v437, %v302
      %vm700 = vcmp.eq.s32.totalorder %v440, %v302
      %vm701 = vcmp.eq.s32.totalorder %v443, %v302
      %vm702 = vcmp.eq.s32.totalorder %v446, %v302
      %vm703 = vcmp.eq.s32.totalorder %v449, %v302
      %vm704 = vcmp.eq.s32.totalorder %v452, %v302
      %vm705 = vcmp.eq.s32.totalorder %v455, %v302
      %vm706 = vcmp.eq.s32.totalorder %v458, %v302
      %vm707 = vcmp.eq.s32.totalorder %v461, %v302
      %vm708 = vcmp.eq.s32.totalorder %v464, %v302
      %vm709 = vcmp.eq.s32.totalorder %v467, %v302
      %vm710 = vcmp.eq.s32.totalorder %v470, %v302
      %vm711 = vcmp.eq.s32.totalorder %v473, %v302
      %vm712 = vcmp.eq.s32.totalorder %v476, %v302
      %vm713 = vcmp.eq.s32.totalorder %v479, %v302
      %vm714 = vcmp.eq.s32.totalorder %v482, %v302
      %vm715 = vcmp.eq.s32.totalorder %v485, %v302
      %vm716 = vcmp.eq.s32.totalorder %v488, %v302
      %vm717 = vcmp.eq.s32.totalorder %v491, %v302
      %vm718 = vcmp.eq.s32.totalorder %v494, %v302
      %vm719 = vcmp.eq.s32.totalorder %v497, %v302
      %vm720 = vcmp.eq.s32.totalorder %v500, %v302
      %vm721 = vcmp.eq.s32.totalorder %v503, %v302
      %vm722 = vcmp.eq.s32.totalorder %v506, %v302
      %vm723 = vcmp.eq.s32.totalorder %v509, %v302
      %vm724 = vcmp.eq.s32.totalorder %v512, %v302
      %vm725 = vcmp.eq.s32.totalorder %v515, %v302
      %vm726 = vcmp.eq.s32.totalorder %v518, %v302
      %vm727 = vcmp.eq.s32.totalorder %v521, %v302
      %vm728 = vcmp.eq.s32.totalorder %v524, %v302
      %vm729 = vcmp.eq.s32.totalorder %v527, %v302
      %vm730 = vcmp.eq.s32.totalorder %v530, %v302
      %vm731 = vcmp.eq.s32.totalorder %v533, %v302
      %vm732 = vcmp.eq.s32.totalorder %v536, %v302
      %vm733 = vcmp.eq.s32.totalorder %v539, %v302
      %vm734 = vcmp.eq.s32.totalorder %v542, %v302
      %vm735 = vcmp.eq.s32.totalorder %v545, %v302
      %vm736 = vcmp.eq.s32.totalorder %v548, %v302
      %vm737 = vcmp.eq.s32.totalorder %v551, %v302
      %vm738 = vcmp.eq.s32.totalorder %v554, %v302
      %vm739 = vcmp.eq.s32.totalorder %v557, %v302
      %vm740 = vcmp.eq.s32.totalorder %v560, %v302
      %vm741 = vcmp.eq.s32.totalorder %v563, %v302
      %vm742 = vcmp.eq.s32.totalorder %v566, %v302
      %vm743 = vcmp.eq.s32.totalorder %v569, %v302
      %vm744 = vcmp.eq.s32.totalorder %v572, %v302
      %vm745 = vcmp.eq.s32.totalorder %v575, %v302
      %vm746 = vcmp.eq.s32.totalorder %v578, %v302
      %vm747 = vcmp.eq.s32.totalorder %v581, %v302
      %vm748 = vcmp.eq.s32.totalorder %v584, %v302
      %vm749 = vcmp.eq.s32.totalorder %v587, %v302
      %vm750 = vcmp.eq.s32.totalorder %v590, %v302
      %vm751 = vcmp.eq.s32.totalorder %v593, %v302
      %vm752 = vcmp.eq.s32.totalorder %v596, %v302
      %vm753 = vcmp.eq.s32.totalorder %v599, %v302
      %vm754 = vcmp.eq.s32.totalorder %v602, %v302
      %vm755 = vcmp.eq.s32.totalorder %v605, %v302
      %vm756 = vcmp.eq.s32.totalorder %v608, %v302
      %vm757 = vcmp.eq.s32.totalorder %v611, %v302
      %vm758 = vcmp.eq.s32.totalorder %v614, %v302
      %vm759 = vcmp.eq.s32.totalorder %v617, %v302
      %vm760 = vcmp.eq.s32.totalorder %v620, %v302
      %vm761 = vcmp.eq.s32.totalorder %v623, %v302
      %vm762 = vcmp.eq.s32.totalorder %v626, %v302
      %vm763 = vcmp.eq.s32.totalorder %v629, %v302
      %vm764 = vcmp.eq.s32.totalorder %v632, %v302
      %vm765 = vcmp.eq.s32.totalorder %v635, %v302
      %vm766 = vcmp.eq.s32.totalorder %v638, %v302
      %vm767 = vcmp.eq.s32.totalorder %v641, %v302
      %vm768 = vcmp.eq.s32.totalorder %v644, %v302
      %vm769 = vcmp.eq.s32.totalorder %v647, %v302
      %vm770 = vcmp.eq.s32.totalorder %v650, %v302
      %vm771 = vcmp.eq.s32.totalorder %v653, %v302
      %vm772 = vcmp.eq.s32.totalorder %v656, %v302
      %vm773 = vcmp.eq.s32.totalorder %v659, %v302
      %vm774 = vcmp.eq.s32.totalorder %v662, %v302
      %vm775 = vcmp.eq.s32.totalorder %v665, %v302
      %vm776 = vcmp.eq.s32.totalorder %v668, %v302
      %vm777 = vcmp.eq.s32.totalorder %v671, %v302
      %vm778 = vcmp.eq.s32.totalorder %v674, %v302
      %vm779 = vcmp.eq.s32.totalorder %v677, %v302
      %vm780 = vcmp.eq.s32.totalorder %v680, %v302
      %vm781 = vcmp.eq.s32.totalorder %v683, %v302
      %vm782 = vcmp.eq.s32.totalorder %v686, %v302
      %v783 = vsel %vm687, 1, 0
      %v784 = vsel %vm688, 1, 0
      %v785 = vsel %vm689, 1, 0
      %v786 = vsel %vm690, 1, 0
      %v787 = vsel %vm691, 1, 0
      %v788 = vsel %vm692, 1, 0
      %v789 = vsel %vm693, 1, 0
      %v790 = vsel %vm694, 1, 0
      %v791 = vsel %vm695, 1, 0
      %v792 = vsel %vm696, 1, 0
      %v793 = vsel %vm697, 1, 0
      %v794 = vsel %vm698, 1, 0
      %v795 = vsel %vm699, 1, 0
      %v796 = vsel %vm700, 1, 0
      %v797 = vsel %vm701, 1, 0
      %v798 = vsel %vm702, 1, 0
      %v799 = vsel %vm703, 1, 0
      %v800 = vsel %vm704, 1, 0
      %v801 = vsel %vm705, 1, 0
      %v802 = vsel %vm706, 1, 0
      %v803 = vsel %vm707, 1, 0
      %v804 = vsel %vm708, 1, 0
      %v805 = vsel %vm709, 1, 0
      %v806 = vsel %vm710, 1, 0
      %v807 = vsel %vm711, 1, 0
      %v808 = vsel %vm712, 1, 0
      %v809 = vsel %vm713, 1, 0
      %v810 = vsel %vm714, 1, 0
      %v811 = vsel %vm715, 1, 0
      %v812 = vsel %vm716, 1, 0
      %v813 = vsel %vm717, 1, 0
      %v814 = vsel %vm718, 1, 0
      %v815 = vsel %vm719, 1, 0
      %v816 = vsel %vm720, 1, 0
      %v817 = vsel %vm721, 1, 0
      %v818 = vsel %vm722, 1, 0
      %v819 = vsel %vm723, 1, 0
      %v820 = vsel %vm724, 1, 0
      %v821 = vsel %vm725, 1, 0
      %v822 = vsel %vm726, 1, 0
      %v823 = vsel %vm727, 1, 0
      %v824 = vsel %vm728, 1, 0
      %v825 = vsel %vm729, 1, 0
      %v826 = vsel %vm730, 1, 0
      %v827 = vsel %vm731, 1, 0
      %v828 = vsel %vm732, 1, 0
      %v829 = vsel %vm733, 1, 0
      %v830 = vsel %vm734, 1, 0
      %v831 = vsel %vm735, 1, 0
      %v832 = vsel %vm736, 1, 0
      %v833 = vsel %vm737, 1, 0
      %v834 = vsel %vm738, 1, 0
      %v835 = vsel %vm739, 1, 0
      %v836 = vsel %vm740, 1, 0
      %v837 = vsel %vm741, 1, 0
      %v838 = vsel %vm742, 1, 0
      %v839 = vsel %vm743, 1, 0
      %v840 = vsel %vm744, 1, 0
      %v841 = vsel %vm745, 1, 0
      %v842 = vsel %vm746, 1, 0
      %v843 = vsel %vm747, 1, 0
      %v844 = vsel %vm748, 1, 0
      %v845 = vsel %vm749, 1, 0
      %v846 = vsel %vm750, 1, 0
      %v847 = vsel %vm751, 1, 0
      %v848 = vsel %vm752, 1, 0
      %v849 = vsel %vm753, 1, 0
      %v850 = vsel %vm754, 1, 0
      %v851 = vsel %vm755, 1, 0
      %v852 = vsel %vm756, 1, 0
      %v853 = vsel %vm757, 1, 0
      %v854 = vsel %vm758, 1, 0
      %v855 = vsel %vm759, 1, 0
      %v856 = vsel %vm760, 1, 0
      %v857 = vsel %vm761, 1, 0
      %v858 = vsel %vm762, 1, 0
      %v859 = vsel %vm763, 1, 0
      %v860 = vsel %vm764, 1, 0
      %v861 = vsel %vm765, 1, 0
      %v862 = vsel %vm766, 1, 0
      %v863 = vsel %vm767, 1, 0
      %v864 = vsel %vm768, 1, 0
      %v865 = vsel %vm769, 1, 0
      %v866 = vsel %vm770, 1, 0
      %v867 = vsel %vm771, 1, 0
      %v868 = vsel %vm772, 1, 0
      %v869 = vsel %vm773, 1, 0
      %v870 = vsel %vm774, 1, 0
      %v871 = vsel %vm775, 1, 0
      %v872 = vsel %vm776, 1, 0
      %v873 = vsel %vm777, 1, 0
      %v874 = vsel %vm778, 1, 0
      %v875 = vsel %vm779, 1, 0
      %v876 = vsel %vm780, 1, 0
      %v877 = vsel %vm781, 1, 0
      %v878 = vsel %vm782, 1, 0
      %v879 = vcvt.s32.f32 %v783
      %v880 = vcvt.s32.f32 %v784
      %v881 = vcvt.s32.f32 %v785
      %v882 = vcvt.s32.f32 %v786
      %v883 = vcvt.s32.f32 %v787
      %v884 = vcvt.s32.f32 %v788
      %v885 = vcvt.s32.f32 %v789
      %v886 = vcvt.s32.f32 %v790
      %v887 = vcvt.s32.f32 %v791
      %v888 = vcvt.s32.f32 %v792
      %v889 = vcvt.s32.f32 %v793
      %v890 = vcvt.s32.f32 %v794
      %v891 = vcvt.s32.f32 %v795
      %v892 = vcvt.s32.f32 %v796
      %v893 = vcvt.s32.f32 %v797
      %v894 = vcvt.s32.f32 %v798
      %v895 = vcvt.s32.f32 %v799
      %v896 = vcvt.s32.f32 %v800
      %v897 = vcvt.s32.f32 %v801
      %v898 = vcvt.s32.f32 %v802
      %v899 = vcvt.s32.f32 %v803
      %v900 = vcvt.s32.f32 %v804
      %v901 = vcvt.s32.f32 %v805
      %v902 = vcvt.s32.f32 %v806
      %v903 = vcvt.s32.f32 %v807
      %v904 = vcvt.s32.f32 %v808
      %v905 = vcvt.s32.f32 %v809
      %v906 = vcvt.s32.f32 %v810
      %v907 = vcvt.s32.f32 %v811
      %v908 = vcvt.s32.f32 %v812
      %v909 = vcvt.s32.f32 %v813
      %v910 = vcvt.s32.f32 %v814
      %v911 = vcvt.s32.f32 %v815
      %v912 = vcvt.s32.f32 %v816
      %v913 = vcvt.s32.f32 %v817
      %v914 = vcvt.s32.f32 %v818
      %v915 = vcvt.s32.f32 %v819
      %v916 = vcvt.s32.f32 %v820
      %v917 = vcvt.s32.f32 %v821
      %v918 = vcvt.s32.f32 %v822
      %v919 = vcvt.s32.f32 %v823
      %v920 = vcvt.s32.f32 %v824
      %v921 = vcvt.s32.f32 %v825
      %v922 = vcvt.s32.f32 %v826
      %v923 = vcvt.s32.f32 %v827
      %v924 = vcvt.s32.f32 %v828
      %v925 = vcvt.s32.f32 %v829
      %v926 = vcvt.s32.f32 %v830
      %v927 = vcvt.s32.f32 %v831
      %v928 = vcvt.s32.f32 %v832
      %v929 = vcvt.s32.f32 %v833
      %v930 = vcvt.s32.f32 %v834
      %v931 = vcvt.s32.f32 %v835
      %v932 = vcvt.s32.f32 %v836
      %v933 = vcvt.s32.f32 %v837
      %v934 = vcvt.s32.f32 %v838
      %v935 = vcvt.s32.f32 %v839
      %v936 = vcvt.s32.f32 %v840
      %v937 = vcvt.s32.f32 %v841
      %v938 = vcvt.s32.f32 %v842
      %v939 = vcvt.s32.f32 %v843
      %v940 = vcvt.s32.f32 %v844
      %v941 = vcvt.s32.f32 %v845
      %v942 = vcvt.s32.f32 %v846
      %v943 = vcvt.s32.f32 %v847
      %v944 = vcvt.s32.f32 %v848
      %v945 = vcvt.s32.f32 %v849
      %v946 = vcvt.s32.f32 %v850
      %v947 = vcvt.s32.f32 %v851
      %v948 = vcvt.s32.f32 %v852
      %v949 = vcvt.s32.f32 %v853
      %v950 = vcvt.s32.f32 %v854
      %v951 = vcvt.s32.f32 %v855
      %v952 = vcvt.s32.f32 %v856
      %v953 = vcvt.s32.f32 %v857
      %v954 = vcvt.s32.f32 %v858
      %v955 = vcvt.s32.f32 %v859
      %v956 = vcvt.s32.f32 %v860
      %v957 = vcvt.s32.f32 %v861
      %v958 = vcvt.s32.f32 %v862
      %v959 = vcvt.s32.f32 %v863
      %v960 = vcvt.s32.f32 %v864
      %v961 = vcvt.s32.f32 %v865
      %v962 = vcvt.s32.f32 %v866
      %v963 = vcvt.s32.f32 %v867
      %v964 = vcvt.s32.f32 %v868
      %v965 = vcvt.s32.f32 %v869
      %v966 = vcvt.s32.f32 %v870
      %v967 = vcvt.s32.f32 %v871
      %v968 = vcvt.s32.f32 %v872
      %v969 = vcvt.s32.f32 %v873
      %v970 = vcvt.s32.f32 %v874
      %v971 = vcvt.s32.f32 %v875
      %v972 = vcvt.s32.f32 %v876
      %v973 = vcvt.s32.f32 %v877
      %v974 = vcvt.s32.f32 %v878
      %v975 = vld [vmem:[%s299] sm:$0xff]
      %v976 = vld [vmem:[%s299 + $0x8] sm:$0xff]
      %v977 = vld [vmem:[%s299 + $0x10] sm:$0xff]
      %v978 = vld [vmem:[%s299 + $0x18] sm:$0xff]
      %v979 = vld [vmem:[%s299 + $0x20] sm:$0xff]
      %v980 = vld [vmem:[%s299 + $0x28] sm:$0xff]
      %v981 = vld [vmem:[%s299 + $0x30] sm:$0xff]
      %v982 = vld [vmem:[%s299 + $0x38] sm:$0xff]
      %v983 = vld [vmem:[%s299 + $0x40] sm:$0xff]
      %v984 = vld [vmem:[%s299 + $0x48] sm:$0xff]
      %v985 = vld [vmem:[%s299 + $0x50] sm:$0xff]
      %v986 = vld [vmem:[%s299 + $0x58] sm:$0xff]
      %v987 = vld [vmem:[%s299 + $0x60] sm:$0xff]
      %v988 = vld [vmem:[%s299 + $0x68] sm:$0xff]
      %v989 = vld [vmem:[%s299 + $0x70] sm:$0xff]
      %v990 = vld [vmem:[%s299 + $0x78] sm:$0xff]
      %v991 = vld [vmem:[%s299 + $0x80] sm:$0xff]
      %v992 = vld [vmem:[%s299 + $0x88] sm:$0xff]
      %v993 = vld [vmem:[%s299 + $0x90] sm:$0xff]
      %v994 = vld [vmem:[%s299 + $0x98] sm:$0xff]
      %v995 = vld [vmem:[%s299 + $0xa0] sm:$0xff]
      %v996 = vld [vmem:[%s299 + $0xa8] sm:$0xff]
      %v997 = vld [vmem:[%s299 + $0xb0] sm:$0xff]
      %v998 = vld [vmem:[%s299 + $0xb8] sm:$0xff]
      %v999 = vld [vmem:[%s299 + $0xc0] sm:$0xff]
      %v1000 = vld [vmem:[%s299 + $0xc8] sm:$0xff]
      %v1001 = vld [vmem:[%s299 + $0xd0] sm:$0xff]
      %v1002 = vld [vmem:[%s299 + $0xd8] sm:$0xff]
      %v1003 = vld [vmem:[%s299 + $0xe0] sm:$0xff]
      %v1004 = vld [vmem:[%s299 + $0xe8] sm:$0xff]
      %v1005 = vld [vmem:[%s299 + $0xf0] sm:$0xff]
      %v1006 = vld [vmem:[%s299 + $0xf8] sm:$0xff]
      %v1007 = vld [vmem:[%s299 + $0x100] sm:$0xff]
      %v1008 = vld [vmem:[%s299 + $0x108] sm:$0xff]
      %v1009 = vld [vmem:[%s299 + $0x110] sm:$0xff]
      %v1010 = vld [vmem:[%s299 + $0x118] sm:$0xff]
      %v1011 = vld [vmem:[%s299 + $0x120] sm:$0xff]
      %v1012 = vld [vmem:[%s299 + $0x128] sm:$0xff]
      %v1013 = vld [vmem:[%s299 + $0x130] sm:$0xff]
      %v1014 = vld [vmem:[%s299 + $0x138] sm:$0xff]
      %v1015 = vld [vmem:[%s299 + $0x140] sm:$0xff]
      %v1016 = vld [vmem:[%s299 + $0x148] sm:$0xff]
      %v1017 = vld [vmem:[%s299 + $0x150] sm:$0xff]
      %v1018 = vld [vmem:[%s299 + $0x158] sm:$0xff]
      %v1019 = vld [vmem:[%s299 + $0x160] sm:$0xff]
      %v1020 = vld [vmem:[%s299 + $0x168] sm:$0xff]
      %v1021 = vld [vmem:[%s299 + $0x170] sm:$0xff]
      %v1022 = vld [vmem:[%s299 + $0x178] sm:$0xff]
      %v1023 = vld [vmem:[%s299 + $0x180] sm:$0xff]
      %v1024 = vld [vmem:[%s299 + $0x188] sm:$0xff]
      %v1025 = vld [vmem:[%s299 + $0x190] sm:$0xff]
      %v1026 = vld [vmem:[%s299 + $0x198] sm:$0xff]
      %v1027 = vld [vmem:[%s299 + $0x1a0] sm:$0xff]
      %v1028 = vld [vmem:[%s299 + $0x1a8] sm:$0xff]
      %v1029 = vld [vmem:[%s299 + $0x1b0] sm:$0xff]
      %v1030 = vld [vmem:[%s299 + $0x1b8] sm:$0xff]
      %v1031 = vld [vmem:[%s299 + $0x1c0] sm:$0xff]
      %v1032 = vld [vmem:[%s299 + $0x1c8] sm:$0xff]
      %v1033 = vld [vmem:[%s299 + $0x1d0] sm:$0xff]
      %v1034 = vld [vmem:[%s299 + $0x1d8] sm:$0xff]
      %v1035 = vld [vmem:[%s299 + $0x1e0] sm:$0xff]
      %v1036 = vld [vmem:[%s299 + $0x1e8] sm:$0xff]
      %v1037 = vld [vmem:[%s299 + $0x1f0] sm:$0xff]
      %v1038 = vld [vmem:[%s299 + $0x1f8] sm:$0xff]
      %v1039 = vld [vmem:[%s299 + $0x200] sm:$0xff]
      %v1040 = vld [vmem:[%s299 + $0x208] sm:$0xff]
      %v1041 = vld [vmem:[%s299 + $0x210] sm:$0xff]
      %v1042 = vld [vmem:[%s299 + $0x218] sm:$0xff]
      %v1043 = vld [vmem:[%s299 + $0x220] sm:$0xff]
      %v1044 = vld [vmem:[%s299 + $0x228] sm:$0xff]
      %v1045 = vld [vmem:[%s299 + $0x230] sm:$0xff]
      %v1046 = vld [vmem:[%s299 + $0x238] sm:$0xff]
      %v1047 = vld [vmem:[%s299 + $0x240] sm:$0xff]
      %v1048 = vld [vmem:[%s299 + $0x248] sm:$0xff]
      %v1049 = vld [vmem:[%s299 + $0x250] sm:$0xff]
      %v1050 = vld [vmem:[%s299 + $0x258] sm:$0xff]
      %v1051 = vld [vmem:[%s299 + $0x260] sm:$0xff]
      %v1052 = vld [vmem:[%s299 + $0x268] sm:$0xff]
      %v1053 = vld [vmem:[%s299 + $0x270] sm:$0xff]
      %v1054 = vld [vmem:[%s299 + $0x278] sm:$0xff]
      %v1055 = vld [vmem:[%s299 + $0x280] sm:$0xff]
      %v1056 = vld [vmem:[%s299 + $0x288] sm:$0xff]
      %v1057 = vld [vmem:[%s299 + $0x290] sm:$0xff]
      %v1058 = vld [vmem:[%s299 + $0x298] sm:$0xff]
      %v1059 = vld [vmem:[%s299 + $0x2a0] sm:$0xff]
      %v1060 = vld [vmem:[%s299 + $0x2a8] sm:$0xff]
      %v1061 = vld [vmem:[%s299 + $0x2b0] sm:$0xff]
      %v1062 = vld [vmem:[%s299 + $0x2b8] sm:$0xff]
      %v1063 = vld [vmem:[%s299 + $0x2c0] sm:$0xff]
      %v1064 = vld [vmem:[%s299 + $0x2c8] sm:$0xff]
      %v1065 = vld [vmem:[%s299 + $0x2d0] sm:$0xff]
      %v1066 = vld [vmem:[%s299 + $0x2d8] sm:$0xff]
      %v1067 = vld [vmem:[%s299 + $0x2e0] sm:$0xff]
      %v1068 = vld [vmem:[%s299 + $0x2e8] sm:$0xff]
      %v1069 = vld [vmem:[%s299 + $0x2f0] sm:$0xff]
      %v1070 = vld [vmem:[%s299 + $0x2f8] sm:$0xff]
      %1071 = vset.pattern.permute.xlu0 0
      %1072 = vperm.xlu0 %1071, %v975
      %v1073 = vpop.permute.xlu0 %1072
      %1074 = vset.pattern.permute.xlu0 0
      %1075 = vperm.xlu0 %1074, %v976
      %v1076 = vpop.permute.xlu0 %1075
      %1077 = vset.pattern.permute.xlu0 0
      %1078 = vperm.xlu0 %1077, %v977
      %v1079 = vpop.permute.xlu0 %1078
      %1080 = vset.pattern.permute.xlu0 0
      %1081 = vperm.xlu0 %1080, %v978
      %v1082 = vpop.permute.xlu0 %1081
      %1083 = vset.pattern.permute.xlu0 0
      %1084 = vperm.xlu0 %1083, %v979
      %v1085 = vpop.permute.xlu0 %1084
      %1086 = vset.pattern.permute.xlu0 0
      %1087 = vperm.xlu0 %1086, %v980
      %v1088 = vpop.permute.xlu0 %1087
      %1089 = vset.pattern.permute.xlu0 0
      %1090 = vperm.xlu0 %1089, %v981
      %v1091 = vpop.permute.xlu0 %1090
      %1092 = vset.pattern.permute.xlu0 0
      %1093 = vperm.xlu0 %1092, %v982
      %v1094 = vpop.permute.xlu0 %1093
      %1095 = vset.pattern.permute.xlu0 0
      %1096 = vperm.xlu0 %1095, %v983
      %v1097 = vpop.permute.xlu0 %1096
      %1098 = vset.pattern.permute.xlu0 0
      %1099 = vperm.xlu0 %1098, %v984
      %v1100 = vpop.permute.xlu0 %1099
      %1101 = vset.pattern.permute.xlu0 0
      %1102 = vperm.xlu0 %1101, %v985
      %v1103 = vpop.permute.xlu0 %1102
      %1104 = vset.pattern.permute.xlu0 0
      %1105 = vperm.xlu0 %1104, %v986
      %v1106 = vpop.permute.xlu0 %1105
      %1107 = vset.pattern.permute.xlu0 0
      %1108 = vperm.xlu0 %1107, %v987
      %v1109 = vpop.permute.xlu0 %1108
      %1110 = vset.pattern.permute.xlu0 0
      %1111 = vperm.xlu0 %1110, %v988
      %v1112 = vpop.permute.xlu0 %1111
      %1113 = vset.pattern.permute.xlu0 0
      %1114 = vperm.xlu0 %1113, %v989
      %v1115 = vpop.permute.xlu0 %1114
      %1116 = vset.pattern.permute.xlu0 0
      %1117 = vperm.xlu0 %1116, %v990
      %v1118 = vpop.permute.xlu0 %1117
      %1119 = vset.pattern.permute.xlu0 0
      %1120 = vperm.xlu0 %1119, %v991
      %v1121 = vpop.permute.xlu0 %1120
      %1122 = vset.pattern.permute.xlu0 0
      %1123 = vperm.xlu0 %1122, %v992
      %v1124 = vpop.permute.xlu0 %1123
      %1125 = vset.pattern.permute.xlu0 0
      %1126 = vperm.xlu0 %1125, %v993
      %v1127 = vpop.permute.xlu0 %1126
      %1128 = vset.pattern.permute.xlu0 0
      %1129 = vperm.xlu0 %1128, %v994
      %v1130 = vpop.permute.xlu0 %1129
      %1131 = vset.pattern.permute.xlu0 0
      %1132 = vperm.xlu0 %1131, %v995
      %v1133 = vpop.permute.xlu0 %1132
      %1134 = vset.pattern.permute.xlu0 0
      %1135 = vperm.xlu0 %1134, %v996
      %v1136 = vpop.permute.xlu0 %1135
      %1137 = vset.pattern.permute.xlu0 0
      %1138 = vperm.xlu0 %1137, %v997
      %v1139 = vpop.permute.xlu0 %1138
      %1140 = vset.pattern.permute.xlu0 0
      %1141 = vperm.xlu0 %1140, %v998
      %v1142 = vpop.permute.xlu0 %1141
      %1143 = vset.pattern.permute.xlu0 0
      %1144 = vperm.xlu0 %1143, %v999
      %v1145 = vpop.permute.xlu0 %1144
      %1146 = vset.pattern.permute.xlu0 0
      %1147 = vperm.xlu0 %1146, %v1000
      %v1148 = vpop.permute.xlu0 %1147
      %1149 = vset.pattern.permute.xlu0 0
      %1150 = vperm.xlu0 %1149, %v1001
      %v1151 = vpop.permute.xlu0 %1150
      %1152 = vset.pattern.permute.xlu0 0
      %1153 = vperm.xlu0 %1152, %v1002
      %v1154 = vpop.permute.xlu0 %1153
      %1155 = vset.pattern.permute.xlu0 0
      %1156 = vperm.xlu0 %1155, %v1003
      %v1157 = vpop.permute.xlu0 %1156
      %1158 = vset.pattern.permute.xlu0 0
      %1159 = vperm.xlu0 %1158, %v1004
      %v1160 = vpop.permute.xlu0 %1159
      %1161 = vset.pattern.permute.xlu0 0
      %1162 = vperm.xlu0 %1161, %v1005
      %v1163 = vpop.permute.xlu0 %1162
      %1164 = vset.pattern.permute.xlu0 0
      %1165 = vperm.xlu0 %1164, %v1006
      %v1166 = vpop.permute.xlu0 %1165
      %1167 = vset.pattern.permute.xlu0 0
      %1168 = vperm.xlu0 %1167, %v1007
      %v1169 = vpop.permute.xlu0 %1168
      %1170 = vset.pattern.permute.xlu0 0
      %1171 = vperm.xlu0 %1170, %v1008
      %v1172 = vpop.permute.xlu0 %1171
      %1173 = vset.pattern.permute.xlu0 0
      %1174 = vperm.xlu0 %1173, %v1009
      %v1175 = vpop.permute.xlu0 %1174
      %1176 = vset.pattern.permute.xlu0 0
      %1177 = vperm.xlu0 %1176, %v1010
      %v1178 = vpop.permute.xlu0 %1177
      %1179 = vset.pattern.permute.xlu0 0
      %1180 = vperm.xlu0 %1179, %v1011
      %v1181 = vpop.permute.xlu0 %1180
      %1182 = vset.pattern.permute.xlu0 0
      %1183 = vperm.xlu0 %1182, %v1012
      %v1184 = vpop.permute.xlu0 %1183
      %1185 = vset.pattern.permute.xlu0 0
      %1186 = vperm.xlu0 %1185, %v1013
      %v1187 = vpop.permute.xlu0 %1186
      %1188 = vset.pattern.permute.xlu0 0
      %1189 = vperm.xlu0 %1188, %v1014
      %v1190 = vpop.permute.xlu0 %1189
      %1191 = vset.pattern.permute.xlu0 0
      %1192 = vperm.xlu0 %1191, %v1015
      %v1193 = vpop.permute.xlu0 %1192
      %1194 = vset.pattern.permute.xlu0 0
      %1195 = vperm.xlu0 %1194, %v1016
      %v1196 = vpop.permute.xlu0 %1195
      %1197 = vset.pattern.permute.xlu0 0
      %1198 = vperm.xlu0 %1197, %v1017
      %v1199 = vpop.permute.xlu0 %1198
      %1200 = vset.pattern.permute.xlu0 0
      %1201 = vperm.xlu0 %1200, %v1018
      %v1202 = vpop.permute.xlu0 %1201
      %1203 = vset.pattern.permute.xlu0 0
      %1204 = vperm.xlu0 %1203, %v1019
      %v1205 = vpop.permute.xlu0 %1204
      %1206 = vset.pattern.permute.xlu0 0
      %1207 = vperm.xlu0 %1206, %v1020
      %v1208 = vpop.permute.xlu0 %1207
      %1209 = vset.pattern.permute.xlu0 0
      %1210 = vperm.xlu0 %1209, %v1021
      %v1211 = vpop.permute.xlu0 %1210
      %1212 = vset.pattern.permute.xlu0 0
      %1213 = vperm.xlu0 %1212, %v1022
      %v1214 = vpop.permute.xlu0 %1213
      %1215 = vset.pattern.permute.xlu0 0
      %1216 = vperm.xlu0 %1215, %v1023
      %v1217 = vpop.permute.xlu0 %1216
      %1218 = vset.pattern.permute.xlu0 0
      %1219 = vperm.xlu0 %1218, %v1024
      %v1220 = vpop.permute.xlu0 %1219
      %1221 = vset.pattern.permute.xlu0 0
      %1222 = vperm.xlu0 %1221, %v1025
      %v1223 = vpop.permute.xlu0 %1222
      %1224 = vset.pattern.permute.xlu0 0
      %1225 = vperm.xlu0 %1224, %v1026
      %v1226 = vpop.permute.xlu0 %1225
      %1227 = vset.pattern.permute.xlu0 0
      %1228 = vperm.xlu0 %1227, %v1027
      %v1229 = vpop.permute.xlu0 %1228
      %1230 = vset.pattern.permute.xlu0 0
      %1231 = vperm.xlu0 %1230, %v1028
      %v1232 = vpop.permute.xlu0 %1231
      %1233 = vset.pattern.permute.xlu0 0
      %1234 = vperm.xlu0 %1233, %v1029
      %v1235 = vpop.permute.xlu0 %1234
      %1236 = vset.pattern.permute.xlu0 0
      %1237 = vperm.xlu0 %1236, %v1030
      %v1238 = vpop.permute.xlu0 %1237
      %1239 = vset.pattern.permute.xlu0 0
      %1240 = vperm.xlu0 %1239, %v1031
      %v1241 = vpop.permute.xlu0 %1240
      %1242 = vset.pattern.permute.xlu0 0
      %1243 = vperm.xlu0 %1242, %v1032
      %v1244 = vpop.permute.xlu0 %1243
      %1245 = vset.pattern.permute.xlu0 0
      %1246 = vperm.xlu0 %1245, %v1033
      %v1247 = vpop.permute.xlu0 %1246
      %1248 = vset.pattern.permute.xlu0 0
      %1249 = vperm.xlu0 %1248, %v1034
      %v1250 = vpop.permute.xlu0 %1249
      %1251 = vset.pattern.permute.xlu0 0
      %1252 = vperm.xlu0 %1251, %v1035
      %v1253 = vpop.permute.xlu0 %1252
      %1254 = vset.pattern.permute.xlu0 0
      %1255 = vperm.xlu0 %1254, %v1036
      %v1256 = vpop.permute.xlu0 %1255
      %1257 = vset.pattern.permute.xlu0 0
      %1258 = vperm.xlu0 %1257, %v1037
      %v1259 = vpop.permute.xlu0 %1258
      %1260 = vset.pattern.permute.xlu0 0
      %1261 = vperm.xlu0 %1260, %v1038
      %v1262 = vpop.permute.xlu0 %1261
      %1263 = vset.pattern.permute.xlu0 0
      %1264 = vperm.xlu0 %1263, %v1039
      %v1265 = vpop.permute.xlu0 %1264
      %1266 = vset.pattern.permute.xlu0 0
      %1267 = vperm.xlu0 %1266, %v1040
      %v1268 = vpop.permute.xlu0 %1267
      %1269 = vset.pattern.permute.xlu0 0
      %1270 = vperm.xlu0 %1269, %v1041
      %v1271 = vpop.permute.xlu0 %1270
      %1272 = vset.pattern.permute.xlu0 0
      %1273 = vperm.xlu0 %1272, %v1042
      %v1274 = vpop.permute.xlu0 %1273
      %1275 = vset.pattern.permute.xlu0 0
      %1276 = vperm.xlu0 %1275, %v1043
      %v1277 = vpop.permute.xlu0 %1276
      %1278 = vset.pattern.permute.xlu0 0
      %1279 = vperm.xlu0 %1278, %v1044
      %v1280 = vpop.permute.xlu0 %1279
      %1281 = vset.pattern.permute.xlu0 0
      %1282 = vperm.xlu0 %1281, %v1045
      %v1283 = vpop.permute.xlu0 %1282
      %1284 = vset.pattern.permute.xlu0 0
      %1285 = vperm.xlu0 %1284, %v1046
      %v1286 = vpop.permute.xlu0 %1285
      %1287 = vset.pattern.permute.xlu0 0
      %1288 = vperm.xlu0 %1287, %v1047
      %v1289 = vpop.permute.xlu0 %1288
      %1290 = vset.pattern.permute.xlu0 0
      %1291 = vperm.xlu0 %1290, %v1048
      %v1292 = vpop.permute.xlu0 %1291
      %1293 = vset.pattern.permute.xlu0 0
      %1294 = vperm.xlu0 %1293, %v1049
      %v1295 = vpop.permute.xlu0 %1294
      %1296 = vset.pattern.permute.xlu0 0
      %1297 = vperm.xlu0 %1296, %v1050
      %v1298 = vpop.permute.xlu0 %1297
      %1299 = vset.pattern.permute.xlu0 0
      %1300 = vperm.xlu0 %1299, %v1051
      %v1301 = vpop.permute.xlu0 %1300
      %1302 = vset.pattern.permute.xlu0 0
      %1303 = vperm.xlu0 %1302, %v1052
      %v1304 = vpop.permute.xlu0 %1303
      %1305 = vset.pattern.permute.xlu0 0
      %1306 = vperm.xlu0 %1305, %v1053
      %v1307 = vpop.permute.xlu0 %1306
      %1308 = vset.pattern.permute.xlu0 0
      %1309 = vperm.xlu0 %1308, %v1054
      %v1310 = vpop.permute.xlu0 %1309
      %1311 = vset.pattern.permute.xlu0 0
      %1312 = vperm.xlu0 %1311, %v1055
      %v1313 = vpop.permute.xlu0 %1312
      %1314 = vset.pattern.permute.xlu0 0
      %1315 = vperm.xlu0 %1314, %v1056
      %v1316 = vpop.permute.xlu0 %1315
      %1317 = vset.pattern.permute.xlu0 0
      %1318 = vperm.xlu0 %1317, %v1057
      %v1319 = vpop.permute.xlu0 %1318
      %1320 = vset.pattern.permute.xlu0 0
      %1321 = vperm.xlu0 %1320, %v1058
      %v1322 = vpop.permute.xlu0 %1321
      %1323 = vset.pattern.permute.xlu0 0
      %1324 = vperm.xlu0 %1323, %v1059
      %v1325 = vpop.permute.xlu0 %1324
      %1326 = vset.pattern.permute.xlu0 0
      %1327 = vperm.xlu0 %1326, %v1060
      %v1328 = vpop.permute.xlu0 %1327
      %1329 = vset.pattern.permute.xlu0 0
      %1330 = vperm.xlu0 %1329, %v1061
      %v1331 = vpop.permute.xlu0 %1330
      %1332 = vset.pattern.permute.xlu0 0
      %1333 = vperm.xlu0 %1332, %v1062
      %v1334 = vpop.permute.xlu0 %1333
      %1335 = vset.pattern.permute.xlu0 0
      %1336 = vperm.xlu0 %1335, %v1063
      %v1337 = vpop.permute.xlu0 %1336
      %1338 = vset.pattern.permute.xlu0 0
      %1339 = vperm.xlu0 %1338, %v1064
      %v1340 = vpop.permute.xlu0 %1339
      %1341 = vset.pattern.permute.xlu0 0
      %1342 = vperm.xlu0 %1341, %v1065
      %v1343 = vpop.permute.xlu0 %1342
      %1344 = vset.pattern.permute.xlu0 0
      %1345 = vperm.xlu0 %1344, %v1066
      %v1346 = vpop.permute.xlu0 %1345
      %1347 = vset.pattern.permute.xlu0 0
      %1348 = vperm.xlu0 %1347, %v1067
      %v1349 = vpop.permute.xlu0 %1348
      %1350 = vset.pattern.permute.xlu0 0
      %1351 = vperm.xlu0 %1350, %v1068
      %v1352 = vpop.permute.xlu0 %1351
      %1353 = vset.pattern.permute.xlu0 0
      %1354 = vperm.xlu0 %1353, %v1069
      %v1355 = vpop.permute.xlu0 %1354
      %1356 = vset.pattern.permute.xlu0 0
      %1357 = vperm.xlu0 %1356, %v1070
      %v1358 = vpop.permute.xlu0 %1357
      %vm1359 = vcmp.eq.s32.totalorder %v1073, %v302
      %vm1360 = vcmp.eq.s32.totalorder %v1076, %v302
      %vm1361 = vcmp.eq.s32.totalorder %v1079, %v302
      %vm1362 = vcmp.eq.s32.totalorder %v1082, %v302
      %vm1363 = vcmp.eq.s32.totalorder %v1085, %v302
      %vm1364 = vcmp.eq.s32.totalorder %v1088, %v302
      %vm1365 = vcmp.eq.s32.totalorder %v1091, %v302
      %vm1366 = vcmp.eq.s32.totalorder %v1094, %v302
      %vm1367 = vcmp.eq.s32.totalorder %v1097, %v302
      %vm1368 = vcmp.eq.s32.totalorder %v1100, %v302
      %vm1369 = vcmp.eq.s32.totalorder %v1103, %v302
      %vm1370 = vcmp.eq.s32.totalorder %v1106, %v302
      %vm1371 = vcmp.eq.s32.totalorder %v1109, %v302
      %vm1372 = vcmp.eq.s32.totalorder %v1112, %v302
      %vm1373 = vcmp.eq.s32.totalorder %v1115, %v302
      %vm1374 = vcmp.eq.s32.totalorder %v1118, %v302
      %vm1375 = vcmp.eq.s32.totalorder %v1121, %v302
      %vm1376 = vcmp.eq.s32.totalorder %v1124, %v302
      %vm1377 = vcmp.eq.s32.totalorder %v1127, %v302
      %vm1378 = vcmp.eq.s32.totalorder %v1130, %v302
      %vm1379 = vcmp.eq.s32.totalorder %v1133, %v302
      %vm1380 = vcmp.eq.s32.totalorder %v1136, %v302
      %vm1381 = vcmp.eq.s32.totalorder %v1139, %v302
      %vm1382 = vcmp.eq.s32.totalorder %v1142, %v302
      %vm1383 = vcmp.eq.s32.totalorder %v1145, %v302
      %vm1384 = vcmp.eq.s32.totalorder %v1148, %v302
      %vm1385 = vcmp.eq.s32.totalorder %v1151, %v302
      %vm1386 = vcmp.eq.s32.totalorder %v1154, %v302
      %vm1387 = vcmp.eq.s32.totalorder %v1157, %v302
      %vm1388 = vcmp.eq.s32.totalorder %v1160, %v302
      %vm1389 = vcmp.eq.s32.totalorder %v1163, %v302
      %vm1390 = vcmp.eq.s32.totalorder %v1166, %v302
      %vm1391 = vcmp.eq.s32.totalorder %v1169, %v302
      %vm1392 = vcmp.eq.s32.totalorder %v1172, %v302
      %vm1393 = vcmp.eq.s32.totalorder %v1175, %v302
      %vm1394 = vcmp.eq.s32.totalorder %v1178, %v302
      %vm1395 = vcmp.eq.s32.totalorder %v1181, %v302
      %vm1396 = vcmp.eq.s32.totalorder %v1184, %v302
      %vm1397 = vcmp.eq.s32.totalorder %v1187, %v302
      %vm1398 = vcmp.eq.s32.totalorder %v1190, %v302
      %vm1399 = vcmp.eq.s32.totalorder %v1193, %v302
      %vm1400 = vcmp.eq.s32.totalorder %v1196, %v302
      %vm1401 = vcmp.eq.s32.totalorder %v1199, %v302
      %vm1402 = vcmp.eq.s32.totalorder %v1202, %v302
      %vm1403 = vcmp.eq.s32.totalorder %v1205, %v302
      %vm1404 = vcmp.eq.s32.totalorder %v1208, %v302
      %vm1405 = vcmp.eq.s32.totalorder %v1211, %v302
      %vm1406 = vcmp.eq.s32.totalorder %v1214, %v302
      %vm1407 = vcmp.eq.s32.totalorder %v1217, %v302
      %vm1408 = vcmp.eq.s32.totalorder %v1220, %v302
      %vm1409 = vcmp.eq.s32.totalorder %v1223, %v302
      %vm1410 = vcmp.eq.s32.totalorder %v1226, %v302
      %vm1411 = vcmp.eq.s32.totalorder %v1229, %v302
      %vm1412 = vcmp.eq.s32.totalorder %v1232, %v302
      %vm1413 = vcmp.eq.s32.totalorder %v1235, %v302
      %vm1414 = vcmp.eq.s32.totalorder %v1238, %v302
      %vm1415 = vcmp.eq.s32.totalorder %v1241, %v302
      %vm1416 = vcmp.eq.s32.totalorder %v1244, %v302
      %vm1417 = vcmp.eq.s32.totalorder %v1247, %v302
      %vm1418 = vcmp.eq.s32.totalorder %v1250, %v302
      %vm1419 = vcmp.eq.s32.totalorder %v1253, %v302
      %vm1420 = vcmp.eq.s32.totalorder %v1256, %v302
      %vm1421 = vcmp.eq.s32.totalorder %v1259, %v302
      %vm1422 = vcmp.eq.s32.totalorder %v1262, %v302
      %vm1423 = vcmp.eq.s32.totalorder %v1265, %v302
      %vm1424 = vcmp.eq.s32.totalorder %v1268, %v302
      %vm1425 = vcmp.eq.s32.totalorder %v1271, %v302
      %vm1426 = vcmp.eq.s32.totalorder %v1274, %v302
      %vm1427 = vcmp.eq.s32.totalorder %v1277, %v302
      %vm1428 = vcmp.eq.s32.totalorder %v1280, %v302
      %vm1429 = vcmp.eq.s32.totalorder %v1283, %v302
      %vm1430 = vcmp.eq.s32.totalorder %v1286, %v302
      %vm1431 = vcmp.eq.s32.totalorder %v1289, %v302
      %vm1432 = vcmp.eq.s32.totalorder %v1292, %v302
      %vm1433 = vcmp.eq.s32.totalorder %v1295, %v302
      %vm1434 = vcmp.eq.s32.totalorder %v1298, %v302
      %vm1435 = vcmp.eq.s32.totalorder %v1301, %v302
      %vm1436 = vcmp.eq.s32.totalorder %v1304, %v302
      %vm1437 = vcmp.eq.s32.totalorder %v1307, %v302
      %vm1438 = vcmp.eq.s32.totalorder %v1310, %v302
      %vm1439 = vcmp.eq.s32.totalorder %v1313, %v302
      %vm1440 = vcmp.eq.s32.totalorder %v1316, %v302
      %vm1441 = vcmp.eq.s32.totalorder %v1319, %v302
      %vm1442 = vcmp.eq.s32.totalorder %v1322, %v302
      %vm1443 = vcmp.eq.s32.totalorder %v1325, %v302
      %vm1444 = vcmp.eq.s32.totalorder %v1328, %v302
      %vm1445 = vcmp.eq.s32.totalorder %v1331, %v302
      %vm1446 = vcmp.eq.s32.totalorder %v1334, %v302
      %vm1447 = vcmp.eq.s32.totalorder %v1337, %v302
      %vm1448 = vcmp.eq.s32.totalorder %v1340, %v302
      %vm1449 = vcmp.eq.s32.totalorder %v1343, %v302
      %vm1450 = vcmp.eq.s32.totalorder %v1346, %v302
      %vm1451 = vcmp.eq.s32.totalorder %v1349, %v302
      %vm1452 = vcmp.eq.s32.totalorder %v1352, %v302
      %vm1453 = vcmp.eq.s32.totalorder %v1355, %v302
      %vm1454 = vcmp.eq.s32.totalorder %v1358, %v302
      %v1455 = vsel %vm1359, 1, 0
      %v1456 = vsel %vm1360, 1, 0
      %v1457 = vsel %vm1361, 1, 0
      %v1458 = vsel %vm1362, 1, 0
      %v1459 = vsel %vm1363, 1, 0
      %v1460 = vsel %vm1364, 1, 0
      %v1461 = vsel %vm1365, 1, 0
      %v1462 = vsel %vm1366, 1, 0
      %v1463 = vsel %vm1367, 1, 0
      %v1464 = vsel %vm1368, 1, 0
      %v1465 = vsel %vm1369, 1, 0
      %v1466 = vsel %vm1370, 1, 0
      %v1467 = vsel %vm1371, 1, 0
      %v1468 = vsel %vm1372, 1, 0
      %v1469 = vsel %vm1373, 1, 0
      %v1470 = vsel %vm1374, 1, 0
      %v1471 = vsel %vm1375, 1, 0
      %v1472 = vsel %vm1376, 1, 0
      %v1473 = vsel %vm1377, 1, 0
      %v1474 = vsel %vm1378, 1, 0
      %v1475 = vsel %vm1379, 1, 0
      %v1476 = vsel %vm1380, 1, 0
      %v1477 = vsel %vm1381, 1, 0
      %v1478 = vsel %vm1382, 1, 0
      %v1479 = vsel %vm1383, 1, 0
      %v1480 = vsel %vm1384, 1, 0
      %v1481 = vsel %vm1385, 1, 0
      %v1482 = vsel %vm1386, 1, 0
      %v1483 = vsel %vm1387, 1, 0
      %v1484 = vsel %vm1388, 1, 0
      %v1485 = vsel %vm1389, 1, 0
      %v1486 = vsel %vm1390, 1, 0
      %v1487 = vsel %vm1391, 1, 0
      %v1488 = vsel %vm1392, 1, 0
      %v1489 = vsel %vm1393, 1, 0
      %v1490 = vsel %vm1394, 1, 0
      %v1491 = vsel %vm1395, 1, 0
      %v1492 = vsel %vm1396, 1, 0
      %v1493 = vsel %vm1397, 1, 0
      %v1494 = vsel %vm1398, 1, 0
      %v1495 = vsel %vm1399, 1, 0
      %v1496 = vsel %vm1400, 1, 0
      %v1497 = vsel %vm1401, 1, 0
      %v1498 = vsel %vm1402, 1, 0
      %v1499 = vsel %vm1403, 1, 0
      %v1500 = vsel %vm1404, 1, 0
      %v1501 = vsel %vm1405, 1, 0
      %v1502 = vsel %vm1406, 1, 0
      %v1503 = vsel %vm1407, 1, 0
      %v1504 = vsel %vm1408, 1, 0
      %v1505 = vsel %vm1409, 1, 0
      %v1506 = vsel %vm1410, 1, 0
      %v1507 = vsel %vm1411, 1, 0
      %v1508 = vsel %vm1412, 1, 0
      %v1509 = vsel %vm1413, 1, 0
      %v1510 = vsel %vm1414, 1, 0
      %v1511 = vsel %vm1415, 1, 0
      %v1512 = vsel %vm1416, 1, 0
      %v1513 = vsel %vm1417, 1, 0
      %v1514 = vsel %vm1418, 1, 0
      %v1515 = vsel %vm1419, 1, 0
      %v1516 = vsel %vm1420, 1, 0
      %v1517 = vsel %vm1421, 1, 0
      %v1518 = vsel %vm1422, 1, 0
      %v1519 = vsel %vm1423, 1, 0
      %v1520 = vsel %vm1424, 1, 0
      %v1521 = vsel %vm1425, 1, 0
      %v1522 = vsel %vm1426, 1, 0
      %v1523 = vsel %vm1427, 1, 0
      %v1524 = vsel %vm1428, 1, 0
      %v1525 = vsel %vm1429, 1, 0
      %v1526 = vsel %vm1430, 1, 0
      %v1527 = vsel %vm1431, 1, 0
      %v1528 = vsel %vm1432, 1, 0
      %v1529 = vsel %vm1433, 1, 0
      %v1530 = vsel %vm1434, 1, 0
      %v1531 = vsel %vm1435, 1, 0
      %v1532 = vsel %vm1436, 1, 0
      %v1533 = vsel %vm1437, 1, 0
      %v1534 = vsel %vm1438, 1, 0
      %v1535 = vsel %vm1439, 1, 0
      %v1536 = vsel %vm1440, 1, 0
      %v1537 = vsel %vm1441, 1, 0
      %v1538 = vsel %vm1442, 1, 0
      %v1539 = vsel %vm1443, 1, 0
      %v1540 = vsel %vm1444, 1, 0
      %v1541 = vsel %vm1445, 1, 0
      %v1542 = vsel %vm1446, 1, 0
      %v1543 = vsel %vm1447, 1, 0
      %v1544 = vsel %vm1448, 1, 0
      %v1545 = vsel %vm1449, 1, 0
      %v1546 = vsel %vm1450, 1, 0
      %v1547 = vsel %vm1451, 1, 0
      %v1548 = vsel %vm1452, 1, 0
      %v1549 = vsel %vm1453, 1, 0
      %v1550 = vsel %vm1454, 1, 0
      %v1551 = vcvt.s32.f32 %v1455
      %v1552 = vcvt.s32.f32 %v1456
      %v1553 = vcvt.s32.f32 %v1457
      %v1554 = vcvt.s32.f32 %v1458
      %v1555 = vcvt.s32.f32 %v1459
      %v1556 = vcvt.s32.f32 %v1460
      %v1557 = vcvt.s32.f32 %v1461
      %v1558 = vcvt.s32.f32 %v1462
      %v1559 = vcvt.s32.f32 %v1463
      %v1560 = vcvt.s32.f32 %v1464
      %v1561 = vcvt.s32.f32 %v1465
      %v1562 = vcvt.s32.f32 %v1466
      %v1563 = vcvt.s32.f32 %v1467
      %v1564 = vcvt.s32.f32 %v1468
      %v1565 = vcvt.s32.f32 %v1469
      %v1566 = vcvt.s32.f32 %v1470
      %v1567 = vcvt.s32.f32 %v1471
      %v1568 = vcvt.s32.f32 %v1472
      %v1569 = vcvt.s32.f32 %v1473
      %v1570 = vcvt.s32.f32 %v1474
      %v1571 = vcvt.s32.f32 %v1475
      %v1572 = vcvt.s32.f32 %v1476
      %v1573 = vcvt.s32.f32 %v1477
      %v1574 = vcvt.s32.f32 %v1478
      %v1575 = vcvt.s32.f32 %v1479
      %v1576 = vcvt.s32.f32 %v1480
      %v1577 = vcvt.s32.f32 %v1481
      %v1578 = vcvt.s32.f32 %v1482
      %v1579 = vcvt.s32.f32 %v1483
      %v1580 = vcvt.s32.f32 %v1484
      %v1581 = vcvt.s32.f32 %v1485
      %v1582 = vcvt.s32.f32 %v1486
      %v1583 = vcvt.s32.f32 %v1487
      %v1584 = vcvt.s32.f32 %v1488
      %v1585 = vcvt.s32.f32 %v1489
      %v1586 = vcvt.s32.f32 %v1490
      %v1587 = vcvt.s32.f32 %v1491
      %v1588 = vcvt.s32.f32 %v1492
      %v1589 = vcvt.s32.f32 %v1493
      %v1590 = vcvt.s32.f32 %v1494
      %v1591 = vcvt.s32.f32 %v1495
      %v1592 = vcvt.s32.f32 %v1496
      %v1593 = vcvt.s32.f32 %v1497
      %v1594 = vcvt.s32.f32 %v1498
      %v1595 = vcvt.s32.f32 %v1499
      %v1596 = vcvt.s32.f32 %v1500
      %v1597 = vcvt.s32.f32 %v1501
      %v1598 = vcvt.s32.f32 %v1502
      %v1599 = vcvt.s32.f32 %v1503
      %v1600 = vcvt.s32.f32 %v1504
      %v1601 = vcvt.s32.f32 %v1505
      %v1602 = vcvt.s32.f32 %v1506
      %v1603 = vcvt.s32.f32 %v1507
      %v1604 = vcvt.s32.f32 %v1508
      %v1605 = vcvt.s32.f32 %v1509
      %v1606 = vcvt.s32.f32 %v1510
      %v1607 = vcvt.s32.f32 %v1511
      %v1608 = vcvt.s32.f32 %v1512
      %v1609 = vcvt.s32.f32 %v1513
      %v1610 = vcvt.s32.f32 %v1514
      %v1611 = vcvt.s32.f32 %v1515
      %v1612 = vcvt.s32.f32 %v1516
      %v1613 = vcvt.s32.f32 %v1517
      %v1614 = vcvt.s32.f32 %v1518
      %v1615 = vcvt.s32.f32 %v1519
      %v1616 = vcvt.s32.f32 %v1520
      %v1617 = vcvt.s32.f32 %v1521
      %v1618 = vcvt.s32.f32 %v1522
      %v1619 = vcvt.s32.f32 %v1523
      %v1620 = vcvt.s32.f32 %v1524
      %v1621 = vcvt.s32.f32 %v1525
      %v1622 = vcvt.s32.f32 %v1526
      %v1623 = vcvt.s32.f32 %v1527
      %v1624 = vcvt.s32.f32 %v1528
      %v1625 = vcvt.s32.f32 %v1529
      %v1626 = vcvt.s32.f32 %v1530
      %v1627 = vcvt.s32.f32 %v1531
      %v1628 = vcvt.s32.f32 %v1532
      %v1629 = vcvt.s32.f32 %v1533
      %v1630 = vcvt.s32.f32 %v1534
      %v1631 = vcvt.s32.f32 %v1535
      %v1632 = vcvt.s32.f32 %v1536
      %v1633 = vcvt.s32.f32 %v1537
      %v1634 = vcvt.s32.f32 %v1538
      %v1635 = vcvt.s32.f32 %v1539
      %v1636 = vcvt.s32.f32 %v1540
      %v1637 = vcvt.s32.f32 %v1541
      %v1638 = vcvt.s32.f32 %v1542
      %v1639 = vcvt.s32.f32 %v1543
      %v1640 = vcvt.s32.f32 %v1544
      %v1641 = vcvt.s32.f32 %v1545
      %v1642 = vcvt.s32.f32 %v1546
      %v1643 = vcvt.s32.f32 %v1547
      %v1644 = vcvt.s32.f32 %v1548
      %v1645 = vcvt.s32.f32 %v1549
      %v1646 = vcvt.s32.f32 %v1550
      %p1647 = scmp.eq.s32.totalorder %s23, 0
      %p1648 = scmp.eq.s32.totalorder %s24, 0
      %p1649 = pnand %p1647, %p1648
      %p1650 = pneg %p1649
      // Predicated region
      $region49: #{tpu_custom_call.1} parent=47 // pred_check
        _
      $region50: #{tpu_custom_call.1} parent=47 // pred_check_branch
        %1652 = sbr.rel (%p1649) target = $region52
      $region51: #{tpu_custom_call.1} parent=47 // pred_region
        %vm1653 = vcmask 811008
        %1654 = vst.msk [vmem:[#allocation3] sm:$0x1] %vm1653, 0.0
      $region52: #{tpu_custom_call.1} parent=47 // pred_fallthru
        _
      // Predicated region
      $region53: #{tpu_custom_call.1} parent=47 // pred_check
        %p1655 = pneg %p1647
      $region54: #{tpu_custom_call.1} parent=47 // pred_check_branch
        %1657 = sbr.rel (%p1655) target = $region56
      $region55: #{tpu_custom_call.1} parent=47 // pred_region
        %v1658 = vsub.f32 %v879, %v1551
        %v1659 = vsub.f32 %v880, %v1552
        %v1660 = vsub.f32 %v881, %v1553
        %v1661 = vsub.f32 %v882, %v1554
        %v1662 = vsub.f32 %v883, %v1555
        %v1663 = vsub.f32 %v884, %v1556
        %v1664 = vsub.f32 %v885, %v1557
        %v1665 = vsub.f32 %v886, %v1558
        %v1666 = vsub.f32 %v887, %v1559
        %v1667 = vsub.f32 %v888, %v1560
        %v1668 = vsub.f32 %v889, %v1561
        %v1669 = vsub.f32 %v890, %v1562
        %v1670 = vsub.f32 %v891, %v1563
        %v1671 = vsub.f32 %v892, %v1564
        %v1672 = vsub.f32 %v893, %v1565
        %v1673 = vsub.f32 %v894, %v1566
        %v1674 = vsub.f32 %v895, %v1567
        %v1675 = vsub.f32 %v896, %v1568
        %v1676 = vsub.f32 %v897, %v1569
        %v1677 = vsub.f32 %v898, %v1570
        %v1678 = vsub.f32 %v899, %v1571
        %v1679 = vsub.f32 %v900, %v1572
        %v1680 = vsub.f32 %v901, %v1573
        %v1681 = vsub.f32 %v902, %v1574
        %v1682 = vsub.f32 %v903, %v1575
        %v1683 = vsub.f32 %v904, %v1576
        %v1684 = vsub.f32 %v905, %v1577
        %v1685 = vsub.f32 %v906, %v1578
        %v1686 = vsub.f32 %v907, %v1579
        %v1687 = vsub.f32 %v908, %v1580
        %v1688 = vsub.f32 %v909, %v1581
        %v1689 = vsub.f32 %v910, %v1582
        %v1690 = vsub.f32 %v911, %v1583
        %v1691 = vsub.f32 %v912, %v1584
        %v1692 = vsub.f32 %v913, %v1585
        %v1693 = vsub.f32 %v914, %v1586
        %v1694 = vsub.f32 %v915, %v1587
        %v1695 = vsub.f32 %v916, %v1588
        %v1696 = vsub.f32 %v917, %v1589
        %v1697 = vsub.f32 %v918, %v1590
        %v1698 = vsub.f32 %v919, %v1591
        %v1699 = vsub.f32 %v920, %v1592
        %v1700 = vsub.f32 %v921, %v1593
        %v1701 = vsub.f32 %v922, %v1594
        %v1702 = vsub.f32 %v923, %v1595
        %v1703 = vsub.f32 %v924, %v1596
        %v1704 = vsub.f32 %v925, %v1597
        %v1705 = vsub.f32 %v926, %v1598
        %v1706 = vsub.f32 %v927, %v1599
        %v1707 = vsub.f32 %v928, %v1600
        %v1708 = vsub.f32 %v929, %v1601
        %v1709 = vsub.f32 %v930, %v1602
        %v1710 = vsub.f32 %v931, %v1603
        %v1711 = vsub.f32 %v932, %v1604
        %v1712 = vsub.f32 %v933, %v1605
        %v1713 = vsub.f32 %v934, %v1606
        %v1714 = vsub.f32 %v935, %v1607
        %v1715 = vsub.f32 %v936, %v1608
        %v1716 = vsub.f32 %v937, %v1609
        %v1717 = vsub.f32 %v938, %v1610
        %v1718 = vsub.f32 %v939, %v1611
        %v1719 = vsub.f32 %v940, %v1612
        %v1720 = vsub.f32 %v941, %v1613
        %v1721 = vsub.f32 %v942, %v1614
        %v1722 = vsub.f32 %v943, %v1615
        %v1723 = vsub.f32 %v944, %v1616
        %v1724 = vsub.f32 %v945, %v1617
        %v1725 = vsub.f32 %v946, %v1618
        %v1726 = vsub.f32 %v947, %v1619
        %v1727 = vsub.f32 %v948, %v1620
        %v1728 = vsub.f32 %v949, %v1621
        %v1729 = vsub.f32 %v950, %v1622
        %v1730 = vsub.f32 %v951, %v1623
        %v1731 = vsub.f32 %v952, %v1624
        %v1732 = vsub.f32 %v953, %v1625
        %v1733 = vsub.f32 %v954, %v1626
        %v1734 = vsub.f32 %v955, %v1627
        %v1735 = vsub.f32 %v956, %v1628
        %v1736 = vsub.f32 %v957, %v1629
        %v1737 = vsub.f32 %v958, %v1630
        %v1738 = vsub.f32 %v959, %v1631
        %v1739 = vsub.f32 %v960, %v1632
        %v1740 = vsub.f32 %v961, %v1633
        %v1741 = vsub.f32 %v962, %v1634
        %v1742 = vsub.f32 %v963, %v1635
        %v1743 = vsub.f32 %v964, %v1636
        %v1744 = vsub.f32 %v965, %v1637
        %v1745 = vsub.f32 %v966, %v1638
        %v1746 = vsub.f32 %v967, %v1639
        %v1747 = vsub.f32 %v968, %v1640
        %v1748 = vsub.f32 %v969, %v1641
        %v1749 = vsub.f32 %v970, %v1642
        %v1750 = vsub.f32 %v971, %v1643
        %v1751 = vsub.f32 %v972, %v1644
        %v1752 = vsub.f32 %v973, %v1645
        %v1753 = vsub.f32 %v974, %v1646
        %v1754 = vld [vmem:[%s3] sm:$0xff]
        %v1755 = vld [vmem:[%s3 + $0x8] sm:$0xff]
        %v1756 = vld [vmem:[%s3 + $0x10] sm:$0xff]
        %v1757 = vld [vmem:[%s3 + $0x18] sm:$0xff]
        %v1758 = vld [vmem:[%s3 + $0x20] sm:$0xff]
        %v1759 = vld [vmem:[%s3 + $0x28] sm:$0xff]
        %v1760 = vld [vmem:[%s3 + $0x30] sm:$0xff]
        %v1761 = vld [vmem:[%s3 + $0x38] sm:$0xff]
        %v1762 = vld [vmem:[%s3 + $0x40] sm:$0xff]
        %v1763 = vld [vmem:[%s3 + $0x48] sm:$0xff]
        %v1764 = vld [vmem:[%s3 + $0x50] sm:$0xff]
        %v1765 = vld [vmem:[%s3 + $0x58] sm:$0xff]
        %v1766 = vld [vmem:[%s3 + $0x60] sm:$0xf]
        %v1767 = vld [vmem:[%s4] sm:$0x1]
        %v1769 = vperm.slane %v1767, 0
        %vm1771 = vcmask 818176
        %v1773 = vsel %vm1771, %v1658, 0
        %v1776 = vsel %vm1771, %v1659, 0
        %v1779 = vsel %vm1771, %v1660, 0
        %v1782 = vsel %vm1771, %v1661, 0
        %v1785 = vsel %vm1771, %v1662, 0
        %v1788 = vsel %vm1771, %v1663, 0
        %v1791 = vsel %vm1771, %v1664, 0
        %v1794 = vsel %vm1771, %v1665, 0
        %v1797 = vsel %vm1771, %v1666, 0
        %v1800 = vsel %vm1771, %v1667, 0
        %v1803 = vsel %vm1771, %v1668, 0
        %v1806 = vsel %vm1771, %v1669, 0
        %v1809 = vsel %vm1771, %v1670, 0
        %v1812 = vsel %vm1771, %v1671, 0
        %v1815 = vsel %vm1771, %v1672, 0
        %v1818 = vsel %vm1771, %v1673, 0
        %v1821 = vsel %vm1771, %v1674, 0
        %v1824 = vsel %vm1771, %v1675, 0
        %v1827 = vsel %vm1771, %v1676, 0
        %v1830 = vsel %vm1771, %v1677, 0
        %v1833 = vsel %vm1771, %v1678, 0
        %v1836 = vsel %vm1771, %v1679, 0
        %v1839 = vsel %vm1771, %v1680, 0
        %v1842 = vsel %vm1771, %v1681, 0
        %v1845 = vsel %vm1771, %v1682, 0
        %v1848 = vsel %vm1771, %v1683, 0
        %v1851 = vsel %vm1771, %v1684, 0
        %v1854 = vsel %vm1771, %v1685, 0
        %v1857 = vsel %vm1771, %v1686, 0
        %v1860 = vsel %vm1771, %v1687, 0
        %v1863 = vsel %vm1771, %v1688, 0
        %v1866 = vsel %vm1771, %v1689, 0
        %v1869 = vsel %vm1771, %v1690, 0
        %v1872 = vsel %vm1771, %v1691, 0
        %v1875 = vsel %vm1771, %v1692, 0
        %v1878 = vsel %vm1771, %v1693, 0
        %v1881 = vsel %vm1771, %v1694, 0
        %v1884 = vsel %vm1771, %v1695, 0
        %v1887 = vsel %vm1771, %v1696, 0
        %v1890 = vsel %vm1771, %v1697, 0
        %v1893 = vsel %vm1771, %v1698, 0
        %v1896 = vsel %vm1771, %v1699, 0
        %v1899 = vsel %vm1771, %v1700, 0
        %v1902 = vsel %vm1771, %v1701, 0
        %v1905 = vsel %vm1771, %v1702, 0
        %v1908 = vsel %vm1771, %v1703, 0
        %v1911 = vsel %vm1771, %v1704, 0
        %v1914 = vsel %vm1771, %v1705, 0
        %v1917 = vsel %vm1771, %v1706, 0
        %v1920 = vsel %vm1771, %v1707, 0
        %v1923 = vsel %vm1771, %v1708, 0
        %v1926 = vsel %vm1771, %v1709, 0
        %v1929 = vsel %vm1771, %v1710, 0
        %v1932 = vsel %vm1771, %v1711, 0
        %v1935 = vsel %vm1771, %v1712, 0
        %v1938 = vsel %vm1771, %v1713, 0
        %v1941 = vsel %vm1771, %v1714, 0
        %v1944 = vsel %vm1771, %v1715, 0
        %v1947 = vsel %vm1771, %v1716, 0
        %v1950 = vsel %vm1771, %v1717, 0
        %v1953 = vsel %vm1771, %v1718, 0
        %v1956 = vsel %vm1771, %v1719, 0
        %v1959 = vsel %vm1771, %v1720, 0
        %v1962 = vsel %vm1771, %v1721, 0
        %v1965 = vsel %vm1771, %v1722, 0
        %v1968 = vsel %vm1771, %v1723, 0
        %v1971 = vsel %vm1771, %v1724, 0
        %v1974 = vsel %vm1771, %v1725, 0
        %v1977 = vsel %vm1771, %v1726, 0
        %v1980 = vsel %vm1771, %v1727, 0
        %v1983 = vsel %vm1771, %v1728, 0
        %v1986 = vsel %vm1771, %v1729, 0
        %v1989 = vsel %vm1771, %v1730, 0
        %v1992 = vsel %vm1771, %v1731, 0
        %v1995 = vsel %vm1771, %v1732, 0
        %v1998 = vsel %vm1771, %v1733, 0
        %v2001 = vsel %vm1771, %v1734, 0
        %v2004 = vsel %vm1771, %v1735, 0
        %v2007 = vsel %vm1771, %v1736, 0
        %v2010 = vsel %vm1771, %v1737, 0
        %v2013 = vsel %vm1771, %v1738, 0
        %v2016 = vsel %vm1771, %v1739, 0
        %v2019 = vsel %vm1771, %v1740, 0
        %v2022 = vsel %vm1771, %v1741, 0
        %v2025 = vsel %vm1771, %v1742, 0
        %v2028 = vsel %vm1771, %v1743, 0
        %v2031 = vsel %vm1771, %v1744, 0
        %v2034 = vsel %vm1771, %v1745, 0
        %v2037 = vsel %vm1771, %v1746, 0
        %v2040 = vsel %vm1771, %v1747, 0
        %v2043 = vsel %vm1771, %v1748, 0
        %v2046 = vsel %vm1771, %v1749, 0
        %v2049 = vsel %vm1771, %v1750, 0
        %v2052 = vsel %vm1771, %v1751, 0
        %v2055 = vsel %vm1771, %v1752, 0
        %v2058 = vsel %vm1771, %v1753, 0
        %vm2060 = vcmask 1043456
        %v2062 = vsel %vm2060, %v1766, 0
        %2064 = vmatpush.msra.mxu0 0.0
        %2065 = vmatpush.msra.mxu0 0.0
        %2066 = vmatpush.msra.mxu0 0.0
        %2067 = vmatpush.msra.mxu0 %v2062
        %2068 = vmatpush.msra.mxu0 %v1765
        %2069 = vmatpush.msra.mxu0 %v1764
        %2070 = vmatpush.msra.mxu0 %v1763
        %2071 = vmatpush.msra.mxu0 %v1762
        %2072 = vmatpush.msra.mxu0 %v1761
        %2073 = vmatpush.msra.mxu0 %v1760
        %2074 = vmatpush.msra.mxu0 %v1759
        %2075 = vmatpush.msra.mxu0 %v1758
        %2076 = vmatpush.msra.mxu0 %v1757
        %2077 = vmatpush.msra.mxu0 %v1756
        %2078 = vmatpush.msra.mxu0 %v1755
        %2079 = vmatpush.msra.mxu0 %v1754
        %2080 = vmatmul.f32.gmra.mxu0 %v1773
        %v2081 = vpop.f32.mrf.mxu0
        %v2082 = vadd.f32 %v1769, %v2081
        %2083 = vmatmul.f32.gmra.mxu0 %v1776
        %v2084 = vpop.f32.mrf.mxu0
        %v2085 = vadd.f32 %v1769, %v2084
        %2086 = vmatmul.f32.gmra.mxu0 %v1779
        %v2087 = vpop.f32.mrf.mxu0
        %v2088 = vadd.f32 %v1769, %v2087
        %2089 = vmatmul.f32.gmra.mxu0 %v1782
        %v2090 = vpop.f32.mrf.mxu0
        %v2091 = vadd.f32 %v1769, %v2090
        %2092 = vmatmul.f32.gmra.mxu0 %v1785
        %v2093 = vpop.f32.mrf.mxu0
        %v2094 = vadd.f32 %v1769, %v2093
        %2095 = vmatmul.f32.gmra.mxu0 %v1788
        %v2096 = vpop.f32.mrf.mxu0
        %v2097 = vadd.f32 %v1769, %v2096
        %2098 = vmatmul.f32.gmra.mxu0 %v1791
        %v2099 = vpop.f32.mrf.mxu0
        %v2100 = vadd.f32 %v1769, %v2099
        %2101 = vmatmul.f32.gmra.mxu0 %v1794
        %v2102 = vpop.f32.mrf.mxu0
        %v2103 = vadd.f32 %v1769, %v2102
        %2104 = vmatmul.f32.gmra.mxu0 %v1797
        %v2105 = vpop.f32.mrf.mxu0
        %v2106 = vadd.f32 %v1769, %v2105
        %2107 = vmatmul.f32.gmra.mxu0 %v1800
        %v2108 = vpop.f32.mrf.mxu0
        %v2109 = vadd.f32 %v1769, %v2108
        %2110 = vmatmul.f32.gmra.mxu0 %v1803
        %v2111 = vpop.f32.mrf.mxu0
        %v2112 = vadd.f32 %v1769, %v2111
        %2113 = vmatmul.f32.gmra.mxu0 %v1806
        %v2114 = vpop.f32.mrf.mxu0
        %v2115 = vadd.f32 %v1769, %v2114
        %2116 = vmatmul.f32.gmra.mxu0 %v1809
        %v2117 = vpop.f32.mrf.mxu0
        %v2118 = vadd.f32 %v1769, %v2117
        %2119 = vmatmul.f32.gmra.mxu0 %v1812
        %v2120 = vpop.f32.mrf.mxu0
        %v2121 = vadd.f32 %v1769, %v2120
        %2122 = vmatmul.f32.gmra.mxu0 %v1815
        %v2123 = vpop.f32.mrf.mxu0
        %v2124 = vadd.f32 %v1769, %v2123
        %2125 = vmatmul.f32.gmra.mxu0 %v1818
        %v2126 = vpop.f32.mrf.mxu0
        %v2127 = vadd.f32 %v1769, %v2126
        %2128 = vmatmul.f32.gmra.mxu0 %v1821
        %v2129 = vpop.f32.mrf.mxu0
        %v2130 = vadd.f32 %v1769, %v2129
        %2131 = vmatmul.f32.gmra.mxu0 %v1824
        %v2132 = vpop.f32.mrf.mxu0
        %v2133 = vadd.f32 %v1769, %v2132
        %2134 = vmatmul.f32.gmra.mxu0 %v1827
        %v2135 = vpop.f32.mrf.mxu0
        %v2136 = vadd.f32 %v1769, %v2135
        %2137 = vmatmul.f32.gmra.mxu0 %v1830
        %v2138 = vpop.f32.mrf.mxu0
        %v2139 = vadd.f32 %v1769, %v2138
        %2140 = vmatmul.f32.gmra.mxu0 %v1833
        %v2141 = vpop.f32.mrf.mxu0
        %v2142 = vadd.f32 %v1769, %v2141
        %2143 = vmatmul.f32.gmra.mxu0 %v1836
        %v2144 = vpop.f32.mrf.mxu0
        %v2145 = vadd.f32 %v1769, %v2144
        %2146 = vmatmul.f32.gmra.mxu0 %v1839
        %v2147 = vpop.f32.mrf.mxu0
        %v2148 = vadd.f32 %v1769, %v2147
        %2149 = vmatmul.f32.gmra.mxu0 %v1842
        %v2150 = vpop.f32.mrf.mxu0
        %v2151 = vadd.f32 %v1769, %v2150
        %2152 = vmatmul.f32.gmra.mxu0 %v1845
        %v2153 = vpop.f32.mrf.mxu0
        %v2154 = vadd.f32 %v1769, %v2153
        %2155 = vmatmul.f32.gmra.mxu0 %v1848
        %v2156 = vpop.f32.mrf.mxu0
        %v2157 = vadd.f32 %v1769, %v2156
        %2158 = vmatmul.f32.gmra.mxu0 %v1851
        %v2159 = vpop.f32.mrf.mxu0
        %v2160 = vadd.f32 %v1769, %v2159
        %2161 = vmatmul.f32.gmra.mxu0 %v1854
        %v2162 = vpop.f32.mrf.mxu0
        %v2163 = vadd.f32 %v1769, %v2162
        %2164 = vmatmul.f32.gmra.mxu0 %v1857
        %v2165 = vpop.f32.mrf.mxu0
        %v2166 = vadd.f32 %v1769, %v2165
        %2167 = vmatmul.f32.gmra.mxu0 %v1860
        %v2168 = vpop.f32.mrf.mxu0
        %v2169 = vadd.f32 %v1769, %v2168
        %2170 = vmatmul.f32.gmra.mxu0 %v1863
        %v2171 = vpop.f32.mrf.mxu0
        %v2172 = vadd.f32 %v1769, %v2171
        %2173 = vmatmul.f32.gmra.mxu0 %v1866
        %v2174 = vpop.f32.mrf.mxu0
        %v2175 = vadd.f32 %v1769, %v2174
        %2176 = vmatmul.f32.gmra.mxu0 %v1869
        %v2177 = vpop.f32.mrf.mxu0
        %v2178 = vadd.f32 %v1769, %v2177
        %2179 = vmatmul.f32.gmra.mxu0 %v1872
        %v2180 = vpop.f32.mrf.mxu0
        %v2181 = vadd.f32 %v1769, %v2180
        %2182 = vmatmul.f32.gmra.mxu0 %v1875
        %v2183 = vpop.f32.mrf.mxu0
        %v2184 = vadd.f32 %v1769, %v2183
        %2185 = vmatmul.f32.gmra.mxu0 %v1878
        %v2186 = vpop.f32.mrf.mxu0
        %v2187 = vadd.f32 %v1769, %v2186
        %2188 = vmatmul.f32.gmra.mxu0 %v1881
        %v2189 = vpop.f32.mrf.mxu0
        %v2190 = vadd.f32 %v1769, %v2189
        %2191 = vmatmul.f32.gmra.mxu0 %v1884
        %v2192 = vpop.f32.mrf.mxu0
        %v2193 = vadd.f32 %v1769, %v2192
        %2194 = vmatmul.f32.gmra.mxu0 %v1887
        %v2195 = vpop.f32.mrf.mxu0
        %v2196 = vadd.f32 %v1769, %v2195
        %2197 = vmatmul.f32.gmra.mxu0 %v1890
        %v2198 = vpop.f32.mrf.mxu0
        %v2199 = vadd.f32 %v1769, %v2198
        %2200 = vmatmul.f32.gmra.mxu0 %v1893
        %v2201 = vpop.f32.mrf.mxu0
        %v2202 = vadd.f32 %v1769, %v2201
        %2203 = vmatmul.f32.gmra.mxu0 %v1896
        %v2204 = vpop.f32.mrf.mxu0
        %v2205 = vadd.f32 %v1769, %v2204
        %2206 = vmatmul.f32.gmra.mxu0 %v1899
        %v2207 = vpop.f32.mrf.mxu0
        %v2208 = vadd.f32 %v1769, %v2207
        %2209 = vmatmul.f32.gmra.mxu0 %v1902
        %v2210 = vpop.f32.mrf.mxu0
        %v2211 = vadd.f32 %v1769, %v2210
        %2212 = vmatmul.f32.gmra.mxu0 %v1905
        %v2213 = vpop.f32.mrf.mxu0
        %v2214 = vadd.f32 %v1769, %v2213
        %2215 = vmatmul.f32.gmra.mxu0 %v1908
        %v2216 = vpop.f32.mrf.mxu0
        %v2217 = vadd.f32 %v1769, %v2216
        %2218 = vmatmul.f32.gmra.mxu0 %v1911
        %v2219 = vpop.f32.mrf.mxu0
        %v2220 = vadd.f32 %v1769, %v2219
        %2221 = vmatmul.f32.gmra.mxu0 %v1914
        %v2222 = vpop.f32.mrf.mxu0
        %v2223 = vadd.f32 %v1769, %v2222
        %2224 = vmatmul.f32.gmra.mxu0 %v1917
        %v2225 = vpop.f32.mrf.mxu0
        %v2226 = vadd.f32 %v1769, %v2225
        %2227 = vmatmul.f32.gmra.mxu0 %v1920
        %v2228 = vpop.f32.mrf.mxu0
        %v2229 = vadd.f32 %v1769, %v2228
        %2230 = vmatmul.f32.gmra.mxu0 %v1923
        %v2231 = vpop.f32.mrf.mxu0
        %v2232 = vadd.f32 %v1769, %v2231
        %2233 = vmatmul.f32.gmra.mxu0 %v1926
        %v2234 = vpop.f32.mrf.mxu0
        %v2235 = vadd.f32 %v1769, %v2234
        %2236 = vmatmul.f32.gmra.mxu0 %v1929
        %v2237 = vpop.f32.mrf.mxu0
        %v2238 = vadd.f32 %v1769, %v2237
        %2239 = vmatmul.f32.gmra.mxu0 %v1932
        %v2240 = vpop.f32.mrf.mxu0
        %v2241 = vadd.f32 %v1769, %v2240
        %2242 = vmatmul.f32.gmra.mxu0 %v1935
        %v2243 = vpop.f32.mrf.mxu0
        %v2244 = vadd.f32 %v1769, %v2243
        %2245 = vmatmul.f32.gmra.mxu0 %v1938
        %v2246 = vpop.f32.mrf.mxu0
        %v2247 = vadd.f32 %v1769, %v2246
        %2248 = vmatmul.f32.gmra.mxu0 %v1941
        %v2249 = vpop.f32.mrf.mxu0
        %v2250 = vadd.f32 %v1769, %v2249
        %2251 = vmatmul.f32.gmra.mxu0 %v1944
        %v2252 = vpop.f32.mrf.mxu0
        %v2253 = vadd.f32 %v1769, %v2252
        %2254 = vmatmul.f32.gmra.mxu0 %v1947
        %v2255 = vpop.f32.mrf.mxu0
        %v2256 = vadd.f32 %v1769, %v2255
        %2257 = vmatmul.f32.gmra.mxu0 %v1950
        %v2258 = vpop.f32.mrf.mxu0
        %v2259 = vadd.f32 %v1769, %v2258
        %2260 = vmatmul.f32.gmra.mxu0 %v1953
        %v2261 = vpop.f32.mrf.mxu0
        %v2262 = vadd.f32 %v1769, %v2261
        %2263 = vmatmul.f32.gmra.mxu0 %v1956
        %v2264 = vpop.f32.mrf.mxu0
        %v2265 = vadd.f32 %v1769, %v2264
        %2266 = vmatmul.f32.gmra.mxu0 %v1959
        %v2267 = vpop.f32.mrf.mxu0
        %v2268 = vadd.f32 %v1769, %v2267
        %2269 = vmatmul.f32.gmra.mxu0 %v1962
        %v2270 = vpop.f32.mrf.mxu0
        %v2271 = vadd.f32 %v1769, %v2270
        %2272 = vmatmul.f32.gmra.mxu0 %v1965
        %v2273 = vpop.f32.mrf.mxu0
        %v2274 = vadd.f32 %v1769, %v2273
        %2275 = vmatmul.f32.gmra.mxu0 %v1968
        %v2276 = vpop.f32.mrf.mxu0
        %v2277 = vadd.f32 %v1769, %v2276
        %2278 = vmatmul.f32.gmra.mxu0 %v1971
        %v2279 = vpop.f32.mrf.mxu0
        %v2280 = vadd.f32 %v1769, %v2279
        %2281 = vmatmul.f32.gmra.mxu0 %v1974
        %v2282 = vpop.f32.mrf.mxu0
        %v2283 = vadd.f32 %v1769, %v2282
        %2284 = vmatmul.f32.gmra.mxu0 %v1977
        %v2285 = vpop.f32.mrf.mxu0
        %v2286 = vadd.f32 %v1769, %v2285
        %2287 = vmatmul.f32.gmra.mxu0 %v1980
        %v2288 = vpop.f32.mrf.mxu0
        %v2289 = vadd.f32 %v1769, %v2288
        %2290 = vmatmul.f32.gmra.mxu0 %v1983
        %v2291 = vpop.f32.mrf.mxu0
        %v2292 = vadd.f32 %v1769, %v2291
        %2293 = vmatmul.f32.gmra.mxu0 %v1986
        %v2294 = vpop.f32.mrf.mxu0
        %v2295 = vadd.f32 %v1769, %v2294
        %2296 = vmatmul.f32.gmra.mxu0 %v1989
        %v2297 = vpop.f32.mrf.mxu0
        %v2298 = vadd.f32 %v1769, %v2297
        %2299 = vmatmul.f32.gmra.mxu0 %v1992
        %v2300 = vpop.f32.mrf.mxu0
        %v2301 = vadd.f32 %v1769, %v2300
        %2302 = vmatmul.f32.gmra.mxu0 %v1995
        %v2303 = vpop.f32.mrf.mxu0
        %v2304 = vadd.f32 %v1769, %v2303
        %2305 = vmatmul.f32.gmra.mxu0 %v1998
        %v2306 = vpop.f32.mrf.mxu0
        %v2307 = vadd.f32 %v1769, %v2306
        %2308 = vmatmul.f32.gmra.mxu0 %v2001
        %v2309 = vpop.f32.mrf.mxu0
        %v2310 = vadd.f32 %v1769, %v2309
        %2311 = vmatmul.f32.gmra.mxu0 %v2004
        %v2312 = vpop.f32.mrf.mxu0
        %v2313 = vadd.f32 %v1769, %v2312
        %2314 = vmatmul.f32.gmra.mxu0 %v2007
        %v2315 = vpop.f32.mrf.mxu0
        %v2316 = vadd.f32 %v1769, %v2315
        %2317 = vmatmul.f32.gmra.mxu0 %v2010
        %v2318 = vpop.f32.mrf.mxu0
        %v2319 = vadd.f32 %v1769, %v2318
        %2320 = vmatmul.f32.gmra.mxu0 %v2013
        %v2321 = vpop.f32.mrf.mxu0
        %v2322 = vadd.f32 %v1769, %v2321
        %2323 = vmatmul.f32.gmra.mxu0 %v2016
        %v2324 = vpop.f32.mrf.mxu0
        %v2325 = vadd.f32 %v1769, %v2324
        %2326 = vmatmul.f32.gmra.mxu0 %v2019
        %v2327 = vpop.f32.mrf.mxu0
        %v2328 = vadd.f32 %v1769, %v2327
        %2329 = vmatmul.f32.gmra.mxu0 %v2022
        %v2330 = vpop.f32.mrf.mxu0
        %v2331 = vadd.f32 %v1769, %v2330
        %2332 = vmatmul.f32.gmra.mxu0 %v2025
        %v2333 = vpop.f32.mrf.mxu0
        %v2334 = vadd.f32 %v1769, %v2333
        %2335 = vmatmul.f32.gmra.mxu0 %v2028
        %v2336 = vpop.f32.mrf.mxu0
        %v2337 = vadd.f32 %v1769, %v2336
        %2338 = vmatmul.f32.gmra.mxu0 %v2031
        %v2339 = vpop.f32.mrf.mxu0
        %v2340 = vadd.f32 %v1769, %v2339
        %2341 = vmatmul.f32.gmra.mxu0 %v2034
        %v2342 = vpop.f32.mrf.mxu0
        %v2343 = vadd.f32 %v1769, %v2342
        %2344 = vmatmul.f32.gmra.mxu0 %v2037
        %v2345 = vpop.f32.mrf.mxu0
        %v2346 = vadd.f32 %v1769, %v2345
        %2347 = vmatmul.f32.gmra.mxu0 %v2040
        %v2348 = vpop.f32.mrf.mxu0
        %v2349 = vadd.f32 %v1769, %v2348
        %2350 = vmatmul.f32.gmra.mxu0 %v2043
        %v2351 = vpop.f32.mrf.mxu0
        %v2352 = vadd.f32 %v1769, %v2351
        %2353 = vmatmul.f32.gmra.mxu0 %v2046
        %v2354 = vpop.f32.mrf.mxu0
        %v2355 = vadd.f32 %v1769, %v2354
        %2356 = vmatmul.f32.gmra.mxu0 %v2049
        %v2357 = vpop.f32.mrf.mxu0
        %v2358 = vadd.f32 %v1769, %v2357
        %2359 = vmatmul.f32.gmra.mxu0 %v2052
        %v2360 = vpop.f32.mrf.mxu0
        %v2361 = vadd.f32 %v1769, %v2360
        %2362 = vmatmul.f32.gmra.mxu0 %v2055
        %v2363 = vpop.f32.mrf.mxu0
        %v2364 = vadd.f32 %v1769, %v2363
        %2365 = vmatmul.f32.gmra.mxu0 %v2058
        %v2366 = vpop.f32.mrf.mxu0
        %v2367 = vadd.f32 %v1769, %v2366
        %2368 = vdwg.mxu0
        %v2369 = vmax.f32 %v2082, 0.0
        %v2370 = vmax.f32 %v2085, 0.0
        %v2371 = vmax.f32 %v2088, 0.0
        %v2372 = vmax.f32 %v2091, 0.0
        %v2373 = vmax.f32 %v2094, 0.0
        %v2374 = vmax.f32 %v2097, 0.0
        %v2375 = vmax.f32 %v2100, 0.0
        %v2376 = vmax.f32 %v2103, 0.0
        %v2377 = vmax.f32 %v2106, 0.0
        %v2378 = vmax.f32 %v2109, 0.0
        %v2379 = vmax.f32 %v2112, 0.0
        %v2380 = vmax.f32 %v2115, 0.0
        %v2381 = vmax.f32 %v2118, 0.0
        %v2382 = vmax.f32 %v2121, 0.0
        %v2383 = vmax.f32 %v2124, 0.0
        %v2384 = vmax.f32 %v2127, 0.0
        %v2385 = vmax.f32 %v2130, 0.0
        %v2386 = vmax.f32 %v2133, 0.0
        %v2387 = vmax.f32 %v2136, 0.0
        %v2388 = vmax.f32 %v2139, 0.0
        %v2389 = vmax.f32 %v2142, 0.0
        %v2390 = vmax.f32 %v2145, 0.0
        %v2391 = vmax.f32 %v2148, 0.0
        %v2392 = vmax.f32 %v2151, 0.0
        %v2393 = vmax.f32 %v2154, 0.0
        %v2394 = vmax.f32 %v2157, 0.0
        %v2395 = vmax.f32 %v2160, 0.0
        %v2396 = vmax.f32 %v2163, 0.0
        %v2397 = vmax.f32 %v2166, 0.0
        %v2398 = vmax.f32 %v2169, 0.0
        %v2399 = vmax.f32 %v2172, 0.0
        %v2400 = vmax.f32 %v2175, 0.0
        %v2401 = vmax.f32 %v2178, 0.0
        %v2402 = vmax.f32 %v2181, 0.0
        %v2403 = vmax.f32 %v2184, 0.0
        %v2404 = vmax.f32 %v2187, 0.0
        %v2405 = vmax.f32 %v2190, 0.0
        %v2406 = vmax.f32 %v2193, 0.0
        %v2407 = vmax.f32 %v2196, 0.0
        %v2408 = vmax.f32 %v2199, 0.0
        %v2409 = vmax.f32 %v2202, 0.0
        %v2410 = vmax.f32 %v2205, 0.0
        %v2411 = vmax.f32 %v2208, 0.0
        %v2412 = vmax.f32 %v2211, 0.0
        %v2413 = vmax.f32 %v2214, 0.0
        %v2414 = vmax.f32 %v2217, 0.0
        %v2415 = vmax.f32 %v2220, 0.0
        %v2416 = vmax.f32 %v2223, 0.0
        %v2417 = vmax.f32 %v2226, 0.0
        %v2418 = vmax.f32 %v2229, 0.0
        %v2419 = vmax.f32 %v2232, 0.0
        %v2420 = vmax.f32 %v2235, 0.0
        %v2421 = vmax.f32 %v2238, 0.0
        %v2422 = vmax.f32 %v2241, 0.0
        %v2423 = vmax.f32 %v2244, 0.0
        %v2424 = vmax.f32 %v2247, 0.0
        %v2425 = vmax.f32 %v2250, 0.0
        %v2426 = vmax.f32 %v2253, 0.0
        %v2427 = vmax.f32 %v2256, 0.0
        %v2428 = vmax.f32 %v2259, 0.0
        %v2429 = vmax.f32 %v2262, 0.0
        %v2430 = vmax.f32 %v2265, 0.0
        %v2431 = vmax.f32 %v2268, 0.0
        %v2432 = vmax.f32 %v2271, 0.0
        %v2433 = vmax.f32 %v2274, 0.0
        %v2434 = vmax.f32 %v2277, 0.0
        %v2435 = vmax.f32 %v2280, 0.0
        %v2436 = vmax.f32 %v2283, 0.0
        %v2437 = vmax.f32 %v2286, 0.0
        %v2438 = vmax.f32 %v2289, 0.0
        %v2439 = vmax.f32 %v2292, 0.0
        %v2440 = vmax.f32 %v2295, 0.0
        %v2441 = vmax.f32 %v2298, 0.0
        %v2442 = vmax.f32 %v2301, 0.0
        %v2443 = vmax.f32 %v2304, 0.0
        %v2444 = vmax.f32 %v2307, 0.0
        %v2445 = vmax.f32 %v2310, 0.0
        %v2446 = vmax.f32 %v2313, 0.0
        %v2447 = vmax.f32 %v2316, 0.0
        %v2448 = vmax.f32 %v2319, 0.0
        %v2449 = vmax.f32 %v2322, 0.0
        %v2450 = vmax.f32 %v2325, 0.0
        %v2451 = vmax.f32 %v2328, 0.0
        %v2452 = vmax.f32 %v2331, 0.0
        %v2453 = vmax.f32 %v2334, 0.0
        %v2454 = vmax.f32 %v2337, 0.0
        %v2455 = vmax.f32 %v2340, 0.0
        %v2456 = vmax.f32 %v2343, 0.0
        %v2457 = vmax.f32 %v2346, 0.0
        %v2458 = vmax.f32 %v2349, 0.0
        %v2459 = vmax.f32 %v2352, 0.0
        %v2460 = vmax.f32 %v2355, 0.0
        %v2461 = vmax.f32 %v2358, 0.0
        %v2462 = vmax.f32 %v2361, 0.0
        %v2463 = vmax.f32 %v2364, 0.0
        %v2464 = vmax.f32 %v2367, 0.0
        %v2465 = vld [vmem:[%s5] sm:$0x1]
        %v2467 = vperm.slane %v2465, 0
        %v2469 = vmul.f32 %v2369, %v2467
        %v2470 = vmul.f32 %v2370, %v2467
        %v2471 = vmul.f32 %v2371, %v2467
        %v2472 = vmul.f32 %v2372, %v2467
        %v2473 = vmul.f32 %v2373, %v2467
        %v2474 = vmul.f32 %v2374, %v2467
        %v2475 = vmul.f32 %v2375, %v2467
        %v2476 = vmul.f32 %v2376, %v2467
        %v2477 = vmul.f32 %v2377, %v2467
        %v2478 = vmul.f32 %v2378, %v2467
        %v2479 = vmul.f32 %v2379, %v2467
        %v2480 = vmul.f32 %v2380, %v2467
        %v2481 = vmul.f32 %v2381, %v2467
        %v2482 = vmul.f32 %v2382, %v2467
        %v2483 = vmul.f32 %v2383, %v2467
        %v2484 = vmul.f32 %v2384, %v2467
        %v2485 = vmul.f32 %v2385, %v2467
        %v2486 = vmul.f32 %v2386, %v2467
        %v2487 = vmul.f32 %v2387, %v2467
        %v2488 = vmul.f32 %v2388, %v2467
        %v2489 = vmul.f32 %v2389, %v2467
        %v2490 = vmul.f32 %v2390, %v2467
        %v2491 = vmul.f32 %v2391, %v2467
        %v2492 = vmul.f32 %v2392, %v2467
        %v2493 = vmul.f32 %v2393, %v2467
        %v2494 = vmul.f32 %v2394, %v2467
        %v2495 = vmul.f32 %v2395, %v2467
        %v2496 = vmul.f32 %v2396, %v2467
        %v2497 = vmul.f32 %v2397, %v2467
        %v2498 = vmul.f32 %v2398, %v2467
        %v2499 = vmul.f32 %v2399, %v2467
        %v2500 = vmul.f32 %v2400, %v2467
        %v2501 = vmul.f32 %v2401, %v2467
        %v2502 = vmul.f32 %v2402, %v2467
        %v2503 = vmul.f32 %v2403, %v2467
        %v2504 = vmul.f32 %v2404, %v2467
        %v2505 = vmul.f32 %v2405, %v2467
        %v2506 = vmul.f32 %v2406, %v2467
        %v2507 = vmul.f32 %v2407, %v2467
        %v2508 = vmul.f32 %v2408, %v2467
        %v2509 = vmul.f32 %v2409, %v2467
        %v2510 = vmul.f32 %v2410, %v2467
        %v2511 = vmul.f32 %v2411, %v2467
        %v2512 = vmul.f32 %v2412, %v2467
        %v2513 = vmul.f32 %v2413, %v2467
        %v2514 = vmul.f32 %v2414, %v2467
        %v2515 = vmul.f32 %v2415, %v2467
        %v2516 = vmul.f32 %v2416, %v2467
        %v2517 = vmul.f32 %v2417, %v2467
        %v2518 = vmul.f32 %v2418, %v2467
        %v2519 = vmul.f32 %v2419, %v2467
        %v2520 = vmul.f32 %v2420, %v2467
        %v2521 = vmul.f32 %v2421, %v2467
        %v2522 = vmul.f32 %v2422, %v2467
        %v2523 = vmul.f32 %v2423, %v2467
        %v2524 = vmul.f32 %v2424, %v2467
        %v2525 = vmul.f32 %v2425, %v2467
        %v2526 = vmul.f32 %v2426, %v2467
        %v2527 = vmul.f32 %v2427, %v2467
        %v2528 = vmul.f32 %v2428, %v2467
        %v2529 = vmul.f32 %v2429, %v2467
        %v2530 = vmul.f32 %v2430, %v2467
        %v2531 = vmul.f32 %v2431, %v2467
        %v2532 = vmul.f32 %v2432, %v2467
        %v2533 = vmul.f32 %v2433, %v2467
        %v2534 = vmul.f32 %v2434, %v2467
        %v2535 = vmul.f32 %v2435, %v2467
        %v2536 = vmul.f32 %v2436, %v2467
        %v2537 = vmul.f32 %v2437, %v2467
        %v2538 = vmul.f32 %v2438, %v2467
        %v2539 = vmul.f32 %v2439, %v2467
        %v2540 = vmul.f32 %v2440, %v2467
        %v2541 = vmul.f32 %v2441, %v2467
        %v2542 = vmul.f32 %v2442, %v2467
        %v2543 = vmul.f32 %v2443, %v2467
        %v2544 = vmul.f32 %v2444, %v2467
        %v2545 = vmul.f32 %v2445, %v2467
        %v2546 = vmul.f32 %v2446, %v2467
        %v2547 = vmul.f32 %v2447, %v2467
        %v2548 = vmul.f32 %v2448, %v2467
        %v2549 = vmul.f32 %v2449, %v2467
        %v2550 = vmul.f32 %v2450, %v2467
        %v2551 = vmul.f32 %v2451, %v2467
        %v2552 = vmul.f32 %v2452, %v2467
        %v2553 = vmul.f32 %v2453, %v2467
        %v2554 = vmul.f32 %v2454, %v2467
        %v2555 = vmul.f32 %v2455, %v2467
        %v2556 = vmul.f32 %v2456, %v2467
        %v2557 = vmul.f32 %v2457, %v2467
        %v2558 = vmul.f32 %v2458, %v2467
        %v2559 = vmul.f32 %v2459, %v2467
        %v2560 = vmul.f32 %v2460, %v2467
        %v2561 = vmul.f32 %v2461, %v2467
        %v2562 = vmul.f32 %v2462, %v2467
        %v2563 = vmul.f32 %v2463, %v2467
        %v2564 = vmul.f32 %v2464, %v2467
        %vm2565 = vcmask 261120
        %v2566 = vsel %vm2565, %v2469, 0.0
        %2567 = vadd.xlane.f32.xlu0 %v2566
        %v2568 = vpop.xlane.xlu0 %2567
        %v2569 = vsel %vm2565, %v2470, 0.0
        %2570 = vadd.xlane.f32.xlu0 %v2569
        %v2571 = vpop.xlane.xlu0 %2570
        %v2572 = vsel %vm2565, %v2471, 0.0
        %2573 = vadd.xlane.f32.xlu0 %v2572
        %v2574 = vpop.xlane.xlu0 %2573
        %v2575 = vsel %vm2565, %v2472, 0.0
        %2576 = vadd.xlane.f32.xlu0 %v2575
        %v2577 = vpop.xlane.xlu0 %2576
        %v2578 = vsel %vm2565, %v2473, 0.0
        %2579 = vadd.xlane.f32.xlu0 %v2578
        %v2580 = vpop.xlane.xlu0 %2579
        %v2581 = vsel %vm2565, %v2474, 0.0
        %2582 = vadd.xlane.f32.xlu0 %v2581
        %v2583 = vpop.xlane.xlu0 %2582
        %v2584 = vsel %vm2565, %v2475, 0.0
        %2585 = vadd.xlane.f32.xlu0 %v2584
        %v2586 = vpop.xlane.xlu0 %2585
        %v2587 = vsel %vm2565, %v2476, 0.0
        %2588 = vadd.xlane.f32.xlu0 %v2587
        %v2589 = vpop.xlane.xlu0 %2588
        %v2590 = vsel %vm2565, %v2477, 0.0
        %2591 = vadd.xlane.f32.xlu0 %v2590
        %v2592 = vpop.xlane.xlu0 %2591
        %v2593 = vsel %vm2565, %v2478, 0.0
        %2594 = vadd.xlane.f32.xlu0 %v2593
        %v2595 = vpop.xlane.xlu0 %2594
        %v2596 = vsel %vm2565, %v2479, 0.0
        %2597 = vadd.xlane.f32.xlu0 %v2596
        %v2598 = vpop.xlane.xlu0 %2597
        %v2599 = vsel %vm2565, %v2480, 0.0
        %2600 = vadd.xlane.f32.xlu0 %v2599
        %v2601 = vpop.xlane.xlu0 %2600
        %v2602 = vsel %vm2565, %v2481, 0.0
        %2603 = vadd.xlane.f32.xlu0 %v2602
        %v2604 = vpop.xlane.xlu0 %2603
        %v2605 = vsel %vm2565, %v2482, 0.0
        %2606 = vadd.xlane.f32.xlu0 %v2605
        %v2607 = vpop.xlane.xlu0 %2606
        %v2608 = vsel %vm2565, %v2483, 0.0
        %2609 = vadd.xlane.f32.xlu0 %v2608
        %v2610 = vpop.xlane.xlu0 %2609
        %v2611 = vsel %vm2565, %v2484, 0.0
        %2612 = vadd.xlane.f32.xlu0 %v2611
        %v2613 = vpop.xlane.xlu0 %2612
        %v2614 = vsel %vm2565, %v2485, 0.0
        %2615 = vadd.xlane.f32.xlu0 %v2614
        %v2616 = vpop.xlane.xlu0 %2615
        %v2617 = vsel %vm2565, %v2486, 0.0
        %2618 = vadd.xlane.f32.xlu0 %v2617
        %v2619 = vpop.xlane.xlu0 %2618
        %v2620 = vsel %vm2565, %v2487, 0.0
        %2621 = vadd.xlane.f32.xlu0 %v2620
        %v2622 = vpop.xlane.xlu0 %2621
        %v2623 = vsel %vm2565, %v2488, 0.0
        %2624 = vadd.xlane.f32.xlu0 %v2623
        %v2625 = vpop.xlane.xlu0 %2624
        %v2626 = vsel %vm2565, %v2489, 0.0
        %2627 = vadd.xlane.f32.xlu0 %v2626
        %v2628 = vpop.xlane.xlu0 %2627
        %v2629 = vsel %vm2565, %v2490, 0.0
        %2630 = vadd.xlane.f32.xlu0 %v2629
        %v2631 = vpop.xlane.xlu0 %2630
        %v2632 = vsel %vm2565, %v2491, 0.0
        %2633 = vadd.xlane.f32.xlu0 %v2632
        %v2634 = vpop.xlane.xlu0 %2633
        %v2635 = vsel %vm2565, %v2492, 0.0
        %2636 = vadd.xlane.f32.xlu0 %v2635
        %v2637 = vpop.xlane.xlu0 %2636
        %v2638 = vsel %vm2565, %v2493, 0.0
        %2639 = vadd.xlane.f32.xlu0 %v2638
        %v2640 = vpop.xlane.xlu0 %2639
        %v2641 = vsel %vm2565, %v2494, 0.0
        %2642 = vadd.xlane.f32.xlu0 %v2641
        %v2643 = vpop.xlane.xlu0 %2642
        %v2644 = vsel %vm2565, %v2495, 0.0
        %2645 = vadd.xlane.f32.xlu0 %v2644
        %v2646 = vpop.xlane.xlu0 %2645
        %v2647 = vsel %vm2565, %v2496, 0.0
        %2648 = vadd.xlane.f32.xlu0 %v2647
        %v2649 = vpop.xlane.xlu0 %2648
        %v2650 = vsel %vm2565, %v2497, 0.0
        %2651 = vadd.xlane.f32.xlu0 %v2650
        %v2652 = vpop.xlane.xlu0 %2651
        %v2653 = vsel %vm2565, %v2498, 0.0
        %2654 = vadd.xlane.f32.xlu0 %v2653
        %v2655 = vpop.xlane.xlu0 %2654
        %v2656 = vsel %vm2565, %v2499, 0.0
        %2657 = vadd.xlane.f32.xlu0 %v2656
        %v2658 = vpop.xlane.xlu0 %2657
        %v2659 = vsel %vm2565, %v2500, 0.0
        %2660 = vadd.xlane.f32.xlu0 %v2659
        %v2661 = vpop.xlane.xlu0 %2660
        %v2662 = vsel %vm2565, %v2501, 0.0
        %2663 = vadd.xlane.f32.xlu0 %v2662
        %v2664 = vpop.xlane.xlu0 %2663
        %v2665 = vsel %vm2565, %v2502, 0.0
        %2666 = vadd.xlane.f32.xlu0 %v2665
        %v2667 = vpop.xlane.xlu0 %2666
        %v2668 = vsel %vm2565, %v2503, 0.0
        %2669 = vadd.xlane.f32.xlu0 %v2668
        %v2670 = vpop.xlane.xlu0 %2669
        %v2671 = vsel %vm2565, %v2504, 0.0
        %2672 = vadd.xlane.f32.xlu0 %v2671
        %v2673 = vpop.xlane.xlu0 %2672
        %v2674 = vsel %vm2565, %v2505, 0.0
        %2675 = vadd.xlane.f32.xlu0 %v2674
        %v2676 = vpop.xlane.xlu0 %2675
        %v2677 = vsel %vm2565, %v2506, 0.0
        %2678 = vadd.xlane.f32.xlu0 %v2677
        %v2679 = vpop.xlane.xlu0 %2678
        %v2680 = vsel %vm2565, %v2507, 0.0
        %2681 = vadd.xlane.f32.xlu0 %v2680
        %v2682 = vpop.xlane.xlu0 %2681
        %v2683 = vsel %vm2565, %v2508, 0.0
        %2684 = vadd.xlane.f32.xlu0 %v2683
        %v2685 = vpop.xlane.xlu0 %2684
        %v2686 = vsel %vm2565, %v2509, 0.0
        %2687 = vadd.xlane.f32.xlu0 %v2686
        %v2688 = vpop.xlane.xlu0 %2687
        %v2689 = vsel %vm2565, %v2510, 0.0
        %2690 = vadd.xlane.f32.xlu0 %v2689
        %v2691 = vpop.xlane.xlu0 %2690
        %v2692 = vsel %vm2565, %v2511, 0.0
        %2693 = vadd.xlane.f32.xlu0 %v2692
        %v2694 = vpop.xlane.xlu0 %2693
        %v2695 = vsel %vm2565, %v2512, 0.0
        %2696 = vadd.xlane.f32.xlu0 %v2695
        %v2697 = vpop.xlane.xlu0 %2696
        %v2698 = vsel %vm2565, %v2513, 0.0
        %2699 = vadd.xlane.f32.xlu0 %v2698
        %v2700 = vpop.xlane.xlu0 %2699
        %v2701 = vsel %vm2565, %v2514, 0.0
        %2702 = vadd.xlane.f32.xlu0 %v2701
        %v2703 = vpop.xlane.xlu0 %2702
        %v2704 = vsel %vm2565, %v2515, 0.0
        %2705 = vadd.xlane.f32.xlu0 %v2704
        %v2706 = vpop.xlane.xlu0 %2705
        %v2707 = vsel %vm2565, %v2516, 0.0
        %2708 = vadd.xlane.f32.xlu0 %v2707
        %v2709 = vpop.xlane.xlu0 %2708
        %v2710 = vsel %vm2565, %v2517, 0.0
        %2711 = vadd.xlane.f32.xlu0 %v2710
        %v2712 = vpop.xlane.xlu0 %2711
        %v2713 = vsel %vm2565, %v2518, 0.0
        %2714 = vadd.xlane.f32.xlu0 %v2713
        %v2715 = vpop.xlane.xlu0 %2714
        %v2716 = vsel %vm2565, %v2519, 0.0
        %2717 = vadd.xlane.f32.xlu0 %v2716
        %v2718 = vpop.xlane.xlu0 %2717
        %v2719 = vsel %vm2565, %v2520, 0.0
        %2720 = vadd.xlane.f32.xlu0 %v2719
        %v2721 = vpop.xlane.xlu0 %2720
        %v2722 = vsel %vm2565, %v2521, 0.0
        %2723 = vadd.xlane.f32.xlu0 %v2722
        %v2724 = vpop.xlane.xlu0 %2723
        %v2725 = vsel %vm2565, %v2522, 0.0
        %2726 = vadd.xlane.f32.xlu0 %v2725
        %v2727 = vpop.xlane.xlu0 %2726
        %v2728 = vsel %vm2565, %v2523, 0.0
        %2729 = vadd.xlane.f32.xlu0 %v2728
        %v2730 = vpop.xlane.xlu0 %2729
        %v2731 = vsel %vm2565, %v2524, 0.0
        %2732 = vadd.xlane.f32.xlu0 %v2731
        %v2733 = vpop.xlane.xlu0 %2732
        %v2734 = vsel %vm2565, %v2525, 0.0
        %2735 = vadd.xlane.f32.xlu0 %v2734
        %v2736 = vpop.xlane.xlu0 %2735
        %v2737 = vsel %vm2565, %v2526, 0.0
        %2738 = vadd.xlane.f32.xlu0 %v2737
        %v2739 = vpop.xlane.xlu0 %2738
        %v2740 = vsel %vm2565, %v2527, 0.0
        %2741 = vadd.xlane.f32.xlu0 %v2740
        %v2742 = vpop.xlane.xlu0 %2741
        %v2743 = vsel %vm2565, %v2528, 0.0
        %2744 = vadd.xlane.f32.xlu0 %v2743
        %v2745 = vpop.xlane.xlu0 %2744
        %v2746 = vsel %vm2565, %v2529, 0.0
        %2747 = vadd.xlane.f32.xlu0 %v2746
        %v2748 = vpop.xlane.xlu0 %2747
        %v2749 = vsel %vm2565, %v2530, 0.0
        %2750 = vadd.xlane.f32.xlu0 %v2749
        %v2751 = vpop.xlane.xlu0 %2750
        %v2752 = vsel %vm2565, %v2531, 0.0
        %2753 = vadd.xlane.f32.xlu0 %v2752
        %v2754 = vpop.xlane.xlu0 %2753
        %v2755 = vsel %vm2565, %v2532, 0.0
        %2756 = vadd.xlane.f32.xlu0 %v2755
        %v2757 = vpop.xlane.xlu0 %2756
        %v2758 = vsel %vm2565, %v2533, 0.0
        %2759 = vadd.xlane.f32.xlu0 %v2758
        %v2760 = vpop.xlane.xlu0 %2759
        %v2761 = vsel %vm2565, %v2534, 0.0
        %2762 = vadd.xlane.f32.xlu0 %v2761
        %v2763 = vpop.xlane.xlu0 %2762
        %v2764 = vsel %vm2565, %v2535, 0.0
        %2765 = vadd.xlane.f32.xlu0 %v2764
        %v2766 = vpop.xlane.xlu0 %2765
        %v2767 = vsel %vm2565, %v2536, 0.0
        %2768 = vadd.xlane.f32.xlu0 %v2767
        %v2769 = vpop.xlane.xlu0 %2768
        %v2770 = vsel %vm2565, %v2537, 0.0
        %2771 = vadd.xlane.f32.xlu0 %v2770
        %v2772 = vpop.xlane.xlu0 %2771
        %v2773 = vsel %vm2565, %v2538, 0.0
        %2774 = vadd.xlane.f32.xlu0 %v2773
        %v2775 = vpop.xlane.xlu0 %2774
        %v2776 = vsel %vm2565, %v2539, 0.0
        %2777 = vadd.xlane.f32.xlu0 %v2776
        %v2778 = vpop.xlane.xlu0 %2777
        %v2779 = vsel %vm2565, %v2540, 0.0
        %2780 = vadd.xlane.f32.xlu0 %v2779
        %v2781 = vpop.xlane.xlu0 %2780
        %v2782 = vsel %vm2565, %v2541, 0.0
        %2783 = vadd.xlane.f32.xlu0 %v2782
        %v2784 = vpop.xlane.xlu0 %2783
        %v2785 = vsel %vm2565, %v2542, 0.0
        %2786 = vadd.xlane.f32.xlu0 %v2785
        %v2787 = vpop.xlane.xlu0 %2786
        %v2788 = vsel %vm2565, %v2543, 0.0
        %2789 = vadd.xlane.f32.xlu0 %v2788
        %v2790 = vpop.xlane.xlu0 %2789
        %v2791 = vsel %vm2565, %v2544, 0.0
        %2792 = vadd.xlane.f32.xlu0 %v2791
        %v2793 = vpop.xlane.xlu0 %2792
        %v2794 = vsel %vm2565, %v2545, 0.0
        %2795 = vadd.xlane.f32.xlu0 %v2794
        %v2796 = vpop.xlane.xlu0 %2795
        %v2797 = vsel %vm2565, %v2546, 0.0
        %2798 = vadd.xlane.f32.xlu0 %v2797
        %v2799 = vpop.xlane.xlu0 %2798
        %v2800 = vsel %vm2565, %v2547, 0.0
        %2801 = vadd.xlane.f32.xlu0 %v2800
        %v2802 = vpop.xlane.xlu0 %2801
        %v2803 = vsel %vm2565, %v2548, 0.0
        %2804 = vadd.xlane.f32.xlu0 %v2803
        %v2805 = vpop.xlane.xlu0 %2804
        %v2806 = vsel %vm2565, %v2549, 0.0
        %2807 = vadd.xlane.f32.xlu0 %v2806
        %v2808 = vpop.xlane.xlu0 %2807
        %v2809 = vsel %vm2565, %v2550, 0.0
        %2810 = vadd.xlane.f32.xlu0 %v2809
        %v2811 = vpop.xlane.xlu0 %2810
        %v2812 = vsel %vm2565, %v2551, 0.0
        %2813 = vadd.xlane.f32.xlu0 %v2812
        %v2814 = vpop.xlane.xlu0 %2813
        %v2815 = vsel %vm2565, %v2552, 0.0
        %2816 = vadd.xlane.f32.xlu0 %v2815
        %v2817 = vpop.xlane.xlu0 %2816
        %v2818 = vsel %vm2565, %v2553, 0.0
        %2819 = vadd.xlane.f32.xlu0 %v2818
        %v2820 = vpop.xlane.xlu0 %2819
        %v2821 = vsel %vm2565, %v2554, 0.0
        %2822 = vadd.xlane.f32.xlu0 %v2821
        %v2823 = vpop.xlane.xlu0 %2822
        %v2824 = vsel %vm2565, %v2555, 0.0
        %2825 = vadd.xlane.f32.xlu0 %v2824
        %v2826 = vpop.xlane.xlu0 %2825
        %v2827 = vsel %vm2565, %v2556, 0.0
        %2828 = vadd.xlane.f32.xlu0 %v2827
        %v2829 = vpop.xlane.xlu0 %2828
        %v2830 = vsel %vm2565, %v2557, 0.0
        %2831 = vadd.xlane.f32.xlu0 %v2830
        %v2832 = vpop.xlane.xlu0 %2831
        %v2833 = vsel %vm2565, %v2558, 0.0
        %2834 = vadd.xlane.f32.xlu0 %v2833
        %v2835 = vpop.xlane.xlu0 %2834
        %v2836 = vsel %vm2565, %v2559, 0.0
        %2837 = vadd.xlane.f32.xlu0 %v2836
        %v2838 = vpop.xlane.xlu0 %2837
        %v2839 = vsel %vm2565, %v2560, 0.0
        %2840 = vadd.xlane.f32.xlu0 %v2839
        %v2841 = vpop.xlane.xlu0 %2840
        %v2842 = vsel %vm2565, %v2561, 0.0
        %2843 = vadd.xlane.f32.xlu0 %v2842
        %v2844 = vpop.xlane.xlu0 %2843
        %v2845 = vsel %vm2565, %v2562, 0.0
        %2846 = vadd.xlane.f32.xlu0 %v2845
        %v2847 = vpop.xlane.xlu0 %2846
        %v2848 = vsel %vm2565, %v2563, 0.0
        %2849 = vadd.xlane.f32.xlu0 %v2848
        %v2850 = vpop.xlane.xlu0 %2849
        %v2851 = vsel %vm2565, %v2564, 0.0
        %2852 = vadd.xlane.f32.xlu0 %v2851
        %v2853 = vpop.xlane.xlu0 %2852
        %s2854 = sld [smem:[#allocation5]]
        %v2855 = vstv %s2854
        %v2856 = vadd.f32 %v2568, %v2855
        %v2857 = vadd.f32 %v2571, %v2855
        %v2858 = vadd.f32 %v2574, %v2855
        %v2859 = vadd.f32 %v2577, %v2855
        %v2860 = vadd.f32 %v2580, %v2855
        %v2861 = vadd.f32 %v2583, %v2855
        %v2862 = vadd.f32 %v2586, %v2855
        %v2863 = vadd.f32 %v2589, %v2855
        %v2864 = vadd.f32 %v2592, %v2855
        %v2865 = vadd.f32 %v2595, %v2855
        %v2866 = vadd.f32 %v2598, %v2855
        %v2867 = vadd.f32 %v2601, %v2855
        %v2868 = vadd.f32 %v2604, %v2855
        %v2869 = vadd.f32 %v2607, %v2855
        %v2870 = vadd.f32 %v2610, %v2855
        %v2871 = vadd.f32 %v2613, %v2855
        %v2872 = vadd.f32 %v2616, %v2855
        %v2873 = vadd.f32 %v2619, %v2855
        %v2874 = vadd.f32 %v2622, %v2855
        %v2875 = vadd.f32 %v2625, %v2855
        %v2876 = vadd.f32 %v2628, %v2855
        %v2877 = vadd.f32 %v2631, %v2855
        %v2878 = vadd.f32 %v2634, %v2855
        %v2879 = vadd.f32 %v2637, %v2855
        %v2880 = vadd.f32 %v2640, %v2855
        %v2881 = vadd.f32 %v2643, %v2855
        %v2882 = vadd.f32 %v2646, %v2855
        %v2883 = vadd.f32 %v2649, %v2855
        %v2884 = vadd.f32 %v2652, %v2855
        %v2885 = vadd.f32 %v2655, %v2855
        %v2886 = vadd.f32 %v2658, %v2855
        %v2887 = vadd.f32 %v2661, %v2855
        %v2888 = vadd.f32 %v2664, %v2855
        %v2889 = vadd.f32 %v2667, %v2855
        %v2890 = vadd.f32 %v2670, %v2855
        %v2891 = vadd.f32 %v2673, %v2855
        %v2892 = vadd.f32 %v2676, %v2855
        %v2893 = vadd.f32 %v2679, %v2855
        %v2894 = vadd.f32 %v2682, %v2855
        %v2895 = vadd.f32 %v2685, %v2855
        %v2896 = vadd.f32 %v2688, %v2855
        %v2897 = vadd.f32 %v2691, %v2855
        %v2898 = vadd.f32 %v2694, %v2855
        %v2899 = vadd.f32 %v2697, %v2855
        %v2900 = vadd.f32 %v2700, %v2855
        %v2901 = vadd.f32 %v2703, %v2855
        %v2902 = vadd.f32 %v2706, %v2855
        %v2903 = vadd.f32 %v2709, %v2855
        %v2904 = vadd.f32 %v2712, %v2855
        %v2905 = vadd.f32 %v2715, %v2855
        %v2906 = vadd.f32 %v2718, %v2855
        %v2907 = vadd.f32 %v2721, %v2855
        %v2908 = vadd.f32 %v2724, %v2855
        %v2909 = vadd.f32 %v2727, %v2855
        %v2910 = vadd.f32 %v2730, %v2855
        %v2911 = vadd.f32 %v2733, %v2855
        %v2912 = vadd.f32 %v2736, %v2855
        %v2913 = vadd.f32 %v2739, %v2855
        %v2914 = vadd.f32 %v2742, %v2855
        %v2915 = vadd.f32 %v2745, %v2855
        %v2916 = vadd.f32 %v2748, %v2855
        %v2917 = vadd.f32 %v2751, %v2855
        %v2918 = vadd.f32 %v2754, %v2855
        %v2919 = vadd.f32 %v2757, %v2855
        %v2920 = vadd.f32 %v2760, %v2855
        %v2921 = vadd.f32 %v2763, %v2855
        %v2922 = vadd.f32 %v2766, %v2855
        %v2923 = vadd.f32 %v2769, %v2855
        %v2924 = vadd.f32 %v2772, %v2855
        %v2925 = vadd.f32 %v2775, %v2855
        %v2926 = vadd.f32 %v2778, %v2855
        %v2927 = vadd.f32 %v2781, %v2855
        %v2928 = vadd.f32 %v2784, %v2855
        %v2929 = vadd.f32 %v2787, %v2855
        %v2930 = vadd.f32 %v2790, %v2855
        %v2931 = vadd.f32 %v2793, %v2855
        %v2932 = vadd.f32 %v2796, %v2855
        %v2933 = vadd.f32 %v2799, %v2855
        %v2934 = vadd.f32 %v2802, %v2855
        %v2935 = vadd.f32 %v2805, %v2855
        %v2936 = vadd.f32 %v2808, %v2855
        %v2937 = vadd.f32 %v2811, %v2855
        %v2938 = vadd.f32 %v2814, %v2855
        %v2939 = vadd.f32 %v2817, %v2855
        %v2940 = vadd.f32 %v2820, %v2855
        %v2941 = vadd.f32 %v2823, %v2855
        %v2942 = vadd.f32 %v2826, %v2855
        %v2943 = vadd.f32 %v2829, %v2855
        %v2944 = vadd.f32 %v2832, %v2855
        %v2945 = vadd.f32 %v2835, %v2855
        %v2946 = vadd.f32 %v2838, %v2855
        %v2947 = vadd.f32 %v2841, %v2855
        %v2948 = vadd.f32 %v2844, %v2855
        %v2949 = vadd.f32 %v2847, %v2855
        %v2950 = vadd.f32 %v2850, %v2855
        %v2951 = vadd.f32 %v2853, %v2855
        %v2952 = vmax.f32 %v2856, 0.0
        %v2953 = vmax.f32 %v2857, 0.0
        %v2954 = vmax.f32 %v2858, 0.0
        %v2955 = vmax.f32 %v2859, 0.0
        %v2956 = vmax.f32 %v2860, 0.0
        %v2957 = vmax.f32 %v2861, 0.0
        %v2958 = vmax.f32 %v2862, 0.0
        %v2959 = vmax.f32 %v2863, 0.0
        %v2960 = vmax.f32 %v2864, 0.0
        %v2961 = vmax.f32 %v2865, 0.0
        %v2962 = vmax.f32 %v2866, 0.0
        %v2963 = vmax.f32 %v2867, 0.0
        %v2964 = vmax.f32 %v2868, 0.0
        %v2965 = vmax.f32 %v2869, 0.0
        %v2966 = vmax.f32 %v2870, 0.0
        %v2967 = vmax.f32 %v2871, 0.0
        %v2968 = vmax.f32 %v2872, 0.0
        %v2969 = vmax.f32 %v2873, 0.0
        %v2970 = vmax.f32 %v2874, 0.0
        %v2971 = vmax.f32 %v2875, 0.0
        %v2972 = vmax.f32 %v2876, 0.0
        %v2973 = vmax.f32 %v2877, 0.0
        %v2974 = vmax.f32 %v2878, 0.0
        %v2975 = vmax.f32 %v2879, 0.0
        %v2976 = vmax.f32 %v2880, 0.0
        %v2977 = vmax.f32 %v2881, 0.0
        %v2978 = vmax.f32 %v2882, 0.0
        %v2979 = vmax.f32 %v2883, 0.0
        %v2980 = vmax.f32 %v2884, 0.0
        %v2981 = vmax.f32 %v2885, 0.0
        %v2982 = vmax.f32 %v2886, 0.0
        %v2983 = vmax.f32 %v2887, 0.0
        %v2984 = vmax.f32 %v2888, 0.0
        %v2985 = vmax.f32 %v2889, 0.0
        %v2986 = vmax.f32 %v2890, 0.0
        %v2987 = vmax.f32 %v2891, 0.0
        %v2988 = vmax.f32 %v2892, 0.0
        %v2989 = vmax.f32 %v2893, 0.0
        %v2990 = vmax.f32 %v2894, 0.0
        %v2991 = vmax.f32 %v2895, 0.0
        %v2992 = vmax.f32 %v2896, 0.0
        %v2993 = vmax.f32 %v2897, 0.0
        %v2994 = vmax.f32 %v2898, 0.0
        %v2995 = vmax.f32 %v2899, 0.0
        %v2996 = vmax.f32 %v2900, 0.0
        %v2997 = vmax.f32 %v2901, 0.0
        %v2998 = vmax.f32 %v2902, 0.0
        %v2999 = vmax.f32 %v2903, 0.0
        %v3000 = vmax.f32 %v2904, 0.0
        %v3001 = vmax.f32 %v2905, 0.0
        %v3002 = vmax.f32 %v2906, 0.0
        %v3003 = vmax.f32 %v2907, 0.0
        %v3004 = vmax.f32 %v2908, 0.0
        %v3005 = vmax.f32 %v2909, 0.0
        %v3006 = vmax.f32 %v2910, 0.0
        %v3007 = vmax.f32 %v2911, 0.0
        %v3008 = vmax.f32 %v2912, 0.0
        %v3009 = vmax.f32 %v2913, 0.0
        %v3010 = vmax.f32 %v2914, 0.0
        %v3011 = vmax.f32 %v2915, 0.0
        %v3012 = vmax.f32 %v2916, 0.0
        %v3013 = vmax.f32 %v2917, 0.0
        %v3014 = vmax.f32 %v2918, 0.0
        %v3015 = vmax.f32 %v2919, 0.0
        %v3016 = vmax.f32 %v2920, 0.0
        %v3017 = vmax.f32 %v2921, 0.0
        %v3018 = vmax.f32 %v2922, 0.0
        %v3019 = vmax.f32 %v2923, 0.0
        %v3020 = vmax.f32 %v2924, 0.0
        %v3021 = vmax.f32 %v2925, 0.0
        %v3022 = vmax.f32 %v2926, 0.0
        %v3023 = vmax.f32 %v2927, 0.0
        %v3024 = vmax.f32 %v2928, 0.0
        %v3025 = vmax.f32 %v2929, 0.0
        %v3026 = vmax.f32 %v2930, 0.0
        %v3027 = vmax.f32 %v2931, 0.0
        %v3028 = vmax.f32 %v2932, 0.0
        %v3029 = vmax.f32 %v2933, 0.0
        %v3030 = vmax.f32 %v2934, 0.0
        %v3031 = vmax.f32 %v2935, 0.0
        %v3032 = vmax.f32 %v2936, 0.0
        %v3033 = vmax.f32 %v2937, 0.0
        %v3034 = vmax.f32 %v2938, 0.0
        %v3035 = vmax.f32 %v2939, 0.0
        %v3036 = vmax.f32 %v2940, 0.0
        %v3037 = vmax.f32 %v2941, 0.0
        %v3038 = vmax.f32 %v2942, 0.0
        %v3039 = vmax.f32 %v2943, 0.0
        %v3040 = vmax.f32 %v2944, 0.0
        %v3041 = vmax.f32 %v2945, 0.0
        %v3042 = vmax.f32 %v2946, 0.0
        %v3043 = vmax.f32 %v2947, 0.0
        %v3044 = vmax.f32 %v2948, 0.0
        %v3045 = vmax.f32 %v2949, 0.0
        %v3046 = vmax.f32 %v2950, 0.0
        %v3047 = vmax.f32 %v2951, 0.0
        %v3048 = vsub.f32 0.0, %v2952
        %v3049 = vsub.f32 0.0, %v2953
        %v3050 = vsub.f32 0.0, %v2954
        %v3051 = vsub.f32 0.0, %v2955
        %v3052 = vsub.f32 0.0, %v2956
        %v3053 = vsub.f32 0.0, %v2957
        %v3054 = vsub.f32 0.0, %v2958
        %v3055 = vsub.f32 0.0, %v2959
        %v3056 = vsub.f32 0.0, %v2960
        %v3057 = vsub.f32 0.0, %v2961
        %v3058 = vsub.f32 0.0, %v2962
        %v3059 = vsub.f32 0.0, %v2963
        %v3060 = vsub.f32 0.0, %v2964
        %v3061 = vsub.f32 0.0, %v2965
        %v3062 = vsub.f32 0.0, %v2966
        %v3063 = vsub.f32 0.0, %v2967
        %v3064 = vsub.f32 0.0, %v2968
        %v3065 = vsub.f32 0.0, %v2969
        %v3066 = vsub.f32 0.0, %v2970
        %v3067 = vsub.f32 0.0, %v2971
        %v3068 = vsub.f32 0.0, %v2972
        %v3069 = vsub.f32 0.0, %v2973
        %v3070 = vsub.f32 0.0, %v2974
        %v3071 = vsub.f32 0.0, %v2975
        %v3072 = vsub.f32 0.0, %v2976
        %v3073 = vsub.f32 0.0, %v2977
        %v3074 = vsub.f32 0.0, %v2978
        %v3075 = vsub.f32 0.0, %v2979
        %v3076 = vsub.f32 0.0, %v2980
        %v3077 = vsub.f32 0.0, %v2981
        %v3078 = vsub.f32 0.0, %v2982
        %v3079 = vsub.f32 0.0, %v2983
        %v3080 = vsub.f32 0.0, %v2984
        %v3081 = vsub.f32 0.0, %v2985
        %v3082 = vsub.f32 0.0, %v2986
        %v3083 = vsub.f32 0.0, %v2987
        %v3084 = vsub.f32 0.0, %v2988
        %v3085 = vsub.f32 0.0, %v2989
        %v3086 = vsub.f32 0.0, %v2990
        %v3087 = vsub.f32 0.0, %v2991
        %v3088 = vsub.f32 0.0, %v2992
        %v3089 = vsub.f32 0.0, %v2993
        %v3090 = vsub.f32 0.0, %v2994
        %v3091 = vsub.f32 0.0, %v2995
        %v3092 = vsub.f32 0.0, %v2996
        %v3093 = vsub.f32 0.0, %v2997
        %v3094 = vsub.f32 0.0, %v2998
        %v3095 = vsub.f32 0.0, %v2999
        %v3096 = vsub.f32 0.0, %v3000
        %v3097 = vsub.f32 0.0, %v3001
        %v3098 = vsub.f32 0.0, %v3002
        %v3099 = vsub.f32 0.0, %v3003
        %v3100 = vsub.f32 0.0, %v3004
        %v3101 = vsub.f32 0.0, %v3005
        %v3102 = vsub.f32 0.0, %v3006
        %v3103 = vsub.f32 0.0, %v3007
        %v3104 = vsub.f32 0.0, %v3008
        %v3105 = vsub.f32 0.0, %v3009
        %v3106 = vsub.f32 0.0, %v3010
        %v3107 = vsub.f32 0.0, %v3011
        %v3108 = vsub.f32 0.0, %v3012
        %v3109 = vsub.f32 0.0, %v3013
        %v3110 = vsub.f32 0.0, %v3014
        %v3111 = vsub.f32 0.0, %v3015
        %v3112 = vsub.f32 0.0, %v3016
        %v3113 = vsub.f32 0.0, %v3017
        %v3114 = vsub.f32 0.0, %v3018
        %v3115 = vsub.f32 0.0, %v3019
        %v3116 = vsub.f32 0.0, %v3020
        %v3117 = vsub.f32 0.0, %v3021
        %v3118 = vsub.f32 0.0, %v3022
        %v3119 = vsub.f32 0.0, %v3023
        %v3120 = vsub.f32 0.0, %v3024
        %v3121 = vsub.f32 0.0, %v3025
        %v3122 = vsub.f32 0.0, %v3026
        %v3123 = vsub.f32 0.0, %v3027
        %v3124 = vsub.f32 0.0, %v3028
        %v3125 = vsub.f32 0.0, %v3029
        %v3126 = vsub.f32 0.0, %v3030
        %v3127 = vsub.f32 0.0, %v3031
        %v3128 = vsub.f32 0.0, %v3032
        %v3129 = vsub.f32 0.0, %v3033
        %v3130 = vsub.f32 0.0, %v3034
        %v3131 = vsub.f32 0.0, %v3035
        %v3132 = vsub.f32 0.0, %v3036
        %v3133 = vsub.f32 0.0, %v3037
        %v3134 = vsub.f32 0.0, %v3038
        %v3135 = vsub.f32 0.0, %v3039
        %v3136 = vsub.f32 0.0, %v3040
        %v3137 = vsub.f32 0.0, %v3041
        %v3138 = vsub.f32 0.0, %v3042
        %v3139 = vsub.f32 0.0, %v3043
        %v3140 = vsub.f32 0.0, %v3044
        %v3141 = vsub.f32 0.0, %v3045
        %v3142 = vsub.f32 0.0, %v3046
        %v3143 = vsub.f32 0.0, %v3047
        %v3144 = vmul.f32 %v3048, 1.442695
        %v3145 = vpow.pop %v3144
        %v3146 = vmul.f32 %v3049, 1.442695
        %v3147 = vpow.pop %v3146
        %v3148 = vmul.f32 %v3050, 1.442695
        %v3149 = vpow.pop %v3148
        %v3150 = vmul.f32 %v3051, 1.442695
        %v3151 = vpow.pop %v3150
        %v3152 = vmul.f32 %v3052, 1.442695
        %v3153 = vpow.pop %v3152
        %v3154 = vmul.f32 %v3053, 1.442695
        %v3155 = vpow.pop %v3154
        %v3156 = vmul.f32 %v3054, 1.442695
        %v3157 = vpow.pop %v3156
        %v3158 = vmul.f32 %v3055, 1.442695
        %v3159 = vpow.pop %v3158
        %v3160 = vmul.f32 %v3056, 1.442695
        %v3161 = vpow.pop %v3160
        %v3162 = vmul.f32 %v3057, 1.442695
        %v3163 = vpow.pop %v3162
        %v3164 = vmul.f32 %v3058, 1.442695
        %v3165 = vpow.pop %v3164
        %v3166 = vmul.f32 %v3059, 1.442695
        %v3167 = vpow.pop %v3166
        %v3168 = vmul.f32 %v3060, 1.442695
        %v3169 = vpow.pop %v3168
        %v3170 = vmul.f32 %v3061, 1.442695
        %v3171 = vpow.pop %v3170
        %v3172 = vmul.f32 %v3062, 1.442695
        %v3173 = vpow.pop %v3172
        %v3174 = vmul.f32 %v3063, 1.442695
        %v3175 = vpow.pop %v3174
        %v3176 = vmul.f32 %v3064, 1.442695
        %v3177 = vpow.pop %v3176
        %v3178 = vmul.f32 %v3065, 1.442695
        %v3179 = vpow.pop %v3178
        %v3180 = vmul.f32 %v3066, 1.442695
        %v3181 = vpow.pop %v3180
        %v3182 = vmul.f32 %v3067, 1.442695
        %v3183 = vpow.pop %v3182
        %v3184 = vmul.f32 %v3068, 1.442695
        %v3185 = vpow.pop %v3184
        %v3186 = vmul.f32 %v3069, 1.442695
        %v3187 = vpow.pop %v3186
        %v3188 = vmul.f32 %v3070, 1.442695
        %v3189 = vpow.pop %v3188
        %v3190 = vmul.f32 %v3071, 1.442695
        %v3191 = vpow.pop %v3190
        %v3192 = vmul.f32 %v3072, 1.442695
        %v3193 = vpow.pop %v3192
        %v3194 = vmul.f32 %v3073, 1.442695
        %v3195 = vpow.pop %v3194
        %v3196 = vmul.f32 %v3074, 1.442695
        %v3197 = vpow.pop %v3196
        %v3198 = vmul.f32 %v3075, 1.442695
        %v3199 = vpow.pop %v3198
        %v3200 = vmul.f32 %v3076, 1.442695
        %v3201 = vpow.pop %v3200
        %v3202 = vmul.f32 %v3077, 1.442695
        %v3203 = vpow.pop %v3202
        %v3204 = vmul.f32 %v3078, 1.442695
        %v3205 = vpow.pop %v3204
        %v3206 = vmul.f32 %v3079, 1.442695
        %v3207 = vpow.pop %v3206
        %v3208 = vmul.f32 %v3080, 1.442695
        %v3209 = vpow.pop %v3208
        %v3210 = vmul.f32 %v3081, 1.442695
        %v3211 = vpow.pop %v3210
        %v3212 = vmul.f32 %v3082, 1.442695
        %v3213 = vpow.pop %v3212
        %v3214 = vmul.f32 %v3083, 1.442695
        %v3215 = vpow.pop %v3214
        %v3216 = vmul.f32 %v3084, 1.442695
        %v3217 = vpow.pop %v3216
        %v3218 = vmul.f32 %v3085, 1.442695
        %v3219 = vpow.pop %v3218
        %v3220 = vmul.f32 %v3086, 1.442695
        %v3221 = vpow.pop %v3220
        %v3222 = vmul.f32 %v3087, 1.442695
        %v3223 = vpow.pop %v3222
        %v3224 = vmul.f32 %v3088, 1.442695
        %v3225 = vpow.pop %v3224
        %v3226 = vmul.f32 %v3089, 1.442695
        %v3227 = vpow.pop %v3226
        %v3228 = vmul.f32 %v3090, 1.442695
        %v3229 = vpow.pop %v3228
        %v3230 = vmul.f32 %v3091, 1.442695
        %v3231 = vpow.pop %v3230
        %v3232 = vmul.f32 %v3092, 1.442695
        %v3233 = vpow.pop %v3232
        %v3234 = vmul.f32 %v3093, 1.442695
        %v3235 = vpow.pop %v3234
        %v3236 = vmul.f32 %v3094, 1.442695
        %v3237 = vpow.pop %v3236
        %v3238 = vmul.f32 %v3095, 1.442695
        %v3239 = vpow.pop %v3238
        %v3240 = vmul.f32 %v3096, 1.442695
        %v3241 = vpow.pop %v3240
        %v3242 = vmul.f32 %v3097, 1.442695
        %v3243 = vpow.pop %v3242
        %v3244 = vmul.f32 %v3098, 1.442695
        %v3245 = vpow.pop %v3244
        %v3246 = vmul.f32 %v3099, 1.442695
        %v3247 = vpow.pop %v3246
        %v3248 = vmul.f32 %v3100, 1.442695
        %v3249 = vpow.pop %v3248
        %v3250 = vmul.f32 %v3101, 1.442695
        %v3251 = vpow.pop %v3250
        %v3252 = vmul.f32 %v3102, 1.442695
        %v3253 = vpow.pop %v3252
        %v3254 = vmul.f32 %v3103, 1.442695
        %v3255 = vpow.pop %v3254
        %v3256 = vmul.f32 %v3104, 1.442695
        %v3257 = vpow.pop %v3256
        %v3258 = vmul.f32 %v3105, 1.442695
        %v3259 = vpow.pop %v3258
        %v3260 = vmul.f32 %v3106, 1.442695
        %v3261 = vpow.pop %v3260
        %v3262 = vmul.f32 %v3107, 1.442695
        %v3263 = vpow.pop %v3262
        %v3264 = vmul.f32 %v3108, 1.442695
        %v3265 = vpow.pop %v3264
        %v3266 = vmul.f32 %v3109, 1.442695
        %v3267 = vpow.pop %v3266
        %v3268 = vmul.f32 %v3110, 1.442695
        %v3269 = vpow.pop %v3268
        %v3270 = vmul.f32 %v3111, 1.442695
        %v3271 = vpow.pop %v3270
        %v3272 = vmul.f32 %v3112, 1.442695
        %v3273 = vpow.pop %v3272
        %v3274 = vmul.f32 %v3113, 1.442695
        %v3275 = vpow.pop %v3274
        %v3276 = vmul.f32 %v3114, 1.442695
        %v3277 = vpow.pop %v3276
        %v3278 = vmul.f32 %v3115, 1.442695
        %v3279 = vpow.pop %v3278
        %v3280 = vmul.f32 %v3116, 1.442695
        %v3281 = vpow.pop %v3280
        %v3282 = vmul.f32 %v3117, 1.442695
        %v3283 = vpow.pop %v3282
        %v3284 = vmul.f32 %v3118, 1.442695
        %v3285 = vpow.pop %v3284
        %v3286 = vmul.f32 %v3119, 1.442695
        %v3287 = vpow.pop %v3286
        %v3288 = vmul.f32 %v3120, 1.442695
        %v3289 = vpow.pop %v3288
        %v3290 = vmul.f32 %v3121, 1.442695
        %v3291 = vpow.pop %v3290
        %v3292 = vmul.f32 %v3122, 1.442695
        %v3293 = vpow.pop %v3292
        %v3294 = vmul.f32 %v3123, 1.442695
        %v3295 = vpow.pop %v3294
        %v3296 = vmul.f32 %v3124, 1.442695
        %v3297 = vpow.pop %v3296
        %v3298 = vmul.f32 %v3125, 1.442695
        %v3299 = vpow.pop %v3298
        %v3300 = vmul.f32 %v3126, 1.442695
        %v3301 = vpow.pop %v3300
        %v3302 = vmul.f32 %v3127, 1.442695
        %v3303 = vpow.pop %v3302
        %v3304 = vmul.f32 %v3128, 1.442695
        %v3305 = vpow.pop %v3304
        %v3306 = vmul.f32 %v3129, 1.442695
        %v3307 = vpow.pop %v3306
        %v3308 = vmul.f32 %v3130, 1.442695
        %v3309 = vpow.pop %v3308
        %v3310 = vmul.f32 %v3131, 1.442695
        %v3311 = vpow.pop %v3310
        %v3312 = vmul.f32 %v3132, 1.442695
        %v3313 = vpow.pop %v3312
        %v3314 = vmul.f32 %v3133, 1.442695
        %v3315 = vpow.pop %v3314
        %v3316 = vmul.f32 %v3134, 1.442695
        %v3317 = vpow.pop %v3316
        %v3318 = vmul.f32 %v3135, 1.442695
        %v3319 = vpow.pop %v3318
        %v3320 = vmul.f32 %v3136, 1.442695
        %v3321 = vpow.pop %v3320
        %v3322 = vmul.f32 %v3137, 1.442695
        %v3323 = vpow.pop %v3322
        %v3324 = vmul.f32 %v3138, 1.442695
        %v3325 = vpow.pop %v3324
        %v3326 = vmul.f32 %v3139, 1.442695
        %v3327 = vpow.pop %v3326
        %v3328 = vmul.f32 %v3140, 1.442695
        %v3329 = vpow.pop %v3328
        %v3330 = vmul.f32 %v3141, 1.442695
        %v3331 = vpow.pop %v3330
        %v3332 = vmul.f32 %v3142, 1.442695
        %v3333 = vpow.pop %v3332
        %v3334 = vmul.f32 %v3143, 1.442695
        %v3335 = vpow.pop %v3334
        %v3336 = vadd.f32 %v3145, 1.0
        %v3337 = vadd.f32 %v3147, 1.0
        %v3338 = vadd.f32 %v3149, 1.0
        %v3339 = vadd.f32 %v3151, 1.0
        %v3340 = vadd.f32 %v3153, 1.0
        %v3341 = vadd.f32 %v3155, 1.0
        %v3342 = vadd.f32 %v3157, 1.0
        %v3343 = vadd.f32 %v3159, 1.0
        %v3344 = vadd.f32 %v3161, 1.0
        %v3345 = vadd.f32 %v3163, 1.0
        %v3346 = vadd.f32 %v3165, 1.0
        %v3347 = vadd.f32 %v3167, 1.0
        %v3348 = vadd.f32 %v3169, 1.0
        %v3349 = vadd.f32 %v3171, 1.0
        %v3350 = vadd.f32 %v3173, 1.0
        %v3351 = vadd.f32 %v3175, 1.0
        %v3352 = vadd.f32 %v3177, 1.0
        %v3353 = vadd.f32 %v3179, 1.0
        %v3354 = vadd.f32 %v3181, 1.0
        %v3355 = vadd.f32 %v3183, 1.0
        %v3356 = vadd.f32 %v3185, 1.0
        %v3357 = vadd.f32 %v3187, 1.0
        %v3358 = vadd.f32 %v3189, 1.0
        %v3359 = vadd.f32 %v3191, 1.0
        %v3360 = vadd.f32 %v3193, 1.0
        %v3361 = vadd.f32 %v3195, 1.0
        %v3362 = vadd.f32 %v3197, 1.0
        %v3363 = vadd.f32 %v3199, 1.0
        %v3364 = vadd.f32 %v3201, 1.0
        %v3365 = vadd.f32 %v3203, 1.0
        %v3366 = vadd.f32 %v3205, 1.0
        %v3367 = vadd.f32 %v3207, 1.0
        %v3368 = vadd.f32 %v3209, 1.0
        %v3369 = vadd.f32 %v3211, 1.0
        %v3370 = vadd.f32 %v3213, 1.0
        %v3371 = vadd.f32 %v3215, 1.0
        %v3372 = vadd.f32 %v3217, 1.0
        %v3373 = vadd.f32 %v3219, 1.0
        %v3374 = vadd.f32 %v3221, 1.0
        %v3375 = vadd.f32 %v3223, 1.0
        %v3376 = vadd.f32 %v3225, 1.0
        %v3377 = vadd.f32 %v3227, 1.0
        %v3378 = vadd.f32 %v3229, 1.0
        %v3379 = vadd.f32 %v3231, 1.0
        %v3380 = vadd.f32 %v3233, 1.0
        %v3381 = vadd.f32 %v3235, 1.0
        %v3382 = vadd.f32 %v3237, 1.0
        %v3383 = vadd.f32 %v3239, 1.0
        %v3384 = vadd.f32 %v3241, 1.0
        %v3385 = vadd.f32 %v3243, 1.0
        %v3386 = vadd.f32 %v3245, 1.0
        %v3387 = vadd.f32 %v3247, 1.0
        %v3388 = vadd.f32 %v3249, 1.0
        %v3389 = vadd.f32 %v3251, 1.0
        %v3390 = vadd.f32 %v3253, 1.0
        %v3391 = vadd.f32 %v3255, 1.0
        %v3392 = vadd.f32 %v3257, 1.0
        %v3393 = vadd.f32 %v3259, 1.0
        %v3394 = vadd.f32 %v3261, 1.0
        %v3395 = vadd.f32 %v3263, 1.0
        %v3396 = vadd.f32 %v3265, 1.0
        %v3397 = vadd.f32 %v3267, 1.0
        %v3398 = vadd.f32 %v3269, 1.0
        %v3399 = vadd.f32 %v3271, 1.0
        %v3400 = vadd.f32 %v3273, 1.0
        %v3401 = vadd.f32 %v3275, 1.0
        %v3402 = vadd.f32 %v3277, 1.0
        %v3403 = vadd.f32 %v3279, 1.0
        %v3404 = vadd.f32 %v3281, 1.0
        %v3405 = vadd.f32 %v3283, 1.0
        %v3406 = vadd.f32 %v3285, 1.0
        %v3407 = vadd.f32 %v3287, 1.0
        %v3408 = vadd.f32 %v3289, 1.0
        %v3409 = vadd.f32 %v3291, 1.0
        %v3410 = vadd.f32 %v3293, 1.0
        %v3411 = vadd.f32 %v3295, 1.0
        %v3412 = vadd.f32 %v3297, 1.0
        %v3413 = vadd.f32 %v3299, 1.0
        %v3414 = vadd.f32 %v3301, 1.0
        %v3415 = vadd.f32 %v3303, 1.0
        %v3416 = vadd.f32 %v3305, 1.0
        %v3417 = vadd.f32 %v3307, 1.0
        %v3418 = vadd.f32 %v3309, 1.0
        %v3419 = vadd.f32 %v3311, 1.0
        %v3420 = vadd.f32 %v3313, 1.0
        %v3421 = vadd.f32 %v3315, 1.0
        %v3422 = vadd.f32 %v3317, 1.0
        %v3423 = vadd.f32 %v3319, 1.0
        %v3424 = vadd.f32 %v3321, 1.0
        %v3425 = vadd.f32 %v3323, 1.0
        %v3426 = vadd.f32 %v3325, 1.0
        %v3427 = vadd.f32 %v3327, 1.0
        %v3428 = vadd.f32 %v3329, 1.0
        %v3429 = vadd.f32 %v3331, 1.0
        %v3430 = vadd.f32 %v3333, 1.0
        %v3431 = vadd.f32 %v3335, 1.0
        %v3432 = vrcp.pop %v3336
        %v3433 = vmul.f32 %v3336, %v3432
        %v3434 = vsub.f32 1.0, %v3433
        %v3435 = vmul.f32 %v3432, %v3434
        %v3436 = vadd.f32 %v3432, %v3435
        %vm3437 = vweird.f32 %v3336
        %vm3438 = vweird.f32 %v3432
        %vm3439 = vmor %vm3437, %vm3438
        %v3440 = vsel %vm3439, %v3432, %v3436
        %v3441 = vand.u32 2147483647, %v3336
        %vm3442 = vcmp.eq.f32.partialorder %v3441, 8.507059e+37
        %v3443 = vand.u32 %v3336, 2147483648
        %v3444 = vor.u32 1.1754944e-38, %v3443
        %v3445 = vsel %vm3442, %v3444, %v3440
        %v3446 = vmul.f32 1.0, %v3445
        %v3447 = vrcp.pop %v3337
        %v3448 = vmul.f32 %v3337, %v3447
        %v3449 = vsub.f32 1.0, %v3448
        %v3450 = vmul.f32 %v3447, %v3449
        %v3451 = vadd.f32 %v3447, %v3450
        %vm3452 = vweird.f32 %v3337
        %vm3453 = vweird.f32 %v3447
        %vm3454 = vmor %vm3452, %vm3453
        %v3455 = vsel %vm3454, %v3447, %v3451
        %v3456 = vand.u32 2147483647, %v3337
        %vm3457 = vcmp.eq.f32.partialorder %v3456, 8.507059e+37
        %v3458 = vand.u32 %v3337, 2147483648
        %v3459 = vor.u32 1.1754944e-38, %v3458
        %v3460 = vsel %vm3457, %v3459, %v3455
        %v3461 = vmul.f32 1.0, %v3460
        %v3462 = vrcp.pop %v3338
        %v3463 = vmul.f32 %v3338, %v3462
        %v3464 = vsub.f32 1.0, %v3463
        %v3465 = vmul.f32 %v3462, %v3464
        %v3466 = vadd.f32 %v3462, %v3465
        %vm3467 = vweird.f32 %v3338
        %vm3468 = vweird.f32 %v3462
        %vm3469 = vmor %vm3467, %vm3468
        %v3470 = vsel %vm3469, %v3462, %v3466
        %v3471 = vand.u32 2147483647, %v3338
        %vm3472 = vcmp.eq.f32.partialorder %v3471, 8.507059e+37
        %v3473 = vand.u32 %v3338, 2147483648
        %v3474 = vor.u32 1.1754944e-38, %v3473
        %v3475 = vsel %vm3472, %v3474, %v3470
        %v3476 = vmul.f32 1.0, %v3475
        %v3477 = vrcp.pop %v3339
        %v3478 = vmul.f32 %v3339, %v3477
        %v3479 = vsub.f32 1.0, %v3478
        %v3480 = vmul.f32 %v3477, %v3479
        %v3481 = vadd.f32 %v3477, %v3480
        %vm3482 = vweird.f32 %v3339
        %vm3483 = vweird.f32 %v3477
        %vm3484 = vmor %vm3482, %vm3483
        %v3485 = vsel %vm3484, %v3477, %v3481
        %v3486 = vand.u32 2147483647, %v3339
        %vm3487 = vcmp.eq.f32.partialorder %v3486, 8.507059e+37
        %v3488 = vand.u32 %v3339, 2147483648
        %v3489 = vor.u32 1.1754944e-38, %v3488
        %v3490 = vsel %vm3487, %v3489, %v3485
        %v3491 = vmul.f32 1.0, %v3490
        %v3492 = vrcp.pop %v3340
        %v3493 = vmul.f32 %v3340, %v3492
        %v3494 = vsub.f32 1.0, %v3493
        %v3495 = vmul.f32 %v3492, %v3494
        %v3496 = vadd.f32 %v3492, %v3495
        %vm3497 = vweird.f32 %v3340
        %vm3498 = vweird.f32 %v3492
        %vm3499 = vmor %vm3497, %vm3498
        %v3500 = vsel %vm3499, %v3492, %v3496
        %v3501 = vand.u32 2147483647, %v3340
        %vm3502 = vcmp.eq.f32.partialorder %v3501, 8.507059e+37
        %v3503 = vand.u32 %v3340, 2147483648
        %v3504 = vor.u32 1.1754944e-38, %v3503
        %v3505 = vsel %vm3502, %v3504, %v3500
        %v3506 = vmul.f32 1.0, %v3505
        %v3507 = vrcp.pop %v3341
        %v3508 = vmul.f32 %v3341, %v3507
        %v3509 = vsub.f32 1.0, %v3508
        %v3510 = vmul.f32 %v3507, %v3509
        %v3511 = vadd.f32 %v3507, %v3510
        %vm3512 = vweird.f32 %v3341
        %vm3513 = vweird.f32 %v3507
        %vm3514 = vmor %vm3512, %vm3513
        %v3515 = vsel %vm3514, %v3507, %v3511
        %v3516 = vand.u32 2147483647, %v3341
        %vm3517 = vcmp.eq.f32.partialorder %v3516, 8.507059e+37
        %v3518 = vand.u32 %v3341, 2147483648
        %v3519 = vor.u32 1.1754944e-38, %v3518
        %v3520 = vsel %vm3517, %v3519, %v3515
        %v3521 = vmul.f32 1.0, %v3520
        %v3522 = vrcp.pop %v3342
        %v3523 = vmul.f32 %v3342, %v3522
        %v3524 = vsub.f32 1.0, %v3523
        %v3525 = vmul.f32 %v3522, %v3524
        %v3526 = vadd.f32 %v3522, %v3525
        %vm3527 = vweird.f32 %v3342
        %vm3528 = vweird.f32 %v3522
        %vm3529 = vmor %vm3527, %vm3528
        %v3530 = vsel %vm3529, %v3522, %v3526
        %v3531 = vand.u32 2147483647, %v3342
        %vm3532 = vcmp.eq.f32.partialorder %v3531, 8.507059e+37
        %v3533 = vand.u32 %v3342, 2147483648
        %v3534 = vor.u32 1.1754944e-38, %v3533
        %v3535 = vsel %vm3532, %v3534, %v3530
        %v3536 = vmul.f32 1.0, %v3535
        %v3537 = vrcp.pop %v3343
        %v3538 = vmul.f32 %v3343, %v3537
        %v3539 = vsub.f32 1.0, %v3538
        %v3540 = vmul.f32 %v3537, %v3539
        %v3541 = vadd.f32 %v3537, %v3540
        %vm3542 = vweird.f32 %v3343
        %vm3543 = vweird.f32 %v3537
        %vm3544 = vmor %vm3542, %vm3543
        %v3545 = vsel %vm3544, %v3537, %v3541
        %v3546 = vand.u32 2147483647, %v3343
        %vm3547 = vcmp.eq.f32.partialorder %v3546, 8.507059e+37
        %v3548 = vand.u32 %v3343, 2147483648
        %v3549 = vor.u32 1.1754944e-38, %v3548
        %v3550 = vsel %vm3547, %v3549, %v3545
        %v3551 = vmul.f32 1.0, %v3550
        %v3552 = vrcp.pop %v3344
        %v3553 = vmul.f32 %v3344, %v3552
        %v3554 = vsub.f32 1.0, %v3553
        %v3555 = vmul.f32 %v3552, %v3554
        %v3556 = vadd.f32 %v3552, %v3555
        %vm3557 = vweird.f32 %v3344
        %vm3558 = vweird.f32 %v3552
        %vm3559 = vmor %vm3557, %vm3558
        %v3560 = vsel %vm3559, %v3552, %v3556
        %v3561 = vand.u32 2147483647, %v3344
        %vm3562 = vcmp.eq.f32.partialorder %v3561, 8.507059e+37
        %v3563 = vand.u32 %v3344, 2147483648
        %v3564 = vor.u32 1.1754944e-38, %v3563
        %v3565 = vsel %vm3562, %v3564, %v3560
        %v3566 = vmul.f32 1.0, %v3565
        %v3567 = vrcp.pop %v3345
        %v3568 = vmul.f32 %v3345, %v3567
        %v3569 = vsub.f32 1.0, %v3568
        %v3570 = vmul.f32 %v3567, %v3569
        %v3571 = vadd.f32 %v3567, %v3570
        %vm3572 = vweird.f32 %v3345
        %vm3573 = vweird.f32 %v3567
        %vm3574 = vmor %vm3572, %vm3573
        %v3575 = vsel %vm3574, %v3567, %v3571
        %v3576 = vand.u32 2147483647, %v3345
        %vm3577 = vcmp.eq.f32.partialorder %v3576, 8.507059e+37
        %v3578 = vand.u32 %v3345, 2147483648
        %v3579 = vor.u32 1.1754944e-38, %v3578
        %v3580 = vsel %vm3577, %v3579, %v3575
        %v3581 = vmul.f32 1.0, %v3580
        %v3582 = vrcp.pop %v3346
        %v3583 = vmul.f32 %v3346, %v3582
        %v3584 = vsub.f32 1.0, %v3583
        %v3585 = vmul.f32 %v3582, %v3584
        %v3586 = vadd.f32 %v3582, %v3585
        %vm3587 = vweird.f32 %v3346
        %vm3588 = vweird.f32 %v3582
        %vm3589 = vmor %vm3587, %vm3588
        %v3590 = vsel %vm3589, %v3582, %v3586
        %v3591 = vand.u32 2147483647, %v3346
        %vm3592 = vcmp.eq.f32.partialorder %v3591, 8.507059e+37
        %v3593 = vand.u32 %v3346, 2147483648
        %v3594 = vor.u32 1.1754944e-38, %v3593
        %v3595 = vsel %vm3592, %v3594, %v3590
        %v3596 = vmul.f32 1.0, %v3595
        %v3597 = vrcp.pop %v3347
        %v3598 = vmul.f32 %v3347, %v3597
        %v3599 = vsub.f32 1.0, %v3598
        %v3600 = vmul.f32 %v3597, %v3599
        %v3601 = vadd.f32 %v3597, %v3600
        %vm3602 = vweird.f32 %v3347
        %vm3603 = vweird.f32 %v3597
        %vm3604 = vmor %vm3602, %vm3603
        %v3605 = vsel %vm3604, %v3597, %v3601
        %v3606 = vand.u32 2147483647, %v3347
        %vm3607 = vcmp.eq.f32.partialorder %v3606, 8.507059e+37
        %v3608 = vand.u32 %v3347, 2147483648
        %v3609 = vor.u32 1.1754944e-38, %v3608
        %v3610 = vsel %vm3607, %v3609, %v3605
        %v3611 = vmul.f32 1.0, %v3610
        %v3612 = vrcp.pop %v3348
        %v3613 = vmul.f32 %v3348, %v3612
        %v3614 = vsub.f32 1.0, %v3613
        %v3615 = vmul.f32 %v3612, %v3614
        %v3616 = vadd.f32 %v3612, %v3615
        %vm3617 = vweird.f32 %v3348
        %vm3618 = vweird.f32 %v3612
        %vm3619 = vmor %vm3617, %vm3618
        %v3620 = vsel %vm3619, %v3612, %v3616
        %v3621 = vand.u32 2147483647, %v3348
        %vm3622 = vcmp.eq.f32.partialorder %v3621, 8.507059e+37
        %v3623 = vand.u32 %v3348, 2147483648
        %v3624 = vor.u32 1.1754944e-38, %v3623
        %v3625 = vsel %vm3622, %v3624, %v3620
        %v3626 = vmul.f32 1.0, %v3625
        %v3627 = vrcp.pop %v3349
        %v3628 = vmul.f32 %v3349, %v3627
        %v3629 = vsub.f32 1.0, %v3628
        %v3630 = vmul.f32 %v3627, %v3629
        %v3631 = vadd.f32 %v3627, %v3630
        %vm3632 = vweird.f32 %v3349
        %vm3633 = vweird.f32 %v3627
        %vm3634 = vmor %vm3632, %vm3633
        %v3635 = vsel %vm3634, %v3627, %v3631
        %v3636 = vand.u32 2147483647, %v3349
        %vm3637 = vcmp.eq.f32.partialorder %v3636, 8.507059e+37
        %v3638 = vand.u32 %v3349, 2147483648
        %v3639 = vor.u32 1.1754944e-38, %v3638
        %v3640 = vsel %vm3637, %v3639, %v3635
        %v3641 = vmul.f32 1.0, %v3640
        %v3642 = vrcp.pop %v3350
        %v3643 = vmul.f32 %v3350, %v3642
        %v3644 = vsub.f32 1.0, %v3643
        %v3645 = vmul.f32 %v3642, %v3644
        %v3646 = vadd.f32 %v3642, %v3645
        %vm3647 = vweird.f32 %v3350
        %vm3648 = vweird.f32 %v3642
        %vm3649 = vmor %vm3647, %vm3648
        %v3650 = vsel %vm3649, %v3642, %v3646
        %v3651 = vand.u32 2147483647, %v3350
        %vm3652 = vcmp.eq.f32.partialorder %v3651, 8.507059e+37
        %v3653 = vand.u32 %v3350, 2147483648
        %v3654 = vor.u32 1.1754944e-38, %v3653
        %v3655 = vsel %vm3652, %v3654, %v3650
        %v3656 = vmul.f32 1.0, %v3655
        %v3657 = vrcp.pop %v3351
        %v3658 = vmul.f32 %v3351, %v3657
        %v3659 = vsub.f32 1.0, %v3658
        %v3660 = vmul.f32 %v3657, %v3659
        %v3661 = vadd.f32 %v3657, %v3660
        %vm3662 = vweird.f32 %v3351
        %vm3663 = vweird.f32 %v3657
        %vm3664 = vmor %vm3662, %vm3663
        %v3665 = vsel %vm3664, %v3657, %v3661
        %v3666 = vand.u32 2147483647, %v3351
        %vm3667 = vcmp.eq.f32.partialorder %v3666, 8.507059e+37
        %v3668 = vand.u32 %v3351, 2147483648
        %v3669 = vor.u32 1.1754944e-38, %v3668
        %v3670 = vsel %vm3667, %v3669, %v3665
        %v3671 = vmul.f32 1.0, %v3670
        %v3672 = vrcp.pop %v3352
        %v3673 = vmul.f32 %v3352, %v3672
        %v3674 = vsub.f32 1.0, %v3673
        %v3675 = vmul.f32 %v3672, %v3674
        %v3676 = vadd.f32 %v3672, %v3675
        %vm3677 = vweird.f32 %v3352
        %vm3678 = vweird.f32 %v3672
        %vm3679 = vmor %vm3677, %vm3678
        %v3680 = vsel %vm3679, %v3672, %v3676
        %v3681 = vand.u32 2147483647, %v3352
        %vm3682 = vcmp.eq.f32.partialorder %v3681, 8.507059e+37
        %v3683 = vand.u32 %v3352, 2147483648
        %v3684 = vor.u32 1.1754944e-38, %v3683
        %v3685 = vsel %vm3682, %v3684, %v3680
        %v3686 = vmul.f32 1.0, %v3685
        %v3687 = vrcp.pop %v3353
        %v3688 = vmul.f32 %v3353, %v3687
        %v3689 = vsub.f32 1.0, %v3688
        %v3690 = vmul.f32 %v3687, %v3689
        %v3691 = vadd.f32 %v3687, %v3690
        %vm3692 = vweird.f32 %v3353
        %vm3693 = vweird.f32 %v3687
        %vm3694 = vmor %vm3692, %vm3693
        %v3695 = vsel %vm3694, %v3687, %v3691
        %v3696 = vand.u32 2147483647, %v3353
        %vm3697 = vcmp.eq.f32.partialorder %v3696, 8.507059e+37
        %v3698 = vand.u32 %v3353, 2147483648
        %v3699 = vor.u32 1.1754944e-38, %v3698
        %v3700 = vsel %vm3697, %v3699, %v3695
        %v3701 = vmul.f32 1.0, %v3700
        %v3702 = vrcp.pop %v3354
        %v3703 = vmul.f32 %v3354, %v3702
        %v3704 = vsub.f32 1.0, %v3703
        %v3705 = vmul.f32 %v3702, %v3704
        %v3706 = vadd.f32 %v3702, %v3705
        %vm3707 = vweird.f32 %v3354
        %vm3708 = vweird.f32 %v3702
        %vm3709 = vmor %vm3707, %vm3708
        %v3710 = vsel %vm3709, %v3702, %v3706
        %v3711 = vand.u32 2147483647, %v3354
        %vm3712 = vcmp.eq.f32.partialorder %v3711, 8.507059e+37
        %v3713 = vand.u32 %v3354, 2147483648
        %v3714 = vor.u32 1.1754944e-38, %v3713
        %v3715 = vsel %vm3712, %v3714, %v3710
        %v3716 = vmul.f32 1.0, %v3715
        %v3717 = vrcp.pop %v3355
        %v3718 = vmul.f32 %v3355, %v3717
        %v3719 = vsub.f32 1.0, %v3718
        %v3720 = vmul.f32 %v3717, %v3719
        %v3721 = vadd.f32 %v3717, %v3720
        %vm3722 = vweird.f32 %v3355
        %vm3723 = vweird.f32 %v3717
        %vm3724 = vmor %vm3722, %vm3723
        %v3725 = vsel %vm3724, %v3717, %v3721
        %v3726 = vand.u32 2147483647, %v3355
        %vm3727 = vcmp.eq.f32.partialorder %v3726, 8.507059e+37
        %v3728 = vand.u32 %v3355, 2147483648
        %v3729 = vor.u32 1.1754944e-38, %v3728
        %v3730 = vsel %vm3727, %v3729, %v3725
        %v3731 = vmul.f32 1.0, %v3730
        %v3732 = vrcp.pop %v3356
        %v3733 = vmul.f32 %v3356, %v3732
        %v3734 = vsub.f32 1.0, %v3733
        %v3735 = vmul.f32 %v3732, %v3734
        %v3736 = vadd.f32 %v3732, %v3735
        %vm3737 = vweird.f32 %v3356
        %vm3738 = vweird.f32 %v3732
        %vm3739 = vmor %vm3737, %vm3738
        %v3740 = vsel %vm3739, %v3732, %v3736
        %v3741 = vand.u32 2147483647, %v3356
        %vm3742 = vcmp.eq.f32.partialorder %v3741, 8.507059e+37
        %v3743 = vand.u32 %v3356, 2147483648
        %v3744 = vor.u32 1.1754944e-38, %v3743
        %v3745 = vsel %vm3742, %v3744, %v3740
        %v3746 = vmul.f32 1.0, %v3745
        %v3747 = vrcp.pop %v3357
        %v3748 = vmul.f32 %v3357, %v3747
        %v3749 = vsub.f32 1.0, %v3748
        %v3750 = vmul.f32 %v3747, %v3749
        %v3751 = vadd.f32 %v3747, %v3750
        %vm3752 = vweird.f32 %v3357
        %vm3753 = vweird.f32 %v3747
        %vm3754 = vmor %vm3752, %vm3753
        %v3755 = vsel %vm3754, %v3747, %v3751
        %v3756 = vand.u32 2147483647, %v3357
        %vm3757 = vcmp.eq.f32.partialorder %v3756, 8.507059e+37
        %v3758 = vand.u32 %v3357, 2147483648
        %v3759 = vor.u32 1.1754944e-38, %v3758
        %v3760 = vsel %vm3757, %v3759, %v3755
        %v3761 = vmul.f32 1.0, %v3760
        %v3762 = vrcp.pop %v3358
        %v3763 = vmul.f32 %v3358, %v3762
        %v3764 = vsub.f32 1.0, %v3763
        %v3765 = vmul.f32 %v3762, %v3764
        %v3766 = vadd.f32 %v3762, %v3765
        %vm3767 = vweird.f32 %v3358
        %vm3768 = vweird.f32 %v3762
        %vm3769 = vmor %vm3767, %vm3768
        %v3770 = vsel %vm3769, %v3762, %v3766
        %v3771 = vand.u32 2147483647, %v3358
        %vm3772 = vcmp.eq.f32.partialorder %v3771, 8.507059e+37
        %v3773 = vand.u32 %v3358, 2147483648
        %v3774 = vor.u32 1.1754944e-38, %v3773
        %v3775 = vsel %vm3772, %v3774, %v3770
        %v3776 = vmul.f32 1.0, %v3775
        %v3777 = vrcp.pop %v3359
        %v3778 = vmul.f32 %v3359, %v3777
        %v3779 = vsub.f32 1.0, %v3778
        %v3780 = vmul.f32 %v3777, %v3779
        %v3781 = vadd.f32 %v3777, %v3780
        %vm3782 = vweird.f32 %v3359
        %vm3783 = vweird.f32 %v3777
        %vm3784 = vmor %vm3782, %vm3783
        %v3785 = vsel %vm3784, %v3777, %v3781
        %v3786 = vand.u32 2147483647, %v3359
        %vm3787 = vcmp.eq.f32.partialorder %v3786, 8.507059e+37
        %v3788 = vand.u32 %v3359, 2147483648
        %v3789 = vor.u32 1.1754944e-38, %v3788
        %v3790 = vsel %vm3787, %v3789, %v3785
        %v3791 = vmul.f32 1.0, %v3790
        %v3792 = vrcp.pop %v3360
        %v3793 = vmul.f32 %v3360, %v3792
        %v3794 = vsub.f32 1.0, %v3793
        %v3795 = vmul.f32 %v3792, %v3794
        %v3796 = vadd.f32 %v3792, %v3795
        %vm3797 = vweird.f32 %v3360
        %vm3798 = vweird.f32 %v3792
        %vm3799 = vmor %vm3797, %vm3798
        %v3800 = vsel %vm3799, %v3792, %v3796
        %v3801 = vand.u32 2147483647, %v3360
        %vm3802 = vcmp.eq.f32.partialorder %v3801, 8.507059e+37
        %v3803 = vand.u32 %v3360, 2147483648
        %v3804 = vor.u32 1.1754944e-38, %v3803
        %v3805 = vsel %vm3802, %v3804, %v3800
        %v3806 = vmul.f32 1.0, %v3805
        %v3807 = vrcp.pop %v3361
        %v3808 = vmul.f32 %v3361, %v3807
        %v3809 = vsub.f32 1.0, %v3808
        %v3810 = vmul.f32 %v3807, %v3809
        %v3811 = vadd.f32 %v3807, %v3810
        %vm3812 = vweird.f32 %v3361
        %vm3813 = vweird.f32 %v3807
        %vm3814 = vmor %vm3812, %vm3813
        %v3815 = vsel %vm3814, %v3807, %v3811
        %v3816 = vand.u32 2147483647, %v3361
        %vm3817 = vcmp.eq.f32.partialorder %v3816, 8.507059e+37
        %v3818 = vand.u32 %v3361, 2147483648
        %v3819 = vor.u32 1.1754944e-38, %v3818
        %v3820 = vsel %vm3817, %v3819, %v3815
        %v3821 = vmul.f32 1.0, %v3820
        %v3822 = vrcp.pop %v3362
        %v3823 = vmul.f32 %v3362, %v3822
        %v3824 = vsub.f32 1.0, %v3823
        %v3825 = vmul.f32 %v3822, %v3824
        %v3826 = vadd.f32 %v3822, %v3825
        %vm3827 = vweird.f32 %v3362
        %vm3828 = vweird.f32 %v3822
        %vm3829 = vmor %vm3827, %vm3828
        %v3830 = vsel %vm3829, %v3822, %v3826
        %v3831 = vand.u32 2147483647, %v3362
        %vm3832 = vcmp.eq.f32.partialorder %v3831, 8.507059e+37
        %v3833 = vand.u32 %v3362, 2147483648
        %v3834 = vor.u32 1.1754944e-38, %v3833
        %v3835 = vsel %vm3832, %v3834, %v3830
        %v3836 = vmul.f32 1.0, %v3835
        %v3837 = vrcp.pop %v3363
        %v3838 = vmul.f32 %v3363, %v3837
        %v3839 = vsub.f32 1.0, %v3838
        %v3840 = vmul.f32 %v3837, %v3839
        %v3841 = vadd.f32 %v3837, %v3840
        %vm3842 = vweird.f32 %v3363
        %vm3843 = vweird.f32 %v3837
        %vm3844 = vmor %vm3842, %vm3843
        %v3845 = vsel %vm3844, %v3837, %v3841
        %v3846 = vand.u32 2147483647, %v3363
        %vm3847 = vcmp.eq.f32.partialorder %v3846, 8.507059e+37
        %v3848 = vand.u32 %v3363, 2147483648
        %v3849 = vor.u32 1.1754944e-38, %v3848
        %v3850 = vsel %vm3847, %v3849, %v3845
        %v3851 = vmul.f32 1.0, %v3850
        %v3852 = vrcp.pop %v3364
        %v3853 = vmul.f32 %v3364, %v3852
        %v3854 = vsub.f32 1.0, %v3853
        %v3855 = vmul.f32 %v3852, %v3854
        %v3856 = vadd.f32 %v3852, %v3855
        %vm3857 = vweird.f32 %v3364
        %vm3858 = vweird.f32 %v3852
        %vm3859 = vmor %vm3857, %vm3858
        %v3860 = vsel %vm3859, %v3852, %v3856
        %v3861 = vand.u32 2147483647, %v3364
        %vm3862 = vcmp.eq.f32.partialorder %v3861, 8.507059e+37
        %v3863 = vand.u32 %v3364, 2147483648
        %v3864 = vor.u32 1.1754944e-38, %v3863
        %v3865 = vsel %vm3862, %v3864, %v3860
        %v3866 = vmul.f32 1.0, %v3865
        %v3867 = vrcp.pop %v3365
        %v3868 = vmul.f32 %v3365, %v3867
        %v3869 = vsub.f32 1.0, %v3868
        %v3870 = vmul.f32 %v3867, %v3869
        %v3871 = vadd.f32 %v3867, %v3870
        %vm3872 = vweird.f32 %v3365
        %vm3873 = vweird.f32 %v3867
        %vm3874 = vmor %vm3872, %vm3873
        %v3875 = vsel %vm3874, %v3867, %v3871
        %v3876 = vand.u32 2147483647, %v3365
        %vm3877 = vcmp.eq.f32.partialorder %v3876, 8.507059e+37
        %v3878 = vand.u32 %v3365, 2147483648
        %v3879 = vor.u32 1.1754944e-38, %v3878
        %v3880 = vsel %vm3877, %v3879, %v3875
        %v3881 = vmul.f32 1.0, %v3880
        %v3882 = vrcp.pop %v3366
        %v3883 = vmul.f32 %v3366, %v3882
        %v3884 = vsub.f32 1.0, %v3883
        %v3885 = vmul.f32 %v3882, %v3884
        %v3886 = vadd.f32 %v3882, %v3885
        %vm3887 = vweird.f32 %v3366
        %vm3888 = vweird.f32 %v3882
        %vm3889 = vmor %vm3887, %vm3888
        %v3890 = vsel %vm3889, %v3882, %v3886
        %v3891 = vand.u32 2147483647, %v3366
        %vm3892 = vcmp.eq.f32.partialorder %v3891, 8.507059e+37
        %v3893 = vand.u32 %v3366, 2147483648
        %v3894 = vor.u32 1.1754944e-38, %v3893
        %v3895 = vsel %vm3892, %v3894, %v3890
        %v3896 = vmul.f32 1.0, %v3895
        %v3897 = vrcp.pop %v3367
        %v3898 = vmul.f32 %v3367, %v3897
        %v3899 = vsub.f32 1.0, %v3898
        %v3900 = vmul.f32 %v3897, %v3899
        %v3901 = vadd.f32 %v3897, %v3900
        %vm3902 = vweird.f32 %v3367
        %vm3903 = vweird.f32 %v3897
        %vm3904 = vmor %vm3902, %vm3903
        %v3905 = vsel %vm3904, %v3897, %v3901
        %v3906 = vand.u32 2147483647, %v3367
        %vm3907 = vcmp.eq.f32.partialorder %v3906, 8.507059e+37
        %v3908 = vand.u32 %v3367, 2147483648
        %v3909 = vor.u32 1.1754944e-38, %v3908
        %v3910 = vsel %vm3907, %v3909, %v3905
        %v3911 = vmul.f32 1.0, %v3910
        %v3912 = vrcp.pop %v3368
        %v3913 = vmul.f32 %v3368, %v3912
        %v3914 = vsub.f32 1.0, %v3913
        %v3915 = vmul.f32 %v3912, %v3914
        %v3916 = vadd.f32 %v3912, %v3915
        %vm3917 = vweird.f32 %v3368
        %vm3918 = vweird.f32 %v3912
        %vm3919 = vmor %vm3917, %vm3918
        %v3920 = vsel %vm3919, %v3912, %v3916
        %v3921 = vand.u32 2147483647, %v3368
        %vm3922 = vcmp.eq.f32.partialorder %v3921, 8.507059e+37
        %v3923 = vand.u32 %v3368, 2147483648
        %v3924 = vor.u32 1.1754944e-38, %v3923
        %v3925 = vsel %vm3922, %v3924, %v3920
        %v3926 = vmul.f32 1.0, %v3925
        %v3927 = vrcp.pop %v3369
        %v3928 = vmul.f32 %v3369, %v3927
        %v3929 = vsub.f32 1.0, %v3928
        %v3930 = vmul.f32 %v3927, %v3929
        %v3931 = vadd.f32 %v3927, %v3930
        %vm3932 = vweird.f32 %v3369
        %vm3933 = vweird.f32 %v3927
        %vm3934 = vmor %vm3932, %vm3933
        %v3935 = vsel %vm3934, %v3927, %v3931
        %v3936 = vand.u32 2147483647, %v3369
        %vm3937 = vcmp.eq.f32.partialorder %v3936, 8.507059e+37
        %v3938 = vand.u32 %v3369, 2147483648
        %v3939 = vor.u32 1.1754944e-38, %v3938
        %v3940 = vsel %vm3937, %v3939, %v3935
        %v3941 = vmul.f32 1.0, %v3940
        %v3942 = vrcp.pop %v3370
        %v3943 = vmul.f32 %v3370, %v3942
        %v3944 = vsub.f32 1.0, %v3943
        %v3945 = vmul.f32 %v3942, %v3944
        %v3946 = vadd.f32 %v3942, %v3945
        %vm3947 = vweird.f32 %v3370
        %vm3948 = vweird.f32 %v3942
        %vm3949 = vmor %vm3947, %vm3948
        %v3950 = vsel %vm3949, %v3942, %v3946
        %v3951 = vand.u32 2147483647, %v3370
        %vm3952 = vcmp.eq.f32.partialorder %v3951, 8.507059e+37
        %v3953 = vand.u32 %v3370, 2147483648
        %v3954 = vor.u32 1.1754944e-38, %v3953
        %v3955 = vsel %vm3952, %v3954, %v3950
        %v3956 = vmul.f32 1.0, %v3955
        %v3957 = vrcp.pop %v3371
        %v3958 = vmul.f32 %v3371, %v3957
        %v3959 = vsub.f32 1.0, %v3958
        %v3960 = vmul.f32 %v3957, %v3959
        %v3961 = vadd.f32 %v3957, %v3960
        %vm3962 = vweird.f32 %v3371
        %vm3963 = vweird.f32 %v3957
        %vm3964 = vmor %vm3962, %vm3963
        %v3965 = vsel %vm3964, %v3957, %v3961
        %v3966 = vand.u32 2147483647, %v3371
        %vm3967 = vcmp.eq.f32.partialorder %v3966, 8.507059e+37
        %v3968 = vand.u32 %v3371, 2147483648
        %v3969 = vor.u32 1.1754944e-38, %v3968
        %v3970 = vsel %vm3967, %v3969, %v3965
        %v3971 = vmul.f32 1.0, %v3970
        %v3972 = vrcp.pop %v3372
        %v3973 = vmul.f32 %v3372, %v3972
        %v3974 = vsub.f32 1.0, %v3973
        %v3975 = vmul.f32 %v3972, %v3974
        %v3976 = vadd.f32 %v3972, %v3975
        %vm3977 = vweird.f32 %v3372
        %vm3978 = vweird.f32 %v3972
        %vm3979 = vmor %vm3977, %vm3978
        %v3980 = vsel %vm3979, %v3972, %v3976
        %v3981 = vand.u32 2147483647, %v3372
        %vm3982 = vcmp.eq.f32.partialorder %v3981, 8.507059e+37
        %v3983 = vand.u32 %v3372, 2147483648
        %v3984 = vor.u32 1.1754944e-38, %v3983
        %v3985 = vsel %vm3982, %v3984, %v3980
        %v3986 = vmul.f32 1.0, %v3985
        %v3987 = vrcp.pop %v3373
        %v3988 = vmul.f32 %v3373, %v3987
        %v3989 = vsub.f32 1.0, %v3988
        %v3990 = vmul.f32 %v3987, %v3989
        %v3991 = vadd.f32 %v3987, %v3990
        %vm3992 = vweird.f32 %v3373
        %vm3993 = vweird.f32 %v3987
        %vm3994 = vmor %vm3992, %vm3993
        %v3995 = vsel %vm3994, %v3987, %v3991
        %v3996 = vand.u32 2147483647, %v3373
        %vm3997 = vcmp.eq.f32.partialorder %v3996, 8.507059e+37
        %v3998 = vand.u32 %v3373, 2147483648
        %v3999 = vor.u32 1.1754944e-38, %v3998
        %v4000 = vsel %vm3997, %v3999, %v3995
        %v4001 = vmul.f32 1.0, %v4000
        %v4002 = vrcp.pop %v3374
        %v4003 = vmul.f32 %v3374, %v4002
        %v4004 = vsub.f32 1.0, %v4003
        %v4005 = vmul.f32 %v4002, %v4004
        %v4006 = vadd.f32 %v4002, %v4005
        %vm4007 = vweird.f32 %v3374
        %vm4008 = vweird.f32 %v4002
        %vm4009 = vmor %vm4007, %vm4008
        %v4010 = vsel %vm4009, %v4002, %v4006
        %v4011 = vand.u32 2147483647, %v3374
        %vm4012 = vcmp.eq.f32.partialorder %v4011, 8.507059e+37
        %v4013 = vand.u32 %v3374, 2147483648
        %v4014 = vor.u32 1.1754944e-38, %v4013
        %v4015 = vsel %vm4012, %v4014, %v4010
        %v4016 = vmul.f32 1.0, %v4015
        %v4017 = vrcp.pop %v3375
        %v4018 = vmul.f32 %v3375, %v4017
        %v4019 = vsub.f32 1.0, %v4018
        %v4020 = vmul.f32 %v4017, %v4019
        %v4021 = vadd.f32 %v4017, %v4020
        %vm4022 = vweird.f32 %v3375
        %vm4023 = vweird.f32 %v4017
        %vm4024 = vmor %vm4022, %vm4023
        %v4025 = vsel %vm4024, %v4017, %v4021
        %v4026 = vand.u32 2147483647, %v3375
        %vm4027 = vcmp.eq.f32.partialorder %v4026, 8.507059e+37
        %v4028 = vand.u32 %v3375, 2147483648
        %v4029 = vor.u32 1.1754944e-38, %v4028
        %v4030 = vsel %vm4027, %v4029, %v4025
        %v4031 = vmul.f32 1.0, %v4030
        %v4032 = vrcp.pop %v3376
        %v4033 = vmul.f32 %v3376, %v4032
        %v4034 = vsub.f32 1.0, %v4033
        %v4035 = vmul.f32 %v4032, %v4034
        %v4036 = vadd.f32 %v4032, %v4035
        %vm4037 = vweird.f32 %v3376
        %vm4038 = vweird.f32 %v4032
        %vm4039 = vmor %vm4037, %vm4038
        %v4040 = vsel %vm4039, %v4032, %v4036
        %v4041 = vand.u32 2147483647, %v3376
        %vm4042 = vcmp.eq.f32.partialorder %v4041, 8.507059e+37
        %v4043 = vand.u32 %v3376, 2147483648
        %v4044 = vor.u32 1.1754944e-38, %v4043
        %v4045 = vsel %vm4042, %v4044, %v4040
        %v4046 = vmul.f32 1.0, %v4045
        %v4047 = vrcp.pop %v3377
        %v4048 = vmul.f32 %v3377, %v4047
        %v4049 = vsub.f32 1.0, %v4048
        %v4050 = vmul.f32 %v4047, %v4049
        %v4051 = vadd.f32 %v4047, %v4050
        %vm4052 = vweird.f32 %v3377
        %vm4053 = vweird.f32 %v4047
        %vm4054 = vmor %vm4052, %vm4053
        %v4055 = vsel %vm4054, %v4047, %v4051
        %v4056 = vand.u32 2147483647, %v3377
        %vm4057 = vcmp.eq.f32.partialorder %v4056, 8.507059e+37
        %v4058 = vand.u32 %v3377, 2147483648
        %v4059 = vor.u32 1.1754944e-38, %v4058
        %v4060 = vsel %vm4057, %v4059, %v4055
        %v4061 = vmul.f32 1.0, %v4060
        %v4062 = vrcp.pop %v3378
        %v4063 = vmul.f32 %v3378, %v4062
        %v4064 = vsub.f32 1.0, %v4063
        %v4065 = vmul.f32 %v4062, %v4064
        %v4066 = vadd.f32 %v4062, %v4065
        %vm4067 = vweird.f32 %v3378
        %vm4068 = vweird.f32 %v4062
        %vm4069 = vmor %vm4067, %vm4068
        %v4070 = vsel %vm4069, %v4062, %v4066
        %v4071 = vand.u32 2147483647, %v3378
        %vm4072 = vcmp.eq.f32.partialorder %v4071, 8.507059e+37
        %v4073 = vand.u32 %v3378, 2147483648
        %v4074 = vor.u32 1.1754944e-38, %v4073
        %v4075 = vsel %vm4072, %v4074, %v4070
        %v4076 = vmul.f32 1.0, %v4075
        %v4077 = vrcp.pop %v3379
        %v4078 = vmul.f32 %v3379, %v4077
        %v4079 = vsub.f32 1.0, %v4078
        %v4080 = vmul.f32 %v4077, %v4079
        %v4081 = vadd.f32 %v4077, %v4080
        %vm4082 = vweird.f32 %v3379
        %vm4083 = vweird.f32 %v4077
        %vm4084 = vmor %vm4082, %vm4083
        %v4085 = vsel %vm4084, %v4077, %v4081
        %v4086 = vand.u32 2147483647, %v3379
        %vm4087 = vcmp.eq.f32.partialorder %v4086, 8.507059e+37
        %v4088 = vand.u32 %v3379, 2147483648
        %v4089 = vor.u32 1.1754944e-38, %v4088
        %v4090 = vsel %vm4087, %v4089, %v4085
        %v4091 = vmul.f32 1.0, %v4090
        %v4092 = vrcp.pop %v3380
        %v4093 = vmul.f32 %v3380, %v4092
        %v4094 = vsub.f32 1.0, %v4093
        %v4095 = vmul.f32 %v4092, %v4094
        %v4096 = vadd.f32 %v4092, %v4095
        %vm4097 = vweird.f32 %v3380
        %vm4098 = vweird.f32 %v4092
        %vm4099 = vmor %vm4097, %vm4098
        %v4100 = vsel %vm4099, %v4092, %v4096
        %v4101 = vand.u32 2147483647, %v3380
        %vm4102 = vcmp.eq.f32.partialorder %v4101, 8.507059e+37
        %v4103 = vand.u32 %v3380, 2147483648
        %v4104 = vor.u32 1.1754944e-38, %v4103
        %v4105 = vsel %vm4102, %v4104, %v4100
        %v4106 = vmul.f32 1.0, %v4105
        %v4107 = vrcp.pop %v3381
        %v4108 = vmul.f32 %v3381, %v4107
        %v4109 = vsub.f32 1.0, %v4108
        %v4110 = vmul.f32 %v4107, %v4109
        %v4111 = vadd.f32 %v4107, %v4110
        %vm4112 = vweird.f32 %v3381
        %vm4113 = vweird.f32 %v4107
        %vm4114 = vmor %vm4112, %vm4113
        %v4115 = vsel %vm4114, %v4107, %v4111
        %v4116 = vand.u32 2147483647, %v3381
        %vm4117 = vcmp.eq.f32.partialorder %v4116, 8.507059e+37
        %v4118 = vand.u32 %v3381, 2147483648
        %v4119 = vor.u32 1.1754944e-38, %v4118
        %v4120 = vsel %vm4117, %v4119, %v4115
        %v4121 = vmul.f32 1.0, %v4120
        %v4122 = vrcp.pop %v3382
        %v4123 = vmul.f32 %v3382, %v4122
        %v4124 = vsub.f32 1.0, %v4123
        %v4125 = vmul.f32 %v4122, %v4124
        %v4126 = vadd.f32 %v4122, %v4125
        %vm4127 = vweird.f32 %v3382
        %vm4128 = vweird.f32 %v4122
        %vm4129 = vmor %vm4127, %vm4128
        %v4130 = vsel %vm4129, %v4122, %v4126
        %v4131 = vand.u32 2147483647, %v3382
        %vm4132 = vcmp.eq.f32.partialorder %v4131, 8.507059e+37
        %v4133 = vand.u32 %v3382, 2147483648
        %v4134 = vor.u32 1.1754944e-38, %v4133
        %v4135 = vsel %vm4132, %v4134, %v4130
        %v4136 = vmul.f32 1.0, %v4135
        %v4137 = vrcp.pop %v3383
        %v4138 = vmul.f32 %v3383, %v4137
        %v4139 = vsub.f32 1.0, %v4138
        %v4140 = vmul.f32 %v4137, %v4139
        %v4141 = vadd.f32 %v4137, %v4140
        %vm4142 = vweird.f32 %v3383
        %vm4143 = vweird.f32 %v4137
        %vm4144 = vmor %vm4142, %vm4143
        %v4145 = vsel %vm4144, %v4137, %v4141
        %v4146 = vand.u32 2147483647, %v3383
        %vm4147 = vcmp.eq.f32.partialorder %v4146, 8.507059e+37
        %v4148 = vand.u32 %v3383, 2147483648
        %v4149 = vor.u32 1.1754944e-38, %v4148
        %v4150 = vsel %vm4147, %v4149, %v4145
        %v4151 = vmul.f32 1.0, %v4150
        %v4152 = vrcp.pop %v3384
        %v4153 = vmul.f32 %v3384, %v4152
        %v4154 = vsub.f32 1.0, %v4153
        %v4155 = vmul.f32 %v4152, %v4154
        %v4156 = vadd.f32 %v4152, %v4155
        %vm4157 = vweird.f32 %v3384
        %vm4158 = vweird.f32 %v4152
        %vm4159 = vmor %vm4157, %vm4158
        %v4160 = vsel %vm4159, %v4152, %v4156
        %v4161 = vand.u32 2147483647, %v3384
        %vm4162 = vcmp.eq.f32.partialorder %v4161, 8.507059e+37
        %v4163 = vand.u32 %v3384, 2147483648
        %v4164 = vor.u32 1.1754944e-38, %v4163
        %v4165 = vsel %vm4162, %v4164, %v4160
        %v4166 = vmul.f32 1.0, %v4165
        %v4167 = vrcp.pop %v3385
        %v4168 = vmul.f32 %v3385, %v4167
        %v4169 = vsub.f32 1.0, %v4168
        %v4170 = vmul.f32 %v4167, %v4169
        %v4171 = vadd.f32 %v4167, %v4170
        %vm4172 = vweird.f32 %v3385
        %vm4173 = vweird.f32 %v4167
        %vm4174 = vmor %vm4172, %vm4173
        %v4175 = vsel %vm4174, %v4167, %v4171
        %v4176 = vand.u32 2147483647, %v3385
        %vm4177 = vcmp.eq.f32.partialorder %v4176, 8.507059e+37
        %v4178 = vand.u32 %v3385, 2147483648
        %v4179 = vor.u32 1.1754944e-38, %v4178
        %v4180 = vsel %vm4177, %v4179, %v4175
        %v4181 = vmul.f32 1.0, %v4180
        %v4182 = vrcp.pop %v3386
        %v4183 = vmul.f32 %v3386, %v4182
        %v4184 = vsub.f32 1.0, %v4183
        %v4185 = vmul.f32 %v4182, %v4184
        %v4186 = vadd.f32 %v4182, %v4185
        %vm4187 = vweird.f32 %v3386
        %vm4188 = vweird.f32 %v4182
        %vm4189 = vmor %vm4187, %vm4188
        %v4190 = vsel %vm4189, %v4182, %v4186
        %v4191 = vand.u32 2147483647, %v3386
        %vm4192 = vcmp.eq.f32.partialorder %v4191, 8.507059e+37
        %v4193 = vand.u32 %v3386, 2147483648
        %v4194 = vor.u32 1.1754944e-38, %v4193
        %v4195 = vsel %vm4192, %v4194, %v4190
        %v4196 = vmul.f32 1.0, %v4195
        %v4197 = vrcp.pop %v3387
        %v4198 = vmul.f32 %v3387, %v4197
        %v4199 = vsub.f32 1.0, %v4198
        %v4200 = vmul.f32 %v4197, %v4199
        %v4201 = vadd.f32 %v4197, %v4200
        %vm4202 = vweird.f32 %v3387
        %vm4203 = vweird.f32 %v4197
        %vm4204 = vmor %vm4202, %vm4203
        %v4205 = vsel %vm4204, %v4197, %v4201
        %v4206 = vand.u32 2147483647, %v3387
        %vm4207 = vcmp.eq.f32.partialorder %v4206, 8.507059e+37
        %v4208 = vand.u32 %v3387, 2147483648
        %v4209 = vor.u32 1.1754944e-38, %v4208
        %v4210 = vsel %vm4207, %v4209, %v4205
        %v4211 = vmul.f32 1.0, %v4210
        %v4212 = vrcp.pop %v3388
        %v4213 = vmul.f32 %v3388, %v4212
        %v4214 = vsub.f32 1.0, %v4213
        %v4215 = vmul.f32 %v4212, %v4214
        %v4216 = vadd.f32 %v4212, %v4215
        %vm4217 = vweird.f32 %v3388
        %vm4218 = vweird.f32 %v4212
        %vm4219 = vmor %vm4217, %vm4218
        %v4220 = vsel %vm4219, %v4212, %v4216
        %v4221 = vand.u32 2147483647, %v3388
        %vm4222 = vcmp.eq.f32.partialorder %v4221, 8.507059e+37
        %v4223 = vand.u32 %v3388, 2147483648
        %v4224 = vor.u32 1.1754944e-38, %v4223
        %v4225 = vsel %vm4222, %v4224, %v4220
        %v4226 = vmul.f32 1.0, %v4225
        %v4227 = vrcp.pop %v3389
        %v4228 = vmul.f32 %v3389, %v4227
        %v4229 = vsub.f32 1.0, %v4228
        %v4230 = vmul.f32 %v4227, %v4229
        %v4231 = vadd.f32 %v4227, %v4230
        %vm4232 = vweird.f32 %v3389
        %vm4233 = vweird.f32 %v4227
        %vm4234 = vmor %vm4232, %vm4233
        %v4235 = vsel %vm4234, %v4227, %v4231
        %v4236 = vand.u32 2147483647, %v3389
        %vm4237 = vcmp.eq.f32.partialorder %v4236, 8.507059e+37
        %v4238 = vand.u32 %v3389, 2147483648
        %v4239 = vor.u32 1.1754944e-38, %v4238
        %v4240 = vsel %vm4237, %v4239, %v4235
        %v4241 = vmul.f32 1.0, %v4240
        %v4242 = vrcp.pop %v3390
        %v4243 = vmul.f32 %v3390, %v4242
        %v4244 = vsub.f32 1.0, %v4243
        %v4245 = vmul.f32 %v4242, %v4244
        %v4246 = vadd.f32 %v4242, %v4245
        %vm4247 = vweird.f32 %v3390
        %vm4248 = vweird.f32 %v4242
        %vm4249 = vmor %vm4247, %vm4248
        %v4250 = vsel %vm4249, %v4242, %v4246
        %v4251 = vand.u32 2147483647, %v3390
        %vm4252 = vcmp.eq.f32.partialorder %v4251, 8.507059e+37
        %v4253 = vand.u32 %v3390, 2147483648
        %v4254 = vor.u32 1.1754944e-38, %v4253
        %v4255 = vsel %vm4252, %v4254, %v4250
        %v4256 = vmul.f32 1.0, %v4255
        %v4257 = vrcp.pop %v3391
        %v4258 = vmul.f32 %v3391, %v4257
        %v4259 = vsub.f32 1.0, %v4258
        %v4260 = vmul.f32 %v4257, %v4259
        %v4261 = vadd.f32 %v4257, %v4260
        %vm4262 = vweird.f32 %v3391
        %vm4263 = vweird.f32 %v4257
        %vm4264 = vmor %vm4262, %vm4263
        %v4265 = vsel %vm4264, %v4257, %v4261
        %v4266 = vand.u32 2147483647, %v3391
        %vm4267 = vcmp.eq.f32.partialorder %v4266, 8.507059e+37
        %v4268 = vand.u32 %v3391, 2147483648
        %v4269 = vor.u32 1.1754944e-38, %v4268
        %v4270 = vsel %vm4267, %v4269, %v4265
        %v4271 = vmul.f32 1.0, %v4270
        %v4272 = vrcp.pop %v3392
        %v4273 = vmul.f32 %v3392, %v4272
        %v4274 = vsub.f32 1.0, %v4273
        %v4275 = vmul.f32 %v4272, %v4274
        %v4276 = vadd.f32 %v4272, %v4275
        %vm4277 = vweird.f32 %v3392
        %vm4278 = vweird.f32 %v4272
        %vm4279 = vmor %vm4277, %vm4278
        %v4280 = vsel %vm4279, %v4272, %v4276
        %v4281 = vand.u32 2147483647, %v3392
        %vm4282 = vcmp.eq.f32.partialorder %v4281, 8.507059e+37
        %v4283 = vand.u32 %v3392, 2147483648
        %v4284 = vor.u32 1.1754944e-38, %v4283
        %v4285 = vsel %vm4282, %v4284, %v4280
        %v4286 = vmul.f32 1.0, %v4285
        %v4287 = vrcp.pop %v3393
        %v4288 = vmul.f32 %v3393, %v4287
        %v4289 = vsub.f32 1.0, %v4288
        %v4290 = vmul.f32 %v4287, %v4289
        %v4291 = vadd.f32 %v4287, %v4290
        %vm4292 = vweird.f32 %v3393
        %vm4293 = vweird.f32 %v4287
        %vm4294 = vmor %vm4292, %vm4293
        %v4295 = vsel %vm4294, %v4287, %v4291
        %v4296 = vand.u32 2147483647, %v3393
        %vm4297 = vcmp.eq.f32.partialorder %v4296, 8.507059e+37
        %v4298 = vand.u32 %v3393, 2147483648
        %v4299 = vor.u32 1.1754944e-38, %v4298
        %v4300 = vsel %vm4297, %v4299, %v4295
        %v4301 = vmul.f32 1.0, %v4300
        %v4302 = vrcp.pop %v3394
        %v4303 = vmul.f32 %v3394, %v4302
        %v4304 = vsub.f32 1.0, %v4303
        %v4305 = vmul.f32 %v4302, %v4304
        %v4306 = vadd.f32 %v4302, %v4305
        %vm4307 = vweird.f32 %v3394
        %vm4308 = vweird.f32 %v4302
        %vm4309 = vmor %vm4307, %vm4308
        %v4310 = vsel %vm4309, %v4302, %v4306
        %v4311 = vand.u32 2147483647, %v3394
        %vm4312 = vcmp.eq.f32.partialorder %v4311, 8.507059e+37
        %v4313 = vand.u32 %v3394, 2147483648
        %v4314 = vor.u32 1.1754944e-38, %v4313
        %v4315 = vsel %vm4312, %v4314, %v4310
        %v4316 = vmul.f32 1.0, %v4315
        %v4317 = vrcp.pop %v3395
        %v4318 = vmul.f32 %v3395, %v4317
        %v4319 = vsub.f32 1.0, %v4318
        %v4320 = vmul.f32 %v4317, %v4319
        %v4321 = vadd.f32 %v4317, %v4320
        %vm4322 = vweird.f32 %v3395
        %vm4323 = vweird.f32 %v4317
        %vm4324 = vmor %vm4322, %vm4323
        %v4325 = vsel %vm4324, %v4317, %v4321
        %v4326 = vand.u32 2147483647, %v3395
        %vm4327 = vcmp.eq.f32.partialorder %v4326, 8.507059e+37
        %v4328 = vand.u32 %v3395, 2147483648
        %v4329 = vor.u32 1.1754944e-38, %v4328
        %v4330 = vsel %vm4327, %v4329, %v4325
        %v4331 = vmul.f32 1.0, %v4330
        %v4332 = vrcp.pop %v3396
        %v4333 = vmul.f32 %v3396, %v4332
        %v4334 = vsub.f32 1.0, %v4333
        %v4335 = vmul.f32 %v4332, %v4334
        %v4336 = vadd.f32 %v4332, %v4335
        %vm4337 = vweird.f32 %v3396
        %vm4338 = vweird.f32 %v4332
        %vm4339 = vmor %vm4337, %vm4338
        %v4340 = vsel %vm4339, %v4332, %v4336
        %v4341 = vand.u32 2147483647, %v3396
        %vm4342 = vcmp.eq.f32.partialorder %v4341, 8.507059e+37
        %v4343 = vand.u32 %v3396, 2147483648
        %v4344 = vor.u32 1.1754944e-38, %v4343
        %v4345 = vsel %vm4342, %v4344, %v4340
        %v4346 = vmul.f32 1.0, %v4345
        %v4347 = vrcp.pop %v3397
        %v4348 = vmul.f32 %v3397, %v4347
        %v4349 = vsub.f32 1.0, %v4348
        %v4350 = vmul.f32 %v4347, %v4349
        %v4351 = vadd.f32 %v4347, %v4350
        %vm4352 = vweird.f32 %v3397
        %vm4353 = vweird.f32 %v4347
        %vm4354 = vmor %vm4352, %vm4353
        %v4355 = vsel %vm4354, %v4347, %v4351
        %v4356 = vand.u32 2147483647, %v3397
        %vm4357 = vcmp.eq.f32.partialorder %v4356, 8.507059e+37
        %v4358 = vand.u32 %v3397, 2147483648
        %v4359 = vor.u32 1.1754944e-38, %v4358
        %v4360 = vsel %vm4357, %v4359, %v4355
        %v4361 = vmul.f32 1.0, %v4360
        %v4362 = vrcp.pop %v3398
        %v4363 = vmul.f32 %v3398, %v4362
        %v4364 = vsub.f32 1.0, %v4363
        %v4365 = vmul.f32 %v4362, %v4364
        %v4366 = vadd.f32 %v4362, %v4365
        %vm4367 = vweird.f32 %v3398
        %vm4368 = vweird.f32 %v4362
        %vm4369 = vmor %vm4367, %vm4368
        %v4370 = vsel %vm4369, %v4362, %v4366
        %v4371 = vand.u32 2147483647, %v3398
        %vm4372 = vcmp.eq.f32.partialorder %v4371, 8.507059e+37
        %v4373 = vand.u32 %v3398, 2147483648
        %v4374 = vor.u32 1.1754944e-38, %v4373
        %v4375 = vsel %vm4372, %v4374, %v4370
        %v4376 = vmul.f32 1.0, %v4375
        %v4377 = vrcp.pop %v3399
        %v4378 = vmul.f32 %v3399, %v4377
        %v4379 = vsub.f32 1.0, %v4378
        %v4380 = vmul.f32 %v4377, %v4379
        %v4381 = vadd.f32 %v4377, %v4380
        %vm4382 = vweird.f32 %v3399
        %vm4383 = vweird.f32 %v4377
        %vm4384 = vmor %vm4382, %vm4383
        %v4385 = vsel %vm4384, %v4377, %v4381
        %v4386 = vand.u32 2147483647, %v3399
        %vm4387 = vcmp.eq.f32.partialorder %v4386, 8.507059e+37
        %v4388 = vand.u32 %v3399, 2147483648
        %v4389 = vor.u32 1.1754944e-38, %v4388
        %v4390 = vsel %vm4387, %v4389, %v4385
        %v4391 = vmul.f32 1.0, %v4390
        %v4392 = vrcp.pop %v3400
        %v4393 = vmul.f32 %v3400, %v4392
        %v4394 = vsub.f32 1.0, %v4393
        %v4395 = vmul.f32 %v4392, %v4394
        %v4396 = vadd.f32 %v4392, %v4395
        %vm4397 = vweird.f32 %v3400
        %vm4398 = vweird.f32 %v4392
        %vm4399 = vmor %vm4397, %vm4398
        %v4400 = vsel %vm4399, %v4392, %v4396
        %v4401 = vand.u32 2147483647, %v3400
        %vm4402 = vcmp.eq.f32.partialorder %v4401, 8.507059e+37
        %v4403 = vand.u32 %v3400, 2147483648
        %v4404 = vor.u32 1.1754944e-38, %v4403
        %v4405 = vsel %vm4402, %v4404, %v4400
        %v4406 = vmul.f32 1.0, %v4405
        %v4407 = vrcp.pop %v3401
        %v4408 = vmul.f32 %v3401, %v4407
        %v4409 = vsub.f32 1.0, %v4408
        %v4410 = vmul.f32 %v4407, %v4409
        %v4411 = vadd.f32 %v4407, %v4410
        %vm4412 = vweird.f32 %v3401
        %vm4413 = vweird.f32 %v4407
        %vm4414 = vmor %vm4412, %vm4413
        %v4415 = vsel %vm4414, %v4407, %v4411
        %v4416 = vand.u32 2147483647, %v3401
        %vm4417 = vcmp.eq.f32.partialorder %v4416, 8.507059e+37
        %v4418 = vand.u32 %v3401, 2147483648
        %v4419 = vor.u32 1.1754944e-38, %v4418
        %v4420 = vsel %vm4417, %v4419, %v4415
        %v4421 = vmul.f32 1.0, %v4420
        %v4422 = vrcp.pop %v3402
        %v4423 = vmul.f32 %v3402, %v4422
        %v4424 = vsub.f32 1.0, %v4423
        %v4425 = vmul.f32 %v4422, %v4424
        %v4426 = vadd.f32 %v4422, %v4425
        %vm4427 = vweird.f32 %v3402
        %vm4428 = vweird.f32 %v4422
        %vm4429 = vmor %vm4427, %vm4428
        %v4430 = vsel %vm4429, %v4422, %v4426
        %v4431 = vand.u32 2147483647, %v3402
        %vm4432 = vcmp.eq.f32.partialorder %v4431, 8.507059e+37
        %v4433 = vand.u32 %v3402, 2147483648
        %v4434 = vor.u32 1.1754944e-38, %v4433
        %v4435 = vsel %vm4432, %v4434, %v4430
        %v4436 = vmul.f32 1.0, %v4435
        %v4437 = vrcp.pop %v3403
        %v4438 = vmul.f32 %v3403, %v4437
        %v4439 = vsub.f32 1.0, %v4438
        %v4440 = vmul.f32 %v4437, %v4439
        %v4441 = vadd.f32 %v4437, %v4440
        %vm4442 = vweird.f32 %v3403
        %vm4443 = vweird.f32 %v4437
        %vm4444 = vmor %vm4442, %vm4443
        %v4445 = vsel %vm4444, %v4437, %v4441
        %v4446 = vand.u32 2147483647, %v3403
        %vm4447 = vcmp.eq.f32.partialorder %v4446, 8.507059e+37
        %v4448 = vand.u32 %v3403, 2147483648
        %v4449 = vor.u32 1.1754944e-38, %v4448
        %v4450 = vsel %vm4447, %v4449, %v4445
        %v4451 = vmul.f32 1.0, %v4450
        %v4452 = vrcp.pop %v3404
        %v4453 = vmul.f32 %v3404, %v4452
        %v4454 = vsub.f32 1.0, %v4453
        %v4455 = vmul.f32 %v4452, %v4454
        %v4456 = vadd.f32 %v4452, %v4455
        %vm4457 = vweird.f32 %v3404
        %vm4458 = vweird.f32 %v4452
        %vm4459 = vmor %vm4457, %vm4458
        %v4460 = vsel %vm4459, %v4452, %v4456
        %v4461 = vand.u32 2147483647, %v3404
        %vm4462 = vcmp.eq.f32.partialorder %v4461, 8.507059e+37
        %v4463 = vand.u32 %v3404, 2147483648
        %v4464 = vor.u32 1.1754944e-38, %v4463
        %v4465 = vsel %vm4462, %v4464, %v4460
        %v4466 = vmul.f32 1.0, %v4465
        %v4467 = vrcp.pop %v3405
        %v4468 = vmul.f32 %v3405, %v4467
        %v4469 = vsub.f32 1.0, %v4468
        %v4470 = vmul.f32 %v4467, %v4469
        %v4471 = vadd.f32 %v4467, %v4470
        %vm4472 = vweird.f32 %v3405
        %vm4473 = vweird.f32 %v4467
        %vm4474 = vmor %vm4472, %vm4473
        %v4475 = vsel %vm4474, %v4467, %v4471
        %v4476 = vand.u32 2147483647, %v3405
        %vm4477 = vcmp.eq.f32.partialorder %v4476, 8.507059e+37
        %v4478 = vand.u32 %v3405, 2147483648
        %v4479 = vor.u32 1.1754944e-38, %v4478
        %v4480 = vsel %vm4477, %v4479, %v4475
        %v4481 = vmul.f32 1.0, %v4480
        %v4482 = vrcp.pop %v3406
        %v4483 = vmul.f32 %v3406, %v4482
        %v4484 = vsub.f32 1.0, %v4483
        %v4485 = vmul.f32 %v4482, %v4484
        %v4486 = vadd.f32 %v4482, %v4485
        %vm4487 = vweird.f32 %v3406
        %vm4488 = vweird.f32 %v4482
        %vm4489 = vmor %vm4487, %vm4488
        %v4490 = vsel %vm4489, %v4482, %v4486
        %v4491 = vand.u32 2147483647, %v3406
        %vm4492 = vcmp.eq.f32.partialorder %v4491, 8.507059e+37
        %v4493 = vand.u32 %v3406, 2147483648
        %v4494 = vor.u32 1.1754944e-38, %v4493
        %v4495 = vsel %vm4492, %v4494, %v4490
        %v4496 = vmul.f32 1.0, %v4495
        %v4497 = vrcp.pop %v3407
        %v4498 = vmul.f32 %v3407, %v4497
        %v4499 = vsub.f32 1.0, %v4498
        %v4500 = vmul.f32 %v4497, %v4499
        %v4501 = vadd.f32 %v4497, %v4500
        %vm4502 = vweird.f32 %v3407
        %vm4503 = vweird.f32 %v4497
        %vm4504 = vmor %vm4502, %vm4503
        %v4505 = vsel %vm4504, %v4497, %v4501
        %v4506 = vand.u32 2147483647, %v3407
        %vm4507 = vcmp.eq.f32.partialorder %v4506, 8.507059e+37
        %v4508 = vand.u32 %v3407, 2147483648
        %v4509 = vor.u32 1.1754944e-38, %v4508
        %v4510 = vsel %vm4507, %v4509, %v4505
        %v4511 = vmul.f32 1.0, %v4510
        %v4512 = vrcp.pop %v3408
        %v4513 = vmul.f32 %v3408, %v4512
        %v4514 = vsub.f32 1.0, %v4513
        %v4515 = vmul.f32 %v4512, %v4514
        %v4516 = vadd.f32 %v4512, %v4515
        %vm4517 = vweird.f32 %v3408
        %vm4518 = vweird.f32 %v4512
        %vm4519 = vmor %vm4517, %vm4518
        %v4520 = vsel %vm4519, %v4512, %v4516
        %v4521 = vand.u32 2147483647, %v3408
        %vm4522 = vcmp.eq.f32.partialorder %v4521, 8.507059e+37
        %v4523 = vand.u32 %v3408, 2147483648
        %v4524 = vor.u32 1.1754944e-38, %v4523
        %v4525 = vsel %vm4522, %v4524, %v4520
        %v4526 = vmul.f32 1.0, %v4525
        %v4527 = vrcp.pop %v3409
        %v4528 = vmul.f32 %v3409, %v4527
        %v4529 = vsub.f32 1.0, %v4528
        %v4530 = vmul.f32 %v4527, %v4529
        %v4531 = vadd.f32 %v4527, %v4530
        %vm4532 = vweird.f32 %v3409
        %vm4533 = vweird.f32 %v4527
        %vm4534 = vmor %vm4532, %vm4533
        %v4535 = vsel %vm4534, %v4527, %v4531
        %v4536 = vand.u32 2147483647, %v3409
        %vm4537 = vcmp.eq.f32.partialorder %v4536, 8.507059e+37
        %v4538 = vand.u32 %v3409, 2147483648
        %v4539 = vor.u32 1.1754944e-38, %v4538
        %v4540 = vsel %vm4537, %v4539, %v4535
        %v4541 = vmul.f32 1.0, %v4540
        %v4542 = vrcp.pop %v3410
        %v4543 = vmul.f32 %v3410, %v4542
        %v4544 = vsub.f32 1.0, %v4543
        %v4545 = vmul.f32 %v4542, %v4544
        %v4546 = vadd.f32 %v4542, %v4545
        %vm4547 = vweird.f32 %v3410
        %vm4548 = vweird.f32 %v4542
        %vm4549 = vmor %vm4547, %vm4548
        %v4550 = vsel %vm4549, %v4542, %v4546
        %v4551 = vand.u32 2147483647, %v3410
        %vm4552 = vcmp.eq.f32.partialorder %v4551, 8.507059e+37
        %v4553 = vand.u32 %v3410, 2147483648
        %v4554 = vor.u32 1.1754944e-38, %v4553
        %v4555 = vsel %vm4552, %v4554, %v4550
        %v4556 = vmul.f32 1.0, %v4555
        %v4557 = vrcp.pop %v3411
        %v4558 = vmul.f32 %v3411, %v4557
        %v4559 = vsub.f32 1.0, %v4558
        %v4560 = vmul.f32 %v4557, %v4559
        %v4561 = vadd.f32 %v4557, %v4560
        %vm4562 = vweird.f32 %v3411
        %vm4563 = vweird.f32 %v4557
        %vm4564 = vmor %vm4562, %vm4563
        %v4565 = vsel %vm4564, %v4557, %v4561
        %v4566 = vand.u32 2147483647, %v3411
        %vm4567 = vcmp.eq.f32.partialorder %v4566, 8.507059e+37
        %v4568 = vand.u32 %v3411, 2147483648
        %v4569 = vor.u32 1.1754944e-38, %v4568
        %v4570 = vsel %vm4567, %v4569, %v4565
        %v4571 = vmul.f32 1.0, %v4570
        %v4572 = vrcp.pop %v3412
        %v4573 = vmul.f32 %v3412, %v4572
        %v4574 = vsub.f32 1.0, %v4573
        %v4575 = vmul.f32 %v4572, %v4574
        %v4576 = vadd.f32 %v4572, %v4575
        %vm4577 = vweird.f32 %v3412
        %vm4578 = vweird.f32 %v4572
        %vm4579 = vmor %vm4577, %vm4578
        %v4580 = vsel %vm4579, %v4572, %v4576
        %v4581 = vand.u32 2147483647, %v3412
        %vm4582 = vcmp.eq.f32.partialorder %v4581, 8.507059e+37
        %v4583 = vand.u32 %v3412, 2147483648
        %v4584 = vor.u32 1.1754944e-38, %v4583
        %v4585 = vsel %vm4582, %v4584, %v4580
        %v4586 = vmul.f32 1.0, %v4585
        %v4587 = vrcp.pop %v3413
        %v4588 = vmul.f32 %v3413, %v4587
        %v4589 = vsub.f32 1.0, %v4588
        %v4590 = vmul.f32 %v4587, %v4589
        %v4591 = vadd.f32 %v4587, %v4590
        %vm4592 = vweird.f32 %v3413
        %vm4593 = vweird.f32 %v4587
        %vm4594 = vmor %vm4592, %vm4593
        %v4595 = vsel %vm4594, %v4587, %v4591
        %v4596 = vand.u32 2147483647, %v3413
        %vm4597 = vcmp.eq.f32.partialorder %v4596, 8.507059e+37
        %v4598 = vand.u32 %v3413, 2147483648
        %v4599 = vor.u32 1.1754944e-38, %v4598
        %v4600 = vsel %vm4597, %v4599, %v4595
        %v4601 = vmul.f32 1.0, %v4600
        %v4602 = vrcp.pop %v3414
        %v4603 = vmul.f32 %v3414, %v4602
        %v4604 = vsub.f32 1.0, %v4603
        %v4605 = vmul.f32 %v4602, %v4604
        %v4606 = vadd.f32 %v4602, %v4605
        %vm4607 = vweird.f32 %v3414
        %vm4608 = vweird.f32 %v4602
        %vm4609 = vmor %vm4607, %vm4608
        %v4610 = vsel %vm4609, %v4602, %v4606
        %v4611 = vand.u32 2147483647, %v3414
        %vm4612 = vcmp.eq.f32.partialorder %v4611, 8.507059e+37
        %v4613 = vand.u32 %v3414, 2147483648
        %v4614 = vor.u32 1.1754944e-38, %v4613
        %v4615 = vsel %vm4612, %v4614, %v4610
        %v4616 = vmul.f32 1.0, %v4615
        %v4617 = vrcp.pop %v3415
        %v4618 = vmul.f32 %v3415, %v4617
        %v4619 = vsub.f32 1.0, %v4618
        %v4620 = vmul.f32 %v4617, %v4619
        %v4621 = vadd.f32 %v4617, %v4620
        %vm4622 = vweird.f32 %v3415
        %vm4623 = vweird.f32 %v4617
        %vm4624 = vmor %vm4622, %vm4623
        %v4625 = vsel %vm4624, %v4617, %v4621
        %v4626 = vand.u32 2147483647, %v3415
        %vm4627 = vcmp.eq.f32.partialorder %v4626, 8.507059e+37
        %v4628 = vand.u32 %v3415, 2147483648
        %v4629 = vor.u32 1.1754944e-38, %v4628
        %v4630 = vsel %vm4627, %v4629, %v4625
        %v4631 = vmul.f32 1.0, %v4630
        %v4632 = vrcp.pop %v3416
        %v4633 = vmul.f32 %v3416, %v4632
        %v4634 = vsub.f32 1.0, %v4633
        %v4635 = vmul.f32 %v4632, %v4634
        %v4636 = vadd.f32 %v4632, %v4635
        %vm4637 = vweird.f32 %v3416
        %vm4638 = vweird.f32 %v4632
        %vm4639 = vmor %vm4637, %vm4638
        %v4640 = vsel %vm4639, %v4632, %v4636
        %v4641 = vand.u32 2147483647, %v3416
        %vm4642 = vcmp.eq.f32.partialorder %v4641, 8.507059e+37
        %v4643 = vand.u32 %v3416, 2147483648
        %v4644 = vor.u32 1.1754944e-38, %v4643
        %v4645 = vsel %vm4642, %v4644, %v4640
        %v4646 = vmul.f32 1.0, %v4645
        %v4647 = vrcp.pop %v3417
        %v4648 = vmul.f32 %v3417, %v4647
        %v4649 = vsub.f32 1.0, %v4648
        %v4650 = vmul.f32 %v4647, %v4649
        %v4651 = vadd.f32 %v4647, %v4650
        %vm4652 = vweird.f32 %v3417
        %vm4653 = vweird.f32 %v4647
        %vm4654 = vmor %vm4652, %vm4653
        %v4655 = vsel %vm4654, %v4647, %v4651
        %v4656 = vand.u32 2147483647, %v3417
        %vm4657 = vcmp.eq.f32.partialorder %v4656, 8.507059e+37
        %v4658 = vand.u32 %v3417, 2147483648
        %v4659 = vor.u32 1.1754944e-38, %v4658
        %v4660 = vsel %vm4657, %v4659, %v4655
        %v4661 = vmul.f32 1.0, %v4660
        %v4662 = vrcp.pop %v3418
        %v4663 = vmul.f32 %v3418, %v4662
        %v4664 = vsub.f32 1.0, %v4663
        %v4665 = vmul.f32 %v4662, %v4664
        %v4666 = vadd.f32 %v4662, %v4665
        %vm4667 = vweird.f32 %v3418
        %vm4668 = vweird.f32 %v4662
        %vm4669 = vmor %vm4667, %vm4668
        %v4670 = vsel %vm4669, %v4662, %v4666
        %v4671 = vand.u32 2147483647, %v3418
        %vm4672 = vcmp.eq.f32.partialorder %v4671, 8.507059e+37
        %v4673 = vand.u32 %v3418, 2147483648
        %v4674 = vor.u32 1.1754944e-38, %v4673
        %v4675 = vsel %vm4672, %v4674, %v4670
        %v4676 = vmul.f32 1.0, %v4675
        %v4677 = vrcp.pop %v3419
        %v4678 = vmul.f32 %v3419, %v4677
        %v4679 = vsub.f32 1.0, %v4678
        %v4680 = vmul.f32 %v4677, %v4679
        %v4681 = vadd.f32 %v4677, %v4680
        %vm4682 = vweird.f32 %v3419
        %vm4683 = vweird.f32 %v4677
        %vm4684 = vmor %vm4682, %vm4683
        %v4685 = vsel %vm4684, %v4677, %v4681
        %v4686 = vand.u32 2147483647, %v3419
        %vm4687 = vcmp.eq.f32.partialorder %v4686, 8.507059e+37
        %v4688 = vand.u32 %v3419, 2147483648
        %v4689 = vor.u32 1.1754944e-38, %v4688
        %v4690 = vsel %vm4687, %v4689, %v4685
        %v4691 = vmul.f32 1.0, %v4690
        %v4692 = vrcp.pop %v3420
        %v4693 = vmul.f32 %v3420, %v4692
        %v4694 = vsub.f32 1.0, %v4693
        %v4695 = vmul.f32 %v4692, %v4694
        %v4696 = vadd.f32 %v4692, %v4695
        %vm4697 = vweird.f32 %v3420
        %vm4698 = vweird.f32 %v4692
        %vm4699 = vmor %vm4697, %vm4698
        %v4700 = vsel %vm4699, %v4692, %v4696
        %v4701 = vand.u32 2147483647, %v3420
        %vm4702 = vcmp.eq.f32.partialorder %v4701, 8.507059e+37
        %v4703 = vand.u32 %v3420, 2147483648
        %v4704 = vor.u32 1.1754944e-38, %v4703
        %v4705 = vsel %vm4702, %v4704, %v4700
        %v4706 = vmul.f32 1.0, %v4705
        %v4707 = vrcp.pop %v3421
        %v4708 = vmul.f32 %v3421, %v4707
        %v4709 = vsub.f32 1.0, %v4708
        %v4710 = vmul.f32 %v4707, %v4709
        %v4711 = vadd.f32 %v4707, %v4710
        %vm4712 = vweird.f32 %v3421
        %vm4713 = vweird.f32 %v4707
        %vm4714 = vmor %vm4712, %vm4713
        %v4715 = vsel %vm4714, %v4707, %v4711
        %v4716 = vand.u32 2147483647, %v3421
        %vm4717 = vcmp.eq.f32.partialorder %v4716, 8.507059e+37
        %v4718 = vand.u32 %v3421, 2147483648
        %v4719 = vor.u32 1.1754944e-38, %v4718
        %v4720 = vsel %vm4717, %v4719, %v4715
        %v4721 = vmul.f32 1.0, %v4720
        %v4722 = vrcp.pop %v3422
        %v4723 = vmul.f32 %v3422, %v4722
        %v4724 = vsub.f32 1.0, %v4723
        %v4725 = vmul.f32 %v4722, %v4724
        %v4726 = vadd.f32 %v4722, %v4725
        %vm4727 = vweird.f32 %v3422
        %vm4728 = vweird.f32 %v4722
        %vm4729 = vmor %vm4727, %vm4728
        %v4730 = vsel %vm4729, %v4722, %v4726
        %v4731 = vand.u32 2147483647, %v3422
        %vm4732 = vcmp.eq.f32.partialorder %v4731, 8.507059e+37
        %v4733 = vand.u32 %v3422, 2147483648
        %v4734 = vor.u32 1.1754944e-38, %v4733
        %v4735 = vsel %vm4732, %v4734, %v4730
        %v4736 = vmul.f32 1.0, %v4735
        %v4737 = vrcp.pop %v3423
        %v4738 = vmul.f32 %v3423, %v4737
        %v4739 = vsub.f32 1.0, %v4738
        %v4740 = vmul.f32 %v4737, %v4739
        %v4741 = vadd.f32 %v4737, %v4740
        %vm4742 = vweird.f32 %v3423
        %vm4743 = vweird.f32 %v4737
        %vm4744 = vmor %vm4742, %vm4743
        %v4745 = vsel %vm4744, %v4737, %v4741
        %v4746 = vand.u32 2147483647, %v3423
        %vm4747 = vcmp.eq.f32.partialorder %v4746, 8.507059e+37
        %v4748 = vand.u32 %v3423, 2147483648
        %v4749 = vor.u32 1.1754944e-38, %v4748
        %v4750 = vsel %vm4747, %v4749, %v4745
        %v4751 = vmul.f32 1.0, %v4750
        %v4752 = vrcp.pop %v3424
        %v4753 = vmul.f32 %v3424, %v4752
        %v4754 = vsub.f32 1.0, %v4753
        %v4755 = vmul.f32 %v4752, %v4754
        %v4756 = vadd.f32 %v4752, %v4755
        %vm4757 = vweird.f32 %v3424
        %vm4758 = vweird.f32 %v4752
        %vm4759 = vmor %vm4757, %vm4758
        %v4760 = vsel %vm4759, %v4752, %v4756
        %v4761 = vand.u32 2147483647, %v3424
        %vm4762 = vcmp.eq.f32.partialorder %v4761, 8.507059e+37
        %v4763 = vand.u32 %v3424, 2147483648
        %v4764 = vor.u32 1.1754944e-38, %v4763
        %v4765 = vsel %vm4762, %v4764, %v4760
        %v4766 = vmul.f32 1.0, %v4765
        %v4767 = vrcp.pop %v3425
        %v4768 = vmul.f32 %v3425, %v4767
        %v4769 = vsub.f32 1.0, %v4768
        %v4770 = vmul.f32 %v4767, %v4769
        %v4771 = vadd.f32 %v4767, %v4770
        %vm4772 = vweird.f32 %v3425
        %vm4773 = vweird.f32 %v4767
        %vm4774 = vmor %vm4772, %vm4773
        %v4775 = vsel %vm4774, %v4767, %v4771
        %v4776 = vand.u32 2147483647, %v3425
        %vm4777 = vcmp.eq.f32.partialorder %v4776, 8.507059e+37
        %v4778 = vand.u32 %v3425, 2147483648
        %v4779 = vor.u32 1.1754944e-38, %v4778
        %v4780 = vsel %vm4777, %v4779, %v4775
        %v4781 = vmul.f32 1.0, %v4780
        %v4782 = vrcp.pop %v3426
        %v4783 = vmul.f32 %v3426, %v4782
        %v4784 = vsub.f32 1.0, %v4783
        %v4785 = vmul.f32 %v4782, %v4784
        %v4786 = vadd.f32 %v4782, %v4785
        %vm4787 = vweird.f32 %v3426
        %vm4788 = vweird.f32 %v4782
        %vm4789 = vmor %vm4787, %vm4788
        %v4790 = vsel %vm4789, %v4782, %v4786
        %v4791 = vand.u32 2147483647, %v3426
        %vm4792 = vcmp.eq.f32.partialorder %v4791, 8.507059e+37
        %v4793 = vand.u32 %v3426, 2147483648
        %v4794 = vor.u32 1.1754944e-38, %v4793
        %v4795 = vsel %vm4792, %v4794, %v4790
        %v4796 = vmul.f32 1.0, %v4795
        %v4797 = vrcp.pop %v3427
        %v4798 = vmul.f32 %v3427, %v4797
        %v4799 = vsub.f32 1.0, %v4798
        %v4800 = vmul.f32 %v4797, %v4799
        %v4801 = vadd.f32 %v4797, %v4800
        %vm4802 = vweird.f32 %v3427
        %vm4803 = vweird.f32 %v4797
        %vm4804 = vmor %vm4802, %vm4803
        %v4805 = vsel %vm4804, %v4797, %v4801
        %v4806 = vand.u32 2147483647, %v3427
        %vm4807 = vcmp.eq.f32.partialorder %v4806, 8.507059e+37
        %v4808 = vand.u32 %v3427, 2147483648
        %v4809 = vor.u32 1.1754944e-38, %v4808
        %v4810 = vsel %vm4807, %v4809, %v4805
        %v4811 = vmul.f32 1.0, %v4810
        %v4812 = vrcp.pop %v3428
        %v4813 = vmul.f32 %v3428, %v4812
        %v4814 = vsub.f32 1.0, %v4813
        %v4815 = vmul.f32 %v4812, %v4814
        %v4816 = vadd.f32 %v4812, %v4815
        %vm4817 = vweird.f32 %v3428
        %vm4818 = vweird.f32 %v4812
        %vm4819 = vmor %vm4817, %vm4818
        %v4820 = vsel %vm4819, %v4812, %v4816
        %v4821 = vand.u32 2147483647, %v3428
        %vm4822 = vcmp.eq.f32.partialorder %v4821, 8.507059e+37
        %v4823 = vand.u32 %v3428, 2147483648
        %v4824 = vor.u32 1.1754944e-38, %v4823
        %v4825 = vsel %vm4822, %v4824, %v4820
        %v4826 = vmul.f32 1.0, %v4825
        %v4827 = vrcp.pop %v3429
        %v4828 = vmul.f32 %v3429, %v4827
        %v4829 = vsub.f32 1.0, %v4828
        %v4830 = vmul.f32 %v4827, %v4829
        %v4831 = vadd.f32 %v4827, %v4830
        %vm4832 = vweird.f32 %v3429
        %vm4833 = vweird.f32 %v4827
        %vm4834 = vmor %vm4832, %vm4833
        %v4835 = vsel %vm4834, %v4827, %v4831
        %v4836 = vand.u32 2147483647, %v3429
        %vm4837 = vcmp.eq.f32.partialorder %v4836, 8.507059e+37
        %v4838 = vand.u32 %v3429, 2147483648
        %v4839 = vor.u32 1.1754944e-38, %v4838
        %v4840 = vsel %vm4837, %v4839, %v4835
        %v4841 = vmul.f32 1.0, %v4840
        %v4842 = vrcp.pop %v3430
        %v4843 = vmul.f32 %v3430, %v4842
        %v4844 = vsub.f32 1.0, %v4843
        %v4845 = vmul.f32 %v4842, %v4844
        %v4846 = vadd.f32 %v4842, %v4845
        %vm4847 = vweird.f32 %v3430
        %vm4848 = vweird.f32 %v4842
        %vm4849 = vmor %vm4847, %vm4848
        %v4850 = vsel %vm4849, %v4842, %v4846
        %v4851 = vand.u32 2147483647, %v3430
        %vm4852 = vcmp.eq.f32.partialorder %v4851, 8.507059e+37
        %v4853 = vand.u32 %v3430, 2147483648
        %v4854 = vor.u32 1.1754944e-38, %v4853
        %v4855 = vsel %vm4852, %v4854, %v4850
        %v4856 = vmul.f32 1.0, %v4855
        %v4857 = vrcp.pop %v3431
        %v4858 = vmul.f32 %v3431, %v4857
        %v4859 = vsub.f32 1.0, %v4858
        %v4860 = vmul.f32 %v4857, %v4859
        %v4861 = vadd.f32 %v4857, %v4860
        %vm4862 = vweird.f32 %v3431
        %vm4863 = vweird.f32 %v4857
        %vm4864 = vmor %vm4862, %vm4863
        %v4865 = vsel %vm4864, %v4857, %v4861
        %v4866 = vand.u32 2147483647, %v3431
        %vm4867 = vcmp.eq.f32.partialorder %v4866, 8.507059e+37
        %v4868 = vand.u32 %v3431, 2147483648
        %v4869 = vor.u32 1.1754944e-38, %v4868
        %v4870 = vsel %vm4867, %v4869, %v4865
        %v4871 = vmul.f32 1.0, %v4870
        %4872 = vxpose.xlu0.b32.start [1/16] %v3446, 128
        %4873 = vxpose.xlu0.b32.cont [2/16] %v3461, 128
        %4874 = vxpose.xlu0.b32.cont [3/16] %v3476, 128
        %4875 = vxpose.xlu0.b32.cont [4/16] %v3491, 128
        %4876 = vxpose.xlu0.b32.cont [5/16] %v3506, 128
        %4877 = vxpose.xlu0.b32.cont [6/16] %v3521, 128
        %4878 = vxpose.xlu0.b32.cont [7/16] %v3536, 128
        %4879 = vxpose.xlu0.b32.cont [8/16] %v3551, 128
        %4880 = vxpose.xlu0.b32.cont [9/16] %v3566, 128
        %4881 = vxpose.xlu0.b32.cont [10/16] %v3581, 128
        %4882 = vxpose.xlu0.b32.cont [11/16] %v3596, 128
        %4883 = vxpose.xlu0.b32.cont [12/16] %v3611, 128
        %4884 = vxpose.xlu0.b32.cont [13/16] %v3626, 128
        %4885 = vxpose.xlu0.b32.cont [14/16] %v3641, 128
        %4886 = vxpose.xlu0.b32.cont [15/16] %v3656, 128
        %4887 = vxpose.xlu0.b32.end [16/16] %v3671, 128
        %v4888 = vpop.trf.xlu0
        %v4889 = vpop.trf.xlu0
        %v4890 = vpop.trf.xlu0
        %v4891 = vpop.trf.xlu0
        %v4892 = vpop.trf.xlu0
        %v4893 = vpop.trf.xlu0
        %v4894 = vpop.trf.xlu0
        %v4895 = vpop.trf.xlu0
        %v4896 = vpop.trf.xlu0
        %v4897 = vpop.trf.xlu0
        %v4898 = vpop.trf.xlu0
        %v4899 = vpop.trf.xlu0
        %v4900 = vpop.trf.xlu0
        %v4901 = vpop.trf.xlu0
        %v4902 = vpop.trf.xlu0
        %v4903 = vpop.trf.xlu0
        %4904 = vxpose.xlu0.b32.start [1/16] %v3686, 128
        %4905 = vxpose.xlu0.b32.cont [2/16] %v3701, 128
        %4906 = vxpose.xlu0.b32.cont [3/16] %v3716, 128
        %4907 = vxpose.xlu0.b32.cont [4/16] %v3731, 128
        %4908 = vxpose.xlu0.b32.cont [5/16] %v3746, 128
        %4909 = vxpose.xlu0.b32.cont [6/16] %v3761, 128
        %4910 = vxpose.xlu0.b32.cont [7/16] %v3776, 128
        %4911 = vxpose.xlu0.b32.cont [8/16] %v3791, 128
        %4912 = vxpose.xlu0.b32.cont [9/16] %v3806, 128
        %4913 = vxpose.xlu0.b32.cont [10/16] %v3821, 128
        %4914 = vxpose.xlu0.b32.cont [11/16] %v3836, 128
        %4915 = vxpose.xlu0.b32.cont [12/16] %v3851, 128
        %4916 = vxpose.xlu0.b32.cont [13/16] %v3866, 128
        %4917 = vxpose.xlu0.b32.cont [14/16] %v3881, 128
        %4918 = vxpose.xlu0.b32.cont [15/16] %v3896, 128
        %4919 = vxpose.xlu0.b32.end [16/16] %v3911, 128
        %v4920 = vpop.trf.xlu0
        %v4921 = vpop.trf.xlu0
        %v4922 = vpop.trf.xlu0
        %v4923 = vpop.trf.xlu0
        %v4924 = vpop.trf.xlu0
        %v4925 = vpop.trf.xlu0
        %v4926 = vpop.trf.xlu0
        %v4927 = vpop.trf.xlu0
        %v4928 = vpop.trf.xlu0
        %v4929 = vpop.trf.xlu0
        %v4930 = vpop.trf.xlu0
        %v4931 = vpop.trf.xlu0
        %v4932 = vpop.trf.xlu0
        %v4933 = vpop.trf.xlu0
        %v4934 = vpop.trf.xlu0
        %v4935 = vpop.trf.xlu0
        %4936 = vxpose.xlu0.b32.start [1/16] %v3926, 128
        %4937 = vxpose.xlu0.b32.cont [2/16] %v3941, 128
        %4938 = vxpose.xlu0.b32.cont [3/16] %v3956, 128
        %4939 = vxpose.xlu0.b32.cont [4/16] %v3971, 128
        %4940 = vxpose.xlu0.b32.cont [5/16] %v3986, 128
        %4941 = vxpose.xlu0.b32.cont [6/16] %v4001, 128
        %4942 = vxpose.xlu0.b32.cont [7/16] %v4016, 128
        %4943 = vxpose.xlu0.b32.cont [8/16] %v4031, 128
        %4944 = vxpose.xlu0.b32.cont [9/16] %v4046, 128
        %4945 = vxpose.xlu0.b32.cont [10/16] %v4061, 128
        %4946 = vxpose.xlu0.b32.cont [11/16] %v4076, 128
        %4947 = vxpose.xlu0.b32.cont [12/16] %v4091, 128
        %4948 = vxpose.xlu0.b32.cont [13/16] %v4106, 128
        %4949 = vxpose.xlu0.b32.cont [14/16] %v4121, 128
        %4950 = vxpose.xlu0.b32.cont [15/16] %v4136, 128
        %4951 = vxpose.xlu0.b32.end [16/16] %v4151, 128
        %v4952 = vpop.trf.xlu0
        %v4953 = vpop.trf.xlu0
        %v4954 = vpop.trf.xlu0
        %v4955 = vpop.trf.xlu0
        %v4956 = vpop.trf.xlu0
        %v4957 = vpop.trf.xlu0
        %v4958 = vpop.trf.xlu0
        %v4959 = vpop.trf.xlu0
        %v4960 = vpop.trf.xlu0
        %v4961 = vpop.trf.xlu0
        %v4962 = vpop.trf.xlu0
        %v4963 = vpop.trf.xlu0
        %v4964 = vpop.trf.xlu0
        %v4965 = vpop.trf.xlu0
        %v4966 = vpop.trf.xlu0
        %v4967 = vpop.trf.xlu0
        %4968 = vxpose.xlu0.b32.start [1/16] %v4166, 128
        %4969 = vxpose.xlu0.b32.cont [2/16] %v4181, 128
        %4970 = vxpose.xlu0.b32.cont [3/16] %v4196, 128
        %4971 = vxpose.xlu0.b32.cont [4/16] %v4211, 128
        %4972 = vxpose.xlu0.b32.cont [5/16] %v4226, 128
        %4973 = vxpose.xlu0.b32.cont [6/16] %v4241, 128
        %4974 = vxpose.xlu0.b32.cont [7/16] %v4256, 128
        %4975 = vxpose.xlu0.b32.cont [8/16] %v4271, 128
        %4976 = vxpose.xlu0.b32.cont [9/16] %v4286, 128
        %4977 = vxpose.xlu0.b32.cont [10/16] %v4301, 128
        %4978 = vxpose.xlu0.b32.cont [11/16] %v4316, 128
        %4979 = vxpose.xlu0.b32.cont [12/16] %v4331, 128
        %4980 = vxpose.xlu0.b32.cont [13/16] %v4346, 128
        %4981 = vxpose.xlu0.b32.cont [14/16] %v4361, 128
        %4982 = vxpose.xlu0.b32.cont [15/16] %v4376, 128
        %4983 = vxpose.xlu0.b32.end [16/16] %v4391, 128
        %v4984 = vpop.trf.xlu0
        %v4985 = vpop.trf.xlu0
        %v4986 = vpop.trf.xlu0
        %v4987 = vpop.trf.xlu0
        %v4988 = vpop.trf.xlu0
        %v4989 = vpop.trf.xlu0
        %v4990 = vpop.trf.xlu0
        %v4991 = vpop.trf.xlu0
        %v4992 = vpop.trf.xlu0
        %v4993 = vpop.trf.xlu0
        %v4994 = vpop.trf.xlu0
        %v4995 = vpop.trf.xlu0
        %v4996 = vpop.trf.xlu0
        %v4997 = vpop.trf.xlu0
        %v4998 = vpop.trf.xlu0
        %v4999 = vpop.trf.xlu0
        %5000 = vxpose.xlu0.b32.start [1/16] %v4406, 128
        %5001 = vxpose.xlu0.b32.cont [2/16] %v4421, 128
        %5002 = vxpose.xlu0.b32.cont [3/16] %v4436, 128
        %5003 = vxpose.xlu0.b32.cont [4/16] %v4451, 128
        %5004 = vxpose.xlu0.b32.cont [5/16] %v4466, 128
        %5005 = vxpose.xlu0.b32.cont [6/16] %v4481, 128
        %5006 = vxpose.xlu0.b32.cont [7/16] %v4496, 128
        %5007 = vxpose.xlu0.b32.cont [8/16] %v4511, 128
        %5008 = vxpose.xlu0.b32.cont [9/16] %v4526, 128
        %5009 = vxpose.xlu0.b32.cont [10/16] %v4541, 128
        %5010 = vxpose.xlu0.b32.cont [11/16] %v4556, 128
        %5011 = vxpose.xlu0.b32.cont [12/16] %v4571, 128
        %5012 = vxpose.xlu0.b32.cont [13/16] %v4586, 128
        %5013 = vxpose.xlu0.b32.cont [14/16] %v4601, 128
        %5014 = vxpose.xlu0.b32.cont [15/16] %v4616, 128
        %5015 = vxpose.xlu0.b32.end [16/16] %v4631, 128
        %v5016 = vpop.trf.xlu0
        %v5017 = vpop.trf.xlu0
        %v5018 = vpop.trf.xlu0
        %v5019 = vpop.trf.xlu0
        %v5020 = vpop.trf.xlu0
        %v5021 = vpop.trf.xlu0
        %v5022 = vpop.trf.xlu0
        %v5023 = vpop.trf.xlu0
        %v5024 = vpop.trf.xlu0
        %v5025 = vpop.trf.xlu0
        %v5026 = vpop.trf.xlu0
        %v5027 = vpop.trf.xlu0
        %v5028 = vpop.trf.xlu0
        %v5029 = vpop.trf.xlu0
        %v5030 = vpop.trf.xlu0
        %v5031 = vpop.trf.xlu0
        %5032 = vxpose.xlu0.b32.start [1/16] %v4646, 128
        %5033 = vxpose.xlu0.b32.cont [2/16] %v4661, 128
        %5034 = vxpose.xlu0.b32.cont [3/16] %v4676, 128
        %5035 = vxpose.xlu0.b32.cont [4/16] %v4691, 128
        %5036 = vxpose.xlu0.b32.cont [5/16] %v4706, 128
        %5037 = vxpose.xlu0.b32.cont [6/16] %v4721, 128
        %5038 = vxpose.xlu0.b32.cont [7/16] %v4736, 128
        %5039 = vxpose.xlu0.b32.cont [8/16] %v4751, 128
        %5040 = vxpose.xlu0.b32.cont [9/16] %v4766, 128
        %5041 = vxpose.xlu0.b32.cont [10/16] %v4781, 128
        %5042 = vxpose.xlu0.b32.cont [11/16] %v4796, 128
        %5043 = vxpose.xlu0.b32.cont [12/16] %v4811, 128
        %5044 = vxpose.xlu0.b32.cont [13/16] %v4826, 128
        %5045 = vxpose.xlu0.b32.cont [14/16] %v4841, 128
        %5046 = vxpose.xlu0.b32.cont [15/16] %v4856, 128
        %5047 = vxpose.xlu0.b32.end [16/16] %v4871, 128
        %v5048 = vpop.trf.xlu0
        %v5049 = vpop.trf.xlu0
        %v5050 = vpop.trf.xlu0
        %v5051 = vpop.trf.xlu0
        %v5052 = vpop.trf.xlu0
        %v5053 = vpop.trf.xlu0
        %v5054 = vpop.trf.xlu0
        %v5055 = vpop.trf.xlu0
        %v5056 = vpop.trf.xlu0
        %v5057 = vpop.trf.xlu0
        %v5058 = vpop.trf.xlu0
        %v5059 = vpop.trf.xlu0
        %v5060 = vpop.trf.xlu0
        %v5061 = vpop.trf.xlu0
        %v5062 = vpop.trf.xlu0
        %v5063 = vpop.trf.xlu0
        %v5070 = vrot.slane %v4920, 7
        %v5071 = vrot.slane %v4952, 6
        %v5072 = vrot.slane %v4984, 5
        %v5073 = vrot.slane %v5016, 4
        %v5074 = vrot.slane %v5048, 3
        %vm5075 = vcmask 1040384
        %v5076 = vsel %vm5075, %v4888, %v5070
        %vm5077 = vcmask 1041408
        %v5078 = vsel %vm5077, %v5076, %v5071
        %vm5079 = vcmask 1043459
        %v5080 = vsel %vm5079, %v5072, %v5073
        %vm5081 = vcmask 1044483
        %v5082 = vsel %vm5081, %v5080, %v5074
        %vm5083 = vcmask 1042432
        %v5084 = vsel %vm5083, %v5078, %v5082
        %s5086 = smul.u32 %s24, 6
        %s5087 = scalar_lea.vmem [#allocation2], %s5086
        %v5088 = vlaneseq
        %vm5089 = vcmp.ge.s32.totalorder %v5088, 0
        %vm5090 = vcmp.lt.s32.totalorder %v5088, 768
        %vm5091 = vmand %vm5089, %vm5090
        %5092 = vst.msk [vmem:[%s5087] sm:$0x3f] %vm5091, %v5084
        %v5093 = vld [vmem:[#allocation3] sm:$0x1]
        %5094 = vmatpush.msra.mxu0 %v894
        %5095 = vmatpush.msra.mxu0 %v893
        %5096 = vmatpush.msra.mxu0 %v892
        %5097 = vmatpush.msra.mxu0 %v891
        %5098 = vmatpush.msra.mxu0 %v890
        %5099 = vmatpush.msra.mxu0 %v889
        %5100 = vmatpush.msra.mxu0 %v888
        %5101 = vmatpush.msra.mxu0 %v887
        %5102 = vmatpush.msra.mxu0 %v886
        %5103 = vmatpush.msra.mxu0 %v885
        %5104 = vmatpush.msra.mxu0 %v884
        %5105 = vmatpush.msra.mxu0 %v883
        %5106 = vmatpush.msra.mxu0 %v882
        %5107 = vmatpush.msra.mxu0 %v881
        %5108 = vmatpush.msra.mxu0 %v880
        %5109 = vmatpush.msra.mxu0 %v879
        %5110 = vmatmul.f32.gmra.mxu0 %v4888
        %v5111 = vpop.f32.mrf.mxu0
        %v5112 = vadd.f32 0.0, %v5111
        %5113 = vdwg.mxu0
        %5114 = vmatpush.msra.mxu0 %v910
        %5115 = vmatpush.msra.mxu0 %v909
        %5116 = vmatpush.msra.mxu0 %v908
        %5117 = vmatpush.msra.mxu0 %v907
        %5118 = vmatpush.msra.mxu0 %v906
        %5119 = vmatpush.msra.mxu0 %v905
        %5120 = vmatpush.msra.mxu0 %v904
        %5121 = vmatpush.msra.mxu0 %v903
        %5122 = vmatpush.msra.mxu0 %v902
        %5123 = vmatpush.msra.mxu0 %v901
        %5124 = vmatpush.msra.mxu0 %v900
        %5125 = vmatpush.msra.mxu0 %v899
        %5126 = vmatpush.msra.mxu0 %v898
        %5127 = vmatpush.msra.mxu0 %v897
        %5128 = vmatpush.msra.mxu0 %v896
        %5129 = vmatpush.msra.mxu0 %v895
        %5130 = vmatmul.f32.gmra.mxu0 %v4920
        %v5131 = vpop.f32.mrf.mxu0
        %v5132 = vadd.f32 %v5112, %v5131
        %5133 = vdwg.mxu0
        %5134 = vmatpush.msra.mxu0 %v926
        %5135 = vmatpush.msra.mxu0 %v925
        %5136 = vmatpush.msra.mxu0 %v924
        %5137 = vmatpush.msra.mxu0 %v923
        %5138 = vmatpush.msra.mxu0 %v922
        %5139 = vmatpush.msra.mxu0 %v921
        %5140 = vmatpush.msra.mxu0 %v920
        %5141 = vmatpush.msra.mxu0 %v919
        %5142 = vmatpush.msra.mxu0 %v918
        %5143 = vmatpush.msra.mxu0 %v917
        %5144 = vmatpush.msra.mxu0 %v916
        %5145 = vmatpush.msra.mxu0 %v915
        %5146 = vmatpush.msra.mxu0 %v914
        %5147 = vmatpush.msra.mxu0 %v913
        %5148 = vmatpush.msra.mxu0 %v912
        %5149 = vmatpush.msra.mxu0 %v911
        %5150 = vmatmul.f32.gmra.mxu0 %v4952
        %v5151 = vpop.f32.mrf.mxu0
        %v5152 = vadd.f32 %v5132, %v5151
        %5153 = vdwg.mxu0
        %5154 = vmatpush.msra.mxu0 %v942
        %5155 = vmatpush.msra.mxu0 %v941
        %5156 = vmatpush.msra.mxu0 %v940
        %5157 = vmatpush.msra.mxu0 %v939
        %5158 = vmatpush.msra.mxu0 %v938
        %5159 = vmatpush.msra.mxu0 %v937
        %5160 = vmatpush.msra.mxu0 %v936
        %5161 = vmatpush.msra.mxu0 %v935
        %5162 = vmatpush.msra.mxu0 %v934
        %5163 = vmatpush.msra.mxu0 %v933
        %5164 = vmatpush.msra.mxu0 %v932
        %5165 = vmatpush.msra.mxu0 %v931
        %5166 = vmatpush.msra.mxu0 %v930
        %5167 = vmatpush.msra.mxu0 %v929
        %5168 = vmatpush.msra.mxu0 %v928
        %5169 = vmatpush.msra.mxu0 %v927
        %5170 = vmatmul.f32.gmra.mxu0 %v4984
        %v5171 = vpop.f32.mrf.mxu0
        %v5172 = vadd.f32 %v5152, %v5171
        %5173 = vdwg.mxu0
        %5174 = vmatpush.msra.mxu0 %v958
        %5175 = vmatpush.msra.mxu0 %v957
        %5176 = vmatpush.msra.mxu0 %v956
        %5177 = vmatpush.msra.mxu0 %v955
        %5178 = vmatpush.msra.mxu0 %v954
        %5179 = vmatpush.msra.mxu0 %v953
        %5180 = vmatpush.msra.mxu0 %v952
        %5181 = vmatpush.msra.mxu0 %v951
        %5182 = vmatpush.msra.mxu0 %v950
        %5183 = vmatpush.msra.mxu0 %v949
        %5184 = vmatpush.msra.mxu0 %v948
        %5185 = vmatpush.msra.mxu0 %v947
        %5186 = vmatpush.msra.mxu0 %v946
        %5187 = vmatpush.msra.mxu0 %v945
        %5188 = vmatpush.msra.mxu0 %v944
        %5189 = vmatpush.msra.mxu0 %v943
        %5190 = vmatmul.f32.gmra.mxu0 %v5016
        %v5191 = vpop.f32.mrf.mxu0
        %v5192 = vadd.f32 %v5172, %v5191
        %5193 = vdwg.mxu0
        %5194 = vmatpush.msra.mxu0 %v974
        %5195 = vmatpush.msra.mxu0 %v973
        %5196 = vmatpush.msra.mxu0 %v972
        %5197 = vmatpush.msra.mxu0 %v971
        %5198 = vmatpush.msra.mxu0 %v970
        %5199 = vmatpush.msra.mxu0 %v969
        %5200 = vmatpush.msra.mxu0 %v968
        %5201 = vmatpush.msra.mxu0 %v967
        %5202 = vmatpush.msra.mxu0 %v966
        %5203 = vmatpush.msra.mxu0 %v965
        %5204 = vmatpush.msra.mxu0 %v964
        %5205 = vmatpush.msra.mxu0 %v963
        %5206 = vmatpush.msra.mxu0 %v962
        %5207 = vmatpush.msra.mxu0 %v961
        %5208 = vmatpush.msra.mxu0 %v960
        %5209 = vmatpush.msra.mxu0 %v959
        %5210 = vmatmul.f32.gmra.mxu0 %v5048
        %v5211 = vpop.f32.mrf.mxu0
        %v5212 = vadd.f32 %v5192, %v5211
        %5213 = vdwg.mxu0
        %v5214 = vadd.f32 %v5093, %v5212
        %vm5215 = vcmask 811008
        %5216 = vst.msk [vmem:[#allocation3] sm:$0x1] %vm5215, %v5214
      $region56: #{tpu_custom_call.1} parent=47 // pred_fallthru
        _
      %p5217 = scmp.eq.s32.totalorder %s23, 1
      %p5218 = pnand %p5217, %p1648
      %p5219 = pneg %p5218
      // Predicated region
      $region57: #{tpu_custom_call.1} parent=47 // pred_check
        _
      $region58: #{tpu_custom_call.1} parent=47 // pred_check_branch
        %5221 = sbr.rel (%p5218) target = $region60
      $region59: #{tpu_custom_call.1} parent=47 // pred_region
        %v5222 = vld [vmem:[#allocation3] sm:$0x1]
        %5223 = vxpose.xlu0.b32.start [1/16] %v5222, 128
        %5224 = vxpose.xlu0.b32.cont [2/16] 0.0, 128
        %5225 = vxpose.xlu0.b32.cont [3/16] 0.0, 128
        %5226 = vxpose.xlu0.b32.cont [4/16] 0.0, 128
        %5227 = vxpose.xlu0.b32.cont [5/16] 0.0, 128
        %5228 = vxpose.xlu0.b32.cont [6/16] 0.0, 128
        %5229 = vxpose.xlu0.b32.cont [7/16] 0.0, 128
        %5230 = vxpose.xlu0.b32.cont [8/16] 0.0, 128
        %5231 = vxpose.xlu0.b32.cont [9/16] 0.0, 128
        %5232 = vxpose.xlu0.b32.cont [10/16] 0.0, 128
        %5233 = vxpose.xlu0.b32.cont [11/16] 0.0, 128
        %5234 = vxpose.xlu0.b32.cont [12/16] 0.0, 128
        %5235 = vxpose.xlu0.b32.cont [13/16] 0.0, 128
        %5236 = vxpose.xlu0.b32.cont [14/16] 0.0, 128
        %5237 = vxpose.xlu0.b32.cont [15/16] 0.0, 128
        %5238 = vxpose.xlu0.b32.end [16/16] 0.0, 128
        %v5239 = vpop.trf.xlu0
        %v5240 = vpop.trf.xlu0
        %v5241 = vpop.trf.xlu0
        %v5242 = vpop.trf.xlu0
        %v5243 = vpop.trf.xlu0
        %v5244 = vpop.trf.xlu0
        %v5245 = vpop.trf.xlu0
        %v5246 = vpop.trf.xlu0
        %v5247 = vpop.trf.xlu0
        %v5248 = vpop.trf.xlu0
        %v5249 = vpop.trf.xlu0
        %v5250 = vpop.trf.xlu0
        %v5251 = vpop.trf.xlu0
        %v5252 = vpop.trf.xlu0
        %v5253 = vpop.trf.xlu0
        %v5254 = vpop.trf.xlu0
        %vm5255 = vcmp.gt.f32.partialorder %v5239, 0.0
        %vm5256 = vcmp.gt.f32.partialorder %v5240, 0.0
        %vm5257 = vcmp.gt.f32.partialorder %v5241, 0.0
        %vm5258 = vcmp.gt.f32.partialorder %v5242, 0.0
        %vm5259 = vcmp.gt.f32.partialorder %v5243, 0.0
        %vm5260 = vcmp.gt.f32.partialorder %v5244, 0.0
        %vm5261 = vcmp.gt.f32.partialorder %v5245, 0.0
        %vm5262 = vcmp.gt.f32.partialorder %v5246, 0.0
        %vm5263 = vcmp.gt.f32.partialorder %v5247, 0.0
        %vm5264 = vcmp.gt.f32.partialorder %v5248, 0.0
        %vm5265 = vcmp.gt.f32.partialorder %v5249, 0.0
        %vm5266 = vcmp.gt.f32.partialorder %v5250, 0.0
        %vm5267 = vcmp.gt.f32.partialorder %v5251, 0.0
        %v5268 = vld [vmem:[%s2] sm:$0xff]
        %v5269 = vld [vmem:[%s2 + $0x8] sm:$0xff]
        %v5270 = vld [vmem:[%s2 + $0x10] sm:$0xff]
        %v5271 = vld [vmem:[%s2 + $0x18] sm:$0xff]
        %v5272 = vld [vmem:[%s2 + $0x20] sm:$0xff]
        %v5273 = vld [vmem:[%s2 + $0x28] sm:$0xff]
        %v5274 = vld [vmem:[%s2 + $0x30] sm:$0xff]
        %v5275 = vld [vmem:[%s2 + $0x38] sm:$0xff]
        %v5276 = vld [vmem:[%s2 + $0x40] sm:$0xff]
        %v5277 = vld [vmem:[%s2 + $0x48] sm:$0xff]
        %v5278 = vld [vmem:[%s2 + $0x50] sm:$0xff]
        %v5279 = vld [vmem:[%s2 + $0x58] sm:$0xff]
        %v5280 = vld [vmem:[%s2 + $0x60] sm:$0xf]
        %v5281 = vsel %vm5255, %v5239, 1.0
        %v5282 = vsel %vm5256, %v5240, 1.0
        %v5283 = vsel %vm5257, %v5241, 1.0
        %v5284 = vsel %vm5258, %v5242, 1.0
        %v5285 = vsel %vm5259, %v5243, 1.0
        %v5286 = vsel %vm5260, %v5244, 1.0
        %v5287 = vsel %vm5261, %v5245, 1.0
        %v5288 = vsel %vm5262, %v5246, 1.0
        %v5289 = vsel %vm5263, %v5247, 1.0
        %v5290 = vsel %vm5264, %v5248, 1.0
        %v5291 = vsel %vm5265, %v5249, 1.0
        %v5292 = vsel %vm5266, %v5250, 1.0
        %v5293 = vsel %vm5267, %v5251, 1.0
        %5295 = vset.pattern.permute.xlu0 0
        %5296 = vperm.xlu0 %5295, %v5281
        %v5297 = vpop.permute.xlu0 %5296
        %5300 = vset.pattern.permute.xlu0 0
        %5301 = vperm.xlu0 %5300, %v5282
        %v5302 = vpop.permute.xlu0 %5301
        %5305 = vset.pattern.permute.xlu0 0
        %5306 = vperm.xlu0 %5305, %v5283
        %v5307 = vpop.permute.xlu0 %5306
        %5310 = vset.pattern.permute.xlu0 0
        %5311 = vperm.xlu0 %5310, %v5284
        %v5312 = vpop.permute.xlu0 %5311
        %5315 = vset.pattern.permute.xlu0 0
        %5316 = vperm.xlu0 %5315, %v5285
        %v5317 = vpop.permute.xlu0 %5316
        %5320 = vset.pattern.permute.xlu0 0
        %5321 = vperm.xlu0 %5320, %v5286
        %v5322 = vpop.permute.xlu0 %5321
        %5325 = vset.pattern.permute.xlu0 0
        %5326 = vperm.xlu0 %5325, %v5287
        %v5327 = vpop.permute.xlu0 %5326
        %5330 = vset.pattern.permute.xlu0 0
        %5331 = vperm.xlu0 %5330, %v5288
        %v5332 = vpop.permute.xlu0 %5331
        %5335 = vset.pattern.permute.xlu0 0
        %5336 = vperm.xlu0 %5335, %v5289
        %v5337 = vpop.permute.xlu0 %5336
        %5340 = vset.pattern.permute.xlu0 0
        %5341 = vperm.xlu0 %5340, %v5290
        %v5342 = vpop.permute.xlu0 %5341
        %5345 = vset.pattern.permute.xlu0 0
        %5346 = vperm.xlu0 %5345, %v5291
        %v5347 = vpop.permute.xlu0 %5346
        %5350 = vset.pattern.permute.xlu0 0
        %5351 = vperm.xlu0 %5350, %v5292
        %v5352 = vpop.permute.xlu0 %5351
        %5355 = vset.pattern.permute.xlu0 0
        %5356 = vperm.xlu0 %5355, %v5293
        %v5357 = vpop.permute.xlu0 %5356
        %v5359 = vrcp.pop %v5297
        %v5360 = vmul.f32 %v5297, %v5359
        %v5361 = vsub.f32 1.0, %v5360
        %v5362 = vmul.f32 %v5359, %v5361
        %v5363 = vadd.f32 %v5359, %v5362
        %vm5364 = vweird.f32 %v5297
        %vm5365 = vweird.f32 %v5359
        %vm5366 = vmor %vm5364, %vm5365
        %v5367 = vsel %vm5366, %v5359, %v5363
        %v5368 = vand.u32 2147483647, %v5297
        %vm5369 = vcmp.eq.f32.partialorder %v5368, 8.507059e+37
        %v5370 = vand.u32 %v5297, 2147483648
        %v5371 = vor.u32 1.1754944e-38, %v5370
        %v5372 = vsel %vm5369, %v5371, %v5367
        %v5373 = vmul.f32 %v5268, %v5372
        %v5374 = vrcp.pop %v5302
        %v5375 = vmul.f32 %v5302, %v5374
        %v5376 = vsub.f32 1.0, %v5375
        %v5377 = vmul.f32 %v5374, %v5376
        %v5378 = vadd.f32 %v5374, %v5377
        %vm5379 = vweird.f32 %v5302
        %vm5380 = vweird.f32 %v5374
        %vm5381 = vmor %vm5379, %vm5380
        %v5382 = vsel %vm5381, %v5374, %v5378
        %v5383 = vand.u32 2147483647, %v5302
        %vm5384 = vcmp.eq.f32.partialorder %v5383, 8.507059e+37
        %v5385 = vand.u32 %v5302, 2147483648
        %v5386 = vor.u32 1.1754944e-38, %v5385
        %v5387 = vsel %vm5384, %v5386, %v5382
        %v5388 = vmul.f32 %v5269, %v5387
        %v5389 = vrcp.pop %v5307
        %v5390 = vmul.f32 %v5307, %v5389
        %v5391 = vsub.f32 1.0, %v5390
        %v5392 = vmul.f32 %v5389, %v5391
        %v5393 = vadd.f32 %v5389, %v5392
        %vm5394 = vweird.f32 %v5307
        %vm5395 = vweird.f32 %v5389
        %vm5396 = vmor %vm5394, %vm5395
        %v5397 = vsel %vm5396, %v5389, %v5393
        %v5398 = vand.u32 2147483647, %v5307
        %vm5399 = vcmp.eq.f32.partialorder %v5398, 8.507059e+37
        %v5400 = vand.u32 %v5307, 2147483648
        %v5401 = vor.u32 1.1754944e-38, %v5400
        %v5402 = vsel %vm5399, %v5401, %v5397
        %v5403 = vmul.f32 %v5270, %v5402
        %v5404 = vrcp.pop %v5312
        %v5405 = vmul.f32 %v5312, %v5404
        %v5406 = vsub.f32 1.0, %v5405
        %v5407 = vmul.f32 %v5404, %v5406
        %v5408 = vadd.f32 %v5404, %v5407
        %vm5409 = vweird.f32 %v5312
        %vm5410 = vweird.f32 %v5404
        %vm5411 = vmor %vm5409, %vm5410
        %v5412 = vsel %vm5411, %v5404, %v5408
        %v5413 = vand.u32 2147483647, %v5312
        %vm5414 = vcmp.eq.f32.partialorder %v5413, 8.507059e+37
        %v5415 = vand.u32 %v5312, 2147483648
        %v5416 = vor.u32 1.1754944e-38, %v5415
        %v5417 = vsel %vm5414, %v5416, %v5412
        %v5418 = vmul.f32 %v5271, %v5417
        %v5419 = vrcp.pop %v5317
        %v5420 = vmul.f32 %v5317, %v5419
        %v5421 = vsub.f32 1.0, %v5420
        %v5422 = vmul.f32 %v5419, %v5421
        %v5423 = vadd.f32 %v5419, %v5422
        %vm5424 = vweird.f32 %v5317
        %vm5425 = vweird.f32 %v5419
        %vm5426 = vmor %vm5424, %vm5425
        %v5427 = vsel %vm5426, %v5419, %v5423
        %v5428 = vand.u32 2147483647, %v5317
        %vm5429 = vcmp.eq.f32.partialorder %v5428, 8.507059e+37
        %v5430 = vand.u32 %v5317, 2147483648
        %v5431 = vor.u32 1.1754944e-38, %v5430
        %v5432 = vsel %vm5429, %v5431, %v5427
        %v5433 = vmul.f32 %v5272, %v5432
        %v5434 = vrcp.pop %v5322
        %v5435 = vmul.f32 %v5322, %v5434
        %v5436 = vsub.f32 1.0, %v5435
        %v5437 = vmul.f32 %v5434, %v5436
        %v5438 = vadd.f32 %v5434, %v5437
        %vm5439 = vweird.f32 %v5322
        %vm5440 = vweird.f32 %v5434
        %vm5441 = vmor %vm5439, %vm5440
        %v5442 = vsel %vm5441, %v5434, %v5438
        %v5443 = vand.u32 2147483647, %v5322
        %vm5444 = vcmp.eq.f32.partialorder %v5443, 8.507059e+37
        %v5445 = vand.u32 %v5322, 2147483648
        %v5446 = vor.u32 1.1754944e-38, %v5445
        %v5447 = vsel %vm5444, %v5446, %v5442
        %v5448 = vmul.f32 %v5273, %v5447
        %v5449 = vrcp.pop %v5327
        %v5450 = vmul.f32 %v5327, %v5449
        %v5451 = vsub.f32 1.0, %v5450
        %v5452 = vmul.f32 %v5449, %v5451
        %v5453 = vadd.f32 %v5449, %v5452
        %vm5454 = vweird.f32 %v5327
        %vm5455 = vweird.f32 %v5449
        %vm5456 = vmor %vm5454, %vm5455
        %v5457 = vsel %vm5456, %v5449, %v5453
        %v5458 = vand.u32 2147483647, %v5327
        %vm5459 = vcmp.eq.f32.partialorder %v5458, 8.507059e+37
        %v5460 = vand.u32 %v5327, 2147483648
        %v5461 = vor.u32 1.1754944e-38, %v5460
        %v5462 = vsel %vm5459, %v5461, %v5457
        %v5463 = vmul.f32 %v5274, %v5462
        %v5464 = vrcp.pop %v5332
        %v5465 = vmul.f32 %v5332, %v5464
        %v5466 = vsub.f32 1.0, %v5465
        %v5467 = vmul.f32 %v5464, %v5466
        %v5468 = vadd.f32 %v5464, %v5467
        %vm5469 = vweird.f32 %v5332
        %vm5470 = vweird.f32 %v5464
        %vm5471 = vmor %vm5469, %vm5470
        %v5472 = vsel %vm5471, %v5464, %v5468
        %v5473 = vand.u32 2147483647, %v5332
        %vm5474 = vcmp.eq.f32.partialorder %v5473, 8.507059e+37
        %v5475 = vand.u32 %v5332, 2147483648
        %v5476 = vor.u32 1.1754944e-38, %v5475
        %v5477 = vsel %vm5474, %v5476, %v5472
        %v5478 = vmul.f32 %v5275, %v5477
        %v5479 = vrcp.pop %v5337
        %v5480 = vmul.f32 %v5337, %v5479
        %v5481 = vsub.f32 1.0, %v5480
        %v5482 = vmul.f32 %v5479, %v5481
        %v5483 = vadd.f32 %v5479, %v5482
        %vm5484 = vweird.f32 %v5337
        %vm5485 = vweird.f32 %v5479
        %vm5486 = vmor %vm5484, %vm5485
        %v5487 = vsel %vm5486, %v5479, %v5483
        %v5488 = vand.u32 2147483647, %v5337
        %vm5489 = vcmp.eq.f32.partialorder %v5488, 8.507059e+37
        %v5490 = vand.u32 %v5337, 2147483648
        %v5491 = vor.u32 1.1754944e-38, %v5490
        %v5492 = vsel %vm5489, %v5491, %v5487
        %v5493 = vmul.f32 %v5276, %v5492
        %v5494 = vrcp.pop %v5342
        %v5495 = vmul.f32 %v5342, %v5494
        %v5496 = vsub.f32 1.0, %v5495
        %v5497 = vmul.f32 %v5494, %v5496
        %v5498 = vadd.f32 %v5494, %v5497
        %vm5499 = vweird.f32 %v5342
        %vm5500 = vweird.f32 %v5494
        %vm5501 = vmor %vm5499, %vm5500
        %v5502 = vsel %vm5501, %v5494, %v5498
        %v5503 = vand.u32 2147483647, %v5342
        %vm5504 = vcmp.eq.f32.partialorder %v5503, 8.507059e+37
        %v5505 = vand.u32 %v5342, 2147483648
        %v5506 = vor.u32 1.1754944e-38, %v5505
        %v5507 = vsel %vm5504, %v5506, %v5502
        %v5508 = vmul.f32 %v5277, %v5507
        %v5509 = vrcp.pop %v5347
        %v5510 = vmul.f32 %v5347, %v5509
        %v5511 = vsub.f32 1.0, %v5510
        %v5512 = vmul.f32 %v5509, %v5511
        %v5513 = vadd.f32 %v5509, %v5512
        %vm5514 = vweird.f32 %v5347
        %vm5515 = vweird.f32 %v5509
        %vm5516 = vmor %vm5514, %vm5515
        %v5517 = vsel %vm5516, %v5509, %v5513
        %v5518 = vand.u32 2147483647, %v5347
        %vm5519 = vcmp.eq.f32.partialorder %v5518, 8.507059e+37
        %v5520 = vand.u32 %v5347, 2147483648
        %v5521 = vor.u32 1.1754944e-38, %v5520
        %v5522 = vsel %vm5519, %v5521, %v5517
        %v5523 = vmul.f32 %v5278, %v5522
        %v5524 = vrcp.pop %v5352
        %v5525 = vmul.f32 %v5352, %v5524
        %v5526 = vsub.f32 1.0, %v5525
        %v5527 = vmul.f32 %v5524, %v5526
        %v5528 = vadd.f32 %v5524, %v5527
        %vm5529 = vweird.f32 %v5352
        %vm5530 = vweird.f32 %v5524
        %vm5531 = vmor %vm5529, %vm5530
        %v5532 = vsel %vm5531, %v5524, %v5528
        %v5533 = vand.u32 2147483647, %v5352
        %vm5534 = vcmp.eq.f32.partialorder %v5533, 8.507059e+37
        %v5535 = vand.u32 %v5352, 2147483648
        %v5536 = vor.u32 1.1754944e-38, %v5535
        %v5537 = vsel %vm5534, %v5536, %v5532
        %v5538 = vmul.f32 %v5279, %v5537
        %v5539 = vrcp.pop %v5357
        %v5540 = vmul.f32 %v5357, %v5539
        %v5541 = vsub.f32 1.0, %v5540
        %v5542 = vmul.f32 %v5539, %v5541
        %v5543 = vadd.f32 %v5539, %v5542
        %vm5544 = vweird.f32 %v5357
        %vm5545 = vweird.f32 %v5539
        %vm5546 = vmor %vm5544, %vm5545
        %v5547 = vsel %vm5546, %v5539, %v5543
        %v5548 = vand.u32 2147483647, %v5357
        %vm5549 = vcmp.eq.f32.partialorder %v5548, 8.507059e+37
        %v5550 = vand.u32 %v5357, 2147483648
        %v5551 = vor.u32 1.1754944e-38, %v5550
        %v5552 = vsel %vm5549, %v5551, %v5547
        %v5553 = vmul.f32 %v5280, %v5552
        %v5554 = vsel %vm5255, 1, 0
        %v5555 = vsel %vm5256, 1, 0
        %v5556 = vsel %vm5257, 1, 0
        %v5557 = vsel %vm5258, 1, 0
        %v5558 = vsel %vm5259, 1, 0
        %v5559 = vsel %vm5260, 1, 0
        %v5560 = vsel %vm5261, 1, 0
        %v5561 = vsel %vm5262, 1, 0
        %v5562 = vsel %vm5263, 1, 0
        %v5563 = vsel %vm5264, 1, 0
        %v5564 = vsel %vm5265, 1, 0
        %v5565 = vsel %vm5266, 1, 0
        %v5566 = vsel %vm5267, 1, 0
        %5567 = vset.pattern.permute.xlu0 0
        %5568 = vperm.xlu0 %5567, %v5554
        %v5569 = vpop.permute.xlu0 %5568
        %5570 = vset.pattern.permute.xlu0 0
        %5571 = vperm.xlu0 %5570, %v5555
        %v5572 = vpop.permute.xlu0 %5571
        %5573 = vset.pattern.permute.xlu0 0
        %5574 = vperm.xlu0 %5573, %v5556
        %v5575 = vpop.permute.xlu0 %5574
        %5576 = vset.pattern.permute.xlu0 0
        %5577 = vperm.xlu0 %5576, %v5557
        %v5578 = vpop.permute.xlu0 %5577
        %5579 = vset.pattern.permute.xlu0 0
        %5580 = vperm.xlu0 %5579, %v5558
        %v5581 = vpop.permute.xlu0 %5580
        %5582 = vset.pattern.permute.xlu0 0
        %5583 = vperm.xlu0 %5582, %v5559
        %v5584 = vpop.permute.xlu0 %5583
        %5585 = vset.pattern.permute.xlu0 0
        %5586 = vperm.xlu0 %5585, %v5560
        %v5587 = vpop.permute.xlu0 %5586
        %5588 = vset.pattern.permute.xlu0 0
        %5589 = vperm.xlu0 %5588, %v5561
        %v5590 = vpop.permute.xlu0 %5589
        %5591 = vset.pattern.permute.xlu0 0
        %5592 = vperm.xlu0 %5591, %v5562
        %v5593 = vpop.permute.xlu0 %5592
        %5594 = vset.pattern.permute.xlu0 0
        %5595 = vperm.xlu0 %5594, %v5563
        %v5596 = vpop.permute.xlu0 %5595
        %5597 = vset.pattern.permute.xlu0 0
        %5598 = vperm.xlu0 %5597, %v5564
        %v5599 = vpop.permute.xlu0 %5598
        %5600 = vset.pattern.permute.xlu0 0
        %5601 = vperm.xlu0 %5600, %v5565
        %v5602 = vpop.permute.xlu0 %5601
        %5603 = vset.pattern.permute.xlu0 0
        %5604 = vperm.xlu0 %5603, %v5566
        %v5605 = vpop.permute.xlu0 %5604
        %vm5606 = vcmp.eq.s32.totalorder %v5569, 1
        %vm5607 = vcmp.eq.s32.totalorder %v5572, 1
        %vm5608 = vcmp.eq.s32.totalorder %v5575, 1
        %vm5609 = vcmp.eq.s32.totalorder %v5578, 1
        %vm5610 = vcmp.eq.s32.totalorder %v5581, 1
        %vm5611 = vcmp.eq.s32.totalorder %v5584, 1
        %vm5612 = vcmp.eq.s32.totalorder %v5587, 1
        %vm5613 = vcmp.eq.s32.totalorder %v5590, 1
        %vm5614 = vcmp.eq.s32.totalorder %v5593, 1
        %vm5615 = vcmp.eq.s32.totalorder %v5596, 1
        %vm5616 = vcmp.eq.s32.totalorder %v5599, 1
        %vm5617 = vcmp.eq.s32.totalorder %v5602, 1
        %vm5618 = vcmp.eq.s32.totalorder %v5605, 1
        %v5619 = vsel %vm5606, %v5373, 0.0
        %v5620 = vsel %vm5607, %v5388, 0.0
        %v5621 = vsel %vm5608, %v5403, 0.0
        %v5622 = vsel %vm5609, %v5418, 0.0
        %v5623 = vsel %vm5610, %v5433, 0.0
        %v5624 = vsel %vm5611, %v5448, 0.0
        %v5625 = vsel %vm5612, %v5463, 0.0
        %v5626 = vsel %vm5613, %v5478, 0.0
        %v5627 = vsel %vm5614, %v5493, 0.0
        %v5628 = vsel %vm5615, %v5508, 0.0
        %v5629 = vsel %vm5616, %v5523, 0.0
        %v5630 = vsel %vm5617, %v5538, 0.0
        %v5631 = vsel %vm5618, %v5553, 0.0
        %vm5632 = vcmask 130048
        %5633 = vst.msk [vmem:[#allocation4] sm:$0xff] %vm5632, %v5619
        %5634 = vst.msk [vmem:[#allocation4 + $0x8] sm:$0xff] %vm5632, %v5620
        %5635 = vst.msk [vmem:[#allocation4 + $0x10] sm:$0xff] %vm5632, %v5621
        %5636 = vst.msk [vmem:[#allocation4 + $0x18] sm:$0xff] %vm5632, %v5622
        %5637 = vst.msk [vmem:[#allocation4 + $0x20] sm:$0xff] %vm5632, %v5623
        %5638 = vst.msk [vmem:[#allocation4 + $0x28] sm:$0xff] %vm5632, %v5624
        %5639 = vst.msk [vmem:[#allocation4 + $0x30] sm:$0xff] %vm5632, %v5625
        %5640 = vst.msk [vmem:[#allocation4 + $0x38] sm:$0xff] %vm5632, %v5626
        %5641 = vst.msk [vmem:[#allocation4 + $0x40] sm:$0xff] %vm5632, %v5627
        %5642 = vst.msk [vmem:[#allocation4 + $0x48] sm:$0xff] %vm5632, %v5628
        %5643 = vst.msk [vmem:[#allocation4 + $0x50] sm:$0xff] %vm5632, %v5629
        %5644 = vst.msk [vmem:[#allocation4 + $0x58] sm:$0xff] %vm5632, %v5630
        %vm5645 = vcmask 125952
        %5646 = vst.msk [vmem:[#allocation4 + $0x60] sm:$0xf] %vm5645, %v5631
        %5647 = vst.msk [vmem:[%s7] sm:$0xff] %vm5632, 0.0
        %5648 = vst.msk [vmem:[%s7 + $0x8] sm:$0xff] %vm5632, 0.0
        %5649 = vst.msk [vmem:[%s7 + $0x10] sm:$0xff] %vm5632, 0.0
        %5650 = vst.msk [vmem:[%s7 + $0x18] sm:$0xff] %vm5632, 0.0
        %5651 = vst.msk [vmem:[%s7 + $0x20] sm:$0xff] %vm5632, 0.0
        %5652 = vst.msk [vmem:[%s7 + $0x28] sm:$0xff] %vm5632, 0.0
        %5653 = vst.msk [vmem:[%s7 + $0x30] sm:$0xff] %vm5632, 0.0
        %5654 = vst.msk [vmem:[%s7 + $0x38] sm:$0xff] %vm5632, 0.0
        %5655 = vst.msk [vmem:[%s7 + $0x40] sm:$0xff] %vm5632, 0.0
        %5656 = vst.msk [vmem:[%s7 + $0x48] sm:$0xff] %vm5632, 0.0
        %5657 = vst.msk [vmem:[%s7 + $0x50] sm:$0xff] %vm5632, 0.0
        %5658 = vst.msk [vmem:[%s7 + $0x58] sm:$0xff] %vm5632, 0.0
        %5659 = vst.msk [vmem:[%s7 + $0x60] sm:$0xf] %vm5645, 0.0
      $region60: #{tpu_custom_call.1} parent=47 // pred_fallthru
        _
      // Predicated region
      $region61: #{tpu_custom_call.1} parent=47 // pred_check
        %p5660 = pneg %p5217
      $region62: #{tpu_custom_call.1} parent=47 // pred_check_branch
        %5662 = sbr.rel (%p5660) target = $region64
      $region63: #{tpu_custom_call.1} parent=47 // pred_region
        %s5663 = smul.u32 %s24, 6
        %s5664 = scalar_lea.vmem [#allocation2], %s5663
        %v5665 = vld [vmem:[%s5664] sm:$0x3f]
        %v5667 = vperm.slane %v5665, 0
        %v5668 = vperm.slane %v5665, 1
        %v5669 = vperm.slane %v5665, 2
        %v5670 = vperm.slane %v5665, 3
        %v5671 = vperm.slane %v5665, 4
        %v5672 = vperm.slane %v5665, 5
        %5679 = vxpose.xlu0.b32.start [1/16] %v5667, 128
        %5680 = vxpose.xlu0.b32.cont [2/16] 0.0, 128
        %5681 = vxpose.xlu0.b32.cont [3/16] 0.0, 128
        %5682 = vxpose.xlu0.b32.cont [4/16] 0.0, 128
        %5683 = vxpose.xlu0.b32.cont [5/16] 0.0, 128
        %5684 = vxpose.xlu0.b32.cont [6/16] 0.0, 128
        %5685 = vxpose.xlu0.b32.cont [7/16] 0.0, 128
        %5686 = vxpose.xlu0.b32.cont [8/16] 0.0, 128
        %5687 = vxpose.xlu0.b32.cont [9/16] 0.0, 128
        %5688 = vxpose.xlu0.b32.cont [10/16] 0.0, 128
        %5689 = vxpose.xlu0.b32.cont [11/16] 0.0, 128
        %5690 = vxpose.xlu0.b32.cont [12/16] 0.0, 128
        %5691 = vxpose.xlu0.b32.cont [13/16] 0.0, 128
        %5692 = vxpose.xlu0.b32.cont [14/16] 0.0, 128
        %5693 = vxpose.xlu0.b32.cont [15/16] 0.0, 128
        %5694 = vxpose.xlu0.b32.end [16/16] 0.0, 128
        %v5695 = vpop.trf.xlu0
        %v5696 = vpop.trf.xlu0
        %v5697 = vpop.trf.xlu0
        %v5698 = vpop.trf.xlu0
        %v5699 = vpop.trf.xlu0
        %v5700 = vpop.trf.xlu0
        %v5701 = vpop.trf.xlu0
        %v5702 = vpop.trf.xlu0
        %v5703 = vpop.trf.xlu0
        %v5704 = vpop.trf.xlu0
        %v5705 = vpop.trf.xlu0
        %v5706 = vpop.trf.xlu0
        %v5707 = vpop.trf.xlu0
        %v5708 = vpop.trf.xlu0
        %v5709 = vpop.trf.xlu0
        %v5710 = vpop.trf.xlu0
        %5711 = vxpose.xlu0.b32.start [1/16] %v5668, 128
        %5712 = vxpose.xlu0.b32.cont [2/16] 0.0, 128
        %5713 = vxpose.xlu0.b32.cont [3/16] 0.0, 128
        %5714 = vxpose.xlu0.b32.cont [4/16] 0.0, 128
        %5715 = vxpose.xlu0.b32.cont [5/16] 0.0, 128
        %5716 = vxpose.xlu0.b32.cont [6/16] 0.0, 128
        %5717 = vxpose.xlu0.b32.cont [7/16] 0.0, 128
        %5718 = vxpose.xlu0.b32.cont [8/16] 0.0, 128
        %5719 = vxpose.xlu0.b32.cont [9/16] 0.0, 128
        %5720 = vxpose.xlu0.b32.cont [10/16] 0.0, 128
        %5721 = vxpose.xlu0.b32.cont [11/16] 0.0, 128
        %5722 = vxpose.xlu0.b32.cont [12/16] 0.0, 128
        %5723 = vxpose.xlu0.b32.cont [13/16] 0.0, 128
        %5724 = vxpose.xlu0.b32.cont [14/16] 0.0, 128
        %5725 = vxpose.xlu0.b32.cont [15/16] 0.0, 128
        %5726 = vxpose.xlu0.b32.end [16/16] 0.0, 128
        %v5727 = vpop.trf.xlu0
        %v5728 = vpop.trf.xlu0
        %v5729 = vpop.trf.xlu0
        %v5730 = vpop.trf.xlu0
        %v5731 = vpop.trf.xlu0
        %v5732 = vpop.trf.xlu0
        %v5733 = vpop.trf.xlu0
        %v5734 = vpop.trf.xlu0
        %v5735 = vpop.trf.xlu0
        %v5736 = vpop.trf.xlu0
        %v5737 = vpop.trf.xlu0
        %v5738 = vpop.trf.xlu0
        %v5739 = vpop.trf.xlu0
        %v5740 = vpop.trf.xlu0
        %v5741 = vpop.trf.xlu0
        %v5742 = vpop.trf.xlu0
        %5743 = vxpose.xlu0.b32.start [1/16] %v5669, 128
        %5744 = vxpose.xlu0.b32.cont [2/16] 0.0, 128
        %5745 = vxpose.xlu0.b32.cont [3/16] 0.0, 128
        %5746 = vxpose.xlu0.b32.cont [4/16] 0.0, 128
        %5747 = vxpose.xlu0.b32.cont [5/16] 0.0, 128
        %5748 = vxpose.xlu0.b32.cont [6/16] 0.0, 128
        %5749 = vxpose.xlu0.b32.cont [7/16] 0.0, 128
        %5750 = vxpose.xlu0.b32.cont [8/16] 0.0, 128
        %5751 = vxpose.xlu0.b32.cont [9/16] 0.0, 128
        %5752 = vxpose.xlu0.b32.cont [10/16] 0.0, 128
        %5753 = vxpose.xlu0.b32.cont [11/16] 0.0, 128
        %5754 = vxpose.xlu0.b32.cont [12/16] 0.0, 128
        %5755 = vxpose.xlu0.b32.cont [13/16] 0.0, 128
        %5756 = vxpose.xlu0.b32.cont [14/16] 0.0, 128
        %5757 = vxpose.xlu0.b32.cont [15/16] 0.0, 128
        %5758 = vxpose.xlu0.b32.end [16/16] 0.0, 128
        %v5759 = vpop.trf.xlu0
        %v5760 = vpop.trf.xlu0
        %v5761 = vpop.trf.xlu0
        %v5762 = vpop.trf.xlu0
        %v5763 = vpop.trf.xlu0
        %v5764 = vpop.trf.xlu0
        %v5765 = vpop.trf.xlu0
        %v5766 = vpop.trf.xlu0
        %v5767 = vpop.trf.xlu0
        %v5768 = vpop.trf.xlu0
        %v5769 = vpop.trf.xlu0
        %v5770 = vpop.trf.xlu0
        %v5771 = vpop.trf.xlu0
        %v5772 = vpop.trf.xlu0
        %v5773 = vpop.trf.xlu0
        %v5774 = vpop.trf.xlu0
        %5775 = vxpose.xlu0.b32.start [1/16] %v5670, 128
        %5776 = vxpose.xlu0.b32.cont [2/16] 0.0, 128
        %5777 = vxpose.xlu0.b32.cont [3/16] 0.0, 128
        %5778 = vxpose.xlu0.b32.cont [4/16] 0.0, 128
        %5779 = vxpose.xlu0.b32.cont [5/16] 0.0, 128
        %5780 = vxpose.xlu0.b32.cont [6/16] 0.0, 128
        %5781 = vxpose.xlu0.b32.cont [7/16] 0.0, 128
        %5782 = vxpose.xlu0.b32.cont [8/16] 0.0, 128
        %5783 = vxpose.xlu0.b32.cont [9/16] 0.0, 128
        %5784 = vxpose.xlu0.b32.cont [10/16] 0.0, 128
        %5785 = vxpose.xlu0.b32.cont [11/16] 0.0, 128
        %5786 = vxpose.xlu0.b32.cont [12/16] 0.0, 128
        %5787 = vxpose.xlu0.b32.cont [13/16] 0.0, 128
        %5788 = vxpose.xlu0.b32.cont [14/16] 0.0, 128
        %5789 = vxpose.xlu0.b32.cont [15/16] 0.0, 128
        %5790 = vxpose.xlu0.b32.end [16/16] 0.0, 128
        %v5791 = vpop.trf.xlu0
        %v5792 = vpop.trf.xlu0
        %v5793 = vpop.trf.xlu0
        %v5794 = vpop.trf.xlu0
        %v5795 = vpop.trf.xlu0
        %v5796 = vpop.trf.xlu0
        %v5797 = vpop.trf.xlu0
        %v5798 = vpop.trf.xlu0
        %v5799 = vpop.trf.xlu0
        %v5800 = vpop.trf.xlu0
        %v5801 = vpop.trf.xlu0
        %v5802 = vpop.trf.xlu0
        %v5803 = vpop.trf.xlu0
        %v5804 = vpop.trf.xlu0
        %v5805 = vpop.trf.xlu0
        %v5806 = vpop.trf.xlu0
        %5807 = vxpose.xlu0.b32.start [1/16] %v5671, 128
        %5808 = vxpose.xlu0.b32.cont [2/16] 0.0, 128
        %5809 = vxpose.xlu0.b32.cont [3/16] 0.0, 128
        %5810 = vxpose.xlu0.b32.cont [4/16] 0.0, 128
        %5811 = vxpose.xlu0.b32.cont [5/16] 0.0, 128
        %5812 = vxpose.xlu0.b32.cont [6/16] 0.0, 128
        %5813 = vxpose.xlu0.b32.cont [7/16] 0.0, 128
        %5814 = vxpose.xlu0.b32.cont [8/16] 0.0, 128
        %5815 = vxpose.xlu0.b32.cont [9/16] 0.0, 128
        %5816 = vxpose.xlu0.b32.cont [10/16] 0.0, 128
        %5817 = vxpose.xlu0.b32.cont [11/16] 0.0, 128
        %5818 = vxpose.xlu0.b32.cont [12/16] 0.0, 128
        %5819 = vxpose.xlu0.b32.cont [13/16] 0.0, 128
        %5820 = vxpose.xlu0.b32.cont [14/16] 0.0, 128
        %5821 = vxpose.xlu0.b32.cont [15/16] 0.0, 128
        %5822 = vxpose.xlu0.b32.end [16/16] 0.0, 128
        %v5823 = vpop.trf.xlu0
        %v5824 = vpop.trf.xlu0
        %v5825 = vpop.trf.xlu0
        %v5826 = vpop.trf.xlu0
        %v5827 = vpop.trf.xlu0
        %v5828 = vpop.trf.xlu0
        %v5829 = vpop.trf.xlu0
        %v5830 = vpop.trf.xlu0
        %v5831 = vpop.trf.xlu0
        %v5832 = vpop.trf.xlu0
        %v5833 = vpop.trf.xlu0
        %v5834 = vpop.trf.xlu0
        %v5835 = vpop.trf.xlu0
        %v5836 = vpop.trf.xlu0
        %v5837 = vpop.trf.xlu0
        %v5838 = vpop.trf.xlu0
        %5839 = vxpose.xlu0.b32.start [1/16] %v5672, 128
        %5840 = vxpose.xlu0.b32.cont [2/16] 0.0, 128
        %5841 = vxpose.xlu0.b32.cont [3/16] 0.0, 128
        %5842 = vxpose.xlu0.b32.cont [4/16] 0.0, 128
        %5843 = vxpose.xlu0.b32.cont [5/16] 0.0, 128
        %5844 = vxpose.xlu0.b32.cont [6/16] 0.0, 128
        %5845 = vxpose.xlu0.b32.cont [7/16] 0.0, 128
        %5846 = vxpose.xlu0.b32.cont [8/16] 0.0, 128
        %5847 = vxpose.xlu0.b32.cont [9/16] 0.0, 128
        %5848 = vxpose.xlu0.b32.cont [10/16] 0.0, 128
        %5849 = vxpose.xlu0.b32.cont [11/16] 0.0, 128
        %5850 = vxpose.xlu0.b32.cont [12/16] 0.0, 128
        %5851 = vxpose.xlu0.b32.cont [13/16] 0.0, 128
        %5852 = vxpose.xlu0.b32.cont [14/16] 0.0, 128
        %5853 = vxpose.xlu0.b32.cont [15/16] 0.0, 128
        %5854 = vxpose.xlu0.b32.end [16/16] 0.0, 128
        %v5855 = vpop.trf.xlu0
        %v5856 = vpop.trf.xlu0
        %v5857 = vpop.trf.xlu0
        %v5858 = vpop.trf.xlu0
        %v5859 = vpop.trf.xlu0
        %v5860 = vpop.trf.xlu0
        %v5861 = vpop.trf.xlu0
        %v5862 = vpop.trf.xlu0
        %v5863 = vpop.trf.xlu0
        %v5864 = vpop.trf.xlu0
        %v5865 = vpop.trf.xlu0
        %v5866 = vpop.trf.xlu0
        %v5867 = vpop.trf.xlu0
        %v5868 = vpop.trf.xlu0
        %v5869 = vpop.trf.xlu0
        %v5870 = vpop.trf.xlu0
        %v5871 = vld [vmem:[#allocation4] sm:$0xff]
        %v5872 = vld [vmem:[#allocation4 + $0x8] sm:$0xff]
        %v5873 = vld [vmem:[#allocation4 + $0x10] sm:$0xff]
        %v5874 = vld [vmem:[#allocation4 + $0x18] sm:$0xff]
        %v5875 = vld [vmem:[#allocation4 + $0x20] sm:$0xff]
        %v5876 = vld [vmem:[#allocation4 + $0x28] sm:$0xff]
        %v5877 = vld [vmem:[#allocation4 + $0x30] sm:$0xff]
        %v5878 = vld [vmem:[#allocation4 + $0x38] sm:$0xff]
        %v5879 = vld [vmem:[#allocation4 + $0x40] sm:$0xff]
        %v5880 = vld [vmem:[#allocation4 + $0x48] sm:$0xff]
        %v5881 = vld [vmem:[#allocation4 + $0x50] sm:$0xff]
        %v5882 = vld [vmem:[#allocation4 + $0x58] sm:$0xff]
        %v5883 = vld [vmem:[#allocation4 + $0x60] sm:$0xf]
        %vm5884 = vcmask 818176
        %v5886 = vsel %vm5884, %v879, 0
        %v5889 = vsel %vm5884, %v880, 0
        %v5892 = vsel %vm5884, %v881, 0
        %v5895 = vsel %vm5884, %v882, 0
        %v5898 = vsel %vm5884, %v883, 0
        %v5901 = vsel %vm5884, %v884, 0
        %v5904 = vsel %vm5884, %v885, 0
        %v5907 = vsel %vm5884, %v886, 0
        %v5910 = vsel %vm5884, %v887, 0
        %v5913 = vsel %vm5884, %v888, 0
        %v5916 = vsel %vm5884, %v889, 0
        %v5919 = vsel %vm5884, %v890, 0
        %v5922 = vsel %vm5884, %v891, 0
        %v5925 = vsel %vm5884, %v892, 0
        %v5928 = vsel %vm5884, %v893, 0
        %v5931 = vsel %vm5884, %v894, 0
        %v5934 = vsel %vm5884, %v895, 0
        %v5937 = vsel %vm5884, %v896, 0
        %v5940 = vsel %vm5884, %v897, 0
        %v5943 = vsel %vm5884, %v898, 0
        %v5946 = vsel %vm5884, %v899, 0
        %v5949 = vsel %vm5884, %v900, 0
        %v5952 = vsel %vm5884, %v901, 0
        %v5955 = vsel %vm5884, %v902, 0
        %v5958 = vsel %vm5884, %v903, 0
        %v5961 = vsel %vm5884, %v904, 0
        %v5964 = vsel %vm5884, %v905, 0
        %v5967 = vsel %vm5884, %v906, 0
        %v5970 = vsel %vm5884, %v907, 0
        %v5973 = vsel %vm5884, %v908, 0
        %v5976 = vsel %vm5884, %v909, 0
        %v5979 = vsel %vm5884, %v910, 0
        %v5982 = vsel %vm5884, %v911, 0
        %v5985 = vsel %vm5884, %v912, 0
        %v5988 = vsel %vm5884, %v913, 0
        %v5991 = vsel %vm5884, %v914, 0
        %v5994 = vsel %vm5884, %v915, 0
        %v5997 = vsel %vm5884, %v916, 0
        %v6000 = vsel %vm5884, %v917, 0
        %v6003 = vsel %vm5884, %v918, 0
        %v6006 = vsel %vm5884, %v919, 0
        %v6009 = vsel %vm5884, %v920, 0
        %v6012 = vsel %vm5884, %v921, 0
        %v6015 = vsel %vm5884, %v922, 0
        %v6018 = vsel %vm5884, %v923, 0
        %v6021 = vsel %vm5884, %v924, 0
        %v6024 = vsel %vm5884, %v925, 0
        %v6027 = vsel %vm5884, %v926, 0
        %v6030 = vsel %vm5884, %v927, 0
        %v6033 = vsel %vm5884, %v928, 0
        %v6036 = vsel %vm5884, %v929, 0
        %v6039 = vsel %vm5884, %v930, 0
        %v6042 = vsel %vm5884, %v931, 0
        %v6045 = vsel %vm5884, %v932, 0
        %v6048 = vsel %vm5884, %v933, 0
        %v6051 = vsel %vm5884, %v934, 0
        %v6054 = vsel %vm5884, %v935, 0
        %v6057 = vsel %vm5884, %v936, 0
        %v6060 = vsel %vm5884, %v937, 0
        %v6063 = vsel %vm5884, %v938, 0
        %v6066 = vsel %vm5884, %v939, 0
        %v6069 = vsel %vm5884, %v940, 0
        %v6072 = vsel %vm5884, %v941, 0
        %v6075 = vsel %vm5884, %v942, 0
        %v6078 = vsel %vm5884, %v943, 0
        %v6081 = vsel %vm5884, %v944, 0
        %v6084 = vsel %vm5884, %v945, 0
        %v6087 = vsel %vm5884, %v946, 0
        %v6090 = vsel %vm5884, %v947, 0
        %v6093 = vsel %vm5884, %v948, 0
        %v6096 = vsel %vm5884, %v949, 0
        %v6099 = vsel %vm5884, %v950, 0
        %v6102 = vsel %vm5884, %v951, 0
        %v6105 = vsel %vm5884, %v952, 0
        %v6108 = vsel %vm5884, %v953, 0
        %v6111 = vsel %vm5884, %v954, 0
        %v6114 = vsel %vm5884, %v955, 0
        %v6117 = vsel %vm5884, %v956, 0
        %v6120 = vsel %vm5884, %v957, 0
        %v6123 = vsel %vm5884, %v958, 0
        %v6126 = vsel %vm5884, %v959, 0
        %v6129 = vsel %vm5884, %v960, 0
        %v6132 = vsel %vm5884, %v961, 0
        %v6135 = vsel %vm5884, %v962, 0
        %v6138 = vsel %vm5884, %v963, 0
        %v6141 = vsel %vm5884, %v964, 0
        %v6144 = vsel %vm5884, %v965, 0
        %v6147 = vsel %vm5884, %v966, 0
        %v6150 = vsel %vm5884, %v967, 0
        %v6153 = vsel %vm5884, %v968, 0
        %v6156 = vsel %vm5884, %v969, 0
        %v6159 = vsel %vm5884, %v970, 0
        %v6162 = vsel %vm5884, %v971, 0
        %v6165 = vsel %vm5884, %v972, 0
        %v6168 = vsel %vm5884, %v973, 0
        %v6171 = vsel %vm5884, %v974, 0
        %vm6173 = vcmask 1043456
        %v6175 = vsel %vm6173, %v5883, 0
        %6177 = vmatpush.msra.mxu0 0.0
        %6178 = vmatpush.msra.mxu0 0.0
        %6179 = vmatpush.msra.mxu0 0.0
        %6180 = vmatpush.msra.mxu0 %v6175
        %6181 = vmatpush.msra.mxu0 %v5882
        %6182 = vmatpush.msra.mxu0 %v5881
        %6183 = vmatpush.msra.mxu0 %v5880
        %6184 = vmatpush.msra.mxu0 %v5879
        %6185 = vmatpush.msra.mxu0 %v5878
        %6186 = vmatpush.msra.mxu0 %v5877
        %6187 = vmatpush.msra.mxu0 %v5876
        %6188 = vmatpush.msra.mxu0 %v5875
        %6189 = vmatpush.msra.mxu0 %v5874
        %6190 = vmatpush.msra.mxu0 %v5873
        %6191 = vmatpush.msra.mxu0 %v5872
        %6192 = vmatpush.msra.mxu0 %v5871
        %6193 = vmatmul.f32.gmra.mxu0 %v5886
        %v6194 = vpop.f32.mrf.mxu0
        %v6195 = vadd.f32 0.0, %v6194
        %6196 = vmatmul.f32.gmra.mxu0 %v5889
        %v6197 = vpop.f32.mrf.mxu0
        %v6198 = vadd.f32 0.0, %v6197
        %6199 = vmatmul.f32.gmra.mxu0 %v5892
        %v6200 = vpop.f32.mrf.mxu0
        %v6201 = vadd.f32 0.0, %v6200
        %6202 = vmatmul.f32.gmra.mxu0 %v5895
        %v6203 = vpop.f32.mrf.mxu0
        %v6204 = vadd.f32 0.0, %v6203
        %6205 = vmatmul.f32.gmra.mxu0 %v5898
        %v6206 = vpop.f32.mrf.mxu0
        %v6207 = vadd.f32 0.0, %v6206
        %6208 = vmatmul.f32.gmra.mxu0 %v5901
        %v6209 = vpop.f32.mrf.mxu0
        %v6210 = vadd.f32 0.0, %v6209
        %6211 = vmatmul.f32.gmra.mxu0 %v5904
        %v6212 = vpop.f32.mrf.mxu0
        %v6213 = vadd.f32 0.0, %v6212
        %6214 = vmatmul.f32.gmra.mxu0 %v5907
        %v6215 = vpop.f32.mrf.mxu0
        %v6216 = vadd.f32 0.0, %v6215
        %6217 = vmatmul.f32.gmra.mxu0 %v5910
        %v6218 = vpop.f32.mrf.mxu0
        %v6219 = vadd.f32 0.0, %v6218
        %6220 = vmatmul.f32.gmra.mxu0 %v5913
        %v6221 = vpop.f32.mrf.mxu0
        %v6222 = vadd.f32 0.0, %v6221
        %6223 = vmatmul.f32.gmra.mxu0 %v5916
        %v6224 = vpop.f32.mrf.mxu0
        %v6225 = vadd.f32 0.0, %v6224
        %6226 = vmatmul.f32.gmra.mxu0 %v5919
        %v6227 = vpop.f32.mrf.mxu0
        %v6228 = vadd.f32 0.0, %v6227
        %6229 = vmatmul.f32.gmra.mxu0 %v5922
        %v6230 = vpop.f32.mrf.mxu0
        %v6231 = vadd.f32 0.0, %v6230
        %6232 = vmatmul.f32.gmra.mxu0 %v5925
        %v6233 = vpop.f32.mrf.mxu0
        %v6234 = vadd.f32 0.0, %v6233
        %6235 = vmatmul.f32.gmra.mxu0 %v5928
        %v6236 = vpop.f32.mrf.mxu0
        %v6237 = vadd.f32 0.0, %v6236
        %6238 = vmatmul.f32.gmra.mxu0 %v5931
        %v6239 = vpop.f32.mrf.mxu0
        %v6240 = vadd.f32 0.0, %v6239
        %6241 = vmatmul.f32.gmra.mxu0 %v5934
        %v6242 = vpop.f32.mrf.mxu0
        %v6243 = vadd.f32 0.0, %v6242
        %6244 = vmatmul.f32.gmra.mxu0 %v5937
        %v6245 = vpop.f32.mrf.mxu0
        %v6246 = vadd.f32 0.0, %v6245
        %6247 = vmatmul.f32.gmra.mxu0 %v5940
        %v6248 = vpop.f32.mrf.mxu0
        %v6249 = vadd.f32 0.0, %v6248
        %6250 = vmatmul.f32.gmra.mxu0 %v5943
        %v6251 = vpop.f32.mrf.mxu0
        %v6252 = vadd.f32 0.0, %v6251
        %6253 = vmatmul.f32.gmra.mxu0 %v5946
        %v6254 = vpop.f32.mrf.mxu0
        %v6255 = vadd.f32 0.0, %v6254
        %6256 = vmatmul.f32.gmra.mxu0 %v5949
        %v6257 = vpop.f32.mrf.mxu0
        %v6258 = vadd.f32 0.0, %v6257
        %6259 = vmatmul.f32.gmra.mxu0 %v5952
        %v6260 = vpop.f32.mrf.mxu0
        %v6261 = vadd.f32 0.0, %v6260
        %6262 = vmatmul.f32.gmra.mxu0 %v5955
        %v6263 = vpop.f32.mrf.mxu0
        %v6264 = vadd.f32 0.0, %v6263
        %6265 = vmatmul.f32.gmra.mxu0 %v5958
        %v6266 = vpop.f32.mrf.mxu0
        %v6267 = vadd.f32 0.0, %v6266
        %6268 = vmatmul.f32.gmra.mxu0 %v5961
        %v6269 = vpop.f32.mrf.mxu0
        %v6270 = vadd.f32 0.0, %v6269
        %6271 = vmatmul.f32.gmra.mxu0 %v5964
        %v6272 = vpop.f32.mrf.mxu0
        %v6273 = vadd.f32 0.0, %v6272
        %6274 = vmatmul.f32.gmra.mxu0 %v5967
        %v6275 = vpop.f32.mrf.mxu0
        %v6276 = vadd.f32 0.0, %v6275
        %6277 = vmatmul.f32.gmra.mxu0 %v5970
        %v6278 = vpop.f32.mrf.mxu0
        %v6279 = vadd.f32 0.0, %v6278
        %6280 = vmatmul.f32.gmra.mxu0 %v5973
        %v6281 = vpop.f32.mrf.mxu0
        %v6282 = vadd.f32 0.0, %v6281
        %6283 = vmatmul.f32.gmra.mxu0 %v5976
        %v6284 = vpop.f32.mrf.mxu0
        %v6285 = vadd.f32 0.0, %v6284
        %6286 = vmatmul.f32.gmra.mxu0 %v5979
        %v6287 = vpop.f32.mrf.mxu0
        %v6288 = vadd.f32 0.0, %v6287
        %6289 = vmatmul.f32.gmra.mxu0 %v5982
        %v6290 = vpop.f32.mrf.mxu0
        %v6291 = vadd.f32 0.0, %v6290
        %6292 = vmatmul.f32.gmra.mxu0 %v5985
        %v6293 = vpop.f32.mrf.mxu0
        %v6294 = vadd.f32 0.0, %v6293
        %6295 = vmatmul.f32.gmra.mxu0 %v5988
        %v6296 = vpop.f32.mrf.mxu0
        %v6297 = vadd.f32 0.0, %v6296
        %6298 = vmatmul.f32.gmra.mxu0 %v5991
        %v6299 = vpop.f32.mrf.mxu0
        %v6300 = vadd.f32 0.0, %v6299
        %6301 = vmatmul.f32.gmra.mxu0 %v5994
        %v6302 = vpop.f32.mrf.mxu0
        %v6303 = vadd.f32 0.0, %v6302
        %6304 = vmatmul.f32.gmra.mxu0 %v5997
        %v6305 = vpop.f32.mrf.mxu0
        %v6306 = vadd.f32 0.0, %v6305
        %6307 = vmatmul.f32.gmra.mxu0 %v6000
        %v6308 = vpop.f32.mrf.mxu0
        %v6309 = vadd.f32 0.0, %v6308
        %6310 = vmatmul.f32.gmra.mxu0 %v6003
        %v6311 = vpop.f32.mrf.mxu0
        %v6312 = vadd.f32 0.0, %v6311
        %6313 = vmatmul.f32.gmra.mxu0 %v6006
        %v6314 = vpop.f32.mrf.mxu0
        %v6315 = vadd.f32 0.0, %v6314
        %6316 = vmatmul.f32.gmra.mxu0 %v6009
        %v6317 = vpop.f32.mrf.mxu0
        %v6318 = vadd.f32 0.0, %v6317
        %6319 = vmatmul.f32.gmra.mxu0 %v6012
        %v6320 = vpop.f32.mrf.mxu0
        %v6321 = vadd.f32 0.0, %v6320
        %6322 = vmatmul.f32.gmra.mxu0 %v6015
        %v6323 = vpop.f32.mrf.mxu0
        %v6324 = vadd.f32 0.0, %v6323
        %6325 = vmatmul.f32.gmra.mxu0 %v6018
        %v6326 = vpop.f32.mrf.mxu0
        %v6327 = vadd.f32 0.0, %v6326
        %6328 = vmatmul.f32.gmra.mxu0 %v6021
        %v6329 = vpop.f32.mrf.mxu0
        %v6330 = vadd.f32 0.0, %v6329
        %6331 = vmatmul.f32.gmra.mxu0 %v6024
        %v6332 = vpop.f32.mrf.mxu0
        %v6333 = vadd.f32 0.0, %v6332
        %6334 = vmatmul.f32.gmra.mxu0 %v6027
        %v6335 = vpop.f32.mrf.mxu0
        %v6336 = vadd.f32 0.0, %v6335
        %6337 = vmatmul.f32.gmra.mxu0 %v6030
        %v6338 = vpop.f32.mrf.mxu0
        %v6339 = vadd.f32 0.0, %v6338
        %6340 = vmatmul.f32.gmra.mxu0 %v6033
        %v6341 = vpop.f32.mrf.mxu0
        %v6342 = vadd.f32 0.0, %v6341
        %6343 = vmatmul.f32.gmra.mxu0 %v6036
        %v6344 = vpop.f32.mrf.mxu0
        %v6345 = vadd.f32 0.0, %v6344
        %6346 = vmatmul.f32.gmra.mxu0 %v6039
        %v6347 = vpop.f32.mrf.mxu0
        %v6348 = vadd.f32 0.0, %v6347
        %6349 = vmatmul.f32.gmra.mxu0 %v6042
        %v6350 = vpop.f32.mrf.mxu0
        %v6351 = vadd.f32 0.0, %v6350
        %6352 = vmatmul.f32.gmra.mxu0 %v6045
        %v6353 = vpop.f32.mrf.mxu0
        %v6354 = vadd.f32 0.0, %v6353
        %6355 = vmatmul.f32.gmra.mxu0 %v6048
        %v6356 = vpop.f32.mrf.mxu0
        %v6357 = vadd.f32 0.0, %v6356
        %6358 = vmatmul.f32.gmra.mxu0 %v6051
        %v6359 = vpop.f32.mrf.mxu0
        %v6360 = vadd.f32 0.0, %v6359
        %6361 = vmatmul.f32.gmra.mxu0 %v6054
        %v6362 = vpop.f32.mrf.mxu0
        %v6363 = vadd.f32 0.0, %v6362
        %6364 = vmatmul.f32.gmra.mxu0 %v6057
        %v6365 = vpop.f32.mrf.mxu0
        %v6366 = vadd.f32 0.0, %v6365
        %6367 = vmatmul.f32.gmra.mxu0 %v6060
        %v6368 = vpop.f32.mrf.mxu0
        %v6369 = vadd.f32 0.0, %v6368
        %6370 = vmatmul.f32.gmra.mxu0 %v6063
        %v6371 = vpop.f32.mrf.mxu0
        %v6372 = vadd.f32 0.0, %v6371
        %6373 = vmatmul.f32.gmra.mxu0 %v6066
        %v6374 = vpop.f32.mrf.mxu0
        %v6375 = vadd.f32 0.0, %v6374
        %6376 = vmatmul.f32.gmra.mxu0 %v6069
        %v6377 = vpop.f32.mrf.mxu0
        %v6378 = vadd.f32 0.0, %v6377
        %6379 = vmatmul.f32.gmra.mxu0 %v6072
        %v6380 = vpop.f32.mrf.mxu0
        %v6381 = vadd.f32 0.0, %v6380
        %6382 = vmatmul.f32.gmra.mxu0 %v6075
        %v6383 = vpop.f32.mrf.mxu0
        %v6384 = vadd.f32 0.0, %v6383
        %6385 = vmatmul.f32.gmra.mxu0 %v6078
        %v6386 = vpop.f32.mrf.mxu0
        %v6387 = vadd.f32 0.0, %v6386
        %6388 = vmatmul.f32.gmra.mxu0 %v6081
        %v6389 = vpop.f32.mrf.mxu0
        %v6390 = vadd.f32 0.0, %v6389
        %6391 = vmatmul.f32.gmra.mxu0 %v6084
        %v6392 = vpop.f32.mrf.mxu0
        %v6393 = vadd.f32 0.0, %v6392
        %6394 = vmatmul.f32.gmra.mxu0 %v6087
        %v6395 = vpop.f32.mrf.mxu0
        %v6396 = vadd.f32 0.0, %v6395
        %6397 = vmatmul.f32.gmra.mxu0 %v6090
        %v6398 = vpop.f32.mrf.mxu0
        %v6399 = vadd.f32 0.0, %v6398
        %6400 = vmatmul.f32.gmra.mxu0 %v6093
        %v6401 = vpop.f32.mrf.mxu0
        %v6402 = vadd.f32 0.0, %v6401
        %6403 = vmatmul.f32.gmra.mxu0 %v6096
        %v6404 = vpop.f32.mrf.mxu0
        %v6405 = vadd.f32 0.0, %v6404
        %6406 = vmatmul.f32.gmra.mxu0 %v6099
        %v6407 = vpop.f32.mrf.mxu0
        %v6408 = vadd.f32 0.0, %v6407
        %6409 = vmatmul.f32.gmra.mxu0 %v6102
        %v6410 = vpop.f32.mrf.mxu0
        %v6411 = vadd.f32 0.0, %v6410
        %6412 = vmatmul.f32.gmra.mxu0 %v6105
        %v6413 = vpop.f32.mrf.mxu0
        %v6414 = vadd.f32 0.0, %v6413
        %6415 = vmatmul.f32.gmra.mxu0 %v6108
        %v6416 = vpop.f32.mrf.mxu0
        %v6417 = vadd.f32 0.0, %v6416
        %6418 = vmatmul.f32.gmra.mxu0 %v6111
        %v6419 = vpop.f32.mrf.mxu0
        %v6420 = vadd.f32 0.0, %v6419
        %6421 = vmatmul.f32.gmra.mxu0 %v6114
        %v6422 = vpop.f32.mrf.mxu0
        %v6423 = vadd.f32 0.0, %v6422
        %6424 = vmatmul.f32.gmra.mxu0 %v6117
        %v6425 = vpop.f32.mrf.mxu0
        %v6426 = vadd.f32 0.0, %v6425
        %6427 = vmatmul.f32.gmra.mxu0 %v6120
        %v6428 = vpop.f32.mrf.mxu0
        %v6429 = vadd.f32 0.0, %v6428
        %6430 = vmatmul.f32.gmra.mxu0 %v6123
        %v6431 = vpop.f32.mrf.mxu0
        %v6432 = vadd.f32 0.0, %v6431
        %6433 = vmatmul.f32.gmra.mxu0 %v6126
        %v6434 = vpop.f32.mrf.mxu0
        %v6435 = vadd.f32 0.0, %v6434
        %6436 = vmatmul.f32.gmra.mxu0 %v6129
        %v6437 = vpop.f32.mrf.mxu0
        %v6438 = vadd.f32 0.0, %v6437
        %6439 = vmatmul.f32.gmra.mxu0 %v6132
        %v6440 = vpop.f32.mrf.mxu0
        %v6441 = vadd.f32 0.0, %v6440
        %6442 = vmatmul.f32.gmra.mxu0 %v6135
        %v6443 = vpop.f32.mrf.mxu0
        %v6444 = vadd.f32 0.0, %v6443
        %6445 = vmatmul.f32.gmra.mxu0 %v6138
        %v6446 = vpop.f32.mrf.mxu0
        %v6447 = vadd.f32 0.0, %v6446
        %6448 = vmatmul.f32.gmra.mxu0 %v6141
        %v6449 = vpop.f32.mrf.mxu0
        %v6450 = vadd.f32 0.0, %v6449
        %6451 = vmatmul.f32.gmra.mxu0 %v6144
        %v6452 = vpop.f32.mrf.mxu0
        %v6453 = vadd.f32 0.0, %v6452
        %6454 = vmatmul.f32.gmra.mxu0 %v6147
        %v6455 = vpop.f32.mrf.mxu0
        %v6456 = vadd.f32 0.0, %v6455
        %6457 = vmatmul.f32.gmra.mxu0 %v6150
        %v6458 = vpop.f32.mrf.mxu0
        %v6459 = vadd.f32 0.0, %v6458
        %6460 = vmatmul.f32.gmra.mxu0 %v6153
        %v6461 = vpop.f32.mrf.mxu0
        %v6462 = vadd.f32 0.0, %v6461
        %6463 = vmatmul.f32.gmra.mxu0 %v6156
        %v6464 = vpop.f32.mrf.mxu0
        %v6465 = vadd.f32 0.0, %v6464
        %6466 = vmatmul.f32.gmra.mxu0 %v6159
        %v6467 = vpop.f32.mrf.mxu0
        %v6468 = vadd.f32 0.0, %v6467
        %6469 = vmatmul.f32.gmra.mxu0 %v6162
        %v6470 = vpop.f32.mrf.mxu0
        %v6471 = vadd.f32 0.0, %v6470
        %6472 = vmatmul.f32.gmra.mxu0 %v6165
        %v6473 = vpop.f32.mrf.mxu0
        %v6474 = vadd.f32 0.0, %v6473
        %6475 = vmatmul.f32.gmra.mxu0 %v6168
        %v6476 = vpop.f32.mrf.mxu0
        %v6477 = vadd.f32 0.0, %v6476
        %6478 = vmatmul.f32.gmra.mxu0 %v6171
        %v6479 = vpop.f32.mrf.mxu0
        %v6480 = vadd.f32 0.0, %v6479
        %6481 = vdwg.mxu0
        %6483 = vset.pattern.permute.xlu0 0
        %6484 = vperm.xlu0 %6483, %v5695
        %v6485 = vpop.permute.xlu0 %6484
        %6488 = vset.pattern.permute.xlu0 0
        %6489 = vperm.xlu0 %6488, %v5696
        %v6490 = vpop.permute.xlu0 %6489
        %6493 = vset.pattern.permute.xlu0 0
        %6494 = vperm.xlu0 %6493, %v5697
        %v6495 = vpop.permute.xlu0 %6494
        %6498 = vset.pattern.permute.xlu0 0
        %6499 = vperm.xlu0 %6498, %v5698
        %v6500 = vpop.permute.xlu0 %6499
        %6503 = vset.pattern.permute.xlu0 0
        %6504 = vperm.xlu0 %6503, %v5699
        %v6505 = vpop.permute.xlu0 %6504
        %6508 = vset.pattern.permute.xlu0 0
        %6509 = vperm.xlu0 %6508, %v5700
        %v6510 = vpop.permute.xlu0 %6509
        %6513 = vset.pattern.permute.xlu0 0
        %6514 = vperm.xlu0 %6513, %v5701
        %v6515 = vpop.permute.xlu0 %6514
        %6518 = vset.pattern.permute.xlu0 0
        %6519 = vperm.xlu0 %6518, %v5702
        %v6520 = vpop.permute.xlu0 %6519
        %6523 = vset.pattern.permute.xlu0 0
        %6524 = vperm.xlu0 %6523, %v5703
        %v6525 = vpop.permute.xlu0 %6524
        %6528 = vset.pattern.permute.xlu0 0
        %6529 = vperm.xlu0 %6528, %v5704
        %v6530 = vpop.permute.xlu0 %6529
        %6533 = vset.pattern.permute.xlu0 0
        %6534 = vperm.xlu0 %6533, %v5705
        %v6535 = vpop.permute.xlu0 %6534
        %6538 = vset.pattern.permute.xlu0 0
        %6539 = vperm.xlu0 %6538, %v5706
        %v6540 = vpop.permute.xlu0 %6539
        %6543 = vset.pattern.permute.xlu0 0
        %6544 = vperm.xlu0 %6543, %v5707
        %v6545 = vpop.permute.xlu0 %6544
        %6548 = vset.pattern.permute.xlu0 0
        %6549 = vperm.xlu0 %6548, %v5708
        %v6550 = vpop.permute.xlu0 %6549
        %6553 = vset.pattern.permute.xlu0 0
        %6554 = vperm.xlu0 %6553, %v5709
        %v6555 = vpop.permute.xlu0 %6554
        %6558 = vset.pattern.permute.xlu0 0
        %6559 = vperm.xlu0 %6558, %v5710
        %v6560 = vpop.permute.xlu0 %6559
        %6563 = vset.pattern.permute.xlu0 0
        %6564 = vperm.xlu0 %6563, %v5727
        %v6565 = vpop.permute.xlu0 %6564
        %6568 = vset.pattern.permute.xlu0 0
        %6569 = vperm.xlu0 %6568, %v5728
        %v6570 = vpop.permute.xlu0 %6569
        %6573 = vset.pattern.permute.xlu0 0
        %6574 = vperm.xlu0 %6573, %v5729
        %v6575 = vpop.permute.xlu0 %6574
        %6578 = vset.pattern.permute.xlu0 0
        %6579 = vperm.xlu0 %6578, %v5730
        %v6580 = vpop.permute.xlu0 %6579
        %6583 = vset.pattern.permute.xlu0 0
        %6584 = vperm.xlu0 %6583, %v5731
        %v6585 = vpop.permute.xlu0 %6584
        %6588 = vset.pattern.permute.xlu0 0
        %6589 = vperm.xlu0 %6588, %v5732
        %v6590 = vpop.permute.xlu0 %6589
        %6593 = vset.pattern.permute.xlu0 0
        %6594 = vperm.xlu0 %6593, %v5733
        %v6595 = vpop.permute.xlu0 %6594
        %6598 = vset.pattern.permute.xlu0 0
        %6599 = vperm.xlu0 %6598, %v5734
        %v6600 = vpop.permute.xlu0 %6599
        %6603 = vset.pattern.permute.xlu0 0
        %6604 = vperm.xlu0 %6603, %v5735
        %v6605 = vpop.permute.xlu0 %6604
        %6608 = vset.pattern.permute.xlu0 0
        %6609 = vperm.xlu0 %6608, %v5736
        %v6610 = vpop.permute.xlu0 %6609
        %6613 = vset.pattern.permute.xlu0 0
        %6614 = vperm.xlu0 %6613, %v5737
        %v6615 = vpop.permute.xlu0 %6614
        %6618 = vset.pattern.permute.xlu0 0
        %6619 = vperm.xlu0 %6618, %v5738
        %v6620 = vpop.permute.xlu0 %6619
        %6623 = vset.pattern.permute.xlu0 0
        %6624 = vperm.xlu0 %6623, %v5739
        %v6625 = vpop.permute.xlu0 %6624
        %6628 = vset.pattern.permute.xlu0 0
        %6629 = vperm.xlu0 %6628, %v5740
        %v6630 = vpop.permute.xlu0 %6629
        %6633 = vset.pattern.permute.xlu0 0
        %6634 = vperm.xlu0 %6633, %v5741
        %v6635 = vpop.permute.xlu0 %6634
        %6638 = vset.pattern.permute.xlu0 0
        %6639 = vperm.xlu0 %6638, %v5742
        %v6640 = vpop.permute.xlu0 %6639
        %6643 = vset.pattern.permute.xlu0 0
        %6644 = vperm.xlu0 %6643, %v5759
        %v6645 = vpop.permute.xlu0 %6644
        %6648 = vset.pattern.permute.xlu0 0
        %6649 = vperm.xlu0 %6648, %v5760
        %v6650 = vpop.permute.xlu0 %6649
        %6653 = vset.pattern.permute.xlu0 0
        %6654 = vperm.xlu0 %6653, %v5761
        %v6655 = vpop.permute.xlu0 %6654
        %6658 = vset.pattern.permute.xlu0 0
        %6659 = vperm.xlu0 %6658, %v5762
        %v6660 = vpop.permute.xlu0 %6659
        %6663 = vset.pattern.permute.xlu0 0
        %6664 = vperm.xlu0 %6663, %v5763
        %v6665 = vpop.permute.xlu0 %6664
        %6668 = vset.pattern.permute.xlu0 0
        %6669 = vperm.xlu0 %6668, %v5764
        %v6670 = vpop.permute.xlu0 %6669
        %6673 = vset.pattern.permute.xlu0 0
        %6674 = vperm.xlu0 %6673, %v5765
        %v6675 = vpop.permute.xlu0 %6674
        %6678 = vset.pattern.permute.xlu0 0
        %6679 = vperm.xlu0 %6678, %v5766
        %v6680 = vpop.permute.xlu0 %6679
        %6683 = vset.pattern.permute.xlu0 0
        %6684 = vperm.xlu0 %6683, %v5767
        %v6685 = vpop.permute.xlu0 %6684
        %6688 = vset.pattern.permute.xlu0 0
        %6689 = vperm.xlu0 %6688, %v5768
        %v6690 = vpop.permute.xlu0 %6689
        %6693 = vset.pattern.permute.xlu0 0
        %6694 = vperm.xlu0 %6693, %v5769
        %v6695 = vpop.permute.xlu0 %6694
        %6698 = vset.pattern.permute.xlu0 0
        %6699 = vperm.xlu0 %6698, %v5770
        %v6700 = vpop.permute.xlu0 %6699
        %6703 = vset.pattern.permute.xlu0 0
        %6704 = vperm.xlu0 %6703, %v5771
        %v6705 = vpop.permute.xlu0 %6704
        %6708 = vset.pattern.permute.xlu0 0
        %6709 = vperm.xlu0 %6708, %v5772
        %v6710 = vpop.permute.xlu0 %6709
        %6713 = vset.pattern.permute.xlu0 0
        %6714 = vperm.xlu0 %6713, %v5773
        %v6715 = vpop.permute.xlu0 %6714
        %6718 = vset.pattern.permute.xlu0 0
        %6719 = vperm.xlu0 %6718, %v5774
        %v6720 = vpop.permute.xlu0 %6719
        %6723 = vset.pattern.permute.xlu0 0
        %6724 = vperm.xlu0 %6723, %v5791
        %v6725 = vpop.permute.xlu0 %6724
        %6728 = vset.pattern.permute.xlu0 0
        %6729 = vperm.xlu0 %6728, %v5792
        %v6730 = vpop.permute.xlu0 %6729
        %6733 = vset.pattern.permute.xlu0 0
        %6734 = vperm.xlu0 %6733, %v5793
        %v6735 = vpop.permute.xlu0 %6734
        %6738 = vset.pattern.permute.xlu0 0
        %6739 = vperm.xlu0 %6738, %v5794
        %v6740 = vpop.permute.xlu0 %6739
        %6743 = vset.pattern.permute.xlu0 0
        %6744 = vperm.xlu0 %6743, %v5795
        %v6745 = vpop.permute.xlu0 %6744
        %6748 = vset.pattern.permute.xlu0 0
        %6749 = vperm.xlu0 %6748, %v5796
        %v6750 = vpop.permute.xlu0 %6749
        %6753 = vset.pattern.permute.xlu0 0
        %6754 = vperm.xlu0 %6753, %v5797
        %v6755 = vpop.permute.xlu0 %6754
        %6758 = vset.pattern.permute.xlu0 0
        %6759 = vperm.xlu0 %6758, %v5798
        %v6760 = vpop.permute.xlu0 %6759
        %6763 = vset.pattern.permute.xlu0 0
        %6764 = vperm.xlu0 %6763, %v5799
        %v6765 = vpop.permute.xlu0 %6764
        %6768 = vset.pattern.permute.xlu0 0
        %6769 = vperm.xlu0 %6768, %v5800
        %v6770 = vpop.permute.xlu0 %6769
        %6773 = vset.pattern.permute.xlu0 0
        %6774 = vperm.xlu0 %6773, %v5801
        %v6775 = vpop.permute.xlu0 %6774
        %6778 = vset.pattern.permute.xlu0 0
        %6779 = vperm.xlu0 %6778, %v5802
        %v6780 = vpop.permute.xlu0 %6779
        %6783 = vset.pattern.permute.xlu0 0
        %6784 = vperm.xlu0 %6783, %v5803
        %v6785 = vpop.permute.xlu0 %6784
        %6788 = vset.pattern.permute.xlu0 0
        %6789 = vperm.xlu0 %6788, %v5804
        %v6790 = vpop.permute.xlu0 %6789
        %6793 = vset.pattern.permute.xlu0 0
        %6794 = vperm.xlu0 %6793, %v5805
        %v6795 = vpop.permute.xlu0 %6794
        %6798 = vset.pattern.permute.xlu0 0
        %6799 = vperm.xlu0 %6798, %v5806
        %v6800 = vpop.permute.xlu0 %6799
        %6803 = vset.pattern.permute.xlu0 0
        %6804 = vperm.xlu0 %6803, %v5823
        %v6805 = vpop.permute.xlu0 %6804
        %6808 = vset.pattern.permute.xlu0 0
        %6809 = vperm.xlu0 %6808, %v5824
        %v6810 = vpop.permute.xlu0 %6809
        %6813 = vset.pattern.permute.xlu0 0
        %6814 = vperm.xlu0 %6813, %v5825
        %v6815 = vpop.permute.xlu0 %6814
        %6818 = vset.pattern.permute.xlu0 0
        %6819 = vperm.xlu0 %6818, %v5826
        %v6820 = vpop.permute.xlu0 %6819
        %6823 = vset.pattern.permute.xlu0 0
        %6824 = vperm.xlu0 %6823, %v5827
        %v6825 = vpop.permute.xlu0 %6824
        %6828 = vset.pattern.permute.xlu0 0
        %6829 = vperm.xlu0 %6828, %v5828
        %v6830 = vpop.permute.xlu0 %6829
        %6833 = vset.pattern.permute.xlu0 0
        %6834 = vperm.xlu0 %6833, %v5829
        %v6835 = vpop.permute.xlu0 %6834
        %6838 = vset.pattern.permute.xlu0 0
        %6839 = vperm.xlu0 %6838, %v5830
        %v6840 = vpop.permute.xlu0 %6839
        %6843 = vset.pattern.permute.xlu0 0
        %6844 = vperm.xlu0 %6843, %v5831
        %v6845 = vpop.permute.xlu0 %6844
        %6848 = vset.pattern.permute.xlu0 0
        %6849 = vperm.xlu0 %6848, %v5832
        %v6850 = vpop.permute.xlu0 %6849
        %6853 = vset.pattern.permute.xlu0 0
        %6854 = vperm.xlu0 %6853, %v5833
        %v6855 = vpop.permute.xlu0 %6854
        %6858 = vset.pattern.permute.xlu0 0
        %6859 = vperm.xlu0 %6858, %v5834
        %v6860 = vpop.permute.xlu0 %6859
        %6863 = vset.pattern.permute.xlu0 0
        %6864 = vperm.xlu0 %6863, %v5835
        %v6865 = vpop.permute.xlu0 %6864
        %6868 = vset.pattern.permute.xlu0 0
        %6869 = vperm.xlu0 %6868, %v5836
        %v6870 = vpop.permute.xlu0 %6869
        %6873 = vset.pattern.permute.xlu0 0
        %6874 = vperm.xlu0 %6873, %v5837
        %v6875 = vpop.permute.xlu0 %6874
        %6878 = vset.pattern.permute.xlu0 0
        %6879 = vperm.xlu0 %6878, %v5838
        %v6880 = vpop.permute.xlu0 %6879
        %6883 = vset.pattern.permute.xlu0 0
        %6884 = vperm.xlu0 %6883, %v5855
        %v6885 = vpop.permute.xlu0 %6884
        %6888 = vset.pattern.permute.xlu0 0
        %6889 = vperm.xlu0 %6888, %v5856
        %v6890 = vpop.permute.xlu0 %6889
        %6893 = vset.pattern.permute.xlu0 0
        %6894 = vperm.xlu0 %6893, %v5857
        %v6895 = vpop.permute.xlu0 %6894
        %6898 = vset.pattern.permute.xlu0 0
        %6899 = vperm.xlu0 %6898, %v5858
        %v6900 = vpop.permute.xlu0 %6899
        %6903 = vset.pattern.permute.xlu0 0
        %6904 = vperm.xlu0 %6903, %v5859
        %v6905 = vpop.permute.xlu0 %6904
        %6908 = vset.pattern.permute.xlu0 0
        %6909 = vperm.xlu0 %6908, %v5860
        %v6910 = vpop.permute.xlu0 %6909
        %6913 = vset.pattern.permute.xlu0 0
        %6914 = vperm.xlu0 %6913, %v5861
        %v6915 = vpop.permute.xlu0 %6914
        %6918 = vset.pattern.permute.xlu0 0
        %6919 = vperm.xlu0 %6918, %v5862
        %v6920 = vpop.permute.xlu0 %6919
        %6923 = vset.pattern.permute.xlu0 0
        %6924 = vperm.xlu0 %6923, %v5863
        %v6925 = vpop.permute.xlu0 %6924
        %6928 = vset.pattern.permute.xlu0 0
        %6929 = vperm.xlu0 %6928, %v5864
        %v6930 = vpop.permute.xlu0 %6929
        %6933 = vset.pattern.permute.xlu0 0
        %6934 = vperm.xlu0 %6933, %v5865
        %v6935 = vpop.permute.xlu0 %6934
        %6938 = vset.pattern.permute.xlu0 0
        %6939 = vperm.xlu0 %6938, %v5866
        %v6940 = vpop.permute.xlu0 %6939
        %6943 = vset.pattern.permute.xlu0 0
        %6944 = vperm.xlu0 %6943, %v5867
        %v6945 = vpop.permute.xlu0 %6944
        %6948 = vset.pattern.permute.xlu0 0
        %6949 = vperm.xlu0 %6948, %v5868
        %v6950 = vpop.permute.xlu0 %6949
        %6953 = vset.pattern.permute.xlu0 0
        %6954 = vperm.xlu0 %6953, %v5869
        %v6955 = vpop.permute.xlu0 %6954
        %6958 = vset.pattern.permute.xlu0 0
        %6959 = vperm.xlu0 %6958, %v5870
        %v6960 = vpop.permute.xlu0 %6959
        %v6962 = vmul.f32 %v6485, %v6195
        %v6963 = vmul.f32 %v6490, %v6198
        %v6964 = vmul.f32 %v6495, %v6201
        %v6965 = vmul.f32 %v6500, %v6204
        %v6966 = vmul.f32 %v6505, %v6207
        %v6967 = vmul.f32 %v6510, %v6210
        %v6968 = vmul.f32 %v6515, %v6213
        %v6969 = vmul.f32 %v6520, %v6216
        %v6970 = vmul.f32 %v6525, %v6219
        %v6971 = vmul.f32 %v6530, %v6222
        %v6972 = vmul.f32 %v6535, %v6225
        %v6973 = vmul.f32 %v6540, %v6228
        %v6974 = vmul.f32 %v6545, %v6231
        %v6975 = vmul.f32 %v6550, %v6234
        %v6976 = vmul.f32 %v6555, %v6237
        %v6977 = vmul.f32 %v6560, %v6240
        %v6978 = vmul.f32 %v6565, %v6243
        %v6979 = vmul.f32 %v6570, %v6246
        %v6980 = vmul.f32 %v6575, %v6249
        %v6981 = vmul.f32 %v6580, %v6252
        %v6982 = vmul.f32 %v6585, %v6255
        %v6983 = vmul.f32 %v6590, %v6258
        %v6984 = vmul.f32 %v6595, %v6261
        %v6985 = vmul.f32 %v6600, %v6264
        %v6986 = vmul.f32 %v6605, %v6267
        %v6987 = vmul.f32 %v6610, %v6270
        %v6988 = vmul.f32 %v6615, %v6273
        %v6989 = vmul.f32 %v6620, %v6276
        %v6990 = vmul.f32 %v6625, %v6279
        %v6991 = vmul.f32 %v6630, %v6282
        %v6992 = vmul.f32 %v6635, %v6285
        %v6993 = vmul.f32 %v6640, %v6288
        %v6994 = vmul.f32 %v6645, %v6291
        %v6995 = vmul.f32 %v6650, %v6294
        %v6996 = vmul.f32 %v6655, %v6297
        %v6997 = vmul.f32 %v6660, %v6300
        %v6998 = vmul.f32 %v6665, %v6303
        %v6999 = vmul.f32 %v6670, %v6306
        %v7000 = vmul.f32 %v6675, %v6309
        %v7001 = vmul.f32 %v6680, %v6312
        %v7002 = vmul.f32 %v6685, %v6315
        %v7003 = vmul.f32 %v6690, %v6318
        %v7004 = vmul.f32 %v6695, %v6321
        %v7005 = vmul.f32 %v6700, %v6324
        %v7006 = vmul.f32 %v6705, %v6327
        %v7007 = vmul.f32 %v6710, %v6330
        %v7008 = vmul.f32 %v6715, %v6333
        %v7009 = vmul.f32 %v6720, %v6336
        %v7010 = vmul.f32 %v6725, %v6339
        %v7011 = vmul.f32 %v6730, %v6342
        %v7012 = vmul.f32 %v6735, %v6345
        %v7013 = vmul.f32 %v6740, %v6348
        %v7014 = vmul.f32 %v6745, %v6351
        %v7015 = vmul.f32 %v6750, %v6354
        %v7016 = vmul.f32 %v6755, %v6357
        %v7017 = vmul.f32 %v6760, %v6360
        %v7018 = vmul.f32 %v6765, %v6363
        %v7019 = vmul.f32 %v6770, %v6366
        %v7020 = vmul.f32 %v6775, %v6369
        %v7021 = vmul.f32 %v6780, %v6372
        %v7022 = vmul.f32 %v6785, %v6375
        %v7023 = vmul.f32 %v6790, %v6378
        %v7024 = vmul.f32 %v6795, %v6381
        %v7025 = vmul.f32 %v6800, %v6384
        %v7026 = vmul.f32 %v6805, %v6387
        %v7027 = vmul.f32 %v6810, %v6390
        %v7028 = vmul.f32 %v6815, %v6393
        %v7029 = vmul.f32 %v6820, %v6396
        %v7030 = vmul.f32 %v6825, %v6399
        %v7031 = vmul.f32 %v6830, %v6402
        %v7032 = vmul.f32 %v6835, %v6405
        %v7033 = vmul.f32 %v6840, %v6408
        %v7034 = vmul.f32 %v6845, %v6411
        %v7035 = vmul.f32 %v6850, %v6414
        %v7036 = vmul.f32 %v6855, %v6417
        %v7037 = vmul.f32 %v6860, %v6420
        %v7038 = vmul.f32 %v6865, %v6423
        %v7039 = vmul.f32 %v6870, %v6426
        %v7040 = vmul.f32 %v6875, %v6429
        %v7041 = vmul.f32 %v6880, %v6432
        %v7042 = vmul.f32 %v6885, %v6435
        %v7043 = vmul.f32 %v6890, %v6438
        %v7044 = vmul.f32 %v6895, %v6441
        %v7045 = vmul.f32 %v6900, %v6444
        %v7046 = vmul.f32 %v6905, %v6447
        %v7047 = vmul.f32 %v6910, %v6450
        %v7048 = vmul.f32 %v6915, %v6453
        %v7049 = vmul.f32 %v6920, %v6456
        %v7050 = vmul.f32 %v6925, %v6459
        %v7051 = vmul.f32 %v6930, %v6462
        %v7052 = vmul.f32 %v6935, %v6465
        %v7053 = vmul.f32 %v6940, %v6468
        %v7054 = vmul.f32 %v6945, %v6471
        %v7055 = vmul.f32 %v6950, %v6474
        %v7056 = vmul.f32 %v6955, %v6477
        %v7057 = vmul.f32 %v6960, %v6480
        %v7058 = vld [vmem:[%s7] sm:$0xff]
        %v7059 = vld [vmem:[%s7 + $0x8] sm:$0xff]
        %v7060 = vld [vmem:[%s7 + $0x10] sm:$0xff]
        %v7061 = vld [vmem:[%s7 + $0x18] sm:$0xff]
        %v7062 = vld [vmem:[%s7 + $0x20] sm:$0xff]
        %v7063 = vld [vmem:[%s7 + $0x28] sm:$0xff]
        %v7064 = vld [vmem:[%s7 + $0x30] sm:$0xff]
        %v7065 = vld [vmem:[%s7 + $0x38] sm:$0xff]
        %v7066 = vld [vmem:[%s7 + $0x40] sm:$0xff]
        %v7067 = vld [vmem:[%s7 + $0x48] sm:$0xff]
        %v7068 = vld [vmem:[%s7 + $0x50] sm:$0xff]
        %v7069 = vld [vmem:[%s7 + $0x58] sm:$0xff]
        %v7070 = vld [vmem:[%s7 + $0x60] sm:$0xf]
        %7071 = vxpose.xlu0.b32.start [1/16] %v1551, 128
        %7072 = vxpose.xlu0.b32.cont [2/16] %v1552, 128
        %7073 = vxpose.xlu0.b32.cont [3/16] %v1553, 128
        %7074 = vxpose.xlu0.b32.cont [4/16] %v1554, 128
        %7075 = vxpose.xlu0.b32.cont [5/16] %v1555, 128
        %7076 = vxpose.xlu0.b32.cont [6/16] %v1556, 128
        %7077 = vxpose.xlu0.b32.cont [7/16] %v1557, 128
        %7078 = vxpose.xlu0.b32.cont [8/16] %v1558, 128
        %7079 = vxpose.xlu0.b32.cont [9/16] %v1559, 128
        %7080 = vxpose.xlu0.b32.cont [10/16] %v1560, 128
        %7081 = vxpose.xlu0.b32.cont [11/16] %v1561, 128
        %7082 = vxpose.xlu0.b32.cont [12/16] %v1562, 128
        %7083 = vxpose.xlu0.b32.cont [13/16] %v1563, 128
        %7084 = vxpose.xlu0.b32.cont [14/16] %v1564, 128
        %7085 = vxpose.xlu0.b32.cont [15/16] %v1565, 128
        %7086 = vxpose.xlu0.b32.end [16/16] %v1566, 128
        %v7087 = vpop.trf.xlu0
        %v7088 = vpop.trf.xlu0
        %v7089 = vpop.trf.xlu0
        %v7090 = vpop.trf.xlu0
        %v7091 = vpop.trf.xlu0
        %v7092 = vpop.trf.xlu0
        %v7093 = vpop.trf.xlu0
        %v7094 = vpop.trf.xlu0
        %v7095 = vpop.trf.xlu0
        %v7096 = vpop.trf.xlu0
        %v7097 = vpop.trf.xlu0
        %v7098 = vpop.trf.xlu0
        %v7099 = vpop.trf.xlu0
        %v7100 = vpop.trf.xlu0
        %v7101 = vpop.trf.xlu0
        %v7102 = vpop.trf.xlu0
        %7103 = vxpose.xlu0.b32.start [1/16] %v1567, 128
        %7104 = vxpose.xlu0.b32.cont [2/16] %v1568, 128
        %7105 = vxpose.xlu0.b32.cont [3/16] %v1569, 128
        %7106 = vxpose.xlu0.b32.cont [4/16] %v1570, 128
        %7107 = vxpose.xlu0.b32.cont [5/16] %v1571, 128
        %7108 = vxpose.xlu0.b32.cont [6/16] %v1572, 128
        %7109 = vxpose.xlu0.b32.cont [7/16] %v1573, 128
        %7110 = vxpose.xlu0.b32.cont [8/16] %v1574, 128
        %7111 = vxpose.xlu0.b32.cont [9/16] %v1575, 128
        %7112 = vxpose.xlu0.b32.cont [10/16] %v1576, 128
        %7113 = vxpose.xlu0.b32.cont [11/16] %v1577, 128
        %7114 = vxpose.xlu0.b32.cont [12/16] %v1578, 128
        %7115 = vxpose.xlu0.b32.cont [13/16] %v1579, 128
        %7116 = vxpose.xlu0.b32.cont [14/16] %v1580, 128
        %7117 = vxpose.xlu0.b32.cont [15/16] %v1581, 128
        %7118 = vxpose.xlu0.b32.end [16/16] %v1582, 128
        %v7119 = vpop.trf.xlu0
        %v7120 = vpop.trf.xlu0
        %v7121 = vpop.trf.xlu0
        %v7122 = vpop.trf.xlu0
        %v7123 = vpop.trf.xlu0
        %v7124 = vpop.trf.xlu0
        %v7125 = vpop.trf.xlu0
        %v7126 = vpop.trf.xlu0
        %v7127 = vpop.trf.xlu0
        %v7128 = vpop.trf.xlu0
        %v7129 = vpop.trf.xlu0
        %v7130 = vpop.trf.xlu0
        %v7131 = vpop.trf.xlu0
        %v7132 = vpop.trf.xlu0
        %v7133 = vpop.trf.xlu0
        %v7134 = vpop.trf.xlu0
        %7135 = vxpose.xlu0.b32.start [1/16] %v1583, 128
        %7136 = vxpose.xlu0.b32.cont [2/16] %v1584, 128
        %7137 = vxpose.xlu0.b32.cont [3/16] %v1585, 128
        %7138 = vxpose.xlu0.b32.cont [4/16] %v1586, 128
        %7139 = vxpose.xlu0.b32.cont [5/16] %v1587, 128
        %7140 = vxpose.xlu0.b32.cont [6/16] %v1588, 128
        %7141 = vxpose.xlu0.b32.cont [7/16] %v1589, 128
        %7142 = vxpose.xlu0.b32.cont [8/16] %v1590, 128
        %7143 = vxpose.xlu0.b32.cont [9/16] %v1591, 128
        %7144 = vxpose.xlu0.b32.cont [10/16] %v1592, 128
        %7145 = vxpose.xlu0.b32.cont [11/16] %v1593, 128
        %7146 = vxpose.xlu0.b32.cont [12/16] %v1594, 128
        %7147 = vxpose.xlu0.b32.cont [13/16] %v1595, 128
        %7148 = vxpose.xlu0.b32.cont [14/16] %v1596, 128
        %7149 = vxpose.xlu0.b32.cont [15/16] %v1597, 128
        %7150 = vxpose.xlu0.b32.end [16/16] %v1598, 128
        %v7151 = vpop.trf.xlu0
        %v7152 = vpop.trf.xlu0
        %v7153 = vpop.trf.xlu0
        %v7154 = vpop.trf.xlu0
        %v7155 = vpop.trf.xlu0
        %v7156 = vpop.trf.xlu0
        %v7157 = vpop.trf.xlu0
        %v7158 = vpop.trf.xlu0
        %v7159 = vpop.trf.xlu0
        %v7160 = vpop.trf.xlu0
        %v7161 = vpop.trf.xlu0
        %v7162 = vpop.trf.xlu0
        %v7163 = vpop.trf.xlu0
        %v7164 = vpop.trf.xlu0
        %v7165 = vpop.trf.xlu0
        %v7166 = vpop.trf.xlu0
        %7167 = vxpose.xlu0.b32.start [1/16] %v1599, 128
        %7168 = vxpose.xlu0.b32.cont [2/16] %v1600, 128
        %7169 = vxpose.xlu0.b32.cont [3/16] %v1601, 128
        %7170 = vxpose.xlu0.b32.cont [4/16] %v1602, 128
        %7171 = vxpose.xlu0.b32.cont [5/16] %v1603, 128
        %7172 = vxpose.xlu0.b32.cont [6/16] %v1604, 128
        %7173 = vxpose.xlu0.b32.cont [7/16] %v1605, 128
        %7174 = vxpose.xlu0.b32.cont [8/16] %v1606, 128
        %7175 = vxpose.xlu0.b32.cont [9/16] %v1607, 128
        %7176 = vxpose.xlu0.b32.cont [10/16] %v1608, 128
        %7177 = vxpose.xlu0.b32.cont [11/16] %v1609, 128
        %7178 = vxpose.xlu0.b32.cont [12/16] %v1610, 128
        %7179 = vxpose.xlu0.b32.cont [13/16] %v1611, 128
        %7180 = vxpose.xlu0.b32.cont [14/16] %v1612, 128
        %7181 = vxpose.xlu0.b32.cont [15/16] %v1613, 128
        %7182 = vxpose.xlu0.b32.end [16/16] %v1614, 128
        %v7183 = vpop.trf.xlu0
        %v7184 = vpop.trf.xlu0
        %v7185 = vpop.trf.xlu0
        %v7186 = vpop.trf.xlu0
        %v7187 = vpop.trf.xlu0
        %v7188 = vpop.trf.xlu0
        %v7189 = vpop.trf.xlu0
        %v7190 = vpop.trf.xlu0
        %v7191 = vpop.trf.xlu0
        %v7192 = vpop.trf.xlu0
        %v7193 = vpop.trf.xlu0
        %v7194 = vpop.trf.xlu0
        %v7195 = vpop.trf.xlu0
        %v7196 = vpop.trf.xlu0
        %v7197 = vpop.trf.xlu0
        %v7198 = vpop.trf.xlu0
        %7199 = vxpose.xlu0.b32.start [1/16] %v1615, 128
        %7200 = vxpose.xlu0.b32.cont [2/16] %v1616, 128
        %7201 = vxpose.xlu0.b32.cont [3/16] %v1617, 128
        %7202 = vxpose.xlu0.b32.cont [4/16] %v1618, 128
        %7203 = vxpose.xlu0.b32.cont [5/16] %v1619, 128
        %7204 = vxpose.xlu0.b32.cont [6/16] %v1620, 128
        %7205 = vxpose.xlu0.b32.cont [7/16] %v1621, 128
        %7206 = vxpose.xlu0.b32.cont [8/16] %v1622, 128
        %7207 = vxpose.xlu0.b32.cont [9/16] %v1623, 128
        %7208 = vxpose.xlu0.b32.cont [10/16] %v1624, 128
        %7209 = vxpose.xlu0.b32.cont [11/16] %v1625, 128
        %7210 = vxpose.xlu0.b32.cont [12/16] %v1626, 128
        %7211 = vxpose.xlu0.b32.cont [13/16] %v1627, 128
        %7212 = vxpose.xlu0.b32.cont [14/16] %v1628, 128
        %7213 = vxpose.xlu0.b32.cont [15/16] %v1629, 128
        %7214 = vxpose.xlu0.b32.end [16/16] %v1630, 128
        %v7215 = vpop.trf.xlu0
        %v7216 = vpop.trf.xlu0
        %v7217 = vpop.trf.xlu0
        %v7218 = vpop.trf.xlu0
        %v7219 = vpop.trf.xlu0
        %v7220 = vpop.trf.xlu0
        %v7221 = vpop.trf.xlu0
        %v7222 = vpop.trf.xlu0
        %v7223 = vpop.trf.xlu0
        %v7224 = vpop.trf.xlu0
        %v7225 = vpop.trf.xlu0
        %v7226 = vpop.trf.xlu0
        %v7227 = vpop.trf.xlu0
        %v7228 = vpop.trf.xlu0
        %v7229 = vpop.trf.xlu0
        %v7230 = vpop.trf.xlu0
        %7231 = vxpose.xlu0.b32.start [1/16] %v1631, 128
        %7232 = vxpose.xlu0.b32.cont [2/16] %v1632, 128
        %7233 = vxpose.xlu0.b32.cont [3/16] %v1633, 128
        %7234 = vxpose.xlu0.b32.cont [4/16] %v1634, 128
        %7235 = vxpose.xlu0.b32.cont [5/16] %v1635, 128
        %7236 = vxpose.xlu0.b32.cont [6/16] %v1636, 128
        %7237 = vxpose.xlu0.b32.cont [7/16] %v1637, 128
        %7238 = vxpose.xlu0.b32.cont [8/16] %v1638, 128
        %7239 = vxpose.xlu0.b32.cont [9/16] %v1639, 128
        %7240 = vxpose.xlu0.b32.cont [10/16] %v1640, 128
        %7241 = vxpose.xlu0.b32.cont [11/16] %v1641, 128
        %7242 = vxpose.xlu0.b32.cont [12/16] %v1642, 128
        %7243 = vxpose.xlu0.b32.cont [13/16] %v1643, 128
        %7244 = vxpose.xlu0.b32.cont [14/16] %v1644, 128
        %7245 = vxpose.xlu0.b32.cont [15/16] %v1645, 128
        %7246 = vxpose.xlu0.b32.end [16/16] %v1646, 128
        %v7247 = vpop.trf.xlu0
        %v7248 = vpop.trf.xlu0
        %v7249 = vpop.trf.xlu0
        %v7250 = vpop.trf.xlu0
        %v7251 = vpop.trf.xlu0
        %v7252 = vpop.trf.xlu0
        %v7253 = vpop.trf.xlu0
        %v7254 = vpop.trf.xlu0
        %v7255 = vpop.trf.xlu0
        %v7256 = vpop.trf.xlu0
        %v7257 = vpop.trf.xlu0
        %v7258 = vpop.trf.xlu0
        %v7259 = vpop.trf.xlu0
        %v7260 = vpop.trf.xlu0
        %v7261 = vpop.trf.xlu0
        %v7262 = vpop.trf.xlu0
        %7263 = vmatpush.msra.mxu0 %v6977
        %7264 = vmatpush.msra.mxu0 %v6976
        %7265 = vmatpush.msra.mxu0 %v6975
        %7266 = vmatpush.msra.mxu0 %v6974
        %7267 = vmatpush.msra.mxu0 %v6973
        %7268 = vmatpush.msra.mxu0 %v6972
        %7269 = vmatpush.msra.mxu0 %v6971
        %7270 = vmatpush.msra.mxu0 %v6970
        %7271 = vmatpush.msra.mxu0 %v6969
        %7272 = vmatpush.msra.mxu0 %v6968
        %7273 = vmatpush.msra.mxu0 %v6967
        %7274 = vmatpush.msra.mxu0 %v6966
        %7275 = vmatpush.msra.mxu0 %v6965
        %7276 = vmatpush.msra.mxu0 %v6964
        %7277 = vmatpush.msra.mxu0 %v6963
        %7278 = vmatpush.msra.mxu0 %v6962
        %7279 = vmatmul.f32.gmra.mxu0 %v7087
        %v7280 = vpop.f32.mrf.mxu0
        %v7281 = vadd.f32 0.0, %v7280
        %7282 = vmatmul.f32.gmra.mxu0 %v7088
        %v7283 = vpop.f32.mrf.mxu0
        %v7284 = vadd.f32 0.0, %v7283
        %7285 = vmatmul.f32.gmra.mxu0 %v7089
        %v7286 = vpop.f32.mrf.mxu0
        %v7287 = vadd.f32 0.0, %v7286
        %7288 = vmatmul.f32.gmra.mxu0 %v7090
        %v7289 = vpop.f32.mrf.mxu0
        %v7290 = vadd.f32 0.0, %v7289
        %7291 = vmatmul.f32.gmra.mxu0 %v7091
        %v7292 = vpop.f32.mrf.mxu0
        %v7293 = vadd.f32 0.0, %v7292
        %7294 = vmatmul.f32.gmra.mxu0 %v7092
        %v7295 = vpop.f32.mrf.mxu0
        %v7296 = vadd.f32 0.0, %v7295
        %7297 = vmatmul.f32.gmra.mxu0 %v7093
        %v7298 = vpop.f32.mrf.mxu0
        %v7299 = vadd.f32 0.0, %v7298
        %7300 = vmatmul.f32.gmra.mxu0 %v7094
        %v7301 = vpop.f32.mrf.mxu0
        %v7302 = vadd.f32 0.0, %v7301
        %7303 = vmatmul.f32.gmra.mxu0 %v7095
        %v7304 = vpop.f32.mrf.mxu0
        %v7305 = vadd.f32 0.0, %v7304
        %7306 = vmatmul.f32.gmra.mxu0 %v7096
        %v7307 = vpop.f32.mrf.mxu0
        %v7308 = vadd.f32 0.0, %v7307
        %7309 = vmatmul.f32.gmra.mxu0 %v7097
        %v7310 = vpop.f32.mrf.mxu0
        %v7311 = vadd.f32 0.0, %v7310
        %7312 = vmatmul.f32.gmra.mxu0 %v7098
        %v7313 = vpop.f32.mrf.mxu0
        %v7314 = vadd.f32 0.0, %v7313
        %7315 = vmatmul.f32.gmra.mxu0 %v7099
        %v7316 = vpop.f32.mrf.mxu0
        %v7317 = vadd.f32 0.0, %v7316
        %7318 = vdwg.mxu0
        %7319 = vmatpush.msra.mxu0 %v6993
        %7320 = vmatpush.msra.mxu0 %v6992
        %7321 = vmatpush.msra.mxu0 %v6991
        %7322 = vmatpush.msra.mxu0 %v6990
        %7323 = vmatpush.msra.mxu0 %v6989
        %7324 = vmatpush.msra.mxu0 %v6988
        %7325 = vmatpush.msra.mxu0 %v6987
        %7326 = vmatpush.msra.mxu0 %v6986
        %7327 = vmatpush.msra.mxu0 %v6985
        %7328 = vmatpush.msra.mxu0 %v6984
        %7329 = vmatpush.msra.mxu0 %v6983
        %7330 = vmatpush.msra.mxu0 %v6982
        %7331 = vmatpush.msra.mxu0 %v6981
        %7332 = vmatpush.msra.mxu0 %v6980
        %7333 = vmatpush.msra.mxu0 %v6979
        %7334 = vmatpush.msra.mxu0 %v6978
        %7335 = vmatmul.f32.gmra.mxu0 %v7119
        %v7336 = vpop.f32.mrf.mxu0
        %v7337 = vadd.f32 %v7281, %v7336
        %7338 = vmatmul.f32.gmra.mxu0 %v7120
        %v7339 = vpop.f32.mrf.mxu0
        %v7340 = vadd.f32 %v7284, %v7339
        %7341 = vmatmul.f32.gmra.mxu0 %v7121
        %v7342 = vpop.f32.mrf.mxu0
        %v7343 = vadd.f32 %v7287, %v7342
        %7344 = vmatmul.f32.gmra.mxu0 %v7122
        %v7345 = vpop.f32.mrf.mxu0
        %v7346 = vadd.f32 %v7290, %v7345
        %7347 = vmatmul.f32.gmra.mxu0 %v7123
        %v7348 = vpop.f32.mrf.mxu0
        %v7349 = vadd.f32 %v7293, %v7348
        %7350 = vmatmul.f32.gmra.mxu0 %v7124
        %v7351 = vpop.f32.mrf.mxu0
        %v7352 = vadd.f32 %v7296, %v7351
        %7353 = vmatmul.f32.gmra.mxu0 %v7125
        %v7354 = vpop.f32.mrf.mxu0
        %v7355 = vadd.f32 %v7299, %v7354
        %7356 = vmatmul.f32.gmra.mxu0 %v7126
        %v7357 = vpop.f32.mrf.mxu0
        %v7358 = vadd.f32 %v7302, %v7357
        %7359 = vmatmul.f32.gmra.mxu0 %v7127
        %v7360 = vpop.f32.mrf.mxu0
        %v7361 = vadd.f32 %v7305, %v7360
        %7362 = vmatmul.f32.gmra.mxu0 %v7128
        %v7363 = vpop.f32.mrf.mxu0
        %v7364 = vadd.f32 %v7308, %v7363
        %7365 = vmatmul.f32.gmra.mxu0 %v7129
        %v7366 = vpop.f32.mrf.mxu0
        %v7367 = vadd.f32 %v7311, %v7366
        %7368 = vmatmul.f32.gmra.mxu0 %v7130
        %v7369 = vpop.f32.mrf.mxu0
        %v7370 = vadd.f32 %v7314, %v7369
        %7371 = vmatmul.f32.gmra.mxu0 %v7131
        %v7372 = vpop.f32.mrf.mxu0
        %v7373 = vadd.f32 %v7317, %v7372
        %7374 = vdwg.mxu0
        %7375 = vmatpush.msra.mxu0 %v7009
        %7376 = vmatpush.msra.mxu0 %v7008
        %7377 = vmatpush.msra.mxu0 %v7007
        %7378 = vmatpush.msra.mxu0 %v7006
        %7379 = vmatpush.msra.mxu0 %v7005
        %7380 = vmatpush.msra.mxu0 %v7004
        %7381 = vmatpush.msra.mxu0 %v7003
        %7382 = vmatpush.msra.mxu0 %v7002
        %7383 = vmatpush.msra.mxu0 %v7001
        %7384 = vmatpush.msra.mxu0 %v7000
        %7385 = vmatpush.msra.mxu0 %v6999
        %7386 = vmatpush.msra.mxu0 %v6998
        %7387 = vmatpush.msra.mxu0 %v6997
        %7388 = vmatpush.msra.mxu0 %v6996
        %7389 = vmatpush.msra.mxu0 %v6995
        %7390 = vmatpush.msra.mxu0 %v6994
        %7391 = vmatmul.f32.gmra.mxu0 %v7151
        %v7392 = vpop.f32.mrf.mxu0
        %v7393 = vadd.f32 %v7337, %v7392
        %7394 = vmatmul.f32.gmra.mxu0 %v7152
        %v7395 = vpop.f32.mrf.mxu0
        %v7396 = vadd.f32 %v7340, %v7395
        %7397 = vmatmul.f32.gmra.mxu0 %v7153
        %v7398 = vpop.f32.mrf.mxu0
        %v7399 = vadd.f32 %v7343, %v7398
        %7400 = vmatmul.f32.gmra.mxu0 %v7154
        %v7401 = vpop.f32.mrf.mxu0
        %v7402 = vadd.f32 %v7346, %v7401
        %7403 = vmatmul.f32.gmra.mxu0 %v7155
        %v7404 = vpop.f32.mrf.mxu0
        %v7405 = vadd.f32 %v7349, %v7404
        %7406 = vmatmul.f32.gmra.mxu0 %v7156
        %v7407 = vpop.f32.mrf.mxu0
        %v7408 = vadd.f32 %v7352, %v7407
        %7409 = vmatmul.f32.gmra.mxu0 %v7157
        %v7410 = vpop.f32.mrf.mxu0
        %v7411 = vadd.f32 %v7355, %v7410
        %7412 = vmatmul.f32.gmra.mxu0 %v7158
        %v7413 = vpop.f32.mrf.mxu0
        %v7414 = vadd.f32 %v7358, %v7413
        %7415 = vmatmul.f32.gmra.mxu0 %v7159
        %v7416 = vpop.f32.mrf.mxu0
        %v7417 = vadd.f32 %v7361, %v7416
        %7418 = vmatmul.f32.gmra.mxu0 %v7160
        %v7419 = vpop.f32.mrf.mxu0
        %v7420 = vadd.f32 %v7364, %v7419
        %7421 = vmatmul.f32.gmra.mxu0 %v7161
        %v7422 = vpop.f32.mrf.mxu0
        %v7423 = vadd.f32 %v7367, %v7422
        %7424 = vmatmul.f32.gmra.mxu0 %v7162
        %v7425 = vpop.f32.mrf.mxu0
        %v7426 = vadd.f32 %v7370, %v7425
        %7427 = vmatmul.f32.gmra.mxu0 %v7163
        %v7428 = vpop.f32.mrf.mxu0
        %v7429 = vadd.f32 %v7373, %v7428
        %7430 = vdwg.mxu0
        %7431 = vmatpush.msra.mxu0 %v7025
        %7432 = vmatpush.msra.mxu0 %v7024
        %7433 = vmatpush.msra.mxu0 %v7023
        %7434 = vmatpush.msra.mxu0 %v7022
        %7435 = vmatpush.msra.mxu0 %v7021
        %7436 = vmatpush.msra.mxu0 %v7020
        %7437 = vmatpush.msra.mxu0 %v7019
        %7438 = vmatpush.msra.mxu0 %v7018
        %7439 = vmatpush.msra.mxu0 %v7017
        %7440 = vmatpush.msra.mxu0 %v7016
        %7441 = vmatpush.msra.mxu0 %v7015
        %7442 = vmatpush.msra.mxu0 %v7014
        %7443 = vmatpush.msra.mxu0 %v7013
        %7444 = vmatpush.msra.mxu0 %v7012
        %7445 = vmatpush.msra.mxu0 %v7011
        %7446 = vmatpush.msra.mxu0 %v7010
        %7447 = vmatmul.f32.gmra.mxu0 %v7183
        %v7448 = vpop.f32.mrf.mxu0
        %v7449 = vadd.f32 %v7393, %v7448
        %7450 = vmatmul.f32.gmra.mxu0 %v7184
        %v7451 = vpop.f32.mrf.mxu0
        %v7452 = vadd.f32 %v7396, %v7451
        %7453 = vmatmul.f32.gmra.mxu0 %v7185
        %v7454 = vpop.f32.mrf.mxu0
        %v7455 = vadd.f32 %v7399, %v7454
        %7456 = vmatmul.f32.gmra.mxu0 %v7186
        %v7457 = vpop.f32.mrf.mxu0
        %v7458 = vadd.f32 %v7402, %v7457
        %7459 = vmatmul.f32.gmra.mxu0 %v7187
        %v7460 = vpop.f32.mrf.mxu0
        %v7461 = vadd.f32 %v7405, %v7460
        %7462 = vmatmul.f32.gmra.mxu0 %v7188
        %v7463 = vpop.f32.mrf.mxu0
        %v7464 = vadd.f32 %v7408, %v7463
        %7465 = vmatmul.f32.gmra.mxu0 %v7189
        %v7466 = vpop.f32.mrf.mxu0
        %v7467 = vadd.f32 %v7411, %v7466
        %7468 = vmatmul.f32.gmra.mxu0 %v7190
        %v7469 = vpop.f32.mrf.mxu0
        %v7470 = vadd.f32 %v7414, %v7469
        %7471 = vmatmul.f32.gmra.mxu0 %v7191
        %v7472 = vpop.f32.mrf.mxu0
        %v7473 = vadd.f32 %v7417, %v7472
        %7474 = vmatmul.f32.gmra.mxu0 %v7192
        %v7475 = vpop.f32.mrf.mxu0
        %v7476 = vadd.f32 %v7420, %v7475
        %7477 = vmatmul.f32.gmra.mxu0 %v7193
        %v7478 = vpop.f32.mrf.mxu0
        %v7479 = vadd.f32 %v7423, %v7478
        %7480 = vmatmul.f32.gmra.mxu0 %v7194
        %v7481 = vpop.f32.mrf.mxu0
        %v7482 = vadd.f32 %v7426, %v7481
        %7483 = vmatmul.f32.gmra.mxu0 %v7195
        %v7484 = vpop.f32.mrf.mxu0
        %v7485 = vadd.f32 %v7429, %v7484
        %7486 = vdwg.mxu0
        %7487 = vmatpush.msra.mxu0 %v7041
        %7488 = vmatpush.msra.mxu0 %v7040
        %7489 = vmatpush.msra.mxu0 %v7039
        %7490 = vmatpush.msra.mxu0 %v7038
        %7491 = vmatpush.msra.mxu0 %v7037
        %7492 = vmatpush.msra.mxu0 %v7036
        %7493 = vmatpush.msra.mxu0 %v7035
        %7494 = vmatpush.msra.mxu0 %v7034
        %7495 = vmatpush.msra.mxu0 %v7033
        %7496 = vmatpush.msra.mxu0 %v7032
        %7497 = vmatpush.msra.mxu0 %v7031
        %7498 = vmatpush.msra.mxu0 %v7030
        %7499 = vmatpush.msra.mxu0 %v7029
        %7500 = vmatpush.msra.mxu0 %v7028
        %7501 = vmatpush.msra.mxu0 %v7027
        %7502 = vmatpush.msra.mxu0 %v7026
        %7503 = vmatmul.f32.gmra.mxu0 %v7215
        %v7504 = vpop.f32.mrf.mxu0
        %v7505 = vadd.f32 %v7449, %v7504
        %7506 = vmatmul.f32.gmra.mxu0 %v7216
        %v7507 = vpop.f32.mrf.mxu0
        %v7508 = vadd.f32 %v7452, %v7507
        %7509 = vmatmul.f32.gmra.mxu0 %v7217
        %v7510 = vpop.f32.mrf.mxu0
        %v7511 = vadd.f32 %v7455, %v7510
        %7512 = vmatmul.f32.gmra.mxu0 %v7218
        %v7513 = vpop.f32.mrf.mxu0
        %v7514 = vadd.f32 %v7458, %v7513
        %7515 = vmatmul.f32.gmra.mxu0 %v7219
        %v7516 = vpop.f32.mrf.mxu0
        %v7517 = vadd.f32 %v7461, %v7516
        %7518 = vmatmul.f32.gmra.mxu0 %v7220
        %v7519 = vpop.f32.mrf.mxu0
        %v7520 = vadd.f32 %v7464, %v7519
        %7521 = vmatmul.f32.gmra.mxu0 %v7221
        %v7522 = vpop.f32.mrf.mxu0
        %v7523 = vadd.f32 %v7467, %v7522
        %7524 = vmatmul.f32.gmra.mxu0 %v7222
        %v7525 = vpop.f32.mrf.mxu0
        %v7526 = vadd.f32 %v7470, %v7525
        %7527 = vmatmul.f32.gmra.mxu0 %v7223
        %v7528 = vpop.f32.mrf.mxu0
        %v7529 = vadd.f32 %v7473, %v7528
        %7530 = vmatmul.f32.gmra.mxu0 %v7224
        %v7531 = vpop.f32.mrf.mxu0
        %v7532 = vadd.f32 %v7476, %v7531
        %7533 = vmatmul.f32.gmra.mxu0 %v7225
        %v7534 = vpop.f32.mrf.mxu0
        %v7535 = vadd.f32 %v7479, %v7534
        %7536 = vmatmul.f32.gmra.mxu0 %v7226
        %v7537 = vpop.f32.mrf.mxu0
        %v7538 = vadd.f32 %v7482, %v7537
        %7539 = vmatmul.f32.gmra.mxu0 %v7227
        %v7540 = vpop.f32.mrf.mxu0
        %v7541 = vadd.f32 %v7485, %v7540
        %7542 = vdwg.mxu0
        %7543 = vmatpush.msra.mxu0 %v7057
        %7544 = vmatpush.msra.mxu0 %v7056
        %7545 = vmatpush.msra.mxu0 %v7055
        %7546 = vmatpush.msra.mxu0 %v7054
        %7547 = vmatpush.msra.mxu0 %v7053
        %7548 = vmatpush.msra.mxu0 %v7052
        %7549 = vmatpush.msra.mxu0 %v7051
        %7550 = vmatpush.msra.mxu0 %v7050
        %7551 = vmatpush.msra.mxu0 %v7049
        %7552 = vmatpush.msra.mxu0 %v7048
        %7553 = vmatpush.msra.mxu0 %v7047
        %7554 = vmatpush.msra.mxu0 %v7046
        %7555 = vmatpush.msra.mxu0 %v7045
        %7556 = vmatpush.msra.mxu0 %v7044
        %7557 = vmatpush.msra.mxu0 %v7043
        %7558 = vmatpush.msra.mxu0 %v7042
        %7559 = vmatmul.f32.gmra.mxu0 %v7247
        %v7560 = vpop.f32.mrf.mxu0
        %v7561 = vadd.f32 %v7505, %v7560
        %7562 = vmatmul.f32.gmra.mxu0 %v7248
        %v7563 = vpop.f32.mrf.mxu0
        %v7564 = vadd.f32 %v7508, %v7563
        %7565 = vmatmul.f32.gmra.mxu0 %v7249
        %v7566 = vpop.f32.mrf.mxu0
        %v7567 = vadd.f32 %v7511, %v7566
        %7568 = vmatmul.f32.gmra.mxu0 %v7250
        %v7569 = vpop.f32.mrf.mxu0
        %v7570 = vadd.f32 %v7514, %v7569
        %7571 = vmatmul.f32.gmra.mxu0 %v7251
        %v7572 = vpop.f32.mrf.mxu0
        %v7573 = vadd.f32 %v7517, %v7572
        %7574 = vmatmul.f32.gmra.mxu0 %v7252
        %v7575 = vpop.f32.mrf.mxu0
        %v7576 = vadd.f32 %v7520, %v7575
        %7577 = vmatmul.f32.gmra.mxu0 %v7253
        %v7578 = vpop.f32.mrf.mxu0
        %v7579 = vadd.f32 %v7523, %v7578
        %7580 = vmatmul.f32.gmra.mxu0 %v7254
        %v7581 = vpop.f32.mrf.mxu0
        %v7582 = vadd.f32 %v7526, %v7581
        %7583 = vmatmul.f32.gmra.mxu0 %v7255
        %v7584 = vpop.f32.mrf.mxu0
        %v7585 = vadd.f32 %v7529, %v7584
        %7586 = vmatmul.f32.gmra.mxu0 %v7256
        %v7587 = vpop.f32.mrf.mxu0
        %v7588 = vadd.f32 %v7532, %v7587
        %7589 = vmatmul.f32.gmra.mxu0 %v7257
        %v7590 = vpop.f32.mrf.mxu0
        %v7591 = vadd.f32 %v7535, %v7590
        %7592 = vmatmul.f32.gmra.mxu0 %v7258
        %v7593 = vpop.f32.mrf.mxu0
        %v7594 = vadd.f32 %v7538, %v7593
        %7595 = vmatmul.f32.gmra.mxu0 %v7259
        %v7596 = vpop.f32.mrf.mxu0
        %v7597 = vadd.f32 %v7541, %v7596
        %7598 = vdwg.mxu0
        %v7599 = vadd.f32 %v7058, %v7561
        %v7600 = vadd.f32 %v7059, %v7564
        %v7601 = vadd.f32 %v7060, %v7567
        %v7602 = vadd.f32 %v7061, %v7570
        %v7603 = vadd.f32 %v7062, %v7573
        %v7604 = vadd.f32 %v7063, %v7576
        %v7605 = vadd.f32 %v7064, %v7579
        %v7606 = vadd.f32 %v7065, %v7582
        %v7607 = vadd.f32 %v7066, %v7585
        %v7608 = vadd.f32 %v7067, %v7588
        %v7609 = vadd.f32 %v7068, %v7591
        %v7610 = vadd.f32 %v7069, %v7594
        %v7611 = vadd.f32 %v7070, %v7597
        %vm7612 = vcmask 130048
        %7613 = vst.msk [vmem:[%s7] sm:$0xff] %vm7612, %v7599
        %7614 = vst.msk [vmem:[%s7 + $0x8] sm:$0xff] %vm7612, %v7600
        %7615 = vst.msk [vmem:[%s7 + $0x10] sm:$0xff] %vm7612, %v7601
        %7616 = vst.msk [vmem:[%s7 + $0x18] sm:$0xff] %vm7612, %v7602
        %7617 = vst.msk [vmem:[%s7 + $0x20] sm:$0xff] %vm7612, %v7603
        %7618 = vst.msk [vmem:[%s7 + $0x28] sm:$0xff] %vm7612, %v7604
        %7619 = vst.msk [vmem:[%s7 + $0x30] sm:$0xff] %vm7612, %v7605
        %7620 = vst.msk [vmem:[%s7 + $0x38] sm:$0xff] %vm7612, %v7606
        %7621 = vst.msk [vmem:[%s7 + $0x40] sm:$0xff] %vm7612, %v7607
        %7622 = vst.msk [vmem:[%s7 + $0x48] sm:$0xff] %vm7612, %v7608
        %7623 = vst.msk [vmem:[%s7 + $0x50] sm:$0xff] %vm7612, %v7609
        %7624 = vst.msk [vmem:[%s7 + $0x58] sm:$0xff] %vm7612, %v7610
        %vm7625 = vcmask 125952
        %7626 = vst.msk [vmem:[%s7 + $0x60] sm:$0xf] %vm7625, %v7611
      $region64: #{tpu_custom_call.1} parent=47 // pred_fallthru
        _
      // Predicated region
      $region65: #{tpu_custom_call.1} parent=47 // pred_check
        %p7627 = pneg %p201
      $region66: #{tpu_custom_call.1} parent=47 // pred_check_branch
        %7629 = sbr.rel (%p7627) target = $region68
      $region67: #{tpu_custom_call.1} parent=47 // pred_region
        _
      $region68: #{tpu_custom_call.1} parent=47 // pred_fallthru
        _
      // Predicated region
      $region69: #{tpu_custom_call.1} parent=47 // pred_check
        %p7630 = pneg %p201
      $region70: #{tpu_custom_call.1} parent=47 // pred_check_branch
        %7632 = sbr.rel (%p7630) target = $region72
      $region71: #{tpu_custom_call.1} parent=47 // pred_region
        _
      $region72: #{tpu_custom_call.1} parent=47 // pred_fallthru
        _
    $region48: #{tpu_custom_call.1} parent=5 // pred_fallthru
      _
    %p7633 = scmp.le.s32.totalorder 2, %s14
    // Predicated region
    $region73: #{tpu_custom_call.1} parent=5 // pred_check
      %p7634 = pneg %p7633
    $region74: #{tpu_custom_call.1} parent=5 // pred_check_branch
      %7636 = sbr.rel (%p7634) target = $region76
    $region75: #{tpu_custom_call.1} parent=5 // pred_region
      %s7637 = ssub.s32 %s14, 2
    $region76: #{tpu_custom_call.1} parent=5 // pred_fallthru
      _
  $region6: #{tpu_custom_call.1} parent=0 // loop_footer
    %s18 = sadd.s32 1, %s14
  $region7: #{tpu_custom_call.1} parent=0 // loop_footer_branch
    %13 = sbr.rel target = $region3
  $region8: #{tpu_custom_call.1} parent=0 // loop_exit
    _

</llo_original>
